<compile_context>
chip_gen: v7x
topology: tpu7x:2x2x1
jax: 0.10.0
libtpu: 0.0.40
codegen_flags: <defaults>
</compile_context>

<pallas_src>
import functools

import jax
import jax.numpy as jnp
from jax.experimental import pallas as pl
from jax.experimental.pallas import tpu as pltpu


def _resa_fused_kernel(x_ref, w_ref, b_ref, o_ref, xx_ref,
                       *, A, B, C, K, pad, halo_l, shifts):
    """One batch element: run all S = len(shifts) RESA steps on a VMEM-resident block."""
    # Zero the conv halo rows once per block; they are never written afterwards.
    if halo_l:
        xx_ref[:, 0:halo_l, :] = jnp.zeros((B, halo_l, C), jnp.bfloat16)
    if pad:
        xx_ref[:, halo_l + A:halo_l + A + pad, :] = jnp.zeros((B, pad, C), jnp.bfloat16)

    # Residency: the feature map lives in the output's VMEM block across all steps.
    o_ref[...] = x_ref[...]

    for s, sh in enumerate(shifts):                  # S = 2*iters, static -> fully unrolled
        cur = o_ref[...]                                             # (B, A, C) f32
        # Stage the UNshifted features once per step (bf16, sublane-aligned offset).
        xx_ref[:, halo_l:halo_l + A, :] = cur.astype(jnp.bfloat16)

        # (K,1) conv with full channel mixing: K per-tap MXU matmuls accumulated in f32.
        acc = None
        for kh in range(K):
            lo = halo_l - pad + kh
            win = xx_ref[:, lo:lo + A, :].reshape(B * A, C)          # bf16
            part = jnp.dot(win, w_ref[s, kh], preferred_element_type=jnp.float32)
            acc = part if acc is None else acc + part
        y = jnp.maximum(acc + b_ref[s], 0.0).reshape(B, A, C)        # bias + ReLU, f32

        # conv/bias/ReLU commute with the circular shift along B, so shift the conv OUTPUT
        # instead of double-staging the input:  out[b] = cur[b] + y[(b + sh) % B].
        if sh == 0:
            o_ref[...] = (cur + y).astype(o_ref.dtype)
        else:
            o_ref[0:B - sh, :, :] = (cur[0:B - sh] + y[sh:B]).astype(o_ref.dtype)
            o_ref[B - sh:B, :, :] = (cur[B - sh:B] + y[0:sh]).astype(o_ref.dtype)


def _resa_fused(x_bac, w_all, b_all, shifts, *, K):
    """x_bac: (N, B, A, C) f32; w_all: (S, K, C, C) bf16; b_all: (S, 1, C) f32;
    shifts: tuple of S Python ints, each in [0, B)."""
    N, B, A, C = x_bac.shape
    S = w_all.shape[0]
    pad = K // 2
    # Left halo rounded up to a bf16 sublane tile (16) so the hot staging store is unmasked.
    halo_l = ((pad + 15) // 16) * 16 if pad else 0

    kern = functools.partial(_resa_fused_kernel, A=A, B=B, C=C, K=K,
                             pad=pad, halo_l=halo_l, shifts=tuple(int(s) for s in shifts))

    # Derived VMEM budget (bytes): double-buffered in/out blocks + weights + scratch + temps.
    blk = B * A * C * 4
    vmem_need = (4 * blk                                   # in + out blocks, double-buffered
                 + 2 * (S * K * C * C * 2 + S * C * 4)     # all step weights + biases
                 + B * (halo_l + A + pad) * C * 2          # bf16 staging scratch
                 + 6 * blk)                                # in-kernel temporaries (cur/acc/y/...)
    vmem_limit = int(min(max(vmem_need, 32 * 1024 * 1024), 48 * 1024 * 1024))

    return pl.pallas_call(
        kern,
        out_shape=jax.ShapeDtypeStruct((N, B, A, C), x_bac.dtype),
        grid=(N,),
        in_specs=[
            pl.BlockSpec((None, B, A, C), lambda n: (n, 0, 0, 0)),   # features: one DMA per n
            pl.BlockSpec((S, K, C, C), lambda n: (0, 0, 0, 0)),      # all step weights, loaded once
            pl.BlockSpec((S, 1, C), lambda n: (0, 0, 0)),            # all step biases, loaded once
        ],
        out_specs=pl.BlockSpec((None, B, A, C), lambda n: (n, 0, 0, 0)),
        scratch_shapes=[pltpu.VMEM((B, halo_l + A + pad, C), jnp.bfloat16)],
        input_output_aliases={0: 0},            # output shares the features' HBM buffer
        compiler_params=pltpu.CompilerParams(
            dimension_semantics=("parallel",),
            vmem_limit_bytes=vmem_limit,
        ),
    )(x_bac, w_all, b_all)


def resa_forward(feats, params, line_type, iters):
    """feats: (N, C, H, W) float32 (PyTorch NCHW). Matches RESA.forward semantics."""
    N, C, H, W = feats.shape
    if line_type == 'row':
        x = jnp.transpose(feats, (0, 3, 2, 1))   # (N, W, H, C): shift over W, conv over H
        B = W
        names = ('l2r', 'r2l')
    else:
        x = jnp.transpose(feats, (0, 2, 3, 1))   # (N, H, W, C): shift over H, conv over W
        B = H
        names = ('t2b', 'b2t')
    delta_lst = [B // 2 ** (iters - i) for i in range(iters)]
    K = params[names[0]][0][0].shape[2]

    ws, bs, shifts = [], [], []
    for sign, name in ((+1, names[0]), (-1, names[1])):
        for i in range(iters):
            w, b = params[name][i]                        # w: (Co, Ci, K), b: (C,)
            ws.append(jnp.transpose(w, (2, 1, 0)))        # (K, Ci, Co): per-tap (Ci, Co) slabs
            bs.append(b[None, :])
            shifts.append(int((sign * delta_lst[i]) % B))  # static, nonnegative, in [0, B)
    w_all = jnp.stack(ws).astype(jnp.bfloat16)            # (S, K, C, C) bf16 MXU operands
    b_all = jnp.stack(bs)                                  # (S, 1, C)   f32

    y = _resa_fused(x, w_all, b_all, tuple(shifts), K=K)
    if line_type == 'row':
        return jnp.transpose(y, (0, 3, 2, 1))              # (N, W, H, C) -> (N, C, H, W)
    return jnp.transpose(y, (0, 3, 1, 2))                  # (N, H, W, C) -> (N, C, H, W)


# ---------------- pure-JAX reference (for correctness check only) ----------------
def _conv_ref(x, w, b, line_type):
    K = w.shape[2]
    if line_type == 'row':
        w4 = w[:, :, :, None]                              # (Co, Ci, K, 1)
        padding = ((K // 2, K // 2), (0, 0))
    else:
        w4 = w[:, :, None, :]                              # (Co, Ci, 1, K)
        padding = ((0, 0), (K // 2, K // 2))
    y = jax.lax.conv_general_dilated(x, w4, window_strides=(1, 1), padding=padding,
                                     dimension_numbers=('NCHW', 'OIHW', 'NCHW'))
    return jnp.maximum(y + b[None, :, None, None], 0.0)


def resa_reference(feats, params, line_type, iters):
    N, C, H, W = feats.shape
    dim = W if line_type == 'row' else H
    axis = 3 if line_type == 'row' else 2
    names = ('l2r', 'r2l') if line_type == 'row' else ('t2b', 'b2t')
    delta_lst = [dim // 2 ** (iters - i) for i in range(iters)]
    x = feats
    for i in range(iters):
        w, b = params[names[0]][i]
        x = x + _conv_ref(jnp.roll(x, -delta_lst[i], axis=axis), w, b, line_type)
    for i in range(iters):
        w, b = params[names[1]][i]
        x = x + _conv_ref(jnp.roll(x, +delta_lst[i], axis=axis), w, b, line_type)
    return x


if __name__ == "__main__":
    # RESA(iters=2, line_type='row', channel=8, spatial_kernel=5)
    iters, line_type, channel, spatial_kernel = 2, 'row', 8, 5
    N, H, W = 2, 16, 16

    key = jax.random.PRNGKey(0)
    names = ('l2r', 'r2l') if line_type == 'row' else ('t2b', 'b2t')
    params = {n: [] for n in names}
    for n in names:
        for i in range(iters):
            key, kw, kb = jax.random.split(key, 3)
            w = 0.1 * jax.random.normal(kw, (channel, channel, spatial_kernel), jnp.float32)
            b = 0.1 * jax.random.normal(kb, (channel,), jnp.float32)
            params[n].append((w, b))
    key, kx = jax.random.split(key)
    feats = jax.random.normal(kx, (N, channel, H, W), jnp.float32)

    run = jax.jit(functools.partial(resa_forward, line_type=line_type, iters=iters))
    out = jax.block_until_ready(run(feats, params))
    ref = jax.block_until_ready(resa_reference(feats, params, line_type, iters))

    assert out.shape == feats.shape and out.dtype == feats.dtype
    # Scale-aware tolerance: bf16 MXU operands (f32 accumulate) vs XLA f32 conv.
    err = float(jnp.max(jnp.abs(out - ref)))
    scale = max(1.0, float(jnp.max(jnp.abs(ref))))
    if err > 2e-2 * scale:
        raise AssertionError(f"mismatch vs reference: max abs err = {err} (scale={scale})")
    print("KERNEL_OK")
</pallas_src>

<mosaic_0001>
module attributes {stable_mosaic.version = 11 : i64} {
  func.func @_resa_fused_kernel(%arg0: i32, %arg1: memref<1x16x16x8xf32, #tpu.memory_space<vmem>>, %arg2: memref<4x5x8x8xbf16, #tpu.memory_space<vmem>>, %arg3: memref<4x1x8xf32, #tpu.memory_space<vmem>>, %arg4: memref<1x16x16x8xf32, #tpu.memory_space<vmem>>, %arg5: memref<16x34x8xbf16, #tpu.memory_space<vmem>>) attributes {dimension_semantics = [#tpu.dimension_semantics<parallel>], iteration_bounds = array<i64: 2>, scalar_prefetch = 0 : i64, scratch_operands = 1 : i64, tpu.core_type = #tpu.core_type<tc>, window_params = [{transform_indices = @transform_0, window_bounds = array<i64: 1, 16, 16, 8>}, {pipeline_mode = #tpu.pipeline_mode<synchronous>, transform_indices = @transform_1, window_bounds = array<i64: 4, 5, 8, 8>}, {pipeline_mode = #tpu.pipeline_mode<synchronous>, transform_indices = @transform_2, window_bounds = array<i64: 4, 1, 8>}, {transform_indices = @transform_3, window_bounds = array<i64: 1, 16, 16, 8>}]} {
    %cst = arith.constant 0.000000e+00 : bf16
    %0 = vector.broadcast %cst : bf16 to vector<16x16x8xbf16>
    %c0 = arith.constant 0 : index
    %c0_0 = arith.constant 0 : index
    %c0_1 = arith.constant 0 : index
    %1 = vector.load %arg5[%c0, %c0_0, %c0_1] : memref<16x34x8xbf16, #tpu.memory_space<vmem>>, vector<16x16x8xbf16>
    tpu.vector_store %arg5[%c0, %c0_0, %c0_1], %0 {strides = array<i32>} : memref<16x34x8xbf16, #tpu.memory_space<vmem>>, vector<16x16x8xbf16>,
    %cst_2 = arith.constant 0.000000e+00 : bf16
    %2 = vector.broadcast %cst_2 : bf16 to vector<16x2x8xbf16>
    %c0_3 = arith.constant 0 : index
    %c32 = arith.constant 32 : index
    %c0_4 = arith.constant 0 : index
    %3 = vector.load %arg5[%c0_3, %c32, %c0_4] : memref<16x34x8xbf16, #tpu.memory_space<vmem>>, vector<16x2x8xbf16>
    tpu.vector_store %arg5[%c0_3, %c32, %c0_4], %2 {strides = array<i32>} : memref<16x34x8xbf16, #tpu.memory_space<vmem>>, vector<16x2x8xbf16>,
    %c0_5 = arith.constant 0 : index
    %c0_6 = arith.constant 0 : index
    %c0_7 = arith.constant 0 : index
    %c0_8 = arith.constant 0 : index
    %4 = vector.load %arg1[%c0_5, %c0_6, %c0_7, %c0_8] : memref<1x16x16x8xf32, #tpu.memory_space<vmem>>, vector<1x16x16x8xf32>
    %5 = vector.shape_cast %4 : vector<1x16x16x8xf32> to vector<16x16x8xf32>
    %c0_9 = arith.constant 0 : index
    %c0_10 = arith.constant 0 : index
    %c0_11 = arith.constant 0 : index
    %c0_12 = arith.constant 0 : index
    %6 = vector.load %arg4[%c0_9, %c0_10, %c0_11, %c0_12] : memref<1x16x16x8xf32, #tpu.memory_space<vmem>>, vector<1x16x16x8xf32>
    %7 = vector.shape_cast %6 : vector<1x16x16x8xf32> to vector<16x16x8xf32>
    %8 = vector.shape_cast %5 : vector<16x16x8xf32> to vector<1x16x16x8xf32>
    tpu.vector_store %arg4[%c0_9, %c0_10, %c0_11, %c0_12], %8 {strides = array<i32>} : memref<1x16x16x8xf32, #tpu.memory_space<vmem>>, vector<1x16x16x8xf32>,
    %c0_13 = arith.constant 0 : index
    %c0_14 = arith.constant 0 : index
    %c0_15 = arith.constant 0 : index
    %c0_16 = arith.constant 0 : index
    %9 = vector.load %arg4[%c0_13, %c0_14, %c0_15, %c0_16] : memref<1x16x16x8xf32, #tpu.memory_space<vmem>>, vector<1x16x16x8xf32>
    %10 = vector.shape_cast %9 : vector<1x16x16x8xf32> to vector<16x16x8xf32>
    %11 = arith.truncf %10 : vector<16x16x8xf32> to vector<16x16x8xbf16>
    %c0_17 = arith.constant 0 : index
    %c16 = arith.constant 16 : index
    %c0_18 = arith.constant 0 : index
    %12 = vector.load %arg5[%c0_17, %c16, %c0_18] : memref<16x34x8xbf16, #tpu.memory_space<vmem>>, vector<16x16x8xbf16>
    tpu.vector_store %arg5[%c0_17, %c16, %c0_18], %11 {strides = array<i32>} : memref<16x34x8xbf16, #tpu.memory_space<vmem>>, vector<16x16x8xbf16>,
    %c0_19 = arith.constant 0 : index
    %c14 = arith.constant 14 : index
    %c0_20 = arith.constant 0 : index
    %13 = vector.load %arg5[%c0_19, %c14, %c0_20] : memref<16x34x8xbf16, #tpu.memory_space<vmem>>, vector<16x16x8xbf16>
    %14 = vector.shape_cast %13 : vector<16x16x8xbf16> to vector<256x8xbf16>
    %c0_21 = arith.constant 0 : index
    %c0_22 = arith.constant 0 : index
    %c0_23 = arith.constant 0 : index
    %c0_24 = arith.constant 0 : index
    %15 = vector.load %arg2[%c0_21, %c0_22, %c0_23, %c0_24] : memref<4x5x8x8xbf16, #tpu.memory_space<vmem>>, vector<1x1x8x8xbf16>
    %16 = vector.shape_cast %15 : vector<1x1x8x8xbf16> to vector<8x8xbf16>
    %cst_25 = arith.constant dense<0.000000e+00> : vector<256x8xf32>
    %17 = tpu.matmul %14, %16, %cst_25 {dimension_numbers = #tpu.dot_dimension_numbers<[1], [0], [0], [1], [0, 0, 1, 1], [], []>} : vector<256x8xbf16>, vector<8x8xbf16>, vector<256x8xf32> -> vector<256x8xf32>
    %c0_26 = arith.constant 0 : index
    %c15 = arith.constant 15 : index
    %c0_27 = arith.constant 0 : index
    %18 = vector.load %arg5[%c0_26, %c15, %c0_27] : memref<16x34x8xbf16, #tpu.memory_space<vmem>>, vector<16x16x8xbf16>
    %19 = vector.shape_cast %18 : vector<16x16x8xbf16> to vector<256x8xbf16>
    %c0_28 = arith.constant 0 : index
    %c1 = arith.constant 1 : index
    %c0_29 = arith.constant 0 : index
    %c0_30 = arith.constant 0 : index
    %20 = vector.load %arg2[%c0_28, %c1, %c0_29, %c0_30] : memref<4x5x8x8xbf16, #tpu.memory_space<vmem>>, vector<1x1x8x8xbf16>
    %21 = vector.shape_cast %20 : vector<1x1x8x8xbf16> to vector<8x8xbf16>
    %cst_31 = arith.constant dense<0.000000e+00> : vector<256x8xf32>
    %22 = tpu.matmul %19, %21, %cst_31 {dimension_numbers = #tpu.dot_dimension_numbers<[1], [0], [0], [1], [0, 0, 1, 1], [], []>} : vector<256x8xbf16>, vector<8x8xbf16>, vector<256x8xf32> -> vector<256x8xf32>
    %23 = arith.addf %17, %22 : vector<256x8xf32>
    %c0_32 = arith.constant 0 : index
    %c16_33 = arith.constant 16 : index
    %c0_34 = arith.constant 0 : index
    %24 = vector.load %arg5[%c0_32, %c16_33, %c0_34] : memref<16x34x8xbf16, #tpu.memory_space<vmem>>, vector<16x16x8xbf16>
    %25 = vector.shape_cast %24 : vector<16x16x8xbf16> to vector<256x8xbf16>
    %c0_35 = arith.constant 0 : index
    %c2 = arith.constant 2 : index
    %c0_36 = arith.constant 0 : index
    %c0_37 = arith.constant 0 : index
    %26 = vector.load %arg2[%c0_35, %c2, %c0_36, %c0_37] : memref<4x5x8x8xbf16, #tpu.memory_space<vmem>>, vector<1x1x8x8xbf16>
    %27 = vector.shape_cast %26 : vector<1x1x8x8xbf16> to vector<8x8xbf16>
    %cst_38 = arith.constant dense<0.000000e+00> : vector<256x8xf32>
    %28 = tpu.matmul %25, %27, %cst_38 {dimension_numbers = #tpu.dot_dimension_numbers<[1], [0], [0], [1], [0, 0, 1, 1], [], []>} : vector<256x8xbf16>, vector<8x8xbf16>, vector<256x8xf32> -> vector<256x8xf32>
    %29 = arith.addf %23, %28 : vector<256x8xf32>
    %c0_39 = arith.constant 0 : index
    %c17 = arith.constant 17 : index
    %c0_40 = arith.constant 0 : index
    %30 = vector.load %arg5[%c0_39, %c17, %c0_40] : memref<16x34x8xbf16, #tpu.memory_space<vmem>>, vector<16x16x8xbf16>
    %31 = vector.shape_cast %30 : vector<16x16x8xbf16> to vector<256x8xbf16>
    %c0_41 = arith.constant 0 : index
    %c3 = arith.constant 3 : index
    %c0_42 = arith.constant 0 : index
    %c0_43 = arith.constant 0 : index
    %32 = vector.load %arg2[%c0_41, %c3, %c0_42, %c0_43] : memref<4x5x8x8xbf16, #tpu.memory_space<vmem>>, vector<1x1x8x8xbf16>
    %33 = vector.shape_cast %32 : vector<1x1x8x8xbf16> to vector<8x8xbf16>
    %cst_44 = arith.constant dense<0.000000e+00> : vector<256x8xf32>
    %34 = tpu.matmul %31, %33, %cst_44 {dimension_numbers = #tpu.dot_dimension_numbers<[1], [0], [0], [1], [0, 0, 1, 1], [], []>} : vector<256x8xbf16>, vector<8x8xbf16>, vector<256x8xf32> -> vector<256x8xf32>
    %35 = arith.addf %29, %34 : vector<256x8xf32>
    %c0_45 = arith.constant 0 : index
    %c18 = arith.constant 18 : index
    %c0_46 = arith.constant 0 : index
    %36 = vector.load %arg5[%c0_45, %c18, %c0_46] : memref<16x34x8xbf16, #tpu.memory_space<vmem>>, vector<16x16x8xbf16>
    %37 = vector.shape_cast %36 : vector<16x16x8xbf16> to vector<256x8xbf16>
    %c0_47 = arith.constant 0 : index
    %c4 = arith.constant 4 : index
    %c0_48 = arith.constant 0 : index
    %c0_49 = arith.constant 0 : index
    %38 = vector.load %arg2[%c0_47, %c4, %c0_48, %c0_49] : memref<4x5x8x8xbf16, #tpu.memory_space<vmem>>, vector<1x1x8x8xbf16>
    %39 = vector.shape_cast %38 : vector<1x1x8x8xbf16> to vector<8x8xbf16>
    %cst_50 = arith.constant dense<0.000000e+00> : vector<256x8xf32>
    %40 = tpu.matmul %37, %39, %cst_50 {dimension_numbers = #tpu.dot_dimension_numbers<[1], [0], [0], [1], [0, 0, 1, 1], [], []>} : vector<256x8xbf16>, vector<8x8xbf16>, vector<256x8xf32> -> vector<256x8xf32>
    %41 = arith.addf %35, %40 : vector<256x8xf32>
    %c0_51 = arith.constant 0 : index
    %c0_52 = arith.constant 0 : index
    %c0_53 = arith.constant 0 : index
    %42 = vector.load %arg3[%c0_51, %c0_52, %c0_53] : memref<4x1x8xf32, #tpu.memory_space<vmem>>, vector<1x1x8xf32>
    %43 = vector.shape_cast %42 : vector<1x1x8xf32> to vector<1x8xf32>
    %44 = vector.broadcast %43 : vector<1x8xf32> to vector<256x8xf32>
    %45 = arith.addf %41, %44 : vector<256x8xf32>
    %cst_54 = arith.constant 0.000000e+00 : f32
    %46 = vector.broadcast %cst_54 : f32 to vector<256x8xf32>
    %47 = arith.maximumf %45, %46 : vector<256x8xf32>
    %48 = vector.shape_cast %47 : vector<256x8xf32> to vector<16x16x8xf32>
    %49 = vector.extract_strided_slice %10 {offsets = [0, 0, 0], sizes = [12, 16, 8], strides = [1, 1, 1]} : vector<16x16x8xf32> to vector<12x16x8xf32>
    %50 = vector.extract_strided_slice %48 {offsets = [4, 0, 0], sizes = [12, 16, 8], strides = [1, 1, 1]} : vector<16x16x8xf32> to vector<12x16x8xf32>
    %51 = arith.addf %49, %50 : vector<12x16x8xf32>
    %c0_55 = arith.constant 0 : index
    %c0_56 = arith.constant 0 : index
    %c0_57 = arith.constant 0 : index
    %c0_58 = arith.constant 0 : index
    %52 = vector.load %arg4[%c0_55, %c0_56, %c0_57, %c0_58] : memref<1x16x16x8xf32, #tpu.memory_space<vmem>>, vector<1x12x16x8xf32>
    %53 = vector.shape_cast %52 : vector<1x12x16x8xf32> to vector<12x16x8xf32>
    %54 = vector.shape_cast %51 : vector<12x16x8xf32> to vector<1x12x16x8xf32>
    tpu.vector_store %arg4[%c0_55, %c0_56, %c0_57, %c0_58], %54 {strides = array<i32>} : memref<1x16x16x8xf32, #tpu.memory_space<vmem>>, vector<1x12x16x8xf32>,
    %55 = vector.extract_strided_slice %10 {offsets = [12, 0, 0], sizes = [4, 16, 8], strides = [1, 1, 1]} : vector<16x16x8xf32> to vector<4x16x8xf32>
    %56 = vector.extract_strided_slice %48 {offsets = [0, 0, 0], sizes = [4, 16, 8], strides = [1, 1, 1]} : vector<16x16x8xf32> to vector<4x16x8xf32>
    %57 = arith.addf %55, %56 : vector<4x16x8xf32>
    %c0_59 = arith.constant 0 : index
    %c12 = arith.constant 12 : index
    %c0_60 = arith.constant 0 : index
    %c0_61 = arith.constant 0 : index
    %58 = vector.load %arg4[%c0_59, %c12, %c0_60, %c0_61] : memref<1x16x16x8xf32, #tpu.memory_space<vmem>>, vector<1x4x16x8xf32>
    %59 = vector.shape_cast %58 : vector<1x4x16x8xf32> to vector<4x16x8xf32>
    %60 = vector.shape_cast %57 : vector<4x16x8xf32> to vector<1x4x16x8xf32>
    tpu.vector_store %arg4[%c0_59, %c12, %c0_60, %c0_61], %60 {strides = array<i32>} : memref<1x16x16x8xf32, #tpu.memory_space<vmem>>, vector<1x4x16x8xf32>,
    %c0_62 = arith.constant 0 : index
    %c0_63 = arith.constant 0 : index
    %c0_64 = arith.constant 0 : index
    %c0_65 = arith.constant 0 : index
    %61 = vector.load %arg4[%c0_62, %c0_63, %c0_64, %c0_65] : memref<1x16x16x8xf32, #tpu.memory_space<vmem>>, vector<1x16x16x8xf32>
    %62 = vector.shape_cast %61 : vector<1x16x16x8xf32> to vector<16x16x8xf32>
    %63 = arith.truncf %62 : vector<16x16x8xf32> to vector<16x16x8xbf16>
    %c0_66 = arith.constant 0 : index
    %c16_67 = arith.constant 16 : index
    %c0_68 = arith.constant 0 : index
    %64 = vector.load %arg5[%c0_66, %c16_67, %c0_68] : memref<16x34x8xbf16, #tpu.memory_space<vmem>>, vector<16x16x8xbf16>
    tpu.vector_store %arg5[%c0_66, %c16_67, %c0_68], %63 {strides = array<i32>} : memref<16x34x8xbf16, #tpu.memory_space<vmem>>, vector<16x16x8xbf16>,
    %c0_69 = arith.constant 0 : index
    %c14_70 = arith.constant 14 : index
    %c0_71 = arith.constant 0 : index
    %65 = vector.load %arg5[%c0_69, %c14_70, %c0_71] : memref<16x34x8xbf16, #tpu.memory_space<vmem>>, vector<16x16x8xbf16>
    %66 = vector.shape_cast %65 : vector<16x16x8xbf16> to vector<256x8xbf16>
    %c1_72 = arith.constant 1 : index
    %c0_73 = arith.constant 0 : index
    %c0_74 = arith.constant 0 : index
    %c0_75 = arith.constant 0 : index
    %67 = vector.load %arg2[%c1_72, %c0_73, %c0_74, %c0_75] : memref<4x5x8x8xbf16, #tpu.memory_space<vmem>>, vector<1x1x8x8xbf16>
    %68 = vector.shape_cast %67 : vector<1x1x8x8xbf16> to vector<8x8xbf16>
    %cst_76 = arith.constant dense<0.000000e+00> : vector<256x8xf32>
    %69 = tpu.matmul %66, %68, %cst_76 {dimension_numbers = #tpu.dot_dimension_numbers<[1], [0], [0], [1], [0, 0, 1, 1], [], []>} : vector<256x8xbf16>, vector<8x8xbf16>, vector<256x8xf32> -> vector<256x8xf32>
    %c0_77 = arith.constant 0 : index
    %c15_78 = arith.constant 15 : index
    %c0_79 = arith.constant 0 : index
    %70 = vector.load %arg5[%c0_77, %c15_78, %c0_79] : memref<16x34x8xbf16, #tpu.memory_space<vmem>>, vector<16x16x8xbf16>
    %71 = vector.shape_cast %70 : vector<16x16x8xbf16> to vector<256x8xbf16>
    %c1_80 = arith.constant 1 : index
    %c1_81 = arith.constant 1 : index
    %c0_82 = arith.constant 0 : index
    %c0_83 = arith.constant 0 : index
    %72 = vector.load %arg2[%c1_80, %c1_81, %c0_82, %c0_83] : memref<4x5x8x8xbf16, #tpu.memory_space<vmem>>, vector<1x1x8x8xbf16>
    %73 = vector.shape_cast %72 : vector<1x1x8x8xbf16> to vector<8x8xbf16>
    %cst_84 = arith.constant dense<0.000000e+00> : vector<256x8xf32>
    %74 = tpu.matmul %71, %73, %cst_84 {dimension_numbers = #tpu.dot_dimension_numbers<[1], [0], [0], [1], [0, 0, 1, 1], [], []>} : vector<256x8xbf16>, vector<8x8xbf16>, vector<256x8xf32> -> vector<256x8xf32>
    %75 = arith.addf %69, %74 : vector<256x8xf32>
    %c0_85 = arith.constant 0 : index
    %c16_86 = arith.constant 16 : index
    %c0_87 = arith.constant 0 : index
    %76 = vector.load %arg5[%c0_85, %c16_86, %c0_87] : memref<16x34x8xbf16, #tpu.memory_space<vmem>>, vector<16x16x8xbf16>
    %77 = vector.shape_cast %76 : vector<16x16x8xbf16> to vector<256x8xbf16>
    %c1_88 = arith.constant 1 : index
    %c2_89 = arith.constant 2 : index
    %c0_90 = arith.constant 0 : index
    %c0_91 = arith.constant 0 : index
    %78 = vector.load %arg2[%c1_88, %c2_89, %c0_90, %c0_91] : memref<4x5x8x8xbf16, #tpu.memory_space<vmem>>, vector<1x1x8x8xbf16>
    %79 = vector.shape_cast %78 : vector<1x1x8x8xbf16> to vector<8x8xbf16>
    %cst_92 = arith.constant dense<0.000000e+00> : vector<256x8xf32>
    %80 = tpu.matmul %77, %79, %cst_92 {dimension_numbers = #tpu.dot_dimension_numbers<[1], [0], [0], [1], [0, 0, 1, 1], [], []>} : vector<256x8xbf16>, vector<8x8xbf16>, vector<256x8xf32> -> vector<256x8xf32>
    %81 = arith.addf %75, %80 : vector<256x8xf32>
    %c0_93 = arith.constant 0 : index
    %c17_94 = arith.constant 17 : index
    %c0_95 = arith.constant 0 : index
    %82 = vector.load %arg5[%c0_93, %c17_94, %c0_95] : memref<16x34x8xbf16, #tpu.memory_space<vmem>>, vector<16x16x8xbf16>
    %83 = vector.shape_cast %82 : vector<16x16x8xbf16> to vector<256x8xbf16>
    %c1_96 = arith.constant 1 : index
    %c3_97 = arith.constant 3 : index
    %c0_98 = arith.constant 0 : index
    %c0_99 = arith.constant 0 : index
    %84 = vector.load %arg2[%c1_96, %c3_97, %c0_98, %c0_99] : memref<4x5x8x8xbf16, #tpu.memory_space<vmem>>, vector<1x1x8x8xbf16>
    %85 = vector.shape_cast %84 : vector<1x1x8x8xbf16> to vector<8x8xbf16>
    %cst_100 = arith.constant dense<0.000000e+00> : vector<256x8xf32>
    %86 = tpu.matmul %83, %85, %cst_100 {dimension_numbers = #tpu.dot_dimension_numbers<[1], [0], [0], [1], [0, 0, 1, 1], [], []>} : vector<256x8xbf16>, vector<8x8xbf16>, vector<256x8xf32> -> vector<256x8xf32>
    %87 = arith.addf %81, %86 : vector<256x8xf32>
    %c0_101 = arith.constant 0 : index
    %c18_102 = arith.constant 18 : index
    %c0_103 = arith.constant 0 : index
    %88 = vector.load %arg5[%c0_101, %c18_102, %c0_103] : memref<16x34x8xbf16, #tpu.memory_space<vmem>>, vector<16x16x8xbf16>
    %89 = vector.shape_cast %88 : vector<16x16x8xbf16> to vector<256x8xbf16>
    %c1_104 = arith.constant 1 : index
    %c4_105 = arith.constant 4 : index
    %c0_106 = arith.constant 0 : index
    %c0_107 = arith.constant 0 : index
    %90 = vector.load %arg2[%c1_104, %c4_105, %c0_106, %c0_107] : memref<4x5x8x8xbf16, #tpu.memory_space<vmem>>, vector<1x1x8x8xbf16>
    %91 = vector.shape_cast %90 : vector<1x1x8x8xbf16> to vector<8x8xbf16>
    %cst_108 = arith.constant dense<0.000000e+00> : vector<256x8xf32>
    %92 = tpu.matmul %89, %91, %cst_108 {dimension_numbers = #tpu.dot_dimension_numbers<[1], [0], [0], [1], [0, 0, 1, 1], [], []>} : vector<256x8xbf16>, vector<8x8xbf16>, vector<256x8xf32> -> vector<256x8xf32>
    %93 = arith.addf %87, %92 : vector<256x8xf32>
    %c1_109 = arith.constant 1 : index
    %c0_110 = arith.constant 0 : index
    %c0_111 = arith.constant 0 : index
    %94 = vector.load %arg3[%c1_109, %c0_110, %c0_111] : memref<4x1x8xf32, #tpu.memory_space<vmem>>, vector<1x1x8xf32>
    %95 = vector.shape_cast %94 : vector<1x1x8xf32> to vector<1x8xf32>
    %96 = vector.broadcast %95 : vector<1x8xf32> to vector<256x8xf32>
    %97 = arith.addf %93, %96 : vector<256x8xf32>
    %cst_112 = arith.constant 0.000000e+00 : f32
    %98 = vector.broadcast %cst_112 : f32 to vector<256x8xf32>
    %99 = arith.maximumf %97, %98 : vector<256x8xf32>
    %100 = vector.shape_cast %99 : vector<256x8xf32> to vector<16x16x8xf32>
    %101 = vector.extract_strided_slice %62 {offsets = [0, 0, 0], sizes = [8, 16, 8], strides = [1, 1, 1]} : vector<16x16x8xf32> to vector<8x16x8xf32>
    %102 = vector.extract_strided_slice %100 {offsets = [8, 0, 0], sizes = [8, 16, 8], strides = [1, 1, 1]} : vector<16x16x8xf32> to vector<8x16x8xf32>
    %103 = arith.addf %101, %102 : vector<8x16x8xf32>
    %c0_113 = arith.constant 0 : index
    %c0_114 = arith.constant 0 : index
    %c0_115 = arith.constant 0 : index
    %c0_116 = arith.constant 0 : index
    %104 = vector.load %arg4[%c0_113, %c0_114, %c0_115, %c0_116] : memref<1x16x16x8xf32, #tpu.memory_space<vmem>>, vector<1x8x16x8xf32>
    %105 = vector.shape_cast %104 : vector<1x8x16x8xf32> to vector<8x16x8xf32>
    %106 = vector.shape_cast %103 : vector<8x16x8xf32> to vector<1x8x16x8xf32>
    tpu.vector_store %arg4[%c0_113, %c0_114, %c0_115, %c0_116], %106 {strides = array<i32>} : memref<1x16x16x8xf32, #tpu.memory_space<vmem>>, vector<1x8x16x8xf32>,
    %107 = vector.extract_strided_slice %62 {offsets = [8, 0, 0], sizes = [8, 16, 8], strides = [1, 1, 1]} : vector<16x16x8xf32> to vector<8x16x8xf32>
    %108 = vector.extract_strided_slice %100 {offsets = [0, 0, 0], sizes = [8, 16, 8], strides = [1, 1, 1]} : vector<16x16x8xf32> to vector<8x16x8xf32>
    %109 = arith.addf %107, %108 : vector<8x16x8xf32>
    %c0_117 = arith.constant 0 : index
    %c8 = arith.constant 8 : index
    %c0_118 = arith.constant 0 : index
    %c0_119 = arith.constant 0 : index
    %110 = vector.load %arg4[%c0_117, %c8, %c0_118, %c0_119] : memref<1x16x16x8xf32, #tpu.memory_space<vmem>>, vector<1x8x16x8xf32>
    %111 = vector.shape_cast %110 : vector<1x8x16x8xf32> to vector<8x16x8xf32>
    %112 = vector.shape_cast %109 : vector<8x16x8xf32> to vector<1x8x16x8xf32>
    tpu.vector_store %arg4[%c0_117, %c8, %c0_118, %c0_119], %112 {strides = array<i32>} : memref<1x16x16x8xf32, #tpu.memory_space<vmem>>, vector<1x8x16x8xf32>,
    %c0_120 = arith.constant 0 : index
    %c0_121 = arith.constant 0 : index
    %c0_122 = arith.constant 0 : index
    %c0_123 = arith.constant 0 : index
    %113 = vector.load %arg4[%c0_120, %c0_121, %c0_122, %c0_123] : memref<1x16x16x8xf32, #tpu.memory_space<vmem>>, vector<1x16x16x8xf32>
    %114 = vector.shape_cast %113 : vector<1x16x16x8xf32> to vector<16x16x8xf32>
    %115 = arith.truncf %114 : vector<16x16x8xf32> to vector<16x16x8xbf16>
    %c0_124 = arith.constant 0 : index
    %c16_125 = arith.constant 16 : index
    %c0_126 = arith.constant 0 : index
    %116 = vector.load %arg5[%c0_124, %c16_125, %c0_126] : memref<16x34x8xbf16, #tpu.memory_space<vmem>>, vector<16x16x8xbf16>
    tpu.vector_store %arg5[%c0_124, %c16_125, %c0_126], %115 {strides = array<i32>} : memref<16x34x8xbf16, #tpu.memory_space<vmem>>, vector<16x16x8xbf16>,
    %c0_127 = arith.constant 0 : index
    %c14_128 = arith.constant 14 : index
    %c0_129 = arith.constant 0 : index
    %117 = vector.load %arg5[%c0_127, %c14_128, %c0_129] : memref<16x34x8xbf16, #tpu.memory_space<vmem>>, vector<16x16x8xbf16>
    %118 = vector.shape_cast %117 : vector<16x16x8xbf16> to vector<256x8xbf16>
    %c2_130 = arith.constant 2 : index
    %c0_131 = arith.constant 0 : index
    %c0_132 = arith.constant 0 : index
    %c0_133 = arith.constant 0 : index
    %119 = vector.load %arg2[%c2_130, %c0_131, %c0_132, %c0_133] : memref<4x5x8x8xbf16, #tpu.memory_space<vmem>>, vector<1x1x8x8xbf16>
    %120 = vector.shape_cast %119 : vector<1x1x8x8xbf16> to vector<8x8xbf16>
    %cst_134 = arith.constant dense<0.000000e+00> : vector<256x8xf32>
    %121 = tpu.matmul %118, %120, %cst_134 {dimension_numbers = #tpu.dot_dimension_numbers<[1], [0], [0], [1], [0, 0, 1, 1], [], []>} : vector<256x8xbf16>, vector<8x8xbf16>, vector<256x8xf32> -> vector<256x8xf32>
    %c0_135 = arith.constant 0 : index
    %c15_136 = arith.constant 15 : index
    %c0_137 = arith.constant 0 : index
    %122 = vector.load %arg5[%c0_135, %c15_136, %c0_137] : memref<16x34x8xbf16, #tpu.memory_space<vmem>>, vector<16x16x8xbf16>
    %123 = vector.shape_cast %122 : vector<16x16x8xbf16> to vector<256x8xbf16>
    %c2_138 = arith.constant 2 : index
    %c1_139 = arith.constant 1 : index
    %c0_140 = arith.constant 0 : index
    %c0_141 = arith.constant 0 : index
    %124 = vector.load %arg2[%c2_138, %c1_139, %c0_140, %c0_141] : memref<4x5x8x8xbf16, #tpu.memory_space<vmem>>, vector<1x1x8x8xbf16>
    %125 = vector.shape_cast %124 : vector<1x1x8x8xbf16> to vector<8x8xbf16>
    %cst_142 = arith.constant dense<0.000000e+00> : vector<256x8xf32>
    %126 = tpu.matmul %123, %125, %cst_142 {dimension_numbers = #tpu.dot_dimension_numbers<[1], [0], [0], [1], [0, 0, 1, 1], [], []>} : vector<256x8xbf16>, vector<8x8xbf16>, vector<256x8xf32> -> vector<256x8xf32>
    %127 = arith.addf %121, %126 : vector<256x8xf32>
    %c0_143 = arith.constant 0 : index
    %c16_144 = arith.constant 16 : index
    %c0_145 = arith.constant 0 : index
    %128 = vector.load %arg5[%c0_143, %c16_144, %c0_145] : memref<16x34x8xbf16, #tpu.memory_space<vmem>>, vector<16x16x8xbf16>
    %129 = vector.shape_cast %128 : vector<16x16x8xbf16> to vector<256x8xbf16>
    %c2_146 = arith.constant 2 : index
    %c2_147 = arith.constant 2 : index
    %c0_148 = arith.constant 0 : index
    %c0_149 = arith.constant 0 : index
    %130 = vector.load %arg2[%c2_146, %c2_147, %c0_148, %c0_149] : memref<4x5x8x8xbf16, #tpu.memory_space<vmem>>, vector<1x1x8x8xbf16>
    %131 = vector.shape_cast %130 : vector<1x1x8x8xbf16> to vector<8x8xbf16>
    %cst_150 = arith.constant dense<0.000000e+00> : vector<256x8xf32>
    %132 = tpu.matmul %129, %131, %cst_150 {dimension_numbers = #tpu.dot_dimension_numbers<[1], [0], [0], [1], [0, 0, 1, 1], [], []>} : vector<256x8xbf16>, vector<8x8xbf16>, vector<256x8xf32> -> vector<256x8xf32>
    %133 = arith.addf %127, %132 : vector<256x8xf32>
    %c0_151 = arith.constant 0 : index
    %c17_152 = arith.constant 17 : index
    %c0_153 = arith.constant 0 : index
    %134 = vector.load %arg5[%c0_151, %c17_152, %c0_153] : memref<16x34x8xbf16, #tpu.memory_space<vmem>>, vector<16x16x8xbf16>
    %135 = vector.shape_cast %134 : vector<16x16x8xbf16> to vector<256x8xbf16>
    %c2_154 = arith.constant 2 : index
    %c3_155 = arith.constant 3 : index
    %c0_156 = arith.constant 0 : index
    %c0_157 = arith.constant 0 : index
    %136 = vector.load %arg2[%c2_154, %c3_155, %c0_156, %c0_157] : memref<4x5x8x8xbf16, #tpu.memory_space<vmem>>, vector<1x1x8x8xbf16>
    %137 = vector.shape_cast %136 : vector<1x1x8x8xbf16> to vector<8x8xbf16>
    %cst_158 = arith.constant dense<0.000000e+00> : vector<256x8xf32>
    %138 = tpu.matmul %135, %137, %cst_158 {dimension_numbers = #tpu.dot_dimension_numbers<[1], [0], [0], [1], [0, 0, 1, 1], [], []>} : vector<256x8xbf16>, vector<8x8xbf16>, vector<256x8xf32> -> vector<256x8xf32>
    %139 = arith.addf %133, %138 : vector<256x8xf32>
    %c0_159 = arith.constant 0 : index
    %c18_160 = arith.constant 18 : index
    %c0_161 = arith.constant 0 : index
    %140 = vector.load %arg5[%c0_159, %c18_160, %c0_161] : memref<16x34x8xbf16, #tpu.memory_space<vmem>>, vector<16x16x8xbf16>
    %141 = vector.shape_cast %140 : vector<16x16x8xbf16> to vector<256x8xbf16>
    %c2_162 = arith.constant 2 : index
    %c4_163 = arith.constant 4 : index
    %c0_164 = arith.constant 0 : index
    %c0_165 = arith.constant 0 : index
    %142 = vector.load %arg2[%c2_162, %c4_163, %c0_164, %c0_165] : memref<4x5x8x8xbf16, #tpu.memory_space<vmem>>, vector<1x1x8x8xbf16>
    %143 = vector.shape_cast %142 : vector<1x1x8x8xbf16> to vector<8x8xbf16>
    %cst_166 = arith.constant dense<0.000000e+00> : vector<256x8xf32>
    %144 = tpu.matmul %141, %143, %cst_166 {dimension_numbers = #tpu.dot_dimension_numbers<[1], [0], [0], [1], [0, 0, 1, 1], [], []>} : vector<256x8xbf16>, vector<8x8xbf16>, vector<256x8xf32> -> vector<256x8xf32>
    %145 = arith.addf %139, %144 : vector<256x8xf32>
    %c2_167 = arith.constant 2 : index
    %c0_168 = arith.constant 0 : index
    %c0_169 = arith.constant 0 : index
    %146 = vector.load %arg3[%c2_167, %c0_168, %c0_169] : memref<4x1x8xf32, #tpu.memory_space<vmem>>, vector<1x1x8xf32>
    %147 = vector.shape_cast %146 : vector<1x1x8xf32> to vector<1x8xf32>
    %148 = vector.broadcast %147 : vector<1x8xf32> to vector<256x8xf32>
    %149 = arith.addf %145, %148 : vector<256x8xf32>
    %cst_170 = arith.constant 0.000000e+00 : f32
    %150 = vector.broadcast %cst_170 : f32 to vector<256x8xf32>
    %151 = arith.maximumf %149, %150 : vector<256x8xf32>
    %152 = vector.shape_cast %151 : vector<256x8xf32> to vector<16x16x8xf32>
    %153 = vector.extract_strided_slice %114 {offsets = [0, 0, 0], sizes = [4, 16, 8], strides = [1, 1, 1]} : vector<16x16x8xf32> to vector<4x16x8xf32>
    %154 = vector.extract_strided_slice %152 {offsets = [12, 0, 0], sizes = [4, 16, 8], strides = [1, 1, 1]} : vector<16x16x8xf32> to vector<4x16x8xf32>
    %155 = arith.addf %153, %154 : vector<4x16x8xf32>
    %c0_171 = arith.constant 0 : index
    %c0_172 = arith.constant 0 : index
    %c0_173 = arith.constant 0 : index
    %c0_174 = arith.constant 0 : index
    %156 = vector.load %arg4[%c0_171, %c0_172, %c0_173, %c0_174] : memref<1x16x16x8xf32, #tpu.memory_space<vmem>>, vector<1x4x16x8xf32>
    %157 = vector.shape_cast %156 : vector<1x4x16x8xf32> to vector<4x16x8xf32>
    %158 = vector.shape_cast %155 : vector<4x16x8xf32> to vector<1x4x16x8xf32>
    tpu.vector_store %arg4[%c0_171, %c0_172, %c0_173, %c0_174], %158 {strides = array<i32>} : memref<1x16x16x8xf32, #tpu.memory_space<vmem>>, vector<1x4x16x8xf32>,
    %159 = vector.extract_strided_slice %114 {offsets = [4, 0, 0], sizes = [12, 16, 8], strides = [1, 1, 1]} : vector<16x16x8xf32> to vector<12x16x8xf32>
    %160 = vector.extract_strided_slice %152 {offsets = [0, 0, 0], sizes = [12, 16, 8], strides = [1, 1, 1]} : vector<16x16x8xf32> to vector<12x16x8xf32>
    %161 = arith.addf %159, %160 : vector<12x16x8xf32>
    %c0_175 = arith.constant 0 : index
    %c4_176 = arith.constant 4 : index
    %c0_177 = arith.constant 0 : index
    %c0_178 = arith.constant 0 : index
    %162 = vector.load %arg4[%c0_175, %c4_176, %c0_177, %c0_178] : memref<1x16x16x8xf32, #tpu.memory_space<vmem>>, vector<1x12x16x8xf32>
    %163 = vector.shape_cast %162 : vector<1x12x16x8xf32> to vector<12x16x8xf32>
    %164 = vector.shape_cast %161 : vector<12x16x8xf32> to vector<1x12x16x8xf32>
    tpu.vector_store %arg4[%c0_175, %c4_176, %c0_177, %c0_178], %164 {strides = array<i32>} : memref<1x16x16x8xf32, #tpu.memory_space<vmem>>, vector<1x12x16x8xf32>,
    %c0_179 = arith.constant 0 : index
    %c0_180 = arith.constant 0 : index
    %c0_181 = arith.constant 0 : index
    %c0_182 = arith.constant 0 : index
    %165 = vector.load %arg4[%c0_179, %c0_180, %c0_181, %c0_182] : memref<1x16x16x8xf32, #tpu.memory_space<vmem>>, vector<1x16x16x8xf32>
    %166 = vector.shape_cast %165 : vector<1x16x16x8xf32> to vector<16x16x8xf32>
    %167 = arith.truncf %166 : vector<16x16x8xf32> to vector<16x16x8xbf16>
    %c0_183 = arith.constant 0 : index
    %c16_184 = arith.constant 16 : index
    %c0_185 = arith.constant 0 : index
    %168 = vector.load %arg5[%c0_183, %c16_184, %c0_185] : memref<16x34x8xbf16, #tpu.memory_space<vmem>>, vector<16x16x8xbf16>
    tpu.vector_store %arg5[%c0_183, %c16_184, %c0_185], %167 {strides = array<i32>} : memref<16x34x8xbf16, #tpu.memory_space<vmem>>, vector<16x16x8xbf16>,
    %c0_186 = arith.constant 0 : index
    %c14_187 = arith.constant 14 : index
    %c0_188 = arith.constant 0 : index
    %169 = vector.load %arg5[%c0_186, %c14_187, %c0_188] : memref<16x34x8xbf16, #tpu.memory_space<vmem>>, vector<16x16x8xbf16>
    %170 = vector.shape_cast %169 : vector<16x16x8xbf16> to vector<256x8xbf16>
    %c3_189 = arith.constant 3 : index
    %c0_190 = arith.constant 0 : index
    %c0_191 = arith.constant 0 : index
    %c0_192 = arith.constant 0 : index
    %171 = vector.load %arg2[%c3_189, %c0_190, %c0_191, %c0_192] : memref<4x5x8x8xbf16, #tpu.memory_space<vmem>>, vector<1x1x8x8xbf16>
    %172 = vector.shape_cast %171 : vector<1x1x8x8xbf16> to vector<8x8xbf16>
    %cst_193 = arith.constant dense<0.000000e+00> : vector<256x8xf32>
    %173 = tpu.matmul %170, %172, %cst_193 {dimension_numbers = #tpu.dot_dimension_numbers<[1], [0], [0], [1], [0, 0, 1, 1], [], []>} : vector<256x8xbf16>, vector<8x8xbf16>, vector<256x8xf32> -> vector<256x8xf32>
    %c0_194 = arith.constant 0 : index
    %c15_195 = arith.constant 15 : index
    %c0_196 = arith.constant 0 : index
    %174 = vector.load %arg5[%c0_194, %c15_195, %c0_196] : memref<16x34x8xbf16, #tpu.memory_space<vmem>>, vector<16x16x8xbf16>
    %175 = vector.shape_cast %174 : vector<16x16x8xbf16> to vector<256x8xbf16>
    %c3_197 = arith.constant 3 : index
    %c1_198 = arith.constant 1 : index
    %c0_199 = arith.constant 0 : index
    %c0_200 = arith.constant 0 : index
    %176 = vector.load %arg2[%c3_197, %c1_198, %c0_199, %c0_200] : memref<4x5x8x8xbf16, #tpu.memory_space<vmem>>, vector<1x1x8x8xbf16>
    %177 = vector.shape_cast %176 : vector<1x1x8x8xbf16> to vector<8x8xbf16>
    %cst_201 = arith.constant dense<0.000000e+00> : vector<256x8xf32>
    %178 = tpu.matmul %175, %177, %cst_201 {dimension_numbers = #tpu.dot_dimension_numbers<[1], [0], [0], [1], [0, 0, 1, 1], [], []>} : vector<256x8xbf16>, vector<8x8xbf16>, vector<256x8xf32> -> vector<256x8xf32>
    %179 = arith.addf %173, %178 : vector<256x8xf32>
    %c0_202 = arith.constant 0 : index
    %c16_203 = arith.constant 16 : index
    %c0_204 = arith.constant 0 : index
    %180 = vector.load %arg5[%c0_202, %c16_203, %c0_204] : memref<16x34x8xbf16, #tpu.memory_space<vmem>>, vector<16x16x8xbf16>
    %181 = vector.shape_cast %180 : vector<16x16x8xbf16> to vector<256x8xbf16>
    %c3_205 = arith.constant 3 : index
    %c2_206 = arith.constant 2 : index
    %c0_207 = arith.constant 0 : index
    %c0_208 = arith.constant 0 : index
    %182 = vector.load %arg2[%c3_205, %c2_206, %c0_207, %c0_208] : memref<4x5x8x8xbf16, #tpu.memory_space<vmem>>, vector<1x1x8x8xbf16>
    %183 = vector.shape_cast %182 : vector<1x1x8x8xbf16> to vector<8x8xbf16>
    %cst_209 = arith.constant dense<0.000000e+00> : vector<256x8xf32>
    %184 = tpu.matmul %181, %183, %cst_209 {dimension_numbers = #tpu.dot_dimension_numbers<[1], [0], [0], [1], [0, 0, 1, 1], [], []>} : vector<256x8xbf16>, vector<8x8xbf16>, vector<256x8xf32> -> vector<256x8xf32>
    %185 = arith.addf %179, %184 : vector<256x8xf32>
    %c0_210 = arith.constant 0 : index
    %c17_211 = arith.constant 17 : index
    %c0_212 = arith.constant 0 : index
    %186 = vector.load %arg5[%c0_210, %c17_211, %c0_212] : memref<16x34x8xbf16, #tpu.memory_space<vmem>>, vector<16x16x8xbf16>
    %187 = vector.shape_cast %186 : vector<16x16x8xbf16> to vector<256x8xbf16>
    %c3_213 = arith.constant 3 : index
    %c3_214 = arith.constant 3 : index
    %c0_215 = arith.constant 0 : index
    %c0_216 = arith.constant 0 : index
    %188 = vector.load %arg2[%c3_213, %c3_214, %c0_215, %c0_216] : memref<4x5x8x8xbf16, #tpu.memory_space<vmem>>, vector<1x1x8x8xbf16>
    %189 = vector.shape_cast %188 : vector<1x1x8x8xbf16> to vector<8x8xbf16>
    %cst_217 = arith.constant dense<0.000000e+00> : vector<256x8xf32>
    %190 = tpu.matmul %187, %189, %cst_217 {dimension_numbers = #tpu.dot_dimension_numbers<[1], [0], [0], [1], [0, 0, 1, 1], [], []>} : vector<256x8xbf16>, vector<8x8xbf16>, vector<256x8xf32> -> vector<256x8xf32>
    %191 = arith.addf %185, %190 : vector<256x8xf32>
    %c0_218 = arith.constant 0 : index
    %c18_219 = arith.constant 18 : index
    %c0_220 = arith.constant 0 : index
    %192 = vector.load %arg5[%c0_218, %c18_219, %c0_220] : memref<16x34x8xbf16, #tpu.memory_space<vmem>>, vector<16x16x8xbf16>
    %193 = vector.shape_cast %192 : vector<16x16x8xbf16> to vector<256x8xbf16>
    %c3_221 = arith.constant 3 : index
    %c4_222 = arith.constant 4 : index
    %c0_223 = arith.constant 0 : index
    %c0_224 = arith.constant 0 : index
    %194 = vector.load %arg2[%c3_221, %c4_222, %c0_223, %c0_224] : memref<4x5x8x8xbf16, #tpu.memory_space<vmem>>, vector<1x1x8x8xbf16>
    %195 = vector.shape_cast %194 : vector<1x1x8x8xbf16> to vector<8x8xbf16>
    %cst_225 = arith.constant dense<0.000000e+00> : vector<256x8xf32>
    %196 = tpu.matmul %193, %195, %cst_225 {dimension_numbers = #tpu.dot_dimension_numbers<[1], [0], [0], [1], [0, 0, 1, 1], [], []>} : vector<256x8xbf16>, vector<8x8xbf16>, vector<256x8xf32> -> vector<256x8xf32>
    %197 = arith.addf %191, %196 : vector<256x8xf32>
    %c3_226 = arith.constant 3 : index
    %c0_227 = arith.constant 0 : index
    %c0_228 = arith.constant 0 : index
    %198 = vector.load %arg3[%c3_226, %c0_227, %c0_228] : memref<4x1x8xf32, #tpu.memory_space<vmem>>, vector<1x1x8xf32>
    %199 = vector.shape_cast %198 : vector<1x1x8xf32> to vector<1x8xf32>
    %200 = vector.broadcast %199 : vector<1x8xf32> to vector<256x8xf32>
    %201 = arith.addf %197, %200 : vector<256x8xf32>
    %cst_229 = arith.constant 0.000000e+00 : f32
    %202 = vector.broadcast %cst_229 : f32 to vector<256x8xf32>
    %203 = arith.maximumf %201, %202 : vector<256x8xf32>
    %204 = vector.shape_cast %203 : vector<256x8xf32> to vector<16x16x8xf32>
    %205 = vector.extract_strided_slice %166 {offsets = [0, 0, 0], sizes = [8, 16, 8], strides = [1, 1, 1]} : vector<16x16x8xf32> to vector<8x16x8xf32>
    %206 = vector.extract_strided_slice %204 {offsets = [8, 0, 0], sizes = [8, 16, 8], strides = [1, 1, 1]} : vector<16x16x8xf32> to vector<8x16x8xf32>
    %207 = arith.addf %205, %206 : vector<8x16x8xf32>
    %c0_230 = arith.constant 0 : index
    %c0_231 = arith.constant 0 : index
    %c0_232 = arith.constant 0 : index
    %c0_233 = arith.constant 0 : index
    %208 = vector.load %arg4[%c0_230, %c0_231, %c0_232, %c0_233] : memref<1x16x16x8xf32, #tpu.memory_space<vmem>>, vector<1x8x16x8xf32>
    %209 = vector.shape_cast %208 : vector<1x8x16x8xf32> to vector<8x16x8xf32>
    %210 = vector.shape_cast %207 : vector<8x16x8xf32> to vector<1x8x16x8xf32>
    tpu.vector_store %arg4[%c0_230, %c0_231, %c0_232, %c0_233], %210 {strides = array<i32>} : memref<1x16x16x8xf32, #tpu.memory_space<vmem>>, vector<1x8x16x8xf32>,
    %211 = vector.extract_strided_slice %166 {offsets = [8, 0, 0], sizes = [8, 16, 8], strides = [1, 1, 1]} : vector<16x16x8xf32> to vector<8x16x8xf32>
    %212 = vector.extract_strided_slice %204 {offsets = [0, 0, 0], sizes = [8, 16, 8], strides = [1, 1, 1]} : vector<16x16x8xf32> to vector<8x16x8xf32>
    %213 = arith.addf %211, %212 : vector<8x16x8xf32>
    %c0_234 = arith.constant 0 : index
    %c8_235 = arith.constant 8 : index
    %c0_236 = arith.constant 0 : index
    %c0_237 = arith.constant 0 : index
    %214 = vector.load %arg4[%c0_234, %c8_235, %c0_236, %c0_237] : memref<1x16x16x8xf32, #tpu.memory_space<vmem>>, vector<1x8x16x8xf32>
    %215 = vector.shape_cast %214 : vector<1x8x16x8xf32> to vector<8x16x8xf32>
    %216 = vector.shape_cast %213 : vector<8x16x8xf32> to vector<1x8x16x8xf32>
    tpu.vector_store %arg4[%c0_234, %c8_235, %c0_236, %c0_237], %216 {strides = array<i32>} : memref<1x16x16x8xf32, #tpu.memory_space<vmem>>, vector<1x8x16x8xf32>,
    return
  }
  func.func @transform_0(%arg0: i32) -> (i32, i32, i32, i32) {
    %c0_i32 = arith.constant 0 : i32
    %c0_i32_0 = arith.constant 0 : i32
    %c0_i32_1 = arith.constant 0 : i32
    %c0_i32_2 = arith.constant 0 : i32
    return %arg0, %c0_i32, %c0_i32_0, %c0_i32_1 : i32, i32, i32, i32
  }
  func.func @transform_1(%arg0: i32) -> (i32, i32, i32, i32) {
    %c0_i32 = arith.constant 0 : i32
    %c0_i32_0 = arith.constant 0 : i32
    %c0_i32_1 = arith.constant 0 : i32
    %c0_i32_2 = arith.constant 0 : i32
    %c0_i32_3 = arith.constant 0 : i32
    return %c0_i32, %c0_i32_0, %c0_i32_1, %c0_i32_2 : i32, i32, i32, i32
  }
  func.func @transform_2(%arg0: i32) -> (i32, i32, i32) {
    %c0_i32 = arith.constant 0 : i32
    %c0_i32_0 = arith.constant 0 : i32
    %c0_i32_1 = arith.constant 0 : i32
    %c0_i32_2 = arith.constant 0 : i32
    return %c0_i32, %c0_i32_0, %c0_i32_1 : i32, i32, i32
  }
  func.func @transform_3(%arg0: i32) -> (i32, i32, i32, i32) {
    %c0_i32 = arith.constant 0 : i32
    %c0_i32_0 = arith.constant 0 : i32
    %c0_i32_1 = arith.constant 0 : i32
    %c0_i32_2 = arith.constant 0 : i32
    return %arg0, %c0_i32, %c0_i32_0, %c0_i32_1 : i32, i32, i32, i32
  }
}

</mosaic_0001>

<llo_original>
// kernel: resa_forward.1
$region0: #{resa_forward.1}
  #allocation0 [shape = 'u32[]', space=smem, size = 0x4, offset = 0x4, fixed_abs, tag = 'smem constant byte address 0x4 - core index']
  #allocation1 [shape = 'u32[144,128]{1,0:T(1,128)}', space=vmem, size = 0x12000, scoped, tag = 'internal scratch']
  #allocation2 [shape = 'bf16[16,34,8]{2,1,0:T(8,128)(2,1)}', space=vmem, size = 0x28000, scoped, tag = 'scratch operand']
  %s0 = inlined_call_operand.vmem [shape: f32[2,16,16,8], index: 0, kind: input, shape index: {}, may-alias: {0,3}]
  %s1 = inlined_call_operand.vmem [shape: bf16[4,5,8,8], index: 1, kind: input, shape index: {}]
  %s2 = inlined_call_operand.vmem [shape: f32[4,1,8], index: 2, kind: input, shape index: {}]
  %s3 = inlined_call_operand.vmem [shape: f32[2,16,16,8], index: 3, kind: output, shape index: {}, may-alias: {0,3}]
  %s4 = sld [smem:[#allocation0]]
  $region45: #{resa_forward.1} parent=0
    _
  %s6 = ssub.s32 1, %s4
  %s7 = scalar_select 0, %s6, %s4
  loop: start=0, step=1, limit=4
  $region2: #{resa_forward.1} parent=0 // loop_pre_header
    _
  $region3: #{resa_forward.1} parent=0 // loop_header
    %s9 = sphi 0, %s13
    %p10 = scmp.ge.s32.totalorder %s9, 4
    %s19 = sphi 0, %s21
    %s22 = sphi 0, %s19
    %s23 = sphi 0, %s22
    %s39 = sphi 0, %s23
    %s43 = sphi 0, %s43
    %s45 = sphi 0, %s43
    %s46 = sphi 0, %s45
    %s60 = sphi 0, %s46
    %s64 = sphi 0, %s64
    %s66 = sphi 0, %s64
    %s67 = sphi 0, %s66
    %s81 = sphi 0, %s67
    %s87 = sphi 0, %s89
    %s90 = sphi 0, %s87
    %s91 = sphi 0, %s90
    %s107 = sphi 0, %s91
  $region4: #{resa_forward.1} parent=0 // loop_header_branch
    %12 = sbr.rel (%p10) target = $region8
  $region5: #{resa_forward.1} parent=0 // loop_body
    %s14 = ssub.s32 %s9, 1
    %s15 = ssub.s32 %s9, 2
    %s16 = sadd.s32 %s9, 1
    %s17 = ssub.s32 %s9, %s16
    %p18 = scmp.eq.s32.totalorder %s17, 0
    %s20 = sadd.s32 %s19, 1
    %s21 = scalar_select %p18, %s19, %s20
    %p24 = pneg %p18
    %p25 = scmp.eq.s32.totalorder %s9, 1
    %p26 = por %p24, %p25
    %p27 = scmp.ne.s32.totalorder %s19, %s22
    %p28 = scmp.eq.s32.totalorder %s9, 0
    %p29 = por %p27, %p28
    %p30 = scmp.ne.s32.totalorder %s19, %s22
    %p31 = scmp.eq.s32.totalorder %s14, 1
    %p32 = por %p30, %p31
    %p33 = scmp.ne.s32.totalorder %s22, %s23
    %p34 = scmp.eq.s32.totalorder %s14, 0
    %p35 = por %p33, %p34
    %p36 = scmp.ne.s32.totalorder %s22, %s23
    %p37 = scmp.eq.s32.totalorder %s15, 1
    %p38 = por %p36, %p37
    %p40 = scmp.ne.s32.totalorder %s23, %s39
    %p41 = scmp.eq.s32.totalorder %s15, 0
    %p42 = por %p40, %p41
    %s44 = sadd.s32 %s43, 1
    %p47 = scmp.eq.s32.totalorder %s9, 1
    %p48 = scmp.ne.s32.totalorder %s43, %s45
    %p49 = scmp.eq.s32.totalorder %s9, 0
    %p50 = por %p48, %p49
    %p51 = scmp.ne.s32.totalorder %s43, %s45
    %p52 = scmp.eq.s32.totalorder %s14, 1
    %p53 = por %p51, %p52
    %p54 = scmp.ne.s32.totalorder %s45, %s46
    %p55 = scmp.eq.s32.totalorder %s14, 0
    %p56 = por %p54, %p55
    %p57 = scmp.ne.s32.totalorder %s45, %s46
    %p58 = scmp.eq.s32.totalorder %s15, 1
    %p59 = por %p57, %p58
    %p61 = scmp.ne.s32.totalorder %s46, %s60
    %p62 = scmp.eq.s32.totalorder %s15, 0
    %p63 = por %p61, %p62
    %s65 = sadd.s32 %s64, 1
    %p68 = scmp.eq.s32.totalorder %s9, 1
    %p69 = scmp.ne.s32.totalorder %s64, %s66
    %p70 = scmp.eq.s32.totalorder %s9, 0
    %p71 = por %p69, %p70
    %p72 = scmp.ne.s32.totalorder %s64, %s66
    %p73 = scmp.eq.s32.totalorder %s14, 1
    %p74 = por %p72, %p73
    %p75 = scmp.ne.s32.totalorder %s66, %s67
    %p76 = scmp.eq.s32.totalorder %s14, 0
    %p77 = por %p75, %p76
    %p78 = scmp.ne.s32.totalorder %s66, %s67
    %p79 = scmp.eq.s32.totalorder %s15, 1
    %p80 = por %p78, %p79
    %p82 = scmp.ne.s32.totalorder %s67, %s81
    %p83 = scmp.eq.s32.totalorder %s15, 0
    %p84 = por %p82, %p83
    %s85 = ssub.s32 %s9, %s16
    %p86 = scmp.eq.s32.totalorder %s85, 0
    %s88 = sadd.s32 %s87, 1
    %s89 = scalar_select %p86, %s87, %s88
    %p92 = pneg %p86
    %p93 = scmp.eq.s32.totalorder %s9, 1
    %p94 = por %p92, %p93
    %p95 = scmp.ne.s32.totalorder %s87, %s90
    %p96 = scmp.eq.s32.totalorder %s9, 0
    %p97 = por %p95, %p96
    %p98 = scmp.ne.s32.totalorder %s87, %s90
    %p99 = scmp.eq.s32.totalorder %s14, 1
    %p100 = por %p98, %p99
    %p101 = scmp.ne.s32.totalorder %s90, %s91
    %p102 = scmp.eq.s32.totalorder %s14, 0
    %p103 = por %p101, %p102
    %p104 = scmp.ne.s32.totalorder %s90, %s91
    %p105 = scmp.eq.s32.totalorder %s15, 1
    %p106 = por %p104, %p105
    %p108 = scmp.ne.s32.totalorder %s91, %s107
    %p109 = scmp.eq.s32.totalorder %s15, 0
    %p110 = por %p108, %p109
    %p111 = scmp.le.s32.totalorder 1, %s9
    %p112 = scmp.lt.s32.totalorder %s9, 3
    %p113 = pnand %p111, %p112
    %p114 = pneg %p113
    // Predicated region
    $region9: #{resa_forward.1} parent=5 // pred_check
      _
    $region10: #{resa_forward.1} parent=5 // pred_check_branch
      %116 = sbr.rel (%p113) target = $region12
    $region11: #{resa_forward.1} parent=5 // pred_region
      %s117 = ssub.s32 %s9, 1
      // Predicated region
      $region13: #{resa_forward.1} parent=11 // pred_check
        %p118 = pneg %p56
      $region14: #{resa_forward.1} parent=11 // pred_check_branch
        %120 = sbr.rel (%p118) target = $region16
      $region15: #{resa_forward.1} parent=11 // pred_region
        _
      $region16: #{resa_forward.1} parent=11 // pred_fallthru
        _
      // Predicated region
      $region17: #{resa_forward.1} parent=11 // pred_check
        %p121 = pneg %p77
      $region18: #{resa_forward.1} parent=11 // pred_check_branch
        %123 = sbr.rel (%p121) target = $region20
      $region19: #{resa_forward.1} parent=11 // pred_region
        _
      $region20: #{resa_forward.1} parent=11 // pred_fallthru
        _
    $region12: #{resa_forward.1} parent=5 // pred_fallthru
      _
    %p124 = scmp.lt.s32.totalorder %s9, 2
    // Predicated region
    $region21: #{resa_forward.1} parent=5 // pred_check
      %p125 = pneg %p124
    $region22: #{resa_forward.1} parent=5 // pred_check_branch
      %127 = sbr.rel (%p125) target = $region24
    $region23: #{resa_forward.1} parent=5 // pred_region
      // Predicated region
      $region25: #{resa_forward.1} parent=23 // pred_check
        %p128 = pneg %p29
      $region26: #{resa_forward.1} parent=23 // pred_check_branch
        %130 = sbr.rel (%p128) target = $region28
      $region27: #{resa_forward.1} parent=23 // pred_region
        %p131 = scmp.lt.s32.totalorder %s9, 1
        %s132 = scalar_select %p131, %s9, 1
        %s133 = smul.addr %s132, 32
        %s134 = smul.addr %s133, 8
        %s135 = scalar_lea.vmem %s0, %s134
      $region28: #{resa_forward.1} parent=23 // pred_fallthru
        _
    $region24: #{resa_forward.1} parent=5 // pred_fallthru
      _
    %p136 = scmp.le.s32.totalorder 1, %s9
    %p137 = scmp.lt.s32.totalorder %s9, 3
    %p138 = pnand %p136, %p137
    %p139 = pneg %p138
    // Predicated region
    $region29: #{resa_forward.1} parent=5 // pred_check
      _
    $region30: #{resa_forward.1} parent=5 // pred_check_branch
      %141 = sbr.rel (%p138) target = $region32
    $region31: #{resa_forward.1} parent=5 // pred_region
      %s142 = ssub.s32 %s9, 1
      %p143 = scmp.lt.s32.totalorder %s14, 1
      %s144 = scalar_select %p143, %s14, 1
      %s145 = smul.addr %s144, 32
      %s146 = smul.addr %s145, 8
      %s147 = scalar_lea.vmem %s0, %s146
      %p148 = pneg %p35
      %p149 = pneg %p32
      %p150 = pneg %p56
      %p151 = pneg %p53
      %p152 = pneg %p77
      %p153 = pneg %p74
      %p154 = pneg %p103
      %p155 = pneg %p100
      %p156 = scmp.lt.s32.totalorder %s14, 1
      %s157 = scalar_select %p156, %s14, 1
      %s158 = smul.addr %s157, 32
      %s159 = smul.addr %s158, 8
      %s160 = scalar_lea.vmem %s3, %s159
      %p161 = scmp.lt.s32.totalorder %s14, 1
      %s162 = scalar_select %p161, %s14, 1
      %s163 = smul.addr %s162, 32
      %s164 = smul.addr %s163, 8
      %s165 = scalar_lea.vmem %s0, %s164
      %p166 = scmp.lt.s32.totalorder %s14, 1
      %s167 = scalar_select %p166, %s14, 1
      %s168 = smul.addr %s167, 32
      %s169 = smul.addr %s168, 8
      %s170 = scalar_lea.vmem %s3, %s169
      %vm172 = vcmask 60416
      %173 = vst.msk [vmem:[#allocation2] sm:$0xf] %vm172, 0
      %174 = vst.msk [vmem:[#allocation2 + $0x4] sm:$0xf] %vm172, 0
      %175 = vst.msk [vmem:[#allocation2 + $0x14] sm:$0xf] %vm172, 0
      %176 = vst.msk [vmem:[#allocation2 + $0x18] sm:$0xf] %vm172, 0
      %177 = vst.msk [vmem:[#allocation2 + $0x28] sm:$0xf] %vm172, 0
      %178 = vst.msk [vmem:[#allocation2 + $0x2c] sm:$0xf] %vm172, 0
      %179 = vst.msk [vmem:[#allocation2 + $0x3c] sm:$0xf] %vm172, 0
      %180 = vst.msk [vmem:[#allocation2 + $0x40] sm:$0xf] %vm172, 0
      %181 = vst.msk [vmem:[#allocation2 + $0x50] sm:$0xf] %vm172, 0
      %182 = vst.msk [vmem:[#allocation2 + $0x54] sm:$0xf] %vm172, 0
      %183 = vst.msk [vmem:[#allocation2 + $0x64] sm:$0xf] %vm172, 0
      %184 = vst.msk [vmem:[#allocation2 + $0x68] sm:$0xf] %vm172, 0
      %185 = vst.msk [vmem:[#allocation2 + $0x78] sm:$0xf] %vm172, 0
      %186 = vst.msk [vmem:[#allocation2 + $0x7c] sm:$0xf] %vm172, 0
      %187 = vst.msk [vmem:[#allocation2 + $0x8c] sm:$0xf] %vm172, 0
      %188 = vst.msk [vmem:[#allocation2 + $0x90] sm:$0xf] %vm172, 0
      %189 = vst.msk [vmem:[#allocation2 + $0xa0] sm:$0xf] %vm172, 0
      %190 = vst.msk [vmem:[#allocation2 + $0xa4] sm:$0xf] %vm172, 0
      %191 = vst.msk [vmem:[#allocation2 + $0xb4] sm:$0xf] %vm172, 0
      %192 = vst.msk [vmem:[#allocation2 + $0xb8] sm:$0xf] %vm172, 0
      %193 = vst.msk [vmem:[#allocation2 + $0xc8] sm:$0xf] %vm172, 0
      %194 = vst.msk [vmem:[#allocation2 + $0xcc] sm:$0xf] %vm172, 0
      %195 = vst.msk [vmem:[#allocation2 + $0xdc] sm:$0xf] %vm172, 0
      %196 = vst.msk [vmem:[#allocation2 + $0xe0] sm:$0xf] %vm172, 0
      %197 = vst.msk [vmem:[#allocation2 + $0xf0] sm:$0xf] %vm172, 0
      %198 = vst.msk [vmem:[#allocation2 + $0xf4] sm:$0xf] %vm172, 0
      %199 = vst.msk [vmem:[#allocation2 + $0x104] sm:$0xf] %vm172, 0
      %200 = vst.msk [vmem:[#allocation2 + $0x108] sm:$0xf] %vm172, 0
      %201 = vst.msk [vmem:[#allocation2 + $0x118] sm:$0xf] %vm172, 0
      %202 = vst.msk [vmem:[#allocation2 + $0x11c] sm:$0xf] %vm172, 0
      %203 = vst.msk [vmem:[#allocation2 + $0x12c] sm:$0xf] %vm172, 0
      %204 = vst.msk [vmem:[#allocation2 + $0x130] sm:$0xf] %vm172, 0
      %vm205 = vcmask 57344
      %206 = vst.msk [vmem:[#allocation2 + $0x10] sm:$0x1] %vm205, 0
      %207 = vst.msk [vmem:[#allocation2 + $0x24] sm:$0x1] %vm205, 0
      %208 = vst.msk [vmem:[#allocation2 + $0x38] sm:$0x1] %vm205, 0
      %209 = vst.msk [vmem:[#allocation2 + $0x4c] sm:$0x1] %vm205, 0
      %210 = vst.msk [vmem:[#allocation2 + $0x60] sm:$0x1] %vm205, 0
      %211 = vst.msk [vmem:[#allocation2 + $0x74] sm:$0x1] %vm205, 0
      %212 = vst.msk [vmem:[#allocation2 + $0x88] sm:$0x1] %vm205, 0
      %213 = vst.msk [vmem:[#allocation2 + $0x9c] sm:$0x1] %vm205, 0
      %214 = vst.msk [vmem:[#allocation2 + $0xb0] sm:$0x1] %vm205, 0
      %215 = vst.msk [vmem:[#allocation2 + $0xc4] sm:$0x1] %vm205, 0
      %216 = vst.msk [vmem:[#allocation2 + $0xd8] sm:$0x1] %vm205, 0
      %217 = vst.msk [vmem:[#allocation2 + $0xec] sm:$0x1] %vm205, 0
      %218 = vst.msk [vmem:[#allocation2 + $0x100] sm:$0x1] %vm205, 0
      %219 = vst.msk [vmem:[#allocation2 + $0x114] sm:$0x1] %vm205, 0
      %220 = vst.msk [vmem:[#allocation2 + $0x128] sm:$0x1] %vm205, 0
      %221 = vst.msk [vmem:[#allocation2 + $0x13c] sm:$0x1] %vm205, 0
      %v222 = vld [vmem:[%s165] sm:$0xff]
      %v223 = vld [vmem:[%s165 + $0x8] sm:$0xff]
      %v224 = vld [vmem:[%s165 + $0x10] sm:$0xff]
      %v225 = vld [vmem:[%s165 + $0x18] sm:$0xff]
      %v226 = vld [vmem:[%s165 + $0x20] sm:$0xff]
      %v227 = vld [vmem:[%s165 + $0x28] sm:$0xff]
      %v228 = vld [vmem:[%s165 + $0x30] sm:$0xff]
      %v229 = vld [vmem:[%s165 + $0x38] sm:$0xff]
      %v230 = vld [vmem:[%s165 + $0x40] sm:$0xff]
      %v231 = vld [vmem:[%s165 + $0x48] sm:$0xff]
      %v232 = vld [vmem:[%s165 + $0x50] sm:$0xff]
      %v233 = vld [vmem:[%s165 + $0x58] sm:$0xff]
      %v234 = vld [vmem:[%s165 + $0x60] sm:$0xff]
      %v235 = vld [vmem:[%s165 + $0x68] sm:$0xff]
      %v236 = vld [vmem:[%s165 + $0x70] sm:$0xff]
      %v237 = vld [vmem:[%s165 + $0x78] sm:$0xff]
      %v238 = vld [vmem:[%s165 + $0x80] sm:$0xff]
      %v239 = vld [vmem:[%s165 + $0x88] sm:$0xff]
      %v240 = vld [vmem:[%s165 + $0x90] sm:$0xff]
      %v241 = vld [vmem:[%s165 + $0x98] sm:$0xff]
      %v242 = vld [vmem:[%s165 + $0xa0] sm:$0xff]
      %v243 = vld [vmem:[%s165 + $0xa8] sm:$0xff]
      %v244 = vld [vmem:[%s165 + $0xb0] sm:$0xff]
      %v245 = vld [vmem:[%s165 + $0xb8] sm:$0xff]
      %v246 = vld [vmem:[%s165 + $0xc0] sm:$0xff]
      %v247 = vld [vmem:[%s165 + $0xc8] sm:$0xff]
      %v248 = vld [vmem:[%s165 + $0xd0] sm:$0xff]
      %v249 = vld [vmem:[%s165 + $0xd8] sm:$0xff]
      %v250 = vld [vmem:[%s165 + $0xe0] sm:$0xff]
      %v251 = vld [vmem:[%s165 + $0xe8] sm:$0xff]
      %v252 = vld [vmem:[%s165 + $0xf0] sm:$0xff]
      %v253 = vld [vmem:[%s165 + $0xf8] sm:$0xff]
      %vm254 = vcmask 64512
      %255 = vst.msk [vmem:[%s170] sm:$0xff] %vm254, %v222
      %256 = vst.msk [vmem:[%s170 + $0x8] sm:$0xff] %vm254, %v223
      %257 = vst.msk [vmem:[%s170 + $0x10] sm:$0xff] %vm254, %v224
      %258 = vst.msk [vmem:[%s170 + $0x18] sm:$0xff] %vm254, %v225
      %259 = vst.msk [vmem:[%s170 + $0x20] sm:$0xff] %vm254, %v226
      %260 = vst.msk [vmem:[%s170 + $0x28] sm:$0xff] %vm254, %v227
      %261 = vst.msk [vmem:[%s170 + $0x30] sm:$0xff] %vm254, %v228
      %262 = vst.msk [vmem:[%s170 + $0x38] sm:$0xff] %vm254, %v229
      %263 = vst.msk [vmem:[%s170 + $0x40] sm:$0xff] %vm254, %v230
      %264 = vst.msk [vmem:[%s170 + $0x48] sm:$0xff] %vm254, %v231
      %265 = vst.msk [vmem:[%s170 + $0x50] sm:$0xff] %vm254, %v232
      %266 = vst.msk [vmem:[%s170 + $0x58] sm:$0xff] %vm254, %v233
      %267 = vst.msk [vmem:[%s170 + $0x60] sm:$0xff] %vm254, %v234
      %268 = vst.msk [vmem:[%s170 + $0x68] sm:$0xff] %vm254, %v235
      %269 = vst.msk [vmem:[%s170 + $0x70] sm:$0xff] %vm254, %v236
      %270 = vst.msk [vmem:[%s170 + $0x78] sm:$0xff] %vm254, %v237
      %271 = vst.msk [vmem:[%s170 + $0x80] sm:$0xff] %vm254, %v238
      %272 = vst.msk [vmem:[%s170 + $0x88] sm:$0xff] %vm254, %v239
      %273 = vst.msk [vmem:[%s170 + $0x90] sm:$0xff] %vm254, %v240
      %274 = vst.msk [vmem:[%s170 + $0x98] sm:$0xff] %vm254, %v241
      %275 = vst.msk [vmem:[%s170 + $0xa0] sm:$0xff] %vm254, %v242
      %276 = vst.msk [vmem:[%s170 + $0xa8] sm:$0xff] %vm254, %v243
      %277 = vst.msk [vmem:[%s170 + $0xb0] sm:$0xff] %vm254, %v244
      %278 = vst.msk [vmem:[%s170 + $0xb8] sm:$0xff] %vm254, %v245
      %279 = vst.msk [vmem:[%s170 + $0xc0] sm:$0xff] %vm254, %v246
      %280 = vst.msk [vmem:[%s170 + $0xc8] sm:$0xff] %vm254, %v247
      %281 = vst.msk [vmem:[%s170 + $0xd0] sm:$0xff] %vm254, %v248
      %282 = vst.msk [vmem:[%s170 + $0xd8] sm:$0xff] %vm254, %v249
      %283 = vst.msk [vmem:[%s170 + $0xe0] sm:$0xff] %vm254, %v250
      %284 = vst.msk [vmem:[%s170 + $0xe8] sm:$0xff] %vm254, %v251
      %285 = vst.msk [vmem:[%s170 + $0xf0] sm:$0xff] %vm254, %v252
      %286 = vst.msk [vmem:[%s170 + $0xf8] sm:$0xff] %vm254, %v253
      %v287 = vld [vmem:[%s170] sm:$0xff]
      %v288 = vld [vmem:[%s170 + $0x8] sm:$0xff]
      %v289 = vld [vmem:[%s170 + $0x10] sm:$0xff]
      %v290 = vld [vmem:[%s170 + $0x18] sm:$0xff]
      %v291 = vld [vmem:[%s170 + $0x20] sm:$0xff]
      %v292 = vld [vmem:[%s170 + $0x28] sm:$0xff]
      %v293 = vld [vmem:[%s170 + $0x30] sm:$0xff]
      %v294 = vld [vmem:[%s170 + $0x38] sm:$0xff]
      %v295 = vld [vmem:[%s170 + $0x40] sm:$0xff]
      %v296 = vld [vmem:[%s170 + $0x48] sm:$0xff]
      %v297 = vld [vmem:[%s170 + $0x50] sm:$0xff]
      %v298 = vld [vmem:[%s170 + $0x58] sm:$0xff]
      %v299 = vld [vmem:[%s170 + $0x60] sm:$0xff]
      %v300 = vld [vmem:[%s170 + $0x68] sm:$0xff]
      %v301 = vld [vmem:[%s170 + $0x70] sm:$0xff]
      %v302 = vld [vmem:[%s170 + $0x78] sm:$0xff]
      %v303 = vld [vmem:[%s170 + $0x80] sm:$0xff]
      %v304 = vld [vmem:[%s170 + $0x88] sm:$0xff]
      %v305 = vld [vmem:[%s170 + $0x90] sm:$0xff]
      %v306 = vld [vmem:[%s170 + $0x98] sm:$0xff]
      %v307 = vld [vmem:[%s170 + $0xa0] sm:$0xff]
      %v308 = vld [vmem:[%s170 + $0xa8] sm:$0xff]
      %v309 = vld [vmem:[%s170 + $0xb0] sm:$0xff]
      %v310 = vld [vmem:[%s170 + $0xb8] sm:$0xff]
      %v311 = vld [vmem:[%s170 + $0xc0] sm:$0xff]
      %v312 = vld [vmem:[%s170 + $0xc8] sm:$0xff]
      %v313 = vld [vmem:[%s170 + $0xd0] sm:$0xff]
      %v314 = vld [vmem:[%s170 + $0xd8] sm:$0xff]
      %v315 = vld [vmem:[%s170 + $0xe0] sm:$0xff]
      %v316 = vld [vmem:[%s170 + $0xe8] sm:$0xff]
      %v317 = vld [vmem:[%s170 + $0xf0] sm:$0xff]
      %v318 = vld [vmem:[%s170 + $0xf8] sm:$0xff]
      %v319 = vpack.c.bf16 %v288, %v287
      %v320 = vpack.c.bf16 %v290, %v289
      %v321 = vpack.c.bf16 %v292, %v291
      %v322 = vpack.c.bf16 %v294, %v293
      %v323 = vpack.c.bf16 %v296, %v295
      %v324 = vpack.c.bf16 %v298, %v297
      %v325 = vpack.c.bf16 %v300, %v299
      %v326 = vpack.c.bf16 %v302, %v301
      %v327 = vpack.c.bf16 %v304, %v303
      %v328 = vpack.c.bf16 %v306, %v305
      %v329 = vpack.c.bf16 %v308, %v307
      %v330 = vpack.c.bf16 %v310, %v309
      %v331 = vpack.c.bf16 %v312, %v311
      %v332 = vpack.c.bf16 %v314, %v313
      %v333 = vpack.c.bf16 %v316, %v315
      %v334 = vpack.c.bf16 %v318, %v317
      %v351 = vunpack.c.l.b16 %v319
      %v352 = vunpack.c.h.b16 %v319
      %v353 = vunpack.c.l.b16 %v320
      %v354 = vunpack.c.h.b16 %v320
      %v355 = vunpack.c.l.b16 %v321
      %v356 = vunpack.c.h.b16 %v321
      %v357 = vunpack.c.l.b16 %v322
      %v358 = vunpack.c.h.b16 %v322
      %v359 = vunpack.c.l.b16 %v323
      %v360 = vunpack.c.h.b16 %v323
      %v361 = vunpack.c.l.b16 %v324
      %v362 = vunpack.c.h.b16 %v324
      %v363 = vunpack.c.l.b16 %v325
      %v364 = vunpack.c.h.b16 %v325
      %v365 = vunpack.c.l.b16 %v326
      %v366 = vunpack.c.h.b16 %v326
      %v367 = vunpack.c.l.b16 %v327
      %v368 = vunpack.c.h.b16 %v327
      %v369 = vunpack.c.l.b16 %v328
      %v370 = vunpack.c.h.b16 %v328
      %v371 = vunpack.c.l.b16 %v329
      %v372 = vunpack.c.h.b16 %v329
      %v373 = vunpack.c.l.b16 %v330
      %v374 = vunpack.c.h.b16 %v330
      %v375 = vunpack.c.l.b16 %v331
      %v376 = vunpack.c.h.b16 %v331
      %v377 = vunpack.c.l.b16 %v332
      %v378 = vunpack.c.h.b16 %v332
      %v379 = vunpack.c.l.b16 %v333
      %v380 = vunpack.c.h.b16 %v333
      %v381 = vunpack.c.l.b16 %v334
      %v382 = vunpack.c.h.b16 %v334
      %v383 = vpack.c.b16 %v351, %v351
      %v384 = vpack.c.b16 %v352, %v352
      %v385 = vpack.c.b16 %v353, %v353
      %v386 = vpack.c.b16 %v354, %v354
      %v387 = vpack.c.b16 %v355, %v355
      %v388 = vpack.c.b16 %v356, %v356
      %v389 = vpack.c.b16 %v357, %v357
      %v390 = vpack.c.b16 %v358, %v358
      %v391 = vpack.c.b16 %v359, %v359
      %v392 = vpack.c.b16 %v360, %v360
      %v393 = vpack.c.b16 %v361, %v361
      %v394 = vpack.c.b16 %v362, %v362
      %v395 = vpack.c.b16 %v363, %v363
      %v396 = vpack.c.b16 %v364, %v364
      %v397 = vpack.c.b16 %v365, %v365
      %v398 = vpack.c.b16 %v366, %v366
      %v399 = vpack.c.b16 %v367, %v367
      %v400 = vpack.c.b16 %v368, %v368
      %v401 = vpack.c.b16 %v369, %v369
      %v402 = vpack.c.b16 %v370, %v370
      %v403 = vpack.c.b16 %v371, %v371
      %v404 = vpack.c.b16 %v372, %v372
      %v405 = vpack.c.b16 %v373, %v373
      %v406 = vpack.c.b16 %v374, %v374
      %v407 = vpack.c.b16 %v375, %v375
      %v408 = vpack.c.b16 %v376, %v376
      %v409 = vpack.c.b16 %v377, %v377
      %v410 = vpack.c.b16 %v378, %v378
      %v411 = vpack.c.b16 %v379, %v379
      %v412 = vpack.c.b16 %v380, %v380
      %v413 = vpack.c.b16 %v381, %v381
      %v414 = vpack.c.b16 %v382, %v382
      %447 = vst.msk [vmem:[#allocation2 + $0x8] sm:$0xf] %vm172, %v383
      %448 = vst.msk [vmem:[#allocation2 + $0xc] sm:$0xf] %vm172, %v384
      %449 = vst.msk [vmem:[#allocation2 + $0x1c] sm:$0xf] %vm172, %v385
      %450 = vst.msk [vmem:[#allocation2 + $0x20] sm:$0xf] %vm172, %v386
      %451 = vst.msk [vmem:[#allocation2 + $0x30] sm:$0xf] %vm172, %v387
      %452 = vst.msk [vmem:[#allocation2 + $0x34] sm:$0xf] %vm172, %v388
      %453 = vst.msk [vmem:[#allocation2 + $0x44] sm:$0xf] %vm172, %v389
      %454 = vst.msk [vmem:[#allocation2 + $0x48] sm:$0xf] %vm172, %v390
      %455 = vst.msk [vmem:[#allocation2 + $0x58] sm:$0xf] %vm172, %v391
      %456 = vst.msk [vmem:[#allocation2 + $0x5c] sm:$0xf] %vm172, %v392
      %457 = vst.msk [vmem:[#allocation2 + $0x6c] sm:$0xf] %vm172, %v393
      %458 = vst.msk [vmem:[#allocation2 + $0x70] sm:$0xf] %vm172, %v394
      %459 = vst.msk [vmem:[#allocation2 + $0x80] sm:$0xf] %vm172, %v395
      %460 = vst.msk [vmem:[#allocation2 + $0x84] sm:$0xf] %vm172, %v396
      %461 = vst.msk [vmem:[#allocation2 + $0x94] sm:$0xf] %vm172, %v397
      %462 = vst.msk [vmem:[#allocation2 + $0x98] sm:$0xf] %vm172, %v398
      %463 = vst.msk [vmem:[#allocation2 + $0xa8] sm:$0xf] %vm172, %v399
      %464 = vst.msk [vmem:[#allocation2 + $0xac] sm:$0xf] %vm172, %v400
      %465 = vst.msk [vmem:[#allocation2 + $0xbc] sm:$0xf] %vm172, %v401
      %466 = vst.msk [vmem:[#allocation2 + $0xc0] sm:$0xf] %vm172, %v402
      %467 = vst.msk [vmem:[#allocation2 + $0xd0] sm:$0xf] %vm172, %v403
      %468 = vst.msk [vmem:[#allocation2 + $0xd4] sm:$0xf] %vm172, %v404
      %469 = vst.msk [vmem:[#allocation2 + $0xe4] sm:$0xf] %vm172, %v405
      %470 = vst.msk [vmem:[#allocation2 + $0xe8] sm:$0xf] %vm172, %v406
      %471 = vst.msk [vmem:[#allocation2 + $0xf8] sm:$0xf] %vm172, %v407
      %472 = vst.msk [vmem:[#allocation2 + $0xfc] sm:$0xf] %vm172, %v408
      %473 = vst.msk [vmem:[#allocation2 + $0x10c] sm:$0xf] %vm172, %v409
      %474 = vst.msk [vmem:[#allocation2 + $0x110] sm:$0xf] %vm172, %v410
      %475 = vst.msk [vmem:[#allocation2 + $0x120] sm:$0xf] %vm172, %v411
      %476 = vst.msk [vmem:[#allocation2 + $0x124] sm:$0xf] %vm172, %v412
      %477 = vst.msk [vmem:[#allocation2 + $0x134] sm:$0xf] %vm172, %v413
      %478 = vst.msk [vmem:[#allocation2 + $0x138] sm:$0xf] %vm172, %v414
      %v479 = vld [vmem:[#allocation2 + $0x4] sm:$0x8]
      %v480 = vld [vmem:[#allocation2 + $0x8] sm:$0xf]
      %v481 = vld [vmem:[#allocation2 + $0xc] sm:$0x7]
      %v482 = vld [vmem:[#allocation2 + $0x18] sm:$0x8]
      %v483 = vld [vmem:[#allocation2 + $0x1c] sm:$0xf]
      %v484 = vld [vmem:[#allocation2 + $0x20] sm:$0x7]
      %v485 = vld [vmem:[#allocation2 + $0x2c] sm:$0x8]
      %v486 = vld [vmem:[#allocation2 + $0x30] sm:$0xf]
      %v487 = vld [vmem:[#allocation2 + $0x34] sm:$0x7]
      %v488 = vld [vmem:[#allocation2 + $0x40] sm:$0x8]
      %v489 = vld [vmem:[#allocation2 + $0x44] sm:$0xf]
      %v490 = vld [vmem:[#allocation2 + $0x48] sm:$0x7]
      %v491 = vld [vmem:[#allocation2 + $0x54] sm:$0x8]
      %v492 = vld [vmem:[#allocation2 + $0x58] sm:$0xf]
      %v493 = vld [vmem:[#allocation2 + $0x5c] sm:$0x7]
      %v494 = vld [vmem:[#allocation2 + $0x68] sm:$0x8]
      %v495 = vld [vmem:[#allocation2 + $0x6c] sm:$0xf]
      %v496 = vld [vmem:[#allocation2 + $0x70] sm:$0x7]
      %v497 = vld [vmem:[#allocation2 + $0x7c] sm:$0x8]
      %v498 = vld [vmem:[#allocation2 + $0x80] sm:$0xf]
      %v499 = vld [vmem:[#allocation2 + $0x84] sm:$0x7]
      %v500 = vld [vmem:[#allocation2 + $0x90] sm:$0x8]
      %v501 = vld [vmem:[#allocation2 + $0x94] sm:$0xf]
      %v502 = vld [vmem:[#allocation2 + $0x98] sm:$0x7]
      %v503 = vld [vmem:[#allocation2 + $0xa4] sm:$0x8]
      %v504 = vld [vmem:[#allocation2 + $0xa8] sm:$0xf]
      %v505 = vld [vmem:[#allocation2 + $0xac] sm:$0x7]
      %v506 = vld [vmem:[#allocation2 + $0xb8] sm:$0x8]
      %v507 = vld [vmem:[#allocation2 + $0xbc] sm:$0xf]
      %v508 = vld [vmem:[#allocation2 + $0xc0] sm:$0x7]
      %v509 = vld [vmem:[#allocation2 + $0xcc] sm:$0x8]
      %v510 = vld [vmem:[#allocation2 + $0xd0] sm:$0xf]
      %v511 = vld [vmem:[#allocation2 + $0xd4] sm:$0x7]
      %v512 = vld [vmem:[#allocation2 + $0xe0] sm:$0x8]
      %v513 = vld [vmem:[#allocation2 + $0xe4] sm:$0xf]
      %v514 = vld [vmem:[#allocation2 + $0xe8] sm:$0x7]
      %v515 = vld [vmem:[#allocation2 + $0xf4] sm:$0x8]
      %v516 = vld [vmem:[#allocation2 + $0xf8] sm:$0xf]
      %v517 = vld [vmem:[#allocation2 + $0xfc] sm:$0x7]
      %v518 = vld [vmem:[#allocation2 + $0x108] sm:$0x8]
      %v519 = vld [vmem:[#allocation2 + $0x10c] sm:$0xf]
      %v520 = vld [vmem:[#allocation2 + $0x110] sm:$0x7]
      %v521 = vld [vmem:[#allocation2 + $0x11c] sm:$0x8]
      %v522 = vld [vmem:[#allocation2 + $0x120] sm:$0xf]
      %v523 = vld [vmem:[#allocation2 + $0x124] sm:$0x7]
      %v524 = vld [vmem:[#allocation2 + $0x130] sm:$0x8]
      %v525 = vld [vmem:[#allocation2 + $0x134] sm:$0xf]
      %v526 = vld [vmem:[#allocation2 + $0x138] sm:$0x7]
      %vm575 = vcmask 1040384
      %vm576 = vcmask 1044484
      %vm577 = vmor %vm575, %vm576
      %v578 = vrot.slane %v479, 7
      %v579 = vrot.slane %v578, 4
      %v580 = vrot.slane %v480, 7
      %v581 = vsel %vm577, %v579, %v580
      %v582 = vrot.slane %v580, 4
      %v583 = vrot.slane %v481, 7
      %v584 = vsel %vm577, %v582, %v583
      %v585 = vrot.slane %v482, 7
      %v586 = vrot.slane %v585, 4
      %v587 = vrot.slane %v483, 7
      %v588 = vsel %vm577, %v586, %v587
      %v589 = vrot.slane %v587, 4
      %v590 = vrot.slane %v484, 7
      %v591 = vsel %vm577, %v589, %v590
      %v592 = vrot.slane %v485, 7
      %v593 = vrot.slane %v592, 4
      %v594 = vrot.slane %v486, 7
      %v595 = vsel %vm577, %v593, %v594
      %v596 = vrot.slane %v594, 4
      %v597 = vrot.slane %v487, 7
      %v598 = vsel %vm577, %v596, %v597
      %v599 = vrot.slane %v488, 7
      %v600 = vrot.slane %v599, 4
      %v601 = vrot.slane %v489, 7
      %v602 = vsel %vm577, %v600, %v601
      %v603 = vrot.slane %v601, 4
      %v604 = vrot.slane %v490, 7
      %v605 = vsel %vm577, %v603, %v604
      %v606 = vrot.slane %v491, 7
      %v607 = vrot.slane %v606, 4
      %v608 = vrot.slane %v492, 7
      %v609 = vsel %vm577, %v607, %v608
      %v610 = vrot.slane %v608, 4
      %v611 = vrot.slane %v493, 7
      %v612 = vsel %vm577, %v610, %v611
      %v613 = vrot.slane %v494, 7
      %v614 = vrot.slane %v613, 4
      %v615 = vrot.slane %v495, 7
      %v616 = vsel %vm577, %v614, %v615
      %v617 = vrot.slane %v615, 4
      %v618 = vrot.slane %v496, 7
      %v619 = vsel %vm577, %v617, %v618
      %v620 = vrot.slane %v497, 7
      %v621 = vrot.slane %v620, 4
      %v622 = vrot.slane %v498, 7
      %v623 = vsel %vm577, %v621, %v622
      %v624 = vrot.slane %v622, 4
      %v625 = vrot.slane %v499, 7
      %v626 = vsel %vm577, %v624, %v625
      %v627 = vrot.slane %v500, 7
      %v628 = vrot.slane %v627, 4
      %v629 = vrot.slane %v501, 7
      %v630 = vsel %vm577, %v628, %v629
      %v631 = vrot.slane %v629, 4
      %v632 = vrot.slane %v502, 7
      %v633 = vsel %vm577, %v631, %v632
      %v634 = vrot.slane %v503, 7
      %v635 = vrot.slane %v634, 4
      %v636 = vrot.slane %v504, 7
      %v637 = vsel %vm577, %v635, %v636
      %v638 = vrot.slane %v636, 4
      %v639 = vrot.slane %v505, 7
      %v640 = vsel %vm577, %v638, %v639
      %v641 = vrot.slane %v506, 7
      %v642 = vrot.slane %v641, 4
      %v643 = vrot.slane %v507, 7
      %v644 = vsel %vm577, %v642, %v643
      %v645 = vrot.slane %v643, 4
      %v646 = vrot.slane %v508, 7
      %v647 = vsel %vm577, %v645, %v646
      %v648 = vrot.slane %v509, 7
      %v649 = vrot.slane %v648, 4
      %v650 = vrot.slane %v510, 7
      %v651 = vsel %vm577, %v649, %v650
      %v652 = vrot.slane %v650, 4
      %v653 = vrot.slane %v511, 7
      %v654 = vsel %vm577, %v652, %v653
      %v655 = vrot.slane %v512, 7
      %v656 = vrot.slane %v655, 4
      %v657 = vrot.slane %v513, 7
      %v658 = vsel %vm577, %v656, %v657
      %v659 = vrot.slane %v657, 4
      %v660 = vrot.slane %v514, 7
      %v661 = vsel %vm577, %v659, %v660
      %v662 = vrot.slane %v515, 7
      %v663 = vrot.slane %v662, 4
      %v664 = vrot.slane %v516, 7
      %v665 = vsel %vm577, %v663, %v664
      %v666 = vrot.slane %v664, 4
      %v667 = vrot.slane %v517, 7
      %v668 = vsel %vm577, %v666, %v667
      %v669 = vrot.slane %v518, 7
      %v670 = vrot.slane %v669, 4
      %v671 = vrot.slane %v519, 7
      %v672 = vsel %vm577, %v670, %v671
      %v673 = vrot.slane %v671, 4
      %v674 = vrot.slane %v520, 7
      %v675 = vsel %vm577, %v673, %v674
      %v676 = vrot.slane %v521, 7
      %v677 = vrot.slane %v676, 4
      %v678 = vrot.slane %v522, 7
      %v679 = vsel %vm577, %v677, %v678
      %v680 = vrot.slane %v678, 4
      %v681 = vrot.slane %v523, 7
      %v682 = vsel %vm577, %v680, %v681
      %v683 = vrot.slane %v524, 7
      %v684 = vrot.slane %v683, 4
      %v685 = vrot.slane %v525, 7
      %v686 = vsel %vm577, %v684, %v685
      %v687 = vrot.slane %v685, 4
      %v688 = vrot.slane %v526, 7
      %v689 = vsel %vm577, %v687, %v688
      %v690 = vld [vmem:[%s1] sm:$0xf]
      %v691 = vld [vmem:[#allocation2 + $0xc] sm:$0xf]
      %v692 = vld [vmem:[#allocation2 + $0x20] sm:$0xf]
      %v693 = vld [vmem:[#allocation2 + $0x34] sm:$0xf]
      %v694 = vld [vmem:[#allocation2 + $0x48] sm:$0xf]
      %v695 = vld [vmem:[#allocation2 + $0x5c] sm:$0xf]
      %v696 = vld [vmem:[#allocation2 + $0x70] sm:$0xf]
      %v697 = vld [vmem:[#allocation2 + $0x84] sm:$0xf]
      %v698 = vld [vmem:[#allocation2 + $0x98] sm:$0xf]
      %v699 = vld [vmem:[#allocation2 + $0xac] sm:$0xf]
      %v700 = vld [vmem:[#allocation2 + $0xc0] sm:$0xf]
      %v701 = vld [vmem:[#allocation2 + $0xd4] sm:$0xf]
      %v702 = vld [vmem:[#allocation2 + $0xe8] sm:$0xf]
      %v703 = vld [vmem:[#allocation2 + $0xfc] sm:$0xf]
      %v704 = vld [vmem:[#allocation2 + $0x110] sm:$0xf]
      %v705 = vld [vmem:[#allocation2 + $0x124] sm:$0xf]
      %v706 = vld [vmem:[#allocation2 + $0x138] sm:$0xf]
      %vm707 = vsmask.f32 256
      %vm708 = vsmask.f32 4368
      %vm709 = vmor %vm707, %vm708
      %v711 = vshrl.u32 %v479, 16
      %v713 = vrot.slane %v711, 7
      %v714 = vrot.slane %v713, 4
      %v716 = vshrl.u32 %v480, 16
      %v718 = vrot.slane %v716, 7
      %v719 = vshll.u32 %v480, 16
      %v721 = vor.u32 %v718, %v719
      %v722 = vsel %vm709, %v714, %v721
      %v723 = vrot.slane %v718, 4
      %v725 = vshrl.u32 %v691, 16
      %v727 = vrot.slane %v725, 7
      %v728 = vshll.u32 %v691, 16
      %v730 = vor.u32 %v727, %v728
      %v731 = vsel %vm709, %v723, %v730
      %v733 = vshrl.u32 %v482, 16
      %v735 = vrot.slane %v733, 7
      %v736 = vrot.slane %v735, 4
      %v738 = vshrl.u32 %v483, 16
      %v740 = vrot.slane %v738, 7
      %v741 = vshll.u32 %v483, 16
      %v743 = vor.u32 %v740, %v741
      %v744 = vsel %vm709, %v736, %v743
      %v745 = vrot.slane %v740, 4
      %v747 = vshrl.u32 %v692, 16
      %v749 = vrot.slane %v747, 7
      %v750 = vshll.u32 %v692, 16
      %v752 = vor.u32 %v749, %v750
      %v753 = vsel %vm709, %v745, %v752
      %v755 = vshrl.u32 %v485, 16
      %v757 = vrot.slane %v755, 7
      %v758 = vrot.slane %v757, 4
      %v760 = vshrl.u32 %v486, 16
      %v762 = vrot.slane %v760, 7
      %v763 = vshll.u32 %v486, 16
      %v765 = vor.u32 %v762, %v763
      %v766 = vsel %vm709, %v758, %v765
      %v767 = vrot.slane %v762, 4
      %v769 = vshrl.u32 %v693, 16
      %v771 = vrot.slane %v769, 7
      %v772 = vshll.u32 %v693, 16
      %v774 = vor.u32 %v771, %v772
      %v775 = vsel %vm709, %v767, %v774
      %v777 = vshrl.u32 %v488, 16
      %v779 = vrot.slane %v777, 7
      %v780 = vrot.slane %v779, 4
      %v782 = vshrl.u32 %v489, 16
      %v784 = vrot.slane %v782, 7
      %v785 = vshll.u32 %v489, 16
      %v787 = vor.u32 %v784, %v785
      %v788 = vsel %vm709, %v780, %v787
      %v789 = vrot.slane %v784, 4
      %v791 = vshrl.u32 %v694, 16
      %v793 = vrot.slane %v791, 7
      %v794 = vshll.u32 %v694, 16
      %v796 = vor.u32 %v793, %v794
      %v797 = vsel %vm709, %v789, %v796
      %v799 = vshrl.u32 %v491, 16
      %v801 = vrot.slane %v799, 7
      %v802 = vrot.slane %v801, 4
      %v804 = vshrl.u32 %v492, 16
      %v806 = vrot.slane %v804, 7
      %v807 = vshll.u32 %v492, 16
      %v809 = vor.u32 %v806, %v807
      %v810 = vsel %vm709, %v802, %v809
      %v811 = vrot.slane %v806, 4
      %v813 = vshrl.u32 %v695, 16
      %v815 = vrot.slane %v813, 7
      %v816 = vshll.u32 %v695, 16
      %v818 = vor.u32 %v815, %v816
      %v819 = vsel %vm709, %v811, %v818
      %v821 = vshrl.u32 %v494, 16
      %v823 = vrot.slane %v821, 7
      %v824 = vrot.slane %v823, 4
      %v826 = vshrl.u32 %v495, 16
      %v828 = vrot.slane %v826, 7
      %v829 = vshll.u32 %v495, 16
      %v831 = vor.u32 %v828, %v829
      %v832 = vsel %vm709, %v824, %v831
      %v833 = vrot.slane %v828, 4
      %v835 = vshrl.u32 %v696, 16
      %v837 = vrot.slane %v835, 7
      %v838 = vshll.u32 %v696, 16
      %v840 = vor.u32 %v837, %v838
      %v841 = vsel %vm709, %v833, %v840
      %v843 = vshrl.u32 %v497, 16
      %v845 = vrot.slane %v843, 7
      %v846 = vrot.slane %v845, 4
      %v848 = vshrl.u32 %v498, 16
      %v850 = vrot.slane %v848, 7
      %v851 = vshll.u32 %v498, 16
      %v853 = vor.u32 %v850, %v851
      %v854 = vsel %vm709, %v846, %v853
      %v855 = vrot.slane %v850, 4
      %v857 = vshrl.u32 %v697, 16
      %v859 = vrot.slane %v857, 7
      %v860 = vshll.u32 %v697, 16
      %v862 = vor.u32 %v859, %v860
      %v863 = vsel %vm709, %v855, %v862
      %v865 = vshrl.u32 %v500, 16
      %v867 = vrot.slane %v865, 7
      %v868 = vrot.slane %v867, 4
      %v870 = vshrl.u32 %v501, 16
      %v872 = vrot.slane %v870, 7
      %v873 = vshll.u32 %v501, 16
      %v875 = vor.u32 %v872, %v873
      %v876 = vsel %vm709, %v868, %v875
      %v877 = vrot.slane %v872, 4
      %v879 = vshrl.u32 %v698, 16
      %v881 = vrot.slane %v879, 7
      %v882 = vshll.u32 %v698, 16
      %v884 = vor.u32 %v881, %v882
      %v885 = vsel %vm709, %v877, %v884
      %v887 = vshrl.u32 %v503, 16
      %v889 = vrot.slane %v887, 7
      %v890 = vrot.slane %v889, 4
      %v892 = vshrl.u32 %v504, 16
      %v894 = vrot.slane %v892, 7
      %v895 = vshll.u32 %v504, 16
      %v897 = vor.u32 %v894, %v895
      %v898 = vsel %vm709, %v890, %v897
      %v899 = vrot.slane %v894, 4
      %v901 = vshrl.u32 %v699, 16
      %v903 = vrot.slane %v901, 7
      %v904 = vshll.u32 %v699, 16
      %v906 = vor.u32 %v903, %v904
      %v907 = vsel %vm709, %v899, %v906
      %v909 = vshrl.u32 %v506, 16
      %v911 = vrot.slane %v909, 7
      %v912 = vrot.slane %v911, 4
      %v914 = vshrl.u32 %v507, 16
      %v916 = vrot.slane %v914, 7
      %v917 = vshll.u32 %v507, 16
      %v919 = vor.u32 %v916, %v917
      %v920 = vsel %vm709, %v912, %v919
      %v921 = vrot.slane %v916, 4
      %v923 = vshrl.u32 %v700, 16
      %v925 = vrot.slane %v923, 7
      %v926 = vshll.u32 %v700, 16
      %v928 = vor.u32 %v925, %v926
      %v929 = vsel %vm709, %v921, %v928
      %v931 = vshrl.u32 %v509, 16
      %v933 = vrot.slane %v931, 7
      %v934 = vrot.slane %v933, 4
      %v936 = vshrl.u32 %v510, 16
      %v938 = vrot.slane %v936, 7
      %v939 = vshll.u32 %v510, 16
      %v941 = vor.u32 %v938, %v939
      %v942 = vsel %vm709, %v934, %v941
      %v943 = vrot.slane %v938, 4
      %v945 = vshrl.u32 %v701, 16
      %v947 = vrot.slane %v945, 7
      %v948 = vshll.u32 %v701, 16
      %v950 = vor.u32 %v947, %v948
      %v951 = vsel %vm709, %v943, %v950
      %v953 = vshrl.u32 %v512, 16
      %v955 = vrot.slane %v953, 7
      %v956 = vrot.slane %v955, 4
      %v958 = vshrl.u32 %v513, 16
      %v960 = vrot.slane %v958, 7
      %v961 = vshll.u32 %v513, 16
      %v963 = vor.u32 %v960, %v961
      %v964 = vsel %vm709, %v956, %v963
      %v965 = vrot.slane %v960, 4
      %v967 = vshrl.u32 %v702, 16
      %v969 = vrot.slane %v967, 7
      %v970 = vshll.u32 %v702, 16
      %v972 = vor.u32 %v969, %v970
      %v973 = vsel %vm709, %v965, %v972
      %v975 = vshrl.u32 %v515, 16
      %v977 = vrot.slane %v975, 7
      %v978 = vrot.slane %v977, 4
      %v980 = vshrl.u32 %v516, 16
      %v982 = vrot.slane %v980, 7
      %v983 = vshll.u32 %v516, 16
      %v985 = vor.u32 %v982, %v983
      %v986 = vsel %vm709, %v978, %v985
      %v987 = vrot.slane %v982, 4
      %v989 = vshrl.u32 %v703, 16
      %v991 = vrot.slane %v989, 7
      %v992 = vshll.u32 %v703, 16
      %v994 = vor.u32 %v991, %v992
      %v995 = vsel %vm709, %v987, %v994
      %v997 = vshrl.u32 %v518, 16
      %v999 = vrot.slane %v997, 7
      %v1000 = vrot.slane %v999, 4
      %v1002 = vshrl.u32 %v519, 16
      %v1004 = vrot.slane %v1002, 7
      %v1005 = vshll.u32 %v519, 16
      %v1007 = vor.u32 %v1004, %v1005
      %v1008 = vsel %vm709, %v1000, %v1007
      %v1009 = vrot.slane %v1004, 4
      %v1011 = vshrl.u32 %v704, 16
      %v1013 = vrot.slane %v1011, 7
      %v1014 = vshll.u32 %v704, 16
      %v1016 = vor.u32 %v1013, %v1014
      %v1017 = vsel %vm709, %v1009, %v1016
      %v1019 = vshrl.u32 %v521, 16
      %v1021 = vrot.slane %v1019, 7
      %v1022 = vrot.slane %v1021, 4
      %v1024 = vshrl.u32 %v522, 16
      %v1026 = vrot.slane %v1024, 7
      %v1027 = vshll.u32 %v522, 16
      %v1029 = vor.u32 %v1026, %v1027
      %v1030 = vsel %vm709, %v1022, %v1029
      %v1031 = vrot.slane %v1026, 4
      %v1033 = vshrl.u32 %v705, 16
      %v1035 = vrot.slane %v1033, 7
      %v1036 = vshll.u32 %v705, 16
      %v1038 = vor.u32 %v1035, %v1036
      %v1039 = vsel %vm709, %v1031, %v1038
      %v1041 = vshrl.u32 %v524, 16
      %v1043 = vrot.slane %v1041, 7
      %v1044 = vrot.slane %v1043, 4
      %v1046 = vshrl.u32 %v525, 16
      %v1048 = vrot.slane %v1046, 7
      %v1049 = vshll.u32 %v525, 16
      %v1051 = vor.u32 %v1048, %v1049
      %v1052 = vsel %vm709, %v1044, %v1051
      %v1053 = vrot.slane %v1048, 4
      %v1055 = vshrl.u32 %v706, 16
      %v1057 = vrot.slane %v1055, 7
      %v1058 = vshll.u32 %v706, 16
      %v1060 = vor.u32 %v1057, %v1058
      %v1061 = vsel %vm709, %v1053, %v1060
      %s1062 = scalar_lea.vmem %s1, 4
      %v1063 = vld [vmem:[%s1062] sm:$0xf]
      %v1064 = vunpack.c.l.b16 %v722
      %v1065 = vunpack.c.l.b16 %v731
      %v1066 = vunpack.c.l.b16 %v744
      %v1067 = vunpack.c.l.b16 %v753
      %v1068 = vunpack.c.l.b16 %v766
      %v1069 = vunpack.c.l.b16 %v775
      %v1070 = vunpack.c.l.b16 %v788
      %v1071 = vunpack.c.l.b16 %v797
      %v1072 = vunpack.c.l.b16 %v810
      %v1073 = vunpack.c.l.b16 %v819
      %v1074 = vunpack.c.l.b16 %v832
      %v1075 = vunpack.c.l.b16 %v841
      %v1076 = vunpack.c.l.b16 %v854
      %v1077 = vunpack.c.l.b16 %v863
      %v1078 = vunpack.c.l.b16 %v876
      %v1079 = vunpack.c.l.b16 %v885
      %v1080 = vunpack.c.l.b16 %v898
      %v1081 = vunpack.c.l.b16 %v907
      %v1082 = vunpack.c.l.b16 %v920
      %v1083 = vunpack.c.l.b16 %v929
      %v1084 = vunpack.c.l.b16 %v942
      %v1085 = vunpack.c.l.b16 %v951
      %v1086 = vunpack.c.l.b16 %v964
      %v1087 = vunpack.c.l.b16 %v973
      %v1088 = vunpack.c.l.b16 %v986
      %v1089 = vunpack.c.l.b16 %v995
      %v1090 = vunpack.c.l.b16 %v1008
      %v1091 = vunpack.c.l.b16 %v1017
      %v1092 = vunpack.c.l.b16 %v1030
      %v1093 = vunpack.c.l.b16 %v1039
      %v1094 = vunpack.c.l.b16 %v1052
      %v1095 = vunpack.c.l.b16 %v1061
      %v1096 = vpack.c.b16 %v1065, %v1064
      %v1097 = vpack.c.b16 %v1067, %v1066
      %v1098 = vpack.c.b16 %v1069, %v1068
      %v1099 = vpack.c.b16 %v1071, %v1070
      %v1100 = vpack.c.b16 %v1073, %v1072
      %v1101 = vpack.c.b16 %v1075, %v1074
      %v1102 = vpack.c.b16 %v1077, %v1076
      %v1103 = vpack.c.b16 %v1079, %v1078
      %v1104 = vpack.c.b16 %v1081, %v1080
      %v1105 = vpack.c.b16 %v1083, %v1082
      %v1106 = vpack.c.b16 %v1085, %v1084
      %v1107 = vpack.c.b16 %v1087, %v1086
      %v1108 = vpack.c.b16 %v1089, %v1088
      %v1109 = vpack.c.b16 %v1091, %v1090
      %v1110 = vpack.c.b16 %v1093, %v1092
      %v1111 = vpack.c.b16 %v1095, %v1094
      %v1113 = vsel %vm254, %v1096, 0
      %v1116 = vsel %vm254, %v1097, 0
      %v1119 = vsel %vm254, %v1098, 0
      %v1122 = vsel %vm254, %v1099, 0
      %v1125 = vsel %vm254, %v1100, 0
      %v1128 = vsel %vm254, %v1101, 0
      %v1131 = vsel %vm254, %v1102, 0
      %v1134 = vsel %vm254, %v1103, 0
      %v1137 = vsel %vm254, %v1104, 0
      %v1140 = vsel %vm254, %v1105, 0
      %v1143 = vsel %vm254, %v1106, 0
      %v1146 = vsel %vm254, %v1107, 0
      %v1149 = vsel %vm254, %v1108, 0
      %v1152 = vsel %vm254, %v1109, 0
      %v1155 = vsel %vm254, %v1110, 0
      %v1158 = vsel %vm254, %v1111, 0
      %vm1160 = vcmask 1043456
      %v1162 = vsel %vm1160, %v1063, 0
      %1164 = vmatprep.subr.bf16.mxu0 0
      %1165 = vmatpush1.bf16.msra.mxu0 %v1162
      %1166 = vmatprep.subr.bf16.mxu0 0
      %1167 = vmatpush1.bf16.msra.mxu0 0
      %1168 = vmatprep.subr.bf16.mxu0 0
      %1169 = vmatpush1.bf16.msra.mxu0 0
      %1170 = vmatprep.subr.bf16.mxu0 0
      %1171 = vmatpush1.bf16.msra.mxu0 0
      %1172 = vmatprep.subr.bf16.mxu0 0
      %1173 = vmatpush1.bf16.msra.mxu0 0
      %1174 = vmatprep.subr.bf16.mxu0 0
      %1175 = vmatpush1.bf16.msra.mxu0 0
      %1176 = vmatprep.subr.bf16.mxu0 0
      %1177 = vmatpush1.bf16.msra.mxu0 0
      %1178 = vmatprep.subr.bf16.mxu0 0
      %1179 = vmatpush1.bf16.msra.mxu0 0
      %1180 = vmatprep.subr.bf16.mxu0 0
      %1181 = vmatpush1.bf16.msra.mxu0 0
      %1182 = vmatprep.subr.bf16.mxu0 0
      %1183 = vmatpush1.bf16.msra.mxu0 0
      %1184 = vmatprep.subr.bf16.mxu0 0
      %1185 = vmatpush1.bf16.msra.mxu0 0
      %1186 = vmatprep.subr.bf16.mxu0 0
      %1187 = vmatpush1.bf16.msra.mxu0 0
      %1188 = vmatprep.subr.bf16.mxu0 0
      %1189 = vmatpush1.bf16.msra.mxu0 0
      %1190 = vmatprep.subr.bf16.mxu0 0
      %1191 = vmatpush1.bf16.msra.mxu0 0
      %1192 = vmatprep.subr.bf16.mxu0 0
      %1193 = vmatpush1.bf16.msra.mxu0 0
      %1194 = vmatprep.subr.bf16.mxu0 0
      %1195 = vmatpush1.bf16.msra.mxu0 0
      %1196 = vmatprep.mubr.bf16.mxu0 0
      %1197 = vmatmul.mubr.bf16.gmra.mrb[0].mxu0 %v1113
      %v1198 = vpop.f32.mrb[0].mxu0
      %v1199 = vadd.f32 0.0, %v1198
      %v1200 = vpop.f32.mrb[0].mxu0
      %v1201 = vpop.f32.mrb[0].mxu0
      %v1202 = vadd.f32 0.0, %v1201
      %v1203 = vpop.f32.mrb[0].mxu0
      %1204 = vmatprep.mubr.bf16.mxu0 0
      %1205 = vmatmul.mubr.bf16.gmra.mrb[0].mxu0 %v1116
      %v1206 = vpop.f32.mrb[0].mxu0
      %v1207 = vadd.f32 0.0, %v1206
      %v1208 = vpop.f32.mrb[0].mxu0
      %v1209 = vpop.f32.mrb[0].mxu0
      %v1210 = vadd.f32 0.0, %v1209
      %v1211 = vpop.f32.mrb[0].mxu0
      %1212 = vmatprep.mubr.bf16.mxu0 0
      %1213 = vmatmul.mubr.bf16.gmra.mrb[0].mxu0 %v1119
      %v1214 = vpop.f32.mrb[0].mxu0
      %v1215 = vadd.f32 0.0, %v1214
      %v1216 = vpop.f32.mrb[0].mxu0
      %v1217 = vpop.f32.mrb[0].mxu0
      %v1218 = vadd.f32 0.0, %v1217
      %v1219 = vpop.f32.mrb[0].mxu0
      %1220 = vmatprep.mubr.bf16.mxu0 0
      %1221 = vmatmul.mubr.bf16.gmra.mrb[0].mxu0 %v1122
      %v1222 = vpop.f32.mrb[0].mxu0
      %v1223 = vadd.f32 0.0, %v1222
      %v1224 = vpop.f32.mrb[0].mxu0
      %v1225 = vpop.f32.mrb[0].mxu0
      %v1226 = vadd.f32 0.0, %v1225
      %v1227 = vpop.f32.mrb[0].mxu0
      %1228 = vmatprep.mubr.bf16.mxu0 0
      %1229 = vmatmul.mubr.bf16.gmra.mrb[0].mxu0 %v1125
      %v1230 = vpop.f32.mrb[0].mxu0
      %v1231 = vadd.f32 0.0, %v1230
      %v1232 = vpop.f32.mrb[0].mxu0
      %v1233 = vpop.f32.mrb[0].mxu0
      %v1234 = vadd.f32 0.0, %v1233
      %v1235 = vpop.f32.mrb[0].mxu0
      %1236 = vmatprep.mubr.bf16.mxu0 0
      %1237 = vmatmul.mubr.bf16.gmra.mrb[0].mxu0 %v1128
      %v1238 = vpop.f32.mrb[0].mxu0
      %v1239 = vadd.f32 0.0, %v1238
      %v1240 = vpop.f32.mrb[0].mxu0
      %v1241 = vpop.f32.mrb[0].mxu0
      %v1242 = vadd.f32 0.0, %v1241
      %v1243 = vpop.f32.mrb[0].mxu0
      %1244 = vmatprep.mubr.bf16.mxu0 0
      %1245 = vmatmul.mubr.bf16.gmra.mrb[0].mxu0 %v1131
      %v1246 = vpop.f32.mrb[0].mxu0
      %v1247 = vadd.f32 0.0, %v1246
      %v1248 = vpop.f32.mrb[0].mxu0
      %v1249 = vpop.f32.mrb[0].mxu0
      %v1250 = vadd.f32 0.0, %v1249
      %v1251 = vpop.f32.mrb[0].mxu0
      %1252 = vmatprep.mubr.bf16.mxu0 0
      %1253 = vmatmul.mubr.bf16.gmra.mrb[0].mxu0 %v1134
      %v1254 = vpop.f32.mrb[0].mxu0
      %v1255 = vadd.f32 0.0, %v1254
      %v1256 = vpop.f32.mrb[0].mxu0
      %v1257 = vpop.f32.mrb[0].mxu0
      %v1258 = vadd.f32 0.0, %v1257
      %v1259 = vpop.f32.mrb[0].mxu0
      %1260 = vmatprep.mubr.bf16.mxu0 0
      %1261 = vmatmul.mubr.bf16.gmra.mrb[0].mxu0 %v1137
      %v1262 = vpop.f32.mrb[0].mxu0
      %v1263 = vadd.f32 0.0, %v1262
      %v1264 = vpop.f32.mrb[0].mxu0
      %v1265 = vpop.f32.mrb[0].mxu0
      %v1266 = vadd.f32 0.0, %v1265
      %v1267 = vpop.f32.mrb[0].mxu0
      %1268 = vmatprep.mubr.bf16.mxu0 0
      %1269 = vmatmul.mubr.bf16.gmra.mrb[0].mxu0 %v1140
      %v1270 = vpop.f32.mrb[0].mxu0
      %v1271 = vadd.f32 0.0, %v1270
      %v1272 = vpop.f32.mrb[0].mxu0
      %v1273 = vpop.f32.mrb[0].mxu0
      %v1274 = vadd.f32 0.0, %v1273
      %v1275 = vpop.f32.mrb[0].mxu0
      %1276 = vmatprep.mubr.bf16.mxu0 0
      %1277 = vmatmul.mubr.bf16.gmra.mrb[0].mxu0 %v1143
      %v1278 = vpop.f32.mrb[0].mxu0
      %v1279 = vadd.f32 0.0, %v1278
      %v1280 = vpop.f32.mrb[0].mxu0
      %v1281 = vpop.f32.mrb[0].mxu0
      %v1282 = vadd.f32 0.0, %v1281
      %v1283 = vpop.f32.mrb[0].mxu0
      %1284 = vmatprep.mubr.bf16.mxu0 0
      %1285 = vmatmul.mubr.bf16.gmra.mrb[0].mxu0 %v1146
      %v1286 = vpop.f32.mrb[0].mxu0
      %v1287 = vadd.f32 0.0, %v1286
      %v1288 = vpop.f32.mrb[0].mxu0
      %v1289 = vpop.f32.mrb[0].mxu0
      %v1290 = vadd.f32 0.0, %v1289
      %v1291 = vpop.f32.mrb[0].mxu0
      %1292 = vmatprep.mubr.bf16.mxu0 0
      %1293 = vmatmul.mubr.bf16.gmra.mrb[0].mxu0 %v1149
      %v1294 = vpop.f32.mrb[0].mxu0
      %v1295 = vadd.f32 0.0, %v1294
      %v1296 = vpop.f32.mrb[0].mxu0
      %v1297 = vpop.f32.mrb[0].mxu0
      %v1298 = vadd.f32 0.0, %v1297
      %v1299 = vpop.f32.mrb[0].mxu0
      %1300 = vmatprep.mubr.bf16.mxu0 0
      %1301 = vmatmul.mubr.bf16.gmra.mrb[0].mxu0 %v1152
      %v1302 = vpop.f32.mrb[0].mxu0
      %v1303 = vadd.f32 0.0, %v1302
      %v1304 = vpop.f32.mrb[0].mxu0
      %v1305 = vpop.f32.mrb[0].mxu0
      %v1306 = vadd.f32 0.0, %v1305
      %v1307 = vpop.f32.mrb[0].mxu0
      %1308 = vmatprep.mubr.bf16.mxu0 0
      %1309 = vmatmul.mubr.bf16.gmra.mrb[0].mxu0 %v1155
      %v1310 = vpop.f32.mrb[0].mxu0
      %v1311 = vadd.f32 0.0, %v1310
      %v1312 = vpop.f32.mrb[0].mxu0
      %v1313 = vpop.f32.mrb[0].mxu0
      %v1314 = vadd.f32 0.0, %v1313
      %v1315 = vpop.f32.mrb[0].mxu0
      %1316 = vmatprep.mubr.bf16.mxu0 0
      %1317 = vmatmul.mubr.bf16.gmra.mrb[0].mxu0 %v1158
      %v1318 = vpop.f32.mrb[0].mxu0
      %v1319 = vadd.f32 0.0, %v1318
      %v1320 = vpop.f32.mrb[0].mxu0
      %v1321 = vpop.f32.mrb[0].mxu0
      %v1322 = vadd.f32 0.0, %v1321
      %v1323 = vpop.f32.mrb[0].mxu0
      %1324 = vdwg.mxu0
      %v1325 = vunpack.c.l.b16 %v581
      %v1326 = vunpack.c.l.b16 %v584
      %v1327 = vunpack.c.l.b16 %v588
      %v1328 = vunpack.c.l.b16 %v591
      %v1329 = vunpack.c.l.b16 %v595
      %v1330 = vunpack.c.l.b16 %v598
      %v1331 = vunpack.c.l.b16 %v602
      %v1332 = vunpack.c.l.b16 %v605
      %v1333 = vunpack.c.l.b16 %v609
      %v1334 = vunpack.c.l.b16 %v612
      %v1335 = vunpack.c.l.b16 %v616
      %v1336 = vunpack.c.l.b16 %v619
      %v1337 = vunpack.c.l.b16 %v623
      %v1338 = vunpack.c.l.b16 %v626
      %v1339 = vunpack.c.l.b16 %v630
      %v1340 = vunpack.c.l.b16 %v633
      %v1341 = vunpack.c.l.b16 %v637
      %v1342 = vunpack.c.l.b16 %v640
      %v1343 = vunpack.c.l.b16 %v644
      %v1344 = vunpack.c.l.b16 %v647
      %v1345 = vunpack.c.l.b16 %v651
      %v1346 = vunpack.c.l.b16 %v654
      %v1347 = vunpack.c.l.b16 %v658
      %v1348 = vunpack.c.l.b16 %v661
      %v1349 = vunpack.c.l.b16 %v665
      %v1350 = vunpack.c.l.b16 %v668
      %v1351 = vunpack.c.l.b16 %v672
      %v1352 = vunpack.c.l.b16 %v675
      %v1353 = vunpack.c.l.b16 %v679
      %v1354 = vunpack.c.l.b16 %v682
      %v1355 = vunpack.c.l.b16 %v686
      %v1356 = vunpack.c.l.b16 %v689
      %v1357 = vpack.c.b16 %v1326, %v1325
      %v1358 = vpack.c.b16 %v1328, %v1327
      %v1359 = vpack.c.b16 %v1330, %v1329
      %v1360 = vpack.c.b16 %v1332, %v1331
      %v1361 = vpack.c.b16 %v1334, %v1333
      %v1362 = vpack.c.b16 %v1336, %v1335
      %v1363 = vpack.c.b16 %v1338, %v1337
      %v1364 = vpack.c.b16 %v1340, %v1339
      %v1365 = vpack.c.b16 %v1342, %v1341
      %v1366 = vpack.c.b16 %v1344, %v1343
      %v1367 = vpack.c.b16 %v1346, %v1345
      %v1368 = vpack.c.b16 %v1348, %v1347
      %v1369 = vpack.c.b16 %v1350, %v1349
      %v1370 = vpack.c.b16 %v1352, %v1351
      %v1371 = vpack.c.b16 %v1354, %v1353
      %v1372 = vpack.c.b16 %v1356, %v1355
      %v1374 = vsel %vm254, %v1357, 0
      %v1377 = vsel %vm254, %v1358, 0
      %v1380 = vsel %vm254, %v1359, 0
      %v1383 = vsel %vm254, %v1360, 0
      %v1386 = vsel %vm254, %v1361, 0
      %v1389 = vsel %vm254, %v1362, 0
      %v1392 = vsel %vm254, %v1363, 0
      %v1395 = vsel %vm254, %v1364, 0
      %v1398 = vsel %vm254, %v1365, 0
      %v1401 = vsel %vm254, %v1366, 0
      %v1404 = vsel %vm254, %v1367, 0
      %v1407 = vsel %vm254, %v1368, 0
      %v1410 = vsel %vm254, %v1369, 0
      %v1413 = vsel %vm254, %v1370, 0
      %v1416 = vsel %vm254, %v1371, 0
      %v1419 = vsel %vm254, %v1372, 0
      %v1422 = vsel %vm1160, %v690, 0
      %1424 = vmatprep.subr.bf16.mxu0 0
      %1425 = vmatpush1.bf16.msra.mxu0 %v1422
      %1426 = vmatprep.subr.bf16.mxu0 0
      %1427 = vmatpush1.bf16.msra.mxu0 0
      %1428 = vmatprep.subr.bf16.mxu0 0
      %1429 = vmatpush1.bf16.msra.mxu0 0
      %1430 = vmatprep.subr.bf16.mxu0 0
      %1431 = vmatpush1.bf16.msra.mxu0 0
      %1432 = vmatprep.subr.bf16.mxu0 0
      %1433 = vmatpush1.bf16.msra.mxu0 0
      %1434 = vmatprep.subr.bf16.mxu0 0
      %1435 = vmatpush1.bf16.msra.mxu0 0
      %1436 = vmatprep.subr.bf16.mxu0 0
      %1437 = vmatpush1.bf16.msra.mxu0 0
      %1438 = vmatprep.subr.bf16.mxu0 0
      %1439 = vmatpush1.bf16.msra.mxu0 0
      %1440 = vmatprep.subr.bf16.mxu0 0
      %1441 = vmatpush1.bf16.msra.mxu0 0
      %1442 = vmatprep.subr.bf16.mxu0 0
      %1443 = vmatpush1.bf16.msra.mxu0 0
      %1444 = vmatprep.subr.bf16.mxu0 0
      %1445 = vmatpush1.bf16.msra.mxu0 0
      %1446 = vmatprep.subr.bf16.mxu0 0
      %1447 = vmatpush1.bf16.msra.mxu0 0
      %1448 = vmatprep.subr.bf16.mxu0 0
      %1449 = vmatpush1.bf16.msra.mxu0 0
      %1450 = vmatprep.subr.bf16.mxu0 0
      %1451 = vmatpush1.bf16.msra.mxu0 0
      %1452 = vmatprep.subr.bf16.mxu0 0
      %1453 = vmatpush1.bf16.msra.mxu0 0
      %1454 = vmatprep.subr.bf16.mxu0 0
      %1455 = vmatpush1.bf16.msra.mxu0 0
      %1456 = vmatprep.mubr.bf16.mxu0 0
      %1457 = vmatmul.mubr.bf16.gmra.mrb[0].mxu0 %v1374
      %v1458 = vpop.f32.mrb[0].mxu0
      %v1459 = vadd.f32 %v1199, %v1458
      %v1460 = vpop.f32.mrb[0].mxu0
      %v1461 = vpop.f32.mrb[0].mxu0
      %v1462 = vadd.f32 %v1202, %v1461
      %v1463 = vpop.f32.mrb[0].mxu0
      %1464 = vmatprep.mubr.bf16.mxu0 0
      %1465 = vmatmul.mubr.bf16.gmra.mrb[0].mxu0 %v1377
      %v1466 = vpop.f32.mrb[0].mxu0
      %v1467 = vadd.f32 %v1207, %v1466
      %v1468 = vpop.f32.mrb[0].mxu0
      %v1469 = vpop.f32.mrb[0].mxu0
      %v1470 = vadd.f32 %v1210, %v1469
      %v1471 = vpop.f32.mrb[0].mxu0
      %1472 = vmatprep.mubr.bf16.mxu0 0
      %1473 = vmatmul.mubr.bf16.gmra.mrb[0].mxu0 %v1380
      %v1474 = vpop.f32.mrb[0].mxu0
      %v1475 = vadd.f32 %v1215, %v1474
      %v1476 = vpop.f32.mrb[0].mxu0
      %v1477 = vpop.f32.mrb[0].mxu0
      %v1478 = vadd.f32 %v1218, %v1477
      %v1479 = vpop.f32.mrb[0].mxu0
      %1480 = vmatprep.mubr.bf16.mxu0 0
      %1481 = vmatmul.mubr.bf16.gmra.mrb[0].mxu0 %v1383
      %v1482 = vpop.f32.mrb[0].mxu0
      %v1483 = vadd.f32 %v1223, %v1482
      %v1484 = vpop.f32.mrb[0].mxu0
      %v1485 = vpop.f32.mrb[0].mxu0
      %v1486 = vadd.f32 %v1226, %v1485
      %v1487 = vpop.f32.mrb[0].mxu0
      %1488 = vmatprep.mubr.bf16.mxu0 0
      %1489 = vmatmul.mubr.bf16.gmra.mrb[0].mxu0 %v1386
      %v1490 = vpop.f32.mrb[0].mxu0
      %v1491 = vadd.f32 %v1231, %v1490
      %v1492 = vpop.f32.mrb[0].mxu0
      %v1493 = vpop.f32.mrb[0].mxu0
      %v1494 = vadd.f32 %v1234, %v1493
      %v1495 = vpop.f32.mrb[0].mxu0
      %1496 = vmatprep.mubr.bf16.mxu0 0
      %1497 = vmatmul.mubr.bf16.gmra.mrb[0].mxu0 %v1389
      %v1498 = vpop.f32.mrb[0].mxu0
      %v1499 = vadd.f32 %v1239, %v1498
      %v1500 = vpop.f32.mrb[0].mxu0
      %v1501 = vpop.f32.mrb[0].mxu0
      %v1502 = vadd.f32 %v1242, %v1501
      %v1503 = vpop.f32.mrb[0].mxu0
      %1504 = vmatprep.mubr.bf16.mxu0 0
      %1505 = vmatmul.mubr.bf16.gmra.mrb[0].mxu0 %v1392
      %v1506 = vpop.f32.mrb[0].mxu0
      %v1507 = vadd.f32 %v1247, %v1506
      %v1508 = vpop.f32.mrb[0].mxu0
      %v1509 = vpop.f32.mrb[0].mxu0
      %v1510 = vadd.f32 %v1250, %v1509
      %v1511 = vpop.f32.mrb[0].mxu0
      %1512 = vmatprep.mubr.bf16.mxu0 0
      %1513 = vmatmul.mubr.bf16.gmra.mrb[0].mxu0 %v1395
      %v1514 = vpop.f32.mrb[0].mxu0
      %v1515 = vadd.f32 %v1255, %v1514
      %v1516 = vpop.f32.mrb[0].mxu0
      %v1517 = vpop.f32.mrb[0].mxu0
      %v1518 = vadd.f32 %v1258, %v1517
      %v1519 = vpop.f32.mrb[0].mxu0
      %1520 = vmatprep.mubr.bf16.mxu0 0
      %1521 = vmatmul.mubr.bf16.gmra.mrb[0].mxu0 %v1398
      %v1522 = vpop.f32.mrb[0].mxu0
      %v1523 = vadd.f32 %v1263, %v1522
      %v1524 = vpop.f32.mrb[0].mxu0
      %v1525 = vpop.f32.mrb[0].mxu0
      %v1526 = vadd.f32 %v1266, %v1525
      %v1527 = vpop.f32.mrb[0].mxu0
      %1528 = vmatprep.mubr.bf16.mxu0 0
      %1529 = vmatmul.mubr.bf16.gmra.mrb[0].mxu0 %v1401
      %v1530 = vpop.f32.mrb[0].mxu0
      %v1531 = vadd.f32 %v1271, %v1530
      %v1532 = vpop.f32.mrb[0].mxu0
      %v1533 = vpop.f32.mrb[0].mxu0
      %v1534 = vadd.f32 %v1274, %v1533
      %v1535 = vpop.f32.mrb[0].mxu0
      %1536 = vmatprep.mubr.bf16.mxu0 0
      %1537 = vmatmul.mubr.bf16.gmra.mrb[0].mxu0 %v1404
      %v1538 = vpop.f32.mrb[0].mxu0
      %v1539 = vadd.f32 %v1279, %v1538
      %v1540 = vpop.f32.mrb[0].mxu0
      %v1541 = vpop.f32.mrb[0].mxu0
      %v1542 = vadd.f32 %v1282, %v1541
      %v1543 = vpop.f32.mrb[0].mxu0
      %1544 = vmatprep.mubr.bf16.mxu0 0
      %1545 = vmatmul.mubr.bf16.gmra.mrb[0].mxu0 %v1407
      %v1546 = vpop.f32.mrb[0].mxu0
      %v1547 = vadd.f32 %v1287, %v1546
      %v1548 = vpop.f32.mrb[0].mxu0
      %v1549 = vpop.f32.mrb[0].mxu0
      %v1550 = vadd.f32 %v1290, %v1549
      %v1551 = vpop.f32.mrb[0].mxu0
      %1552 = vmatprep.mubr.bf16.mxu0 0
      %1553 = vmatmul.mubr.bf16.gmra.mrb[0].mxu0 %v1410
      %v1554 = vpop.f32.mrb[0].mxu0
      %v1555 = vadd.f32 %v1295, %v1554
      %v1556 = vpop.f32.mrb[0].mxu0
      %v1557 = vpop.f32.mrb[0].mxu0
      %v1558 = vadd.f32 %v1298, %v1557
      %v1559 = vpop.f32.mrb[0].mxu0
      %1560 = vmatprep.mubr.bf16.mxu0 0
      %1561 = vmatmul.mubr.bf16.gmra.mrb[0].mxu0 %v1413
      %v1562 = vpop.f32.mrb[0].mxu0
      %v1563 = vadd.f32 %v1303, %v1562
      %v1564 = vpop.f32.mrb[0].mxu0
      %v1565 = vpop.f32.mrb[0].mxu0
      %v1566 = vadd.f32 %v1306, %v1565
      %v1567 = vpop.f32.mrb[0].mxu0
      %1568 = vmatprep.mubr.bf16.mxu0 0
      %1569 = vmatmul.mubr.bf16.gmra.mrb[0].mxu0 %v1416
      %v1570 = vpop.f32.mrb[0].mxu0
      %v1571 = vadd.f32 %v1311, %v1570
      %v1572 = vpop.f32.mrb[0].mxu0
      %v1573 = vpop.f32.mrb[0].mxu0
      %v1574 = vadd.f32 %v1314, %v1573
      %v1575 = vpop.f32.mrb[0].mxu0
      %1576 = vmatprep.mubr.bf16.mxu0 0
      %1577 = vmatmul.mubr.bf16.gmra.mrb[0].mxu0 %v1419
      %v1578 = vpop.f32.mrb[0].mxu0
      %v1579 = vadd.f32 %v1319, %v1578
      %v1580 = vpop.f32.mrb[0].mxu0
      %v1581 = vpop.f32.mrb[0].mxu0
      %v1582 = vadd.f32 %v1322, %v1581
      %v1583 = vpop.f32.mrb[0].mxu0
      %1584 = vdwg.mxu0
      %s1585 = scalar_lea.vmem %s1, 8
      %v1586 = vld [vmem:[%s1585] sm:$0xf]
      %v1603 = vunpack.c.l.b16 %v480
      %v1604 = vunpack.c.l.b16 %v691
      %v1605 = vunpack.c.l.b16 %v483
      %v1606 = vunpack.c.l.b16 %v692
      %v1607 = vunpack.c.l.b16 %v486
      %v1608 = vunpack.c.l.b16 %v693
      %v1609 = vunpack.c.l.b16 %v489
      %v1610 = vunpack.c.l.b16 %v694
      %v1611 = vunpack.c.l.b16 %v492
      %v1612 = vunpack.c.l.b16 %v695
      %v1613 = vunpack.c.l.b16 %v495
      %v1614 = vunpack.c.l.b16 %v696
      %v1615 = vunpack.c.l.b16 %v498
      %v1616 = vunpack.c.l.b16 %v697
      %v1617 = vunpack.c.l.b16 %v501
      %v1618 = vunpack.c.l.b16 %v698
      %v1619 = vunpack.c.l.b16 %v504
      %v1620 = vunpack.c.l.b16 %v699
      %v1621 = vunpack.c.l.b16 %v507
      %v1622 = vunpack.c.l.b16 %v700
      %v1623 = vunpack.c.l.b16 %v510
      %v1624 = vunpack.c.l.b16 %v701
      %v1625 = vunpack.c.l.b16 %v513
      %v1626 = vunpack.c.l.b16 %v702
      %v1627 = vunpack.c.l.b16 %v516
      %v1628 = vunpack.c.l.b16 %v703
      %v1629 = vunpack.c.l.b16 %v519
      %v1630 = vunpack.c.l.b16 %v704
      %v1631 = vunpack.c.l.b16 %v522
      %v1632 = vunpack.c.l.b16 %v705
      %v1633 = vunpack.c.l.b16 %v525
      %v1634 = vunpack.c.l.b16 %v706
      %v1635 = vpack.c.b16 %v1604, %v1603
      %v1636 = vpack.c.b16 %v1606, %v1605
      %v1637 = vpack.c.b16 %v1608, %v1607
      %v1638 = vpack.c.b16 %v1610, %v1609
      %v1639 = vpack.c.b16 %v1612, %v1611
      %v1640 = vpack.c.b16 %v1614, %v1613
      %v1641 = vpack.c.b16 %v1616, %v1615
      %v1642 = vpack.c.b16 %v1618, %v1617
      %v1643 = vpack.c.b16 %v1620, %v1619
      %v1644 = vpack.c.b16 %v1622, %v1621
      %v1645 = vpack.c.b16 %v1624, %v1623
      %v1646 = vpack.c.b16 %v1626, %v1625
      %v1647 = vpack.c.b16 %v1628, %v1627
      %v1648 = vpack.c.b16 %v1630, %v1629
      %v1649 = vpack.c.b16 %v1632, %v1631
      %v1650 = vpack.c.b16 %v1634, %v1633
      %v1652 = vsel %vm254, %v1635, 0
      %v1655 = vsel %vm254, %v1636, 0
      %v1658 = vsel %vm254, %v1637, 0
      %v1661 = vsel %vm254, %v1638, 0
      %v1664 = vsel %vm254, %v1639, 0
      %v1667 = vsel %vm254, %v1640, 0
      %v1670 = vsel %vm254, %v1641, 0
      %v1673 = vsel %vm254, %v1642, 0
      %v1676 = vsel %vm254, %v1643, 0
      %v1679 = vsel %vm254, %v1644, 0
      %v1682 = vsel %vm254, %v1645, 0
      %v1685 = vsel %vm254, %v1646, 0
      %v1688 = vsel %vm254, %v1647, 0
      %v1691 = vsel %vm254, %v1648, 0
      %v1694 = vsel %vm254, %v1649, 0
      %v1697 = vsel %vm254, %v1650, 0
      %v1700 = vsel %vm1160, %v1586, 0
      %1702 = vmatprep.subr.bf16.mxu0 0
      %1703 = vmatpush1.bf16.msra.mxu0 %v1700
      %1704 = vmatprep.subr.bf16.mxu0 0
      %1705 = vmatpush1.bf16.msra.mxu0 0
      %1706 = vmatprep.subr.bf16.mxu0 0
      %1707 = vmatpush1.bf16.msra.mxu0 0
      %1708 = vmatprep.subr.bf16.mxu0 0
      %1709 = vmatpush1.bf16.msra.mxu0 0
      %1710 = vmatprep.subr.bf16.mxu0 0
      %1711 = vmatpush1.bf16.msra.mxu0 0
      %1712 = vmatprep.subr.bf16.mxu0 0
      %1713 = vmatpush1.bf16.msra.mxu0 0
      %1714 = vmatprep.subr.bf16.mxu0 0
      %1715 = vmatpush1.bf16.msra.mxu0 0
      %1716 = vmatprep.subr.bf16.mxu0 0
      %1717 = vmatpush1.bf16.msra.mxu0 0
      %1718 = vmatprep.subr.bf16.mxu0 0
      %1719 = vmatpush1.bf16.msra.mxu0 0
      %1720 = vmatprep.subr.bf16.mxu0 0
      %1721 = vmatpush1.bf16.msra.mxu0 0
      %1722 = vmatprep.subr.bf16.mxu0 0
      %1723 = vmatpush1.bf16.msra.mxu0 0
      %1724 = vmatprep.subr.bf16.mxu0 0
      %1725 = vmatpush1.bf16.msra.mxu0 0
      %1726 = vmatprep.subr.bf16.mxu0 0
      %1727 = vmatpush1.bf16.msra.mxu0 0
      %1728 = vmatprep.subr.bf16.mxu0 0
      %1729 = vmatpush1.bf16.msra.mxu0 0
      %1730 = vmatprep.subr.bf16.mxu0 0
      %1731 = vmatpush1.bf16.msra.mxu0 0
      %1732 = vmatprep.subr.bf16.mxu0 0
      %1733 = vmatpush1.bf16.msra.mxu0 0
      %1734 = vmatprep.mubr.bf16.mxu0 0
      %1735 = vmatmul.mubr.bf16.gmra.mrb[0].mxu0 %v1652
      %v1736 = vpop.f32.mrb[0].mxu0
      %v1737 = vadd.f32 0.0, %v1736
      %v1738 = vpop.f32.mrb[0].mxu0
      %v1739 = vpop.f32.mrb[0].mxu0
      %v1740 = vadd.f32 0.0, %v1739
      %v1741 = vpop.f32.mrb[0].mxu0
      %1742 = vmatprep.mubr.bf16.mxu0 0
      %1743 = vmatmul.mubr.bf16.gmra.mrb[0].mxu0 %v1655
      %v1744 = vpop.f32.mrb[0].mxu0
      %v1745 = vadd.f32 0.0, %v1744
      %v1746 = vpop.f32.mrb[0].mxu0
      %v1747 = vpop.f32.mrb[0].mxu0
      %v1748 = vadd.f32 0.0, %v1747
      %v1749 = vpop.f32.mrb[0].mxu0
      %1750 = vmatprep.mubr.bf16.mxu0 0
      %1751 = vmatmul.mubr.bf16.gmra.mrb[0].mxu0 %v1658
      %v1752 = vpop.f32.mrb[0].mxu0
      %v1753 = vadd.f32 0.0, %v1752
      %v1754 = vpop.f32.mrb[0].mxu0
      %v1755 = vpop.f32.mrb[0].mxu0
      %v1756 = vadd.f32 0.0, %v1755
      %v1757 = vpop.f32.mrb[0].mxu0
      %1758 = vmatprep.mubr.bf16.mxu0 0
      %1759 = vmatmul.mubr.bf16.gmra.mrb[0].mxu0 %v1661
      %v1760 = vpop.f32.mrb[0].mxu0
      %v1761 = vadd.f32 0.0, %v1760
      %v1762 = vpop.f32.mrb[0].mxu0
      %v1763 = vpop.f32.mrb[0].mxu0
      %v1764 = vadd.f32 0.0, %v1763
      %v1765 = vpop.f32.mrb[0].mxu0
      %1766 = vmatprep.mubr.bf16.mxu0 0
      %1767 = vmatmul.mubr.bf16.gmra.mrb[0].mxu0 %v1664
      %v1768 = vpop.f32.mrb[0].mxu0
      %v1769 = vadd.f32 0.0, %v1768
      %v1770 = vpop.f32.mrb[0].mxu0
      %v1771 = vpop.f32.mrb[0].mxu0
      %v1772 = vadd.f32 0.0, %v1771
      %v1773 = vpop.f32.mrb[0].mxu0
      %1774 = vmatprep.mubr.bf16.mxu0 0
      %1775 = vmatmul.mubr.bf16.gmra.mrb[0].mxu0 %v1667
      %v1776 = vpop.f32.mrb[0].mxu0
      %v1777 = vadd.f32 0.0, %v1776
      %v1778 = vpop.f32.mrb[0].mxu0
      %v1779 = vpop.f32.mrb[0].mxu0
      %v1780 = vadd.f32 0.0, %v1779
      %v1781 = vpop.f32.mrb[0].mxu0
      %1782 = vmatprep.mubr.bf16.mxu0 0
      %1783 = vmatmul.mubr.bf16.gmra.mrb[0].mxu0 %v1670
      %v1784 = vpop.f32.mrb[0].mxu0
      %v1785 = vadd.f32 0.0, %v1784
      %v1786 = vpop.f32.mrb[0].mxu0
      %v1787 = vpop.f32.mrb[0].mxu0
      %v1788 = vadd.f32 0.0, %v1787
      %v1789 = vpop.f32.mrb[0].mxu0
      %1790 = vmatprep.mubr.bf16.mxu0 0
      %1791 = vmatmul.mubr.bf16.gmra.mrb[0].mxu0 %v1673
      %v1792 = vpop.f32.mrb[0].mxu0
      %v1793 = vadd.f32 0.0, %v1792
      %v1794 = vpop.f32.mrb[0].mxu0
      %v1795 = vpop.f32.mrb[0].mxu0
      %v1796 = vadd.f32 0.0, %v1795
      %v1797 = vpop.f32.mrb[0].mxu0
      %1798 = vmatprep.mubr.bf16.mxu0 0
      %1799 = vmatmul.mubr.bf16.gmra.mrb[0].mxu0 %v1676
      %v1800 = vpop.f32.mrb[0].mxu0
      %v1801 = vadd.f32 0.0, %v1800
      %v1802 = vpop.f32.mrb[0].mxu0
      %v1803 = vpop.f32.mrb[0].mxu0
      %v1804 = vadd.f32 0.0, %v1803
      %v1805 = vpop.f32.mrb[0].mxu0
      %1806 = vmatprep.mubr.bf16.mxu0 0
      %1807 = vmatmul.mubr.bf16.gmra.mrb[0].mxu0 %v1679
      %v1808 = vpop.f32.mrb[0].mxu0
      %v1809 = vadd.f32 0.0, %v1808
      %v1810 = vpop.f32.mrb[0].mxu0
      %v1811 = vpop.f32.mrb[0].mxu0
      %v1812 = vadd.f32 0.0, %v1811
      %v1813 = vpop.f32.mrb[0].mxu0
      %1814 = vmatprep.mubr.bf16.mxu0 0
      %1815 = vmatmul.mubr.bf16.gmra.mrb[0].mxu0 %v1682
      %v1816 = vpop.f32.mrb[0].mxu0
      %v1817 = vadd.f32 0.0, %v1816
      %v1818 = vpop.f32.mrb[0].mxu0
      %v1819 = vpop.f32.mrb[0].mxu0
      %v1820 = vadd.f32 0.0, %v1819
      %v1821 = vpop.f32.mrb[0].mxu0
      %1822 = vmatprep.mubr.bf16.mxu0 0
      %1823 = vmatmul.mubr.bf16.gmra.mrb[0].mxu0 %v1685
      %v1824 = vpop.f32.mrb[0].mxu0
      %v1825 = vadd.f32 0.0, %v1824
      %v1826 = vpop.f32.mrb[0].mxu0
      %v1827 = vpop.f32.mrb[0].mxu0
      %v1828 = vadd.f32 0.0, %v1827
      %v1829 = vpop.f32.mrb[0].mxu0
      %1830 = vmatprep.mubr.bf16.mxu0 0
      %1831 = vmatmul.mubr.bf16.gmra.mrb[0].mxu0 %v1688
      %v1832 = vpop.f32.mrb[0].mxu0
      %v1833 = vadd.f32 0.0, %v1832
      %v1834 = vpop.f32.mrb[0].mxu0
      %v1835 = vpop.f32.mrb[0].mxu0
      %v1836 = vadd.f32 0.0, %v1835
      %v1837 = vpop.f32.mrb[0].mxu0
      %1838 = vmatprep.mubr.bf16.mxu0 0
      %1839 = vmatmul.mubr.bf16.gmra.mrb[0].mxu0 %v1691
      %v1840 = vpop.f32.mrb[0].mxu0
      %v1841 = vadd.f32 0.0, %v1840
      %v1842 = vpop.f32.mrb[0].mxu0
      %v1843 = vpop.f32.mrb[0].mxu0
      %v1844 = vadd.f32 0.0, %v1843
      %v1845 = vpop.f32.mrb[0].mxu0
      %1846 = vmatprep.mubr.bf16.mxu0 0
      %1847 = vmatmul.mubr.bf16.gmra.mrb[0].mxu0 %v1694
      %v1848 = vpop.f32.mrb[0].mxu0
      %v1849 = vadd.f32 0.0, %v1848
      %v1850 = vpop.f32.mrb[0].mxu0
      %v1851 = vpop.f32.mrb[0].mxu0
      %v1852 = vadd.f32 0.0, %v1851
      %v1853 = vpop.f32.mrb[0].mxu0
      %1854 = vmatprep.mubr.bf16.mxu0 0
      %1855 = vmatmul.mubr.bf16.gmra.mrb[0].mxu0 %v1697
      %v1856 = vpop.f32.mrb[0].mxu0
      %v1857 = vadd.f32 0.0, %v1856
      %v1858 = vpop.f32.mrb[0].mxu0
      %v1859 = vpop.f32.mrb[0].mxu0
      %v1860 = vadd.f32 0.0, %v1859
      %v1861 = vpop.f32.mrb[0].mxu0
      %1862 = vdwg.mxu0
      %v1863 = vadd.f32 %v1459, %v1737
      %v1864 = vadd.f32 %v1462, %v1740
      %v1865 = vadd.f32 %v1467, %v1745
      %v1866 = vadd.f32 %v1470, %v1748
      %v1867 = vadd.f32 %v1475, %v1753
      %v1868 = vadd.f32 %v1478, %v1756
      %v1869 = vadd.f32 %v1483, %v1761
      %v1870 = vadd.f32 %v1486, %v1764
      %v1871 = vadd.f32 %v1491, %v1769
      %v1872 = vadd.f32 %v1494, %v1772
      %v1873 = vadd.f32 %v1499, %v1777
      %v1874 = vadd.f32 %v1502, %v1780
      %v1875 = vadd.f32 %v1507, %v1785
      %v1876 = vadd.f32 %v1510, %v1788
      %v1877 = vadd.f32 %v1515, %v1793
      %v1878 = vadd.f32 %v1518, %v1796
      %v1879 = vadd.f32 %v1523, %v1801
      %v1880 = vadd.f32 %v1526, %v1804
      %v1881 = vadd.f32 %v1531, %v1809
      %v1882 = vadd.f32 %v1534, %v1812
      %v1883 = vadd.f32 %v1539, %v1817
      %v1884 = vadd.f32 %v1542, %v1820
      %v1885 = vadd.f32 %v1547, %v1825
      %v1886 = vadd.f32 %v1550, %v1828
      %v1887 = vadd.f32 %v1555, %v1833
      %v1888 = vadd.f32 %v1558, %v1836
      %v1889 = vadd.f32 %v1563, %v1841
      %v1890 = vadd.f32 %v1566, %v1844
      %v1891 = vadd.f32 %v1571, %v1849
      %v1892 = vadd.f32 %v1574, %v1852
      %v1893 = vadd.f32 %v1579, %v1857
      %v1894 = vadd.f32 %v1582, %v1860
      %v1895 = vld [vmem:[#allocation2 + $0x8] sm:$0xf]
      %v1896 = vld [vmem:[#allocation2 + $0xc] sm:$0xf]
      %v1897 = vld [vmem:[#allocation2 + $0x10] sm:$0x1]
      %v1898 = vld [vmem:[#allocation2 + $0x1c] sm:$0xf]
      %v1899 = vld [vmem:[#allocation2 + $0x20] sm:$0xf]
      %v1900 = vld [vmem:[#allocation2 + $0x24] sm:$0x1]
      %v1901 = vld [vmem:[#allocation2 + $0x30] sm:$0xf]
      %v1902 = vld [vmem:[#allocation2 + $0x34] sm:$0xf]
      %v1903 = vld [vmem:[#allocation2 + $0x38] sm:$0x1]
      %v1904 = vld [vmem:[#allocation2 + $0x44] sm:$0xf]
      %v1905 = vld [vmem:[#allocation2 + $0x48] sm:$0xf]
      %v1906 = vld [vmem:[#allocation2 + $0x4c] sm:$0x1]
      %v1907 = vld [vmem:[#allocation2 + $0x58] sm:$0xf]
      %v1908 = vld [vmem:[#allocation2 + $0x5c] sm:$0xf]
      %v1909 = vld [vmem:[#allocation2 + $0x60] sm:$0x1]
      %v1910 = vld [vmem:[#allocation2 + $0x6c] sm:$0xf]
      %v1911 = vld [vmem:[#allocation2 + $0x70] sm:$0xf]
      %v1912 = vld [vmem:[#allocation2 + $0x74] sm:$0x1]
      %v1913 = vld [vmem:[#allocation2 + $0x80] sm:$0xf]
      %v1914 = vld [vmem:[#allocation2 + $0x84] sm:$0xf]
      %v1915 = vld [vmem:[#allocation2 + $0x88] sm:$0x1]
      %v1916 = vld [vmem:[#allocation2 + $0x94] sm:$0xf]
      %v1917 = vld [vmem:[#allocation2 + $0x98] sm:$0xf]
      %v1918 = vld [vmem:[#allocation2 + $0x9c] sm:$0x1]
      %v1919 = vld [vmem:[#allocation2 + $0xa8] sm:$0xf]
      %v1920 = vld [vmem:[#allocation2 + $0xac] sm:$0xf]
      %v1921 = vld [vmem:[#allocation2 + $0xb0] sm:$0x1]
      %v1922 = vld [vmem:[#allocation2 + $0xbc] sm:$0xf]
      %v1923 = vld [vmem:[#allocation2 + $0xc0] sm:$0xf]
      %v1924 = vld [vmem:[#allocation2 + $0xc4] sm:$0x1]
      %v1925 = vld [vmem:[#allocation2 + $0xd0] sm:$0xf]
      %v1926 = vld [vmem:[#allocation2 + $0xd4] sm:$0xf]
      %v1927 = vld [vmem:[#allocation2 + $0xd8] sm:$0x1]
      %v1928 = vld [vmem:[#allocation2 + $0xe4] sm:$0xf]
      %v1929 = vld [vmem:[#allocation2 + $0xe8] sm:$0xf]
      %v1930 = vld [vmem:[#allocation2 + $0xec] sm:$0x1]
      %v1931 = vld [vmem:[#allocation2 + $0xf8] sm:$0xf]
      %v1932 = vld [vmem:[#allocation2 + $0xfc] sm:$0xf]
      %v1933 = vld [vmem:[#allocation2 + $0x100] sm:$0x1]
      %v1934 = vld [vmem:[#allocation2 + $0x10c] sm:$0xf]
      %v1935 = vld [vmem:[#allocation2 + $0x110] sm:$0xf]
      %v1936 = vld [vmem:[#allocation2 + $0x114] sm:$0x1]
      %v1937 = vld [vmem:[#allocation2 + $0x120] sm:$0xf]
      %v1938 = vld [vmem:[#allocation2 + $0x124] sm:$0xf]
      %v1939 = vld [vmem:[#allocation2 + $0x128] sm:$0x1]
      %v1940 = vld [vmem:[#allocation2 + $0x134] sm:$0xf]
      %v1941 = vld [vmem:[#allocation2 + $0x138] sm:$0xf]
      %v1942 = vld [vmem:[#allocation2 + $0x13c] sm:$0x1]
      %vm1943 = vsmask.f32 3328
      %vm1944 = vsmask.f32 7440
      %vm1945 = vmor %vm1943, %vm1944
      %v1947 = vshrl.u32 %v1895, 16
      %v1949 = vrot.slane %v1947, 4
      %v1950 = vshll.u32 %v1895, 16
      %v1952 = vrot.slane %v1950, 5
      %v1953 = vor.u32 %v1949, %v1952
      %v1954 = vrot.slane %v1953, 4
      %v1956 = vshll.u32 %v1896, 16
      %v1958 = vrot.slane %v1956, 5
      %v1959 = vsel %vm1945, %v1954, %v1958
      %v1960 = vshrl.u32 %v1896, 16
      %v1962 = vrot.slane %v1960, 4
      %v1963 = vor.u32 %v1962, %v1958
      %v1964 = vrot.slane %v1963, 4
      %v1966 = vshll.u32 %v1897, 16
      %v1968 = vrot.slane %v1966, 5
      %v1969 = vsel %vm1945, %v1964, %v1968
      %v1971 = vshrl.u32 %v1898, 16
      %v1973 = vrot.slane %v1971, 4
      %v1974 = vshll.u32 %v1898, 16
      %v1976 = vrot.slane %v1974, 5
      %v1977 = vor.u32 %v1973, %v1976
      %v1978 = vrot.slane %v1977, 4
      %v1980 = vshll.u32 %v1899, 16
      %v1982 = vrot.slane %v1980, 5
      %v1983 = vsel %vm1945, %v1978, %v1982
      %v1984 = vshrl.u32 %v1899, 16
      %v1986 = vrot.slane %v1984, 4
      %v1987 = vor.u32 %v1986, %v1982
      %v1988 = vrot.slane %v1987, 4
      %v1990 = vshll.u32 %v1900, 16
      %v1992 = vrot.slane %v1990, 5
      %v1993 = vsel %vm1945, %v1988, %v1992
      %v1995 = vshrl.u32 %v1901, 16
      %v1997 = vrot.slane %v1995, 4
      %v1998 = vshll.u32 %v1901, 16
      %v2000 = vrot.slane %v1998, 5
      %v2001 = vor.u32 %v1997, %v2000
      %v2002 = vrot.slane %v2001, 4
      %v2004 = vshll.u32 %v1902, 16
      %v2006 = vrot.slane %v2004, 5
      %v2007 = vsel %vm1945, %v2002, %v2006
      %v2008 = vshrl.u32 %v1902, 16
      %v2010 = vrot.slane %v2008, 4
      %v2011 = vor.u32 %v2010, %v2006
      %v2012 = vrot.slane %v2011, 4
      %v2014 = vshll.u32 %v1903, 16
      %v2016 = vrot.slane %v2014, 5
      %v2017 = vsel %vm1945, %v2012, %v2016
      %v2019 = vshrl.u32 %v1904, 16
      %v2021 = vrot.slane %v2019, 4
      %v2022 = vshll.u32 %v1904, 16
      %v2024 = vrot.slane %v2022, 5
      %v2025 = vor.u32 %v2021, %v2024
      %v2026 = vrot.slane %v2025, 4
      %v2028 = vshll.u32 %v1905, 16
      %v2030 = vrot.slane %v2028, 5
      %v2031 = vsel %vm1945, %v2026, %v2030
      %v2032 = vshrl.u32 %v1905, 16
      %v2034 = vrot.slane %v2032, 4
      %v2035 = vor.u32 %v2034, %v2030
      %v2036 = vrot.slane %v2035, 4
      %v2038 = vshll.u32 %v1906, 16
      %v2040 = vrot.slane %v2038, 5
      %v2041 = vsel %vm1945, %v2036, %v2040
      %v2043 = vshrl.u32 %v1907, 16
      %v2045 = vrot.slane %v2043, 4
      %v2046 = vshll.u32 %v1907, 16
      %v2048 = vrot.slane %v2046, 5
      %v2049 = vor.u32 %v2045, %v2048
      %v2050 = vrot.slane %v2049, 4
      %v2052 = vshll.u32 %v1908, 16
      %v2054 = vrot.slane %v2052, 5
      %v2055 = vsel %vm1945, %v2050, %v2054
      %v2056 = vshrl.u32 %v1908, 16
      %v2058 = vrot.slane %v2056, 4
      %v2059 = vor.u32 %v2058, %v2054
      %v2060 = vrot.slane %v2059, 4
      %v2062 = vshll.u32 %v1909, 16
      %v2064 = vrot.slane %v2062, 5
      %v2065 = vsel %vm1945, %v2060, %v2064
      %v2067 = vshrl.u32 %v1910, 16
      %v2069 = vrot.slane %v2067, 4
      %v2070 = vshll.u32 %v1910, 16
      %v2072 = vrot.slane %v2070, 5
      %v2073 = vor.u32 %v2069, %v2072
      %v2074 = vrot.slane %v2073, 4
      %v2076 = vshll.u32 %v1911, 16
      %v2078 = vrot.slane %v2076, 5
      %v2079 = vsel %vm1945, %v2074, %v2078
      %v2080 = vshrl.u32 %v1911, 16
      %v2082 = vrot.slane %v2080, 4
      %v2083 = vor.u32 %v2082, %v2078
      %v2084 = vrot.slane %v2083, 4
      %v2086 = vshll.u32 %v1912, 16
      %v2088 = vrot.slane %v2086, 5
      %v2089 = vsel %vm1945, %v2084, %v2088
      %v2091 = vshrl.u32 %v1913, 16
      %v2093 = vrot.slane %v2091, 4
      %v2094 = vshll.u32 %v1913, 16
      %v2096 = vrot.slane %v2094, 5
      %v2097 = vor.u32 %v2093, %v2096
      %v2098 = vrot.slane %v2097, 4
      %v2100 = vshll.u32 %v1914, 16
      %v2102 = vrot.slane %v2100, 5
      %v2103 = vsel %vm1945, %v2098, %v2102
      %v2104 = vshrl.u32 %v1914, 16
      %v2106 = vrot.slane %v2104, 4
      %v2107 = vor.u32 %v2106, %v2102
      %v2108 = vrot.slane %v2107, 4
      %v2110 = vshll.u32 %v1915, 16
      %v2112 = vrot.slane %v2110, 5
      %v2113 = vsel %vm1945, %v2108, %v2112
      %v2115 = vshrl.u32 %v1916, 16
      %v2117 = vrot.slane %v2115, 4
      %v2118 = vshll.u32 %v1916, 16
      %v2120 = vrot.slane %v2118, 5
      %v2121 = vor.u32 %v2117, %v2120
      %v2122 = vrot.slane %v2121, 4
      %v2124 = vshll.u32 %v1917, 16
      %v2126 = vrot.slane %v2124, 5
      %v2127 = vsel %vm1945, %v2122, %v2126
      %v2128 = vshrl.u32 %v1917, 16
      %v2130 = vrot.slane %v2128, 4
      %v2131 = vor.u32 %v2130, %v2126
      %v2132 = vrot.slane %v2131, 4
      %v2134 = vshll.u32 %v1918, 16
      %v2136 = vrot.slane %v2134, 5
      %v2137 = vsel %vm1945, %v2132, %v2136
      %v2139 = vshrl.u32 %v1919, 16
      %v2141 = vrot.slane %v2139, 4
      %v2142 = vshll.u32 %v1919, 16
      %v2144 = vrot.slane %v2142, 5
      %v2145 = vor.u32 %v2141, %v2144
      %v2146 = vrot.slane %v2145, 4
      %v2148 = vshll.u32 %v1920, 16
      %v2150 = vrot.slane %v2148, 5
      %v2151 = vsel %vm1945, %v2146, %v2150
      %v2152 = vshrl.u32 %v1920, 16
      %v2154 = vrot.slane %v2152, 4
      %v2155 = vor.u32 %v2154, %v2150
      %v2156 = vrot.slane %v2155, 4
      %v2158 = vshll.u32 %v1921, 16
      %v2160 = vrot.slane %v2158, 5
      %v2161 = vsel %vm1945, %v2156, %v2160
      %v2163 = vshrl.u32 %v1922, 16
      %v2165 = vrot.slane %v2163, 4
      %v2166 = vshll.u32 %v1922, 16
      %v2168 = vrot.slane %v2166, 5
      %v2169 = vor.u32 %v2165, %v2168
      %v2170 = vrot.slane %v2169, 4
      %v2172 = vshll.u32 %v1923, 16
      %v2174 = vrot.slane %v2172, 5
      %v2175 = vsel %vm1945, %v2170, %v2174
      %v2176 = vshrl.u32 %v1923, 16
      %v2178 = vrot.slane %v2176, 4
      %v2179 = vor.u32 %v2178, %v2174
      %v2180 = vrot.slane %v2179, 4
      %v2182 = vshll.u32 %v1924, 16
      %v2184 = vrot.slane %v2182, 5
      %v2185 = vsel %vm1945, %v2180, %v2184
      %v2187 = vshrl.u32 %v1925, 16
      %v2189 = vrot.slane %v2187, 4
      %v2190 = vshll.u32 %v1925, 16
      %v2192 = vrot.slane %v2190, 5
      %v2193 = vor.u32 %v2189, %v2192
      %v2194 = vrot.slane %v2193, 4
      %v2196 = vshll.u32 %v1926, 16
      %v2198 = vrot.slane %v2196, 5
      %v2199 = vsel %vm1945, %v2194, %v2198
      %v2200 = vshrl.u32 %v1926, 16
      %v2202 = vrot.slane %v2200, 4
      %v2203 = vor.u32 %v2202, %v2198
      %v2204 = vrot.slane %v2203, 4
      %v2206 = vshll.u32 %v1927, 16
      %v2208 = vrot.slane %v2206, 5
      %v2209 = vsel %vm1945, %v2204, %v2208
      %v2211 = vshrl.u32 %v1928, 16
      %v2213 = vrot.slane %v2211, 4
      %v2214 = vshll.u32 %v1928, 16
      %v2216 = vrot.slane %v2214, 5
      %v2217 = vor.u32 %v2213, %v2216
      %v2218 = vrot.slane %v2217, 4
      %v2220 = vshll.u32 %v1929, 16
      %v2222 = vrot.slane %v2220, 5
      %v2223 = vsel %vm1945, %v2218, %v2222
      %v2224 = vshrl.u32 %v1929, 16
      %v2226 = vrot.slane %v2224, 4
      %v2227 = vor.u32 %v2226, %v2222
      %v2228 = vrot.slane %v2227, 4
      %v2230 = vshll.u32 %v1930, 16
      %v2232 = vrot.slane %v2230, 5
      %v2233 = vsel %vm1945, %v2228, %v2232
      %v2235 = vshrl.u32 %v1931, 16
      %v2237 = vrot.slane %v2235, 4
      %v2238 = vshll.u32 %v1931, 16
      %v2240 = vrot.slane %v2238, 5
      %v2241 = vor.u32 %v2237, %v2240
      %v2242 = vrot.slane %v2241, 4
      %v2244 = vshll.u32 %v1932, 16
      %v2246 = vrot.slane %v2244, 5
      %v2247 = vsel %vm1945, %v2242, %v2246
      %v2248 = vshrl.u32 %v1932, 16
      %v2250 = vrot.slane %v2248, 4
      %v2251 = vor.u32 %v2250, %v2246
      %v2252 = vrot.slane %v2251, 4
      %v2254 = vshll.u32 %v1933, 16
      %v2256 = vrot.slane %v2254, 5
      %v2257 = vsel %vm1945, %v2252, %v2256
      %v2259 = vshrl.u32 %v1934, 16
      %v2261 = vrot.slane %v2259, 4
      %v2262 = vshll.u32 %v1934, 16
      %v2264 = vrot.slane %v2262, 5
      %v2265 = vor.u32 %v2261, %v2264
      %v2266 = vrot.slane %v2265, 4
      %v2268 = vshll.u32 %v1935, 16
      %v2270 = vrot.slane %v2268, 5
      %v2271 = vsel %vm1945, %v2266, %v2270
      %v2272 = vshrl.u32 %v1935, 16
      %v2274 = vrot.slane %v2272, 4
      %v2275 = vor.u32 %v2274, %v2270
      %v2276 = vrot.slane %v2275, 4
      %v2278 = vshll.u32 %v1936, 16
      %v2280 = vrot.slane %v2278, 5
      %v2281 = vsel %vm1945, %v2276, %v2280
      %v2283 = vshrl.u32 %v1937, 16
      %v2285 = vrot.slane %v2283, 4
      %v2286 = vshll.u32 %v1937, 16
      %v2288 = vrot.slane %v2286, 5
      %v2289 = vor.u32 %v2285, %v2288
      %v2290 = vrot.slane %v2289, 4
      %v2292 = vshll.u32 %v1938, 16
      %v2294 = vrot.slane %v2292, 5
      %v2295 = vsel %vm1945, %v2290, %v2294
      %v2296 = vshrl.u32 %v1938, 16
      %v2298 = vrot.slane %v2296, 4
      %v2299 = vor.u32 %v2298, %v2294
      %v2300 = vrot.slane %v2299, 4
      %v2302 = vshll.u32 %v1939, 16
      %v2304 = vrot.slane %v2302, 5
      %v2305 = vsel %vm1945, %v2300, %v2304
      %v2307 = vshrl.u32 %v1940, 16
      %v2309 = vrot.slane %v2307, 4
      %v2310 = vshll.u32 %v1940, 16
      %v2312 = vrot.slane %v2310, 5
      %v2313 = vor.u32 %v2309, %v2312
      %v2314 = vrot.slane %v2313, 4
      %v2316 = vshll.u32 %v1941, 16
      %v2318 = vrot.slane %v2316, 5
      %v2319 = vsel %vm1945, %v2314, %v2318
      %v2320 = vshrl.u32 %v1941, 16
      %v2322 = vrot.slane %v2320, 4
      %v2323 = vor.u32 %v2322, %v2318
      %v2324 = vrot.slane %v2323, 4
      %v2326 = vshll.u32 %v1942, 16
      %v2328 = vrot.slane %v2326, 5
      %v2329 = vsel %vm1945, %v2324, %v2328
      %s2330 = scalar_lea.vmem %s1, 12
      %v2331 = vld [vmem:[%s2330] sm:$0xf]
      %v2332 = vunpack.c.l.b16 %v1959
      %v2333 = vunpack.c.l.b16 %v1969
      %v2334 = vunpack.c.l.b16 %v1983
      %v2335 = vunpack.c.l.b16 %v1993
      %v2336 = vunpack.c.l.b16 %v2007
      %v2337 = vunpack.c.l.b16 %v2017
      %v2338 = vunpack.c.l.b16 %v2031
      %v2339 = vunpack.c.l.b16 %v2041
      %v2340 = vunpack.c.l.b16 %v2055
      %v2341 = vunpack.c.l.b16 %v2065
      %v2342 = vunpack.c.l.b16 %v2079
      %v2343 = vunpack.c.l.b16 %v2089
      %v2344 = vunpack.c.l.b16 %v2103
      %v2345 = vunpack.c.l.b16 %v2113
      %v2346 = vunpack.c.l.b16 %v2127
      %v2347 = vunpack.c.l.b16 %v2137
      %v2348 = vunpack.c.l.b16 %v2151
      %v2349 = vunpack.c.l.b16 %v2161
      %v2350 = vunpack.c.l.b16 %v2175
      %v2351 = vunpack.c.l.b16 %v2185
      %v2352 = vunpack.c.l.b16 %v2199
      %v2353 = vunpack.c.l.b16 %v2209
      %v2354 = vunpack.c.l.b16 %v2223
      %v2355 = vunpack.c.l.b16 %v2233
      %v2356 = vunpack.c.l.b16 %v2247
      %v2357 = vunpack.c.l.b16 %v2257
      %v2358 = vunpack.c.l.b16 %v2271
      %v2359 = vunpack.c.l.b16 %v2281
      %v2360 = vunpack.c.l.b16 %v2295
      %v2361 = vunpack.c.l.b16 %v2305
      %v2362 = vunpack.c.l.b16 %v2319
      %v2363 = vunpack.c.l.b16 %v2329
      %v2364 = vpack.c.b16 %v2333, %v2332
      %v2365 = vpack.c.b16 %v2335, %v2334
      %v2366 = vpack.c.b16 %v2337, %v2336
      %v2367 = vpack.c.b16 %v2339, %v2338
      %v2368 = vpack.c.b16 %v2341, %v2340
      %v2369 = vpack.c.b16 %v2343, %v2342
      %v2370 = vpack.c.b16 %v2345, %v2344
      %v2371 = vpack.c.b16 %v2347, %v2346
      %v2372 = vpack.c.b16 %v2349, %v2348
      %v2373 = vpack.c.b16 %v2351, %v2350
      %v2374 = vpack.c.b16 %v2353, %v2352
      %v2375 = vpack.c.b16 %v2355, %v2354
      %v2376 = vpack.c.b16 %v2357, %v2356
      %v2377 = vpack.c.b16 %v2359, %v2358
      %v2378 = vpack.c.b16 %v2361, %v2360
      %v2379 = vpack.c.b16 %v2363, %v2362
      %v2381 = vsel %vm254, %v2364, 0
      %v2384 = vsel %vm254, %v2365, 0
      %v2387 = vsel %vm254, %v2366, 0
      %v2390 = vsel %vm254, %v2367, 0
      %v2393 = vsel %vm254, %v2368, 0
      %v2396 = vsel %vm254, %v2369, 0
      %v2399 = vsel %vm254, %v2370, 0
      %v2402 = vsel %vm254, %v2371, 0
      %v2405 = vsel %vm254, %v2372, 0
      %v2408 = vsel %vm254, %v2373, 0
      %v2411 = vsel %vm254, %v2374, 0
      %v2414 = vsel %vm254, %v2375, 0
      %v2417 = vsel %vm254, %v2376, 0
      %v2420 = vsel %vm254, %v2377, 0
      %v2423 = vsel %vm254, %v2378, 0
      %v2426 = vsel %vm254, %v2379, 0
      %v2429 = vsel %vm1160, %v2331, 0
      %2431 = vmatprep.subr.bf16.mxu0 0
      %2432 = vmatpush1.bf16.msra.mxu0 %v2429
      %2433 = vmatprep.subr.bf16.mxu0 0
      %2434 = vmatpush1.bf16.msra.mxu0 0
      %2435 = vmatprep.subr.bf16.mxu0 0
      %2436 = vmatpush1.bf16.msra.mxu0 0
      %2437 = vmatprep.subr.bf16.mxu0 0
      %2438 = vmatpush1.bf16.msra.mxu0 0
      %2439 = vmatprep.subr.bf16.mxu0 0
      %2440 = vmatpush1.bf16.msra.mxu0 0
      %2441 = vmatprep.subr.bf16.mxu0 0
      %2442 = vmatpush1.bf16.msra.mxu0 0
      %2443 = vmatprep.subr.bf16.mxu0 0
      %2444 = vmatpush1.bf16.msra.mxu0 0
      %2445 = vmatprep.subr.bf16.mxu0 0
      %2446 = vmatpush1.bf16.msra.mxu0 0
      %2447 = vmatprep.subr.bf16.mxu0 0
      %2448 = vmatpush1.bf16.msra.mxu0 0
      %2449 = vmatprep.subr.bf16.mxu0 0
      %2450 = vmatpush1.bf16.msra.mxu0 0
      %2451 = vmatprep.subr.bf16.mxu0 0
      %2452 = vmatpush1.bf16.msra.mxu0 0
      %2453 = vmatprep.subr.bf16.mxu0 0
      %2454 = vmatpush1.bf16.msra.mxu0 0
      %2455 = vmatprep.subr.bf16.mxu0 0
      %2456 = vmatpush1.bf16.msra.mxu0 0
      %2457 = vmatprep.subr.bf16.mxu0 0
      %2458 = vmatpush1.bf16.msra.mxu0 0
      %2459 = vmatprep.subr.bf16.mxu0 0
      %2460 = vmatpush1.bf16.msra.mxu0 0
      %2461 = vmatprep.subr.bf16.mxu0 0
      %2462 = vmatpush1.bf16.msra.mxu0 0
      %2463 = vmatprep.mubr.bf16.mxu0 0
      %2464 = vmatmul.mubr.bf16.gmra.mrb[0].mxu0 %v2381
      %v2465 = vpop.f32.mrb[0].mxu0
      %v2466 = vadd.f32 0.0, %v2465
      %v2467 = vpop.f32.mrb[0].mxu0
      %v2468 = vpop.f32.mrb[0].mxu0
      %v2469 = vadd.f32 0.0, %v2468
      %v2470 = vpop.f32.mrb[0].mxu0
      %2471 = vmatprep.mubr.bf16.mxu0 0
      %2472 = vmatmul.mubr.bf16.gmra.mrb[0].mxu0 %v2384
      %v2473 = vpop.f32.mrb[0].mxu0
      %v2474 = vadd.f32 0.0, %v2473
      %v2475 = vpop.f32.mrb[0].mxu0
      %v2476 = vpop.f32.mrb[0].mxu0
      %v2477 = vadd.f32 0.0, %v2476
      %v2478 = vpop.f32.mrb[0].mxu0
      %2479 = vmatprep.mubr.bf16.mxu0 0
      %2480 = vmatmul.mubr.bf16.gmra.mrb[0].mxu0 %v2387
      %v2481 = vpop.f32.mrb[0].mxu0
      %v2482 = vadd.f32 0.0, %v2481
      %v2483 = vpop.f32.mrb[0].mxu0
      %v2484 = vpop.f32.mrb[0].mxu0
      %v2485 = vadd.f32 0.0, %v2484
      %v2486 = vpop.f32.mrb[0].mxu0
      %2487 = vmatprep.mubr.bf16.mxu0 0
      %2488 = vmatmul.mubr.bf16.gmra.mrb[0].mxu0 %v2390
      %v2489 = vpop.f32.mrb[0].mxu0
      %v2490 = vadd.f32 0.0, %v2489
      %v2491 = vpop.f32.mrb[0].mxu0
      %v2492 = vpop.f32.mrb[0].mxu0
      %v2493 = vadd.f32 0.0, %v2492
      %v2494 = vpop.f32.mrb[0].mxu0
      %2495 = vmatprep.mubr.bf16.mxu0 0
      %2496 = vmatmul.mubr.bf16.gmra.mrb[0].mxu0 %v2393
      %v2497 = vpop.f32.mrb[0].mxu0
      %v2498 = vadd.f32 0.0, %v2497
      %v2499 = vpop.f32.mrb[0].mxu0
      %v2500 = vpop.f32.mrb[0].mxu0
      %v2501 = vadd.f32 0.0, %v2500
      %v2502 = vpop.f32.mrb[0].mxu0
      %2503 = vmatprep.mubr.bf16.mxu0 0
      %2504 = vmatmul.mubr.bf16.gmra.mrb[0].mxu0 %v2396
      %v2505 = vpop.f32.mrb[0].mxu0
      %v2506 = vadd.f32 0.0, %v2505
      %v2507 = vpop.f32.mrb[0].mxu0
      %v2508 = vpop.f32.mrb[0].mxu0
      %v2509 = vadd.f32 0.0, %v2508
      %v2510 = vpop.f32.mrb[0].mxu0
      %2511 = vmatprep.mubr.bf16.mxu0 0
      %2512 = vmatmul.mubr.bf16.gmra.mrb[0].mxu0 %v2399
      %v2513 = vpop.f32.mrb[0].mxu0
      %v2514 = vadd.f32 0.0, %v2513
      %v2515 = vpop.f32.mrb[0].mxu0
      %v2516 = vpop.f32.mrb[0].mxu0
      %v2517 = vadd.f32 0.0, %v2516
      %v2518 = vpop.f32.mrb[0].mxu0
      %2519 = vmatprep.mubr.bf16.mxu0 0
      %2520 = vmatmul.mubr.bf16.gmra.mrb[0].mxu0 %v2402
      %v2521 = vpop.f32.mrb[0].mxu0
      %v2522 = vadd.f32 0.0, %v2521
      %v2523 = vpop.f32.mrb[0].mxu0
      %v2524 = vpop.f32.mrb[0].mxu0
      %v2525 = vadd.f32 0.0, %v2524
      %v2526 = vpop.f32.mrb[0].mxu0
      %2527 = vmatprep.mubr.bf16.mxu0 0
      %2528 = vmatmul.mubr.bf16.gmra.mrb[0].mxu0 %v2405
      %v2529 = vpop.f32.mrb[0].mxu0
      %v2530 = vadd.f32 0.0, %v2529
      %v2531 = vpop.f32.mrb[0].mxu0
      %v2532 = vpop.f32.mrb[0].mxu0
      %v2533 = vadd.f32 0.0, %v2532
      %v2534 = vpop.f32.mrb[0].mxu0
      %2535 = vmatprep.mubr.bf16.mxu0 0
      %2536 = vmatmul.mubr.bf16.gmra.mrb[0].mxu0 %v2408
      %v2537 = vpop.f32.mrb[0].mxu0
      %v2538 = vadd.f32 0.0, %v2537
      %v2539 = vpop.f32.mrb[0].mxu0
      %v2540 = vpop.f32.mrb[0].mxu0
      %v2541 = vadd.f32 0.0, %v2540
      %v2542 = vpop.f32.mrb[0].mxu0
      %2543 = vmatprep.mubr.bf16.mxu0 0
      %2544 = vmatmul.mubr.bf16.gmra.mrb[0].mxu0 %v2411
      %v2545 = vpop.f32.mrb[0].mxu0
      %v2546 = vadd.f32 0.0, %v2545
      %v2547 = vpop.f32.mrb[0].mxu0
      %v2548 = vpop.f32.mrb[0].mxu0
      %v2549 = vadd.f32 0.0, %v2548
      %v2550 = vpop.f32.mrb[0].mxu0
      %2551 = vmatprep.mubr.bf16.mxu0 0
      %2552 = vmatmul.mubr.bf16.gmra.mrb[0].mxu0 %v2414
      %v2553 = vpop.f32.mrb[0].mxu0
      %v2554 = vadd.f32 0.0, %v2553
      %v2555 = vpop.f32.mrb[0].mxu0
      %v2556 = vpop.f32.mrb[0].mxu0
      %v2557 = vadd.f32 0.0, %v2556
      %v2558 = vpop.f32.mrb[0].mxu0
      %2559 = vmatprep.mubr.bf16.mxu0 0
      %2560 = vmatmul.mubr.bf16.gmra.mrb[0].mxu0 %v2417
      %v2561 = vpop.f32.mrb[0].mxu0
      %v2562 = vadd.f32 0.0, %v2561
      %v2563 = vpop.f32.mrb[0].mxu0
      %v2564 = vpop.f32.mrb[0].mxu0
      %v2565 = vadd.f32 0.0, %v2564
      %v2566 = vpop.f32.mrb[0].mxu0
      %2567 = vmatprep.mubr.bf16.mxu0 0
      %2568 = vmatmul.mubr.bf16.gmra.mrb[0].mxu0 %v2420
      %v2569 = vpop.f32.mrb[0].mxu0
      %v2570 = vadd.f32 0.0, %v2569
      %v2571 = vpop.f32.mrb[0].mxu0
      %v2572 = vpop.f32.mrb[0].mxu0
      %v2573 = vadd.f32 0.0, %v2572
      %v2574 = vpop.f32.mrb[0].mxu0
      %2575 = vmatprep.mubr.bf16.mxu0 0
      %2576 = vmatmul.mubr.bf16.gmra.mrb[0].mxu0 %v2423
      %v2577 = vpop.f32.mrb[0].mxu0
      %v2578 = vadd.f32 0.0, %v2577
      %v2579 = vpop.f32.mrb[0].mxu0
      %v2580 = vpop.f32.mrb[0].mxu0
      %v2581 = vadd.f32 0.0, %v2580
      %v2582 = vpop.f32.mrb[0].mxu0
      %2583 = vmatprep.mubr.bf16.mxu0 0
      %2584 = vmatmul.mubr.bf16.gmra.mrb[0].mxu0 %v2426
      %v2585 = vpop.f32.mrb[0].mxu0
      %v2586 = vadd.f32 0.0, %v2585
      %v2587 = vpop.f32.mrb[0].mxu0
      %v2588 = vpop.f32.mrb[0].mxu0
      %v2589 = vadd.f32 0.0, %v2588
      %v2590 = vpop.f32.mrb[0].mxu0
      %2591 = vdwg.mxu0
      %v2592 = vadd.f32 %v1863, %v2466
      %v2593 = vadd.f32 %v1864, %v2469
      %v2594 = vadd.f32 %v1865, %v2474
      %v2595 = vadd.f32 %v1866, %v2477
      %v2596 = vadd.f32 %v1867, %v2482
      %v2597 = vadd.f32 %v1868, %v2485
      %v2598 = vadd.f32 %v1869, %v2490
      %v2599 = vadd.f32 %v1870, %v2493
      %v2600 = vadd.f32 %v1871, %v2498
      %v2601 = vadd.f32 %v1872, %v2501
      %v2602 = vadd.f32 %v1873, %v2506
      %v2603 = vadd.f32 %v1874, %v2509
      %v2604 = vadd.f32 %v1875, %v2514
      %v2605 = vadd.f32 %v1876, %v2517
      %v2606 = vadd.f32 %v1877, %v2522
      %v2607 = vadd.f32 %v1878, %v2525
      %v2608 = vadd.f32 %v1879, %v2530
      %v2609 = vadd.f32 %v1880, %v2533
      %v2610 = vadd.f32 %v1881, %v2538
      %v2611 = vadd.f32 %v1882, %v2541
      %v2612 = vadd.f32 %v1883, %v2546
      %v2613 = vadd.f32 %v1884, %v2549
      %v2614 = vadd.f32 %v1885, %v2554
      %v2615 = vadd.f32 %v1886, %v2557
      %v2616 = vadd.f32 %v1887, %v2562
      %v2617 = vadd.f32 %v1888, %v2565
      %v2618 = vadd.f32 %v1889, %v2570
      %v2619 = vadd.f32 %v1890, %v2573
      %v2620 = vadd.f32 %v1891, %v2578
      %v2621 = vadd.f32 %v1892, %v2581
      %v2622 = vadd.f32 %v1893, %v2586
      %v2623 = vadd.f32 %v1894, %v2589
      %v2624 = vld [vmem:[#allocation2 + $0x8] sm:$0xe]
      %v2625 = vld [vmem:[#allocation2 + $0x1c] sm:$0xe]
      %v2626 = vld [vmem:[#allocation2 + $0x30] sm:$0xe]
      %v2627 = vld [vmem:[#allocation2 + $0x44] sm:$0xe]
      %v2628 = vld [vmem:[#allocation2 + $0x58] sm:$0xe]
      %v2629 = vld [vmem:[#allocation2 + $0x6c] sm:$0xe]
      %v2630 = vld [vmem:[#allocation2 + $0x80] sm:$0xe]
      %v2631 = vld [vmem:[#allocation2 + $0x94] sm:$0xe]
      %v2632 = vld [vmem:[#allocation2 + $0xa8] sm:$0xe]
      %v2633 = vld [vmem:[#allocation2 + $0xbc] sm:$0xe]
      %v2634 = vld [vmem:[#allocation2 + $0xd0] sm:$0xe]
      %v2635 = vld [vmem:[#allocation2 + $0xe4] sm:$0xe]
      %v2636 = vld [vmem:[#allocation2 + $0xf8] sm:$0xe]
      %v2637 = vld [vmem:[#allocation2 + $0x10c] sm:$0xe]
      %v2638 = vld [vmem:[#allocation2 + $0x120] sm:$0xe]
      %v2639 = vld [vmem:[#allocation2 + $0x134] sm:$0xe]
      %vm2688 = vcmask 1042432
      %vm2689 = vcmask 1046532
      %vm2690 = vmor %vm2688, %vm2689
      %v2691 = vrot.slane %v2624, 5
      %v2692 = vrot.slane %v2691, 4
      %v2693 = vrot.slane %v1896, 5
      %v2694 = vsel %vm2690, %v2692, %v2693
      %v2695 = vrot.slane %v2693, 4
      %v2696 = vrot.slane %v1897, 5
      %v2697 = vsel %vm2690, %v2695, %v2696
      %v2698 = vrot.slane %v2625, 5
      %v2699 = vrot.slane %v2698, 4
      %v2700 = vrot.slane %v1899, 5
      %v2701 = vsel %vm2690, %v2699, %v2700
      %v2702 = vrot.slane %v2700, 4
      %v2703 = vrot.slane %v1900, 5
      %v2704 = vsel %vm2690, %v2702, %v2703
      %v2705 = vrot.slane %v2626, 5
      %v2706 = vrot.slane %v2705, 4
      %v2707 = vrot.slane %v1902, 5
      %v2708 = vsel %vm2690, %v2706, %v2707
      %v2709 = vrot.slane %v2707, 4
      %v2710 = vrot.slane %v1903, 5
      %v2711 = vsel %vm2690, %v2709, %v2710
      %v2712 = vrot.slane %v2627, 5
      %v2713 = vrot.slane %v2712, 4
      %v2714 = vrot.slane %v1905, 5
      %v2715 = vsel %vm2690, %v2713, %v2714
      %v2716 = vrot.slane %v2714, 4
      %v2717 = vrot.slane %v1906, 5
      %v2718 = vsel %vm2690, %v2716, %v2717
      %v2719 = vrot.slane %v2628, 5
      %v2720 = vrot.slane %v2719, 4
      %v2721 = vrot.slane %v1908, 5
      %v2722 = vsel %vm2690, %v2720, %v2721
      %v2723 = vrot.slane %v2721, 4
      %v2724 = vrot.slane %v1909, 5
      %v2725 = vsel %vm2690, %v2723, %v2724
      %v2726 = vrot.slane %v2629, 5
      %v2727 = vrot.slane %v2726, 4
      %v2728 = vrot.slane %v1911, 5
      %v2729 = vsel %vm2690, %v2727, %v2728
      %v2730 = vrot.slane %v2728, 4
      %v2731 = vrot.slane %v1912, 5
      %v2732 = vsel %vm2690, %v2730, %v2731
      %v2733 = vrot.slane %v2630, 5
      %v2734 = vrot.slane %v2733, 4
      %v2735 = vrot.slane %v1914, 5
      %v2736 = vsel %vm2690, %v2734, %v2735
      %v2737 = vrot.slane %v2735, 4
      %v2738 = vrot.slane %v1915, 5
      %v2739 = vsel %vm2690, %v2737, %v2738
      %v2740 = vrot.slane %v2631, 5
      %v2741 = vrot.slane %v2740, 4
      %v2742 = vrot.slane %v1917, 5
      %v2743 = vsel %vm2690, %v2741, %v2742
      %v2744 = vrot.slane %v2742, 4
      %v2745 = vrot.slane %v1918, 5
      %v2746 = vsel %vm2690, %v2744, %v2745
      %v2747 = vrot.slane %v2632, 5
      %v2748 = vrot.slane %v2747, 4
      %v2749 = vrot.slane %v1920, 5
      %v2750 = vsel %vm2690, %v2748, %v2749
      %v2751 = vrot.slane %v2749, 4
      %v2752 = vrot.slane %v1921, 5
      %v2753 = vsel %vm2690, %v2751, %v2752
      %v2754 = vrot.slane %v2633, 5
      %v2755 = vrot.slane %v2754, 4
      %v2756 = vrot.slane %v1923, 5
      %v2757 = vsel %vm2690, %v2755, %v2756
      %v2758 = vrot.slane %v2756, 4
      %v2759 = vrot.slane %v1924, 5
      %v2760 = vsel %vm2690, %v2758, %v2759
      %v2761 = vrot.slane %v2634, 5
      %v2762 = vrot.slane %v2761, 4
      %v2763 = vrot.slane %v1926, 5
      %v2764 = vsel %vm2690, %v2762, %v2763
      %v2765 = vrot.slane %v2763, 4
      %v2766 = vrot.slane %v1927, 5
      %v2767 = vsel %vm2690, %v2765, %v2766
      %v2768 = vrot.slane %v2635, 5
      %v2769 = vrot.slane %v2768, 4
      %v2770 = vrot.slane %v1929, 5
      %v2771 = vsel %vm2690, %v2769, %v2770
      %v2772 = vrot.slane %v2770, 4
      %v2773 = vrot.slane %v1930, 5
      %v2774 = vsel %vm2690, %v2772, %v2773
      %v2775 = vrot.slane %v2636, 5
      %v2776 = vrot.slane %v2775, 4
      %v2777 = vrot.slane %v1932, 5
      %v2778 = vsel %vm2690, %v2776, %v2777
      %v2779 = vrot.slane %v2777, 4
      %v2780 = vrot.slane %v1933, 5
      %v2781 = vsel %vm2690, %v2779, %v2780
      %v2782 = vrot.slane %v2637, 5
      %v2783 = vrot.slane %v2782, 4
      %v2784 = vrot.slane %v1935, 5
      %v2785 = vsel %vm2690, %v2783, %v2784
      %v2786 = vrot.slane %v2784, 4
      %v2787 = vrot.slane %v1936, 5
      %v2788 = vsel %vm2690, %v2786, %v2787
      %v2789 = vrot.slane %v2638, 5
      %v2790 = vrot.slane %v2789, 4
      %v2791 = vrot.slane %v1938, 5
      %v2792 = vsel %vm2690, %v2790, %v2791
      %v2793 = vrot.slane %v2791, 4
      %v2794 = vrot.slane %v1939, 5
      %v2795 = vsel %vm2690, %v2793, %v2794
      %v2796 = vrot.slane %v2639, 5
      %v2797 = vrot.slane %v2796, 4
      %v2798 = vrot.slane %v1941, 5
      %v2799 = vsel %vm2690, %v2797, %v2798
      %v2800 = vrot.slane %v2798, 4
      %v2801 = vrot.slane %v1942, 5
      %v2802 = vsel %vm2690, %v2800, %v2801
      %s2803 = scalar_lea.vmem %s1, 16
      %v2804 = vld [vmem:[%s2803] sm:$0xf]
      %v2805 = vunpack.c.l.b16 %v2694
      %v2806 = vunpack.c.l.b16 %v2697
      %v2807 = vunpack.c.l.b16 %v2701
      %v2808 = vunpack.c.l.b16 %v2704
      %v2809 = vunpack.c.l.b16 %v2708
      %v2810 = vunpack.c.l.b16 %v2711
      %v2811 = vunpack.c.l.b16 %v2715
      %v2812 = vunpack.c.l.b16 %v2718
      %v2813 = vunpack.c.l.b16 %v2722
      %v2814 = vunpack.c.l.b16 %v2725
      %v2815 = vunpack.c.l.b16 %v2729
      %v2816 = vunpack.c.l.b16 %v2732
      %v2817 = vunpack.c.l.b16 %v2736
      %v2818 = vunpack.c.l.b16 %v2739
      %v2819 = vunpack.c.l.b16 %v2743
      %v2820 = vunpack.c.l.b16 %v2746
      %v2821 = vunpack.c.l.b16 %v2750
      %v2822 = vunpack.c.l.b16 %v2753
      %v2823 = vunpack.c.l.b16 %v2757
      %v2824 = vunpack.c.l.b16 %v2760
      %v2825 = vunpack.c.l.b16 %v2764
      %v2826 = vunpack.c.l.b16 %v2767
      %v2827 = vunpack.c.l.b16 %v2771
      %v2828 = vunpack.c.l.b16 %v2774
      %v2829 = vunpack.c.l.b16 %v2778
      %v2830 = vunpack.c.l.b16 %v2781
      %v2831 = vunpack.c.l.b16 %v2785
      %v2832 = vunpack.c.l.b16 %v2788
      %v2833 = vunpack.c.l.b16 %v2792
      %v2834 = vunpack.c.l.b16 %v2795
      %v2835 = vunpack.c.l.b16 %v2799
      %v2836 = vunpack.c.l.b16 %v2802
      %v2837 = vpack.c.b16 %v2806, %v2805
      %v2838 = vpack.c.b16 %v2808, %v2807
      %v2839 = vpack.c.b16 %v2810, %v2809
      %v2840 = vpack.c.b16 %v2812, %v2811
      %v2841 = vpack.c.b16 %v2814, %v2813
      %v2842 = vpack.c.b16 %v2816, %v2815
      %v2843 = vpack.c.b16 %v2818, %v2817
      %v2844 = vpack.c.b16 %v2820, %v2819
      %v2845 = vpack.c.b16 %v2822, %v2821
      %v2846 = vpack.c.b16 %v2824, %v2823
      %v2847 = vpack.c.b16 %v2826, %v2825
      %v2848 = vpack.c.b16 %v2828, %v2827
      %v2849 = vpack.c.b16 %v2830, %v2829
      %v2850 = vpack.c.b16 %v2832, %v2831
      %v2851 = vpack.c.b16 %v2834, %v2833
      %v2852 = vpack.c.b16 %v2836, %v2835
      %v2854 = vsel %vm254, %v2837, 0
      %v2857 = vsel %vm254, %v2838, 0
      %v2860 = vsel %vm254, %v2839, 0
      %v2863 = vsel %vm254, %v2840, 0
      %v2866 = vsel %vm254, %v2841, 0
      %v2869 = vsel %vm254, %v2842, 0
      %v2872 = vsel %vm254, %v2843, 0
      %v2875 = vsel %vm254, %v2844, 0
      %v2878 = vsel %vm254, %v2845, 0
      %v2881 = vsel %vm254, %v2846, 0
      %v2884 = vsel %vm254, %v2847, 0
      %v2887 = vsel %vm254, %v2848, 0
      %v2890 = vsel %vm254, %v2849, 0
      %v2893 = vsel %vm254, %v2850, 0
      %v2896 = vsel %vm254, %v2851, 0
      %v2899 = vsel %vm254, %v2852, 0
      %v2902 = vsel %vm1160, %v2804, 0
      %2904 = vmatprep.subr.bf16.mxu0 0
      %2905 = vmatpush1.bf16.msra.mxu0 %v2902
      %2906 = vmatprep.subr.bf16.mxu0 0
      %2907 = vmatpush1.bf16.msra.mxu0 0
      %2908 = vmatprep.subr.bf16.mxu0 0
      %2909 = vmatpush1.bf16.msra.mxu0 0
      %2910 = vmatprep.subr.bf16.mxu0 0
      %2911 = vmatpush1.bf16.msra.mxu0 0
      %2912 = vmatprep.subr.bf16.mxu0 0
      %2913 = vmatpush1.bf16.msra.mxu0 0
      %2914 = vmatprep.subr.bf16.mxu0 0
      %2915 = vmatpush1.bf16.msra.mxu0 0
      %2916 = vmatprep.subr.bf16.mxu0 0
      %2917 = vmatpush1.bf16.msra.mxu0 0
      %2918 = vmatprep.subr.bf16.mxu0 0
      %2919 = vmatpush1.bf16.msra.mxu0 0
      %2920 = vmatprep.subr.bf16.mxu0 0
      %2921 = vmatpush1.bf16.msra.mxu0 0
      %2922 = vmatprep.subr.bf16.mxu0 0
      %2923 = vmatpush1.bf16.msra.mxu0 0
      %2924 = vmatprep.subr.bf16.mxu0 0
      %2925 = vmatpush1.bf16.msra.mxu0 0
      %2926 = vmatprep.subr.bf16.mxu0 0
      %2927 = vmatpush1.bf16.msra.mxu0 0
      %2928 = vmatprep.subr.bf16.mxu0 0
      %2929 = vmatpush1.bf16.msra.mxu0 0
      %2930 = vmatprep.subr.bf16.mxu0 0
      %2931 = vmatpush1.bf16.msra.mxu0 0
      %2932 = vmatprep.subr.bf16.mxu0 0
      %2933 = vmatpush1.bf16.msra.mxu0 0
      %2934 = vmatprep.subr.bf16.mxu0 0
      %2935 = vmatpush1.bf16.msra.mxu0 0
      %2936 = vmatprep.mubr.bf16.mxu0 0
      %2937 = vmatmul.mubr.bf16.gmra.mrb[0].mxu0 %v2854
      %v2938 = vpop.f32.mrb[0].mxu0
      %v2939 = vadd.f32 0.0, %v2938
      %v2940 = vpop.f32.mrb[0].mxu0
      %v2941 = vpop.f32.mrb[0].mxu0
      %v2942 = vadd.f32 0.0, %v2941
      %v2943 = vpop.f32.mrb[0].mxu0
      %2944 = vmatprep.mubr.bf16.mxu0 0
      %2945 = vmatmul.mubr.bf16.gmra.mrb[0].mxu0 %v2857
      %v2946 = vpop.f32.mrb[0].mxu0
      %v2947 = vadd.f32 0.0, %v2946
      %v2948 = vpop.f32.mrb[0].mxu0
      %v2949 = vpop.f32.mrb[0].mxu0
      %v2950 = vadd.f32 0.0, %v2949
      %v2951 = vpop.f32.mrb[0].mxu0
      %2952 = vmatprep.mubr.bf16.mxu0 0
      %2953 = vmatmul.mubr.bf16.gmra.mrb[0].mxu0 %v2860
      %v2954 = vpop.f32.mrb[0].mxu0
      %v2955 = vadd.f32 0.0, %v2954
      %v2956 = vpop.f32.mrb[0].mxu0
      %v2957 = vpop.f32.mrb[0].mxu0
      %v2958 = vadd.f32 0.0, %v2957
      %v2959 = vpop.f32.mrb[0].mxu0
      %2960 = vmatprep.mubr.bf16.mxu0 0
      %2961 = vmatmul.mubr.bf16.gmra.mrb[0].mxu0 %v2863
      %v2962 = vpop.f32.mrb[0].mxu0
      %v2963 = vadd.f32 0.0, %v2962
      %v2964 = vpop.f32.mrb[0].mxu0
      %v2965 = vpop.f32.mrb[0].mxu0
      %v2966 = vadd.f32 0.0, %v2965
      %v2967 = vpop.f32.mrb[0].mxu0
      %2968 = vmatprep.mubr.bf16.mxu0 0
      %2969 = vmatmul.mubr.bf16.gmra.mrb[0].mxu0 %v2866
      %v2970 = vpop.f32.mrb[0].mxu0
      %v2971 = vadd.f32 0.0, %v2970
      %v2972 = vpop.f32.mrb[0].mxu0
      %v2973 = vpop.f32.mrb[0].mxu0
      %v2974 = vadd.f32 0.0, %v2973
      %v2975 = vpop.f32.mrb[0].mxu0
      %2976 = vmatprep.mubr.bf16.mxu0 0
      %2977 = vmatmul.mubr.bf16.gmra.mrb[0].mxu0 %v2869
      %v2978 = vpop.f32.mrb[0].mxu0
      %v2979 = vadd.f32 0.0, %v2978
      %v2980 = vpop.f32.mrb[0].mxu0
      %v2981 = vpop.f32.mrb[0].mxu0
      %v2982 = vadd.f32 0.0, %v2981
      %v2983 = vpop.f32.mrb[0].mxu0
      %2984 = vmatprep.mubr.bf16.mxu0 0
      %2985 = vmatmul.mubr.bf16.gmra.mrb[0].mxu0 %v2872
      %v2986 = vpop.f32.mrb[0].mxu0
      %v2987 = vadd.f32 0.0, %v2986
      %v2988 = vpop.f32.mrb[0].mxu0
      %v2989 = vpop.f32.mrb[0].mxu0
      %v2990 = vadd.f32 0.0, %v2989
      %v2991 = vpop.f32.mrb[0].mxu0
      %2992 = vmatprep.mubr.bf16.mxu0 0
      %2993 = vmatmul.mubr.bf16.gmra.mrb[0].mxu0 %v2875
      %v2994 = vpop.f32.mrb[0].mxu0
      %v2995 = vadd.f32 0.0, %v2994
      %v2996 = vpop.f32.mrb[0].mxu0
      %v2997 = vpop.f32.mrb[0].mxu0
      %v2998 = vadd.f32 0.0, %v2997
      %v2999 = vpop.f32.mrb[0].mxu0
      %3000 = vmatprep.mubr.bf16.mxu0 0
      %3001 = vmatmul.mubr.bf16.gmra.mrb[0].mxu0 %v2878
      %v3002 = vpop.f32.mrb[0].mxu0
      %v3003 = vadd.f32 0.0, %v3002
      %v3004 = vpop.f32.mrb[0].mxu0
      %v3005 = vpop.f32.mrb[0].mxu0
      %v3006 = vadd.f32 0.0, %v3005
      %v3007 = vpop.f32.mrb[0].mxu0
      %3008 = vmatprep.mubr.bf16.mxu0 0
      %3009 = vmatmul.mubr.bf16.gmra.mrb[0].mxu0 %v2881
      %v3010 = vpop.f32.mrb[0].mxu0
      %v3011 = vadd.f32 0.0, %v3010
      %v3012 = vpop.f32.mrb[0].mxu0
      %v3013 = vpop.f32.mrb[0].mxu0
      %v3014 = vadd.f32 0.0, %v3013
      %v3015 = vpop.f32.mrb[0].mxu0
      %3016 = vmatprep.mubr.bf16.mxu0 0
      %3017 = vmatmul.mubr.bf16.gmra.mrb[0].mxu0 %v2884
      %v3018 = vpop.f32.mrb[0].mxu0
      %v3019 = vadd.f32 0.0, %v3018
      %v3020 = vpop.f32.mrb[0].mxu0
      %v3021 = vpop.f32.mrb[0].mxu0
      %v3022 = vadd.f32 0.0, %v3021
      %v3023 = vpop.f32.mrb[0].mxu0
      %3024 = vmatprep.mubr.bf16.mxu0 0
      %3025 = vmatmul.mubr.bf16.gmra.mrb[0].mxu0 %v2887
      %v3026 = vpop.f32.mrb[0].mxu0
      %v3027 = vadd.f32 0.0, %v3026
      %v3028 = vpop.f32.mrb[0].mxu0
      %v3029 = vpop.f32.mrb[0].mxu0
      %v3030 = vadd.f32 0.0, %v3029
      %v3031 = vpop.f32.mrb[0].mxu0
      %3032 = vmatprep.mubr.bf16.mxu0 0
      %3033 = vmatmul.mubr.bf16.gmra.mrb[0].mxu0 %v2890
      %v3034 = vpop.f32.mrb[0].mxu0
      %v3035 = vadd.f32 0.0, %v3034
      %v3036 = vpop.f32.mrb[0].mxu0
      %v3037 = vpop.f32.mrb[0].mxu0
      %v3038 = vadd.f32 0.0, %v3037
      %v3039 = vpop.f32.mrb[0].mxu0
      %3040 = vmatprep.mubr.bf16.mxu0 0
      %3041 = vmatmul.mubr.bf16.gmra.mrb[0].mxu0 %v2893
      %v3042 = vpop.f32.mrb[0].mxu0
      %v3043 = vadd.f32 0.0, %v3042
      %v3044 = vpop.f32.mrb[0].mxu0
      %v3045 = vpop.f32.mrb[0].mxu0
      %v3046 = vadd.f32 0.0, %v3045
      %v3047 = vpop.f32.mrb[0].mxu0
      %3048 = vmatprep.mubr.bf16.mxu0 0
      %3049 = vmatmul.mubr.bf16.gmra.mrb[0].mxu0 %v2896
      %v3050 = vpop.f32.mrb[0].mxu0
      %v3051 = vadd.f32 0.0, %v3050
      %v3052 = vpop.f32.mrb[0].mxu0
      %v3053 = vpop.f32.mrb[0].mxu0
      %v3054 = vadd.f32 0.0, %v3053
      %v3055 = vpop.f32.mrb[0].mxu0
      %3056 = vmatprep.mubr.bf16.mxu0 0
      %3057 = vmatmul.mubr.bf16.gmra.mrb[0].mxu0 %v2899
      %v3058 = vpop.f32.mrb[0].mxu0
      %v3059 = vadd.f32 0.0, %v3058
      %v3060 = vpop.f32.mrb[0].mxu0
      %v3061 = vpop.f32.mrb[0].mxu0
      %v3062 = vadd.f32 0.0, %v3061
      %v3063 = vpop.f32.mrb[0].mxu0
      %3064 = vdwg.mxu0
      %v3065 = vadd.f32 %v2592, %v2939
      %v3066 = vadd.f32 %v2593, %v2942
      %v3067 = vadd.f32 %v2594, %v2947
      %v3068 = vadd.f32 %v2595, %v2950
      %v3069 = vadd.f32 %v2596, %v2955
      %v3070 = vadd.f32 %v2597, %v2958
      %v3071 = vadd.f32 %v2598, %v2963
      %v3072 = vadd.f32 %v2599, %v2966
      %v3073 = vadd.f32 %v2600, %v2971
      %v3074 = vadd.f32 %v2601, %v2974
      %v3075 = vadd.f32 %v2602, %v2979
      %v3076 = vadd.f32 %v2603, %v2982
      %v3077 = vadd.f32 %v2604, %v2987
      %v3078 = vadd.f32 %v2605, %v2990
      %v3079 = vadd.f32 %v2606, %v2995
      %v3080 = vadd.f32 %v2607, %v2998
      %v3081 = vadd.f32 %v2608, %v3003
      %v3082 = vadd.f32 %v2609, %v3006
      %v3083 = vadd.f32 %v2610, %v3011
      %v3084 = vadd.f32 %v2611, %v3014
      %v3085 = vadd.f32 %v2612, %v3019
      %v3086 = vadd.f32 %v2613, %v3022
      %v3087 = vadd.f32 %v2614, %v3027
      %v3088 = vadd.f32 %v2615, %v3030
      %v3089 = vadd.f32 %v2616, %v3035
      %v3090 = vadd.f32 %v2617, %v3038
      %v3091 = vadd.f32 %v2618, %v3043
      %v3092 = vadd.f32 %v2619, %v3046
      %v3093 = vadd.f32 %v2620, %v3051
      %v3094 = vadd.f32 %v2621, %v3054
      %v3095 = vadd.f32 %v2622, %v3059
      %v3096 = vadd.f32 %v2623, %v3062
      %v3097 = vld [vmem:[%s2] sm:$0x1]
      %v3099 = vlaneseq
      %v3100 = vshrl.u32 %v3099, 7
      %v3101 = vsub.s32 0, %v3100
      %v3102 = vrot.slane %v3097, %v3101
      %v3104 = vadd.f32 %v3065, %v3102
      %v3105 = vadd.f32 %v3066, %v3102
      %v3106 = vadd.f32 %v3067, %v3102
      %v3107 = vadd.f32 %v3068, %v3102
      %v3108 = vadd.f32 %v3069, %v3102
      %v3109 = vadd.f32 %v3070, %v3102
      %v3110 = vadd.f32 %v3071, %v3102
      %v3111 = vadd.f32 %v3072, %v3102
      %v3112 = vadd.f32 %v3073, %v3102
      %v3113 = vadd.f32 %v3074, %v3102
      %v3114 = vadd.f32 %v3075, %v3102
      %v3115 = vadd.f32 %v3076, %v3102
      %v3116 = vadd.f32 %v3077, %v3102
      %v3117 = vadd.f32 %v3078, %v3102
      %v3118 = vadd.f32 %v3079, %v3102
      %v3119 = vadd.f32 %v3080, %v3102
      %v3120 = vadd.f32 %v3081, %v3102
      %v3121 = vadd.f32 %v3082, %v3102
      %v3122 = vadd.f32 %v3083, %v3102
      %v3123 = vadd.f32 %v3084, %v3102
      %v3124 = vadd.f32 %v3085, %v3102
      %v3125 = vadd.f32 %v3086, %v3102
      %v3126 = vadd.f32 %v3087, %v3102
      %v3127 = vadd.f32 %v3088, %v3102
      %v3128 = vadd.f32 %v3089, %v3102
      %v3129 = vadd.f32 %v3090, %v3102
      %v3130 = vadd.f32 %v3091, %v3102
      %v3131 = vadd.f32 %v3092, %v3102
      %v3132 = vadd.f32 %v3093, %v3102
      %v3133 = vadd.f32 %v3094, %v3102
      %v3134 = vadd.f32 %v3095, %v3102
      %v3135 = vadd.f32 %v3096, %v3102
      %v3136 = vmax.f32 %v3104, 0.0
      %v3137 = vmax.f32 %v3105, 0.0
      %v3138 = vmax.f32 %v3106, 0.0
      %v3139 = vmax.f32 %v3107, 0.0
      %v3140 = vmax.f32 %v3108, 0.0
      %v3141 = vmax.f32 %v3109, 0.0
      %v3142 = vmax.f32 %v3110, 0.0
      %v3143 = vmax.f32 %v3111, 0.0
      %v3144 = vmax.f32 %v3112, 0.0
      %v3145 = vmax.f32 %v3113, 0.0
      %v3146 = vmax.f32 %v3114, 0.0
      %v3147 = vmax.f32 %v3115, 0.0
      %v3148 = vmax.f32 %v3116, 0.0
      %v3149 = vmax.f32 %v3117, 0.0
      %v3150 = vmax.f32 %v3118, 0.0
      %v3151 = vmax.f32 %v3119, 0.0
      %v3152 = vmax.f32 %v3120, 0.0
      %v3153 = vmax.f32 %v3121, 0.0
      %v3154 = vmax.f32 %v3122, 0.0
      %v3155 = vmax.f32 %v3123, 0.0
      %v3156 = vmax.f32 %v3124, 0.0
      %v3157 = vmax.f32 %v3125, 0.0
      %v3158 = vmax.f32 %v3126, 0.0
      %v3159 = vmax.f32 %v3127, 0.0
      %v3160 = vmax.f32 %v3128, 0.0
      %v3161 = vmax.f32 %v3129, 0.0
      %v3162 = vmax.f32 %v3130, 0.0
      %v3163 = vmax.f32 %v3131, 0.0
      %v3164 = vmax.f32 %v3132, 0.0
      %v3165 = vmax.f32 %v3133, 0.0
      %v3166 = vmax.f32 %v3134, 0.0
      %v3167 = vmax.f32 %v3135, 0.0
      %v3168 = vadd.f32 %v287, %v3144
      %v3169 = vadd.f32 %v288, %v3145
      %v3170 = vadd.f32 %v289, %v3146
      %v3171 = vadd.f32 %v290, %v3147
      %v3172 = vadd.f32 %v291, %v3148
      %v3173 = vadd.f32 %v292, %v3149
      %v3174 = vadd.f32 %v293, %v3150
      %v3175 = vadd.f32 %v294, %v3151
      %v3176 = vadd.f32 %v295, %v3152
      %v3177 = vadd.f32 %v296, %v3153
      %v3178 = vadd.f32 %v297, %v3154
      %v3179 = vadd.f32 %v298, %v3155
      %v3180 = vadd.f32 %v299, %v3156
      %v3181 = vadd.f32 %v300, %v3157
      %v3182 = vadd.f32 %v301, %v3158
      %v3183 = vadd.f32 %v302, %v3159
      %v3184 = vadd.f32 %v303, %v3160
      %v3185 = vadd.f32 %v304, %v3161
      %v3186 = vadd.f32 %v305, %v3162
      %v3187 = vadd.f32 %v306, %v3163
      %v3188 = vadd.f32 %v307, %v3164
      %v3189 = vadd.f32 %v308, %v3165
      %v3190 = vadd.f32 %v309, %v3166
      %v3191 = vadd.f32 %v310, %v3167
      %3192 = vst.msk [vmem:[%s170] sm:$0xff] %vm254, %v3168
      %3193 = vst.msk [vmem:[%s170 + $0x8] sm:$0xff] %vm254, %v3169
      %3194 = vst.msk [vmem:[%s170 + $0x10] sm:$0xff] %vm254, %v3170
      %3195 = vst.msk [vmem:[%s170 + $0x18] sm:$0xff] %vm254, %v3171
      %3196 = vst.msk [vmem:[%s170 + $0x20] sm:$0xff] %vm254, %v3172
      %3197 = vst.msk [vmem:[%s170 + $0x28] sm:$0xff] %vm254, %v3173
      %3198 = vst.msk [vmem:[%s170 + $0x30] sm:$0xff] %vm254, %v3174
      %3199 = vst.msk [vmem:[%s170 + $0x38] sm:$0xff] %vm254, %v3175
      %3200 = vst.msk [vmem:[%s170 + $0x40] sm:$0xff] %vm254, %v3176
      %3201 = vst.msk [vmem:[%s170 + $0x48] sm:$0xff] %vm254, %v3177
      %3202 = vst.msk [vmem:[%s170 + $0x50] sm:$0xff] %vm254, %v3178
      %3203 = vst.msk [vmem:[%s170 + $0x58] sm:$0xff] %vm254, %v3179
      %3204 = vst.msk [vmem:[%s170 + $0x60] sm:$0xff] %vm254, %v3180
      %3205 = vst.msk [vmem:[%s170 + $0x68] sm:$0xff] %vm254, %v3181
      %3206 = vst.msk [vmem:[%s170 + $0x70] sm:$0xff] %vm254, %v3182
      %3207 = vst.msk [vmem:[%s170 + $0x78] sm:$0xff] %vm254, %v3183
      %3208 = vst.msk [vmem:[%s170 + $0x80] sm:$0xff] %vm254, %v3184
      %3209 = vst.msk [vmem:[%s170 + $0x88] sm:$0xff] %vm254, %v3185
      %3210 = vst.msk [vmem:[%s170 + $0x90] sm:$0xff] %vm254, %v3186
      %3211 = vst.msk [vmem:[%s170 + $0x98] sm:$0xff] %vm254, %v3187
      %3212 = vst.msk [vmem:[%s170 + $0xa0] sm:$0xff] %vm254, %v3188
      %3213 = vst.msk [vmem:[%s170 + $0xa8] sm:$0xff] %vm254, %v3189
      %3214 = vst.msk [vmem:[%s170 + $0xb0] sm:$0xff] %vm254, %v3190
      %3215 = vst.msk [vmem:[%s170 + $0xb8] sm:$0xff] %vm254, %v3191
      %v3216 = vadd.f32 %v311, %v3136
      %v3217 = vadd.f32 %v312, %v3137
      %v3218 = vadd.f32 %v313, %v3138
      %v3219 = vadd.f32 %v314, %v3139
      %v3220 = vadd.f32 %v315, %v3140
      %v3221 = vadd.f32 %v316, %v3141
      %v3222 = vadd.f32 %v317, %v3142
      %v3223 = vadd.f32 %v318, %v3143
      %s3224 = scalar_lea.vmem %s170, 192
      %3225 = vst.msk [vmem:[%s3224] sm:$0xff] %vm254, %v3216
      %3226 = vst.msk [vmem:[%s3224 + $0x8] sm:$0xff] %vm254, %v3217
      %3227 = vst.msk [vmem:[%s3224 + $0x10] sm:$0xff] %vm254, %v3218
      %3228 = vst.msk [vmem:[%s3224 + $0x18] sm:$0xff] %vm254, %v3219
      %3229 = vst.msk [vmem:[%s3224 + $0x20] sm:$0xff] %vm254, %v3220
      %3230 = vst.msk [vmem:[%s3224 + $0x28] sm:$0xff] %vm254, %v3221
      %3231 = vst.msk [vmem:[%s3224 + $0x30] sm:$0xff] %vm254, %v3222
      %3232 = vst.msk [vmem:[%s3224 + $0x38] sm:$0xff] %vm254, %v3223
      %v3233 = vld [vmem:[%s170] sm:$0xff]
      %v3234 = vld [vmem:[%s170 + $0x8] sm:$0xff]
      %v3235 = vld [vmem:[%s170 + $0x10] sm:$0xff]
      %v3236 = vld [vmem:[%s170 + $0x18] sm:$0xff]
      %v3237 = vld [vmem:[%s170 + $0x20] sm:$0xff]
      %v3238 = vld [vmem:[%s170 + $0x28] sm:$0xff]
      %v3239 = vld [vmem:[%s170 + $0x30] sm:$0xff]
      %v3240 = vld [vmem:[%s170 + $0x38] sm:$0xff]
      %v3241 = vld [vmem:[%s170 + $0x40] sm:$0xff]
      %v3242 = vld [vmem:[%s170 + $0x48] sm:$0xff]
      %v3243 = vld [vmem:[%s170 + $0x50] sm:$0xff]
      %v3244 = vld [vmem:[%s170 + $0x58] sm:$0xff]
      %v3245 = vld [vmem:[%s170 + $0x60] sm:$0xff]
      %v3246 = vld [vmem:[%s170 + $0x68] sm:$0xff]
      %v3247 = vld [vmem:[%s170 + $0x70] sm:$0xff]
      %v3248 = vld [vmem:[%s170 + $0x78] sm:$0xff]
      %v3249 = vld [vmem:[%s170 + $0x80] sm:$0xff]
      %v3250 = vld [vmem:[%s170 + $0x88] sm:$0xff]
      %v3251 = vld [vmem:[%s170 + $0x90] sm:$0xff]
      %v3252 = vld [vmem:[%s170 + $0x98] sm:$0xff]
      %v3253 = vld [vmem:[%s170 + $0xa0] sm:$0xff]
      %v3254 = vld [vmem:[%s170 + $0xa8] sm:$0xff]
      %v3255 = vld [vmem:[%s170 + $0xb0] sm:$0xff]
      %v3256 = vld [vmem:[%s170 + $0xb8] sm:$0xff]
      %v3257 = vld [vmem:[%s170 + $0xc0] sm:$0xff]
      %v3258 = vld [vmem:[%s170 + $0xc8] sm:$0xff]
      %v3259 = vld [vmem:[%s170 + $0xd0] sm:$0xff]
      %v3260 = vld [vmem:[%s170 + $0xd8] sm:$0xff]
      %v3261 = vld [vmem:[%s170 + $0xe0] sm:$0xff]
      %v3262 = vld [vmem:[%s170 + $0xe8] sm:$0xff]
      %v3263 = vld [vmem:[%s170 + $0xf0] sm:$0xff]
      %v3264 = vld [vmem:[%s170 + $0xf8] sm:$0xff]
      %v3265 = vpack.c.bf16 %v3234, %v3233
      %v3266 = vpack.c.bf16 %v3236, %v3235
      %v3267 = vpack.c.bf16 %v3238, %v3237
      %v3268 = vpack.c.bf16 %v3240, %v3239
      %v3269 = vpack.c.bf16 %v3242, %v3241
      %v3270 = vpack.c.bf16 %v3244, %v3243
      %v3271 = vpack.c.bf16 %v3246, %v3245
      %v3272 = vpack.c.bf16 %v3248, %v3247
      %v3273 = vpack.c.bf16 %v3250, %v3249
      %v3274 = vpack.c.bf16 %v3252, %v3251
      %v3275 = vpack.c.bf16 %v3254, %v3253
      %v3276 = vpack.c.bf16 %v3256, %v3255
      %v3277 = vpack.c.bf16 %v3258, %v3257
      %v3278 = vpack.c.bf16 %v3260, %v3259
      %v3279 = vpack.c.bf16 %v3262, %v3261
      %v3280 = vpack.c.bf16 %v3264, %v3263
      %v3297 = vunpack.c.l.b16 %v3265
      %v3298 = vunpack.c.h.b16 %v3265
      %v3299 = vunpack.c.l.b16 %v3266
      %v3300 = vunpack.c.h.b16 %v3266
      %v3301 = vunpack.c.l.b16 %v3267
      %v3302 = vunpack.c.h.b16 %v3267
      %v3303 = vunpack.c.l.b16 %v3268
      %v3304 = vunpack.c.h.b16 %v3268
      %v3305 = vunpack.c.l.b16 %v3269
      %v3306 = vunpack.c.h.b16 %v3269
      %v3307 = vunpack.c.l.b16 %v3270
      %v3308 = vunpack.c.h.b16 %v3270
      %v3309 = vunpack.c.l.b16 %v3271
      %v3310 = vunpack.c.h.b16 %v3271
      %v3311 = vunpack.c.l.b16 %v3272
      %v3312 = vunpack.c.h.b16 %v3272
      %v3313 = vunpack.c.l.b16 %v3273
      %v3314 = vunpack.c.h.b16 %v3273
      %v3315 = vunpack.c.l.b16 %v3274
      %v3316 = vunpack.c.h.b16 %v3274
      %v3317 = vunpack.c.l.b16 %v3275
      %v3318 = vunpack.c.h.b16 %v3275
      %v3319 = vunpack.c.l.b16 %v3276
      %v3320 = vunpack.c.h.b16 %v3276
      %v3321 = vunpack.c.l.b16 %v3277
      %v3322 = vunpack.c.h.b16 %v3277
      %v3323 = vunpack.c.l.b16 %v3278
      %v3324 = vunpack.c.h.b16 %v3278
      %v3325 = vunpack.c.l.b16 %v3279
      %v3326 = vunpack.c.h.b16 %v3279
      %v3327 = vunpack.c.l.b16 %v3280
      %v3328 = vunpack.c.h.b16 %v3280
      %v3329 = vpack.c.b16 %v3297, %v3297
      %v3330 = vpack.c.b16 %v3298, %v3298
      %v3331 = vpack.c.b16 %v3299, %v3299
      %v3332 = vpack.c.b16 %v3300, %v3300
      %v3333 = vpack.c.b16 %v3301, %v3301
      %v3334 = vpack.c.b16 %v3302, %v3302
      %v3335 = vpack.c.b16 %v3303, %v3303
      %v3336 = vpack.c.b16 %v3304, %v3304
      %v3337 = vpack.c.b16 %v3305, %v3305
      %v3338 = vpack.c.b16 %v3306, %v3306
      %v3339 = vpack.c.b16 %v3307, %v3307
      %v3340 = vpack.c.b16 %v3308, %v3308
      %v3341 = vpack.c.b16 %v3309, %v3309
      %v3342 = vpack.c.b16 %v3310, %v3310
      %v3343 = vpack.c.b16 %v3311, %v3311
      %v3344 = vpack.c.b16 %v3312, %v3312
      %v3345 = vpack.c.b16 %v3313, %v3313
      %v3346 = vpack.c.b16 %v3314, %v3314
      %v3347 = vpack.c.b16 %v3315, %v3315
      %v3348 = vpack.c.b16 %v3316, %v3316
      %v3349 = vpack.c.b16 %v3317, %v3317
      %v3350 = vpack.c.b16 %v3318, %v3318
      %v3351 = vpack.c.b16 %v3319, %v3319
      %v3352 = vpack.c.b16 %v3320, %v3320
      %v3353 = vpack.c.b16 %v3321, %v3321
      %v3354 = vpack.c.b16 %v3322, %v3322
      %v3355 = vpack.c.b16 %v3323, %v3323
      %v3356 = vpack.c.b16 %v3324, %v3324
      %v3357 = vpack.c.b16 %v3325, %v3325
      %v3358 = vpack.c.b16 %v3326, %v3326
      %v3359 = vpack.c.b16 %v3327, %v3327
      %v3360 = vpack.c.b16 %v3328, %v3328
      %3393 = vst.msk [vmem:[#allocation2 + $0x8] sm:$0xf] %vm172, %v3329
      %3394 = vst.msk [vmem:[#allocation2 + $0xc] sm:$0xf] %vm172, %v3330
      %3395 = vst.msk [vmem:[#allocation2 + $0x1c] sm:$0xf] %vm172, %v3331
      %3396 = vst.msk [vmem:[#allocation2 + $0x20] sm:$0xf] %vm172, %v3332
      %3397 = vst.msk [vmem:[#allocation2 + $0x30] sm:$0xf] %vm172, %v3333
      %3398 = vst.msk [vmem:[#allocation2 + $0x34] sm:$0xf] %vm172, %v3334
      %3399 = vst.msk [vmem:[#allocation2 + $0x44] sm:$0xf] %vm172, %v3335
      %3400 = vst.msk [vmem:[#allocation2 + $0x48] sm:$0xf] %vm172, %v3336
      %3401 = vst.msk [vmem:[#allocation2 + $0x58] sm:$0xf] %vm172, %v3337
      %3402 = vst.msk [vmem:[#allocation2 + $0x5c] sm:$0xf] %vm172, %v3338
      %3403 = vst.msk [vmem:[#allocation2 + $0x6c] sm:$0xf] %vm172, %v3339
      %3404 = vst.msk [vmem:[#allocation2 + $0x70] sm:$0xf] %vm172, %v3340
      %3405 = vst.msk [vmem:[#allocation2 + $0x80] sm:$0xf] %vm172, %v3341
      %3406 = vst.msk [vmem:[#allocation2 + $0x84] sm:$0xf] %vm172, %v3342
      %3407 = vst.msk [vmem:[#allocation2 + $0x94] sm:$0xf] %vm172, %v3343
      %3408 = vst.msk [vmem:[#allocation2 + $0x98] sm:$0xf] %vm172, %v3344
      %3409 = vst.msk [vmem:[#allocation2 + $0xa8] sm:$0xf] %vm172, %v3345
      %3410 = vst.msk [vmem:[#allocation2 + $0xac] sm:$0xf] %vm172, %v3346
      %3411 = vst.msk [vmem:[#allocation2 + $0xbc] sm:$0xf] %vm172, %v3347
      %3412 = vst.msk [vmem:[#allocation2 + $0xc0] sm:$0xf] %vm172, %v3348
      %3413 = vst.msk [vmem:[#allocation2 + $0xd0] sm:$0xf] %vm172, %v3349
      %3414 = vst.msk [vmem:[#allocation2 + $0xd4] sm:$0xf] %vm172, %v3350
      %3415 = vst.msk [vmem:[#allocation2 + $0xe4] sm:$0xf] %vm172, %v3351
      %3416 = vst.msk [vmem:[#allocation2 + $0xe8] sm:$0xf] %vm172, %v3352
      %3417 = vst.msk [vmem:[#allocation2 + $0xf8] sm:$0xf] %vm172, %v3353
      %3418 = vst.msk [vmem:[#allocation2 + $0xfc] sm:$0xf] %vm172, %v3354
      %3419 = vst.msk [vmem:[#allocation2 + $0x10c] sm:$0xf] %vm172, %v3355
      %3420 = vst.msk [vmem:[#allocation2 + $0x110] sm:$0xf] %vm172, %v3356
      %3421 = vst.msk [vmem:[#allocation2 + $0x120] sm:$0xf] %vm172, %v3357
      %3422 = vst.msk [vmem:[#allocation2 + $0x124] sm:$0xf] %vm172, %v3358
      %3423 = vst.msk [vmem:[#allocation2 + $0x134] sm:$0xf] %vm172, %v3359
      %3424 = vst.msk [vmem:[#allocation2 + $0x138] sm:$0xf] %vm172, %v3360
      %v3425 = vld [vmem:[#allocation2 + $0x4] sm:$0x8]
      %v3426 = vld [vmem:[#allocation2 + $0x8] sm:$0xf]
      %v3427 = vld [vmem:[#allocation2 + $0xc] sm:$0x7]
      %v3428 = vld [vmem:[#allocation2 + $0x18] sm:$0x8]
      %v3429 = vld [vmem:[#allocation2 + $0x1c] sm:$0xf]
      %v3430 = vld [vmem:[#allocation2 + $0x20] sm:$0x7]
      %v3431 = vld [vmem:[#allocation2 + $0x2c] sm:$0x8]
      %v3432 = vld [vmem:[#allocation2 + $0x30] sm:$0xf]
      %v3433 = vld [vmem:[#allocation2 + $0x34] sm:$0x7]
      %v3434 = vld [vmem:[#allocation2 + $0x40] sm:$0x8]
      %v3435 = vld [vmem:[#allocation2 + $0x44] sm:$0xf]
      %v3436 = vld [vmem:[#allocation2 + $0x48] sm:$0x7]
      %v3437 = vld [vmem:[#allocation2 + $0x54] sm:$0x8]
      %v3438 = vld [vmem:[#allocation2 + $0x58] sm:$0xf]
      %v3439 = vld [vmem:[#allocation2 + $0x5c] sm:$0x7]
      %v3440 = vld [vmem:[#allocation2 + $0x68] sm:$0x8]
      %v3441 = vld [vmem:[#allocation2 + $0x6c] sm:$0xf]
      %v3442 = vld [vmem:[#allocation2 + $0x70] sm:$0x7]
      %v3443 = vld [vmem:[#allocation2 + $0x7c] sm:$0x8]
      %v3444 = vld [vmem:[#allocation2 + $0x80] sm:$0xf]
      %v3445 = vld [vmem:[#allocation2 + $0x84] sm:$0x7]
      %v3446 = vld [vmem:[#allocation2 + $0x90] sm:$0x8]
      %v3447 = vld [vmem:[#allocation2 + $0x94] sm:$0xf]
      %v3448 = vld [vmem:[#allocation2 + $0x98] sm:$0x7]
      %v3449 = vld [vmem:[#allocation2 + $0xa4] sm:$0x8]
      %v3450 = vld [vmem:[#allocation2 + $0xa8] sm:$0xf]
      %v3451 = vld [vmem:[#allocation2 + $0xac] sm:$0x7]
      %v3452 = vld [vmem:[#allocation2 + $0xb8] sm:$0x8]
      %v3453 = vld [vmem:[#allocation2 + $0xbc] sm:$0xf]
      %v3454 = vld [vmem:[#allocation2 + $0xc0] sm:$0x7]
      %v3455 = vld [vmem:[#allocation2 + $0xcc] sm:$0x8]
      %v3456 = vld [vmem:[#allocation2 + $0xd0] sm:$0xf]
      %v3457 = vld [vmem:[#allocation2 + $0xd4] sm:$0x7]
      %v3458 = vld [vmem:[#allocation2 + $0xe0] sm:$0x8]
      %v3459 = vld [vmem:[#allocation2 + $0xe4] sm:$0xf]
      %v3460 = vld [vmem:[#allocation2 + $0xe8] sm:$0x7]
      %v3461 = vld [vmem:[#allocation2 + $0xf4] sm:$0x8]
      %v3462 = vld [vmem:[#allocation2 + $0xf8] sm:$0xf]
      %v3463 = vld [vmem:[#allocation2 + $0xfc] sm:$0x7]
      %v3464 = vld [vmem:[#allocation2 + $0x108] sm:$0x8]
      %v3465 = vld [vmem:[#allocation2 + $0x10c] sm:$0xf]
      %v3466 = vld [vmem:[#allocation2 + $0x110] sm:$0x7]
      %v3467 = vld [vmem:[#allocation2 + $0x11c] sm:$0x8]
      %v3468 = vld [vmem:[#allocation2 + $0x120] sm:$0xf]
      %v3469 = vld [vmem:[#allocation2 + $0x124] sm:$0x7]
      %v3470 = vld [vmem:[#allocation2 + $0x130] sm:$0x8]
      %v3471 = vld [vmem:[#allocation2 + $0x134] sm:$0xf]
      %v3472 = vld [vmem:[#allocation2 + $0x138] sm:$0x7]
      %v3521 = vrot.slane %v3425, 7
      %v3522 = vrot.slane %v3521, 4
      %v3523 = vrot.slane %v3426, 7
      %v3524 = vsel %vm577, %v3522, %v3523
      %v3525 = vrot.slane %v3523, 4
      %v3526 = vrot.slane %v3427, 7
      %v3527 = vsel %vm577, %v3525, %v3526
      %v3528 = vrot.slane %v3428, 7
      %v3529 = vrot.slane %v3528, 4
      %v3530 = vrot.slane %v3429, 7
      %v3531 = vsel %vm577, %v3529, %v3530
      %v3532 = vrot.slane %v3530, 4
      %v3533 = vrot.slane %v3430, 7
      %v3534 = vsel %vm577, %v3532, %v3533
      %v3535 = vrot.slane %v3431, 7
      %v3536 = vrot.slane %v3535, 4
      %v3537 = vrot.slane %v3432, 7
      %v3538 = vsel %vm577, %v3536, %v3537
      %v3539 = vrot.slane %v3537, 4
      %v3540 = vrot.slane %v3433, 7
      %v3541 = vsel %vm577, %v3539, %v3540
      %v3542 = vrot.slane %v3434, 7
      %v3543 = vrot.slane %v3542, 4
      %v3544 = vrot.slane %v3435, 7
      %v3545 = vsel %vm577, %v3543, %v3544
      %v3546 = vrot.slane %v3544, 4
      %v3547 = vrot.slane %v3436, 7
      %v3548 = vsel %vm577, %v3546, %v3547
      %v3549 = vrot.slane %v3437, 7
      %v3550 = vrot.slane %v3549, 4
      %v3551 = vrot.slane %v3438, 7
      %v3552 = vsel %vm577, %v3550, %v3551
      %v3553 = vrot.slane %v3551, 4
      %v3554 = vrot.slane %v3439, 7
      %v3555 = vsel %vm577, %v3553, %v3554
      %v3556 = vrot.slane %v3440, 7
      %v3557 = vrot.slane %v3556, 4
      %v3558 = vrot.slane %v3441, 7
      %v3559 = vsel %vm577, %v3557, %v3558
      %v3560 = vrot.slane %v3558, 4
      %v3561 = vrot.slane %v3442, 7
      %v3562 = vsel %vm577, %v3560, %v3561
      %v3563 = vrot.slane %v3443, 7
      %v3564 = vrot.slane %v3563, 4
      %v3565 = vrot.slane %v3444, 7
      %v3566 = vsel %vm577, %v3564, %v3565
      %v3567 = vrot.slane %v3565, 4
      %v3568 = vrot.slane %v3445, 7
      %v3569 = vsel %vm577, %v3567, %v3568
      %v3570 = vrot.slane %v3446, 7
      %v3571 = vrot.slane %v3570, 4
      %v3572 = vrot.slane %v3447, 7
      %v3573 = vsel %vm577, %v3571, %v3572
      %v3574 = vrot.slane %v3572, 4
      %v3575 = vrot.slane %v3448, 7
      %v3576 = vsel %vm577, %v3574, %v3575
      %v3577 = vrot.slane %v3449, 7
      %v3578 = vrot.slane %v3577, 4
      %v3579 = vrot.slane %v3450, 7
      %v3580 = vsel %vm577, %v3578, %v3579
      %v3581 = vrot.slane %v3579, 4
      %v3582 = vrot.slane %v3451, 7
      %v3583 = vsel %vm577, %v3581, %v3582
      %v3584 = vrot.slane %v3452, 7
      %v3585 = vrot.slane %v3584, 4
      %v3586 = vrot.slane %v3453, 7
      %v3587 = vsel %vm577, %v3585, %v3586
      %v3588 = vrot.slane %v3586, 4
      %v3589 = vrot.slane %v3454, 7
      %v3590 = vsel %vm577, %v3588, %v3589
      %v3591 = vrot.slane %v3455, 7
      %v3592 = vrot.slane %v3591, 4
      %v3593 = vrot.slane %v3456, 7
      %v3594 = vsel %vm577, %v3592, %v3593
      %v3595 = vrot.slane %v3593, 4
      %v3596 = vrot.slane %v3457, 7
      %v3597 = vsel %vm577, %v3595, %v3596
      %v3598 = vrot.slane %v3458, 7
      %v3599 = vrot.slane %v3598, 4
      %v3600 = vrot.slane %v3459, 7
      %v3601 = vsel %vm577, %v3599, %v3600
      %v3602 = vrot.slane %v3600, 4
      %v3603 = vrot.slane %v3460, 7
      %v3604 = vsel %vm577, %v3602, %v3603
      %v3605 = vrot.slane %v3461, 7
      %v3606 = vrot.slane %v3605, 4
      %v3607 = vrot.slane %v3462, 7
      %v3608 = vsel %vm577, %v3606, %v3607
      %v3609 = vrot.slane %v3607, 4
      %v3610 = vrot.slane %v3463, 7
      %v3611 = vsel %vm577, %v3609, %v3610
      %v3612 = vrot.slane %v3464, 7
      %v3613 = vrot.slane %v3612, 4
      %v3614 = vrot.slane %v3465, 7
      %v3615 = vsel %vm577, %v3613, %v3614
      %v3616 = vrot.slane %v3614, 4
      %v3617 = vrot.slane %v3466, 7
      %v3618 = vsel %vm577, %v3616, %v3617
      %v3619 = vrot.slane %v3467, 7
      %v3620 = vrot.slane %v3619, 4
      %v3621 = vrot.slane %v3468, 7
      %v3622 = vsel %vm577, %v3620, %v3621
      %v3623 = vrot.slane %v3621, 4
      %v3624 = vrot.slane %v3469, 7
      %v3625 = vsel %vm577, %v3623, %v3624
      %v3626 = vrot.slane %v3470, 7
      %v3627 = vrot.slane %v3626, 4
      %v3628 = vrot.slane %v3471, 7
      %v3629 = vsel %vm577, %v3627, %v3628
      %v3630 = vrot.slane %v3628, 4
      %v3631 = vrot.slane %v3472, 7
      %v3632 = vsel %vm577, %v3630, %v3631
      %s3633 = scalar_lea.vmem %s1, 20
      %v3634 = vld [vmem:[%s3633] sm:$0xf]
      %v3635 = vld [vmem:[#allocation2 + $0xc] sm:$0xf]
      %v3636 = vld [vmem:[#allocation2 + $0x20] sm:$0xf]
      %v3637 = vld [vmem:[#allocation2 + $0x34] sm:$0xf]
      %v3638 = vld [vmem:[#allocation2 + $0x48] sm:$0xf]
      %v3639 = vld [vmem:[#allocation2 + $0x5c] sm:$0xf]
      %v3640 = vld [vmem:[#allocation2 + $0x70] sm:$0xf]
      %v3641 = vld [vmem:[#allocation2 + $0x84] sm:$0xf]
      %v3642 = vld [vmem:[#allocation2 + $0x98] sm:$0xf]
      %v3643 = vld [vmem:[#allocation2 + $0xac] sm:$0xf]
      %v3644 = vld [vmem:[#allocation2 + $0xc0] sm:$0xf]
      %v3645 = vld [vmem:[#allocation2 + $0xd4] sm:$0xf]
      %v3646 = vld [vmem:[#allocation2 + $0xe8] sm:$0xf]
      %v3647 = vld [vmem:[#allocation2 + $0xfc] sm:$0xf]
      %v3648 = vld [vmem:[#allocation2 + $0x110] sm:$0xf]
      %v3649 = vld [vmem:[#allocation2 + $0x124] sm:$0xf]
      %v3650 = vld [vmem:[#allocation2 + $0x138] sm:$0xf]
      %v3652 = vshrl.u32 %v3425, 16
      %v3654 = vrot.slane %v3652, 7
      %v3655 = vrot.slane %v3654, 4
      %v3657 = vshrl.u32 %v3426, 16
      %v3659 = vrot.slane %v3657, 7
      %v3660 = vshll.u32 %v3426, 16
      %v3662 = vor.u32 %v3659, %v3660
      %v3663 = vsel %vm709, %v3655, %v3662
      %v3664 = vrot.slane %v3659, 4
      %v3666 = vshrl.u32 %v3635, 16
      %v3668 = vrot.slane %v3666, 7
      %v3669 = vshll.u32 %v3635, 16
      %v3671 = vor.u32 %v3668, %v3669
      %v3672 = vsel %vm709, %v3664, %v3671
      %v3674 = vshrl.u32 %v3428, 16
      %v3676 = vrot.slane %v3674, 7
      %v3677 = vrot.slane %v3676, 4
      %v3679 = vshrl.u32 %v3429, 16
      %v3681 = vrot.slane %v3679, 7
      %v3682 = vshll.u32 %v3429, 16
      %v3684 = vor.u32 %v3681, %v3682
      %v3685 = vsel %vm709, %v3677, %v3684
      %v3686 = vrot.slane %v3681, 4
      %v3688 = vshrl.u32 %v3636, 16
      %v3690 = vrot.slane %v3688, 7
      %v3691 = vshll.u32 %v3636, 16
      %v3693 = vor.u32 %v3690, %v3691
      %v3694 = vsel %vm709, %v3686, %v3693
      %v3696 = vshrl.u32 %v3431, 16
      %v3698 = vrot.slane %v3696, 7
      %v3699 = vrot.slane %v3698, 4
      %v3701 = vshrl.u32 %v3432, 16
      %v3703 = vrot.slane %v3701, 7
      %v3704 = vshll.u32 %v3432, 16
      %v3706 = vor.u32 %v3703, %v3704
      %v3707 = vsel %vm709, %v3699, %v3706
      %v3708 = vrot.slane %v3703, 4
      %v3710 = vshrl.u32 %v3637, 16
      %v3712 = vrot.slane %v3710, 7
      %v3713 = vshll.u32 %v3637, 16
      %v3715 = vor.u32 %v3712, %v3713
      %v3716 = vsel %vm709, %v3708, %v3715
      %v3718 = vshrl.u32 %v3434, 16
      %v3720 = vrot.slane %v3718, 7
      %v3721 = vrot.slane %v3720, 4
      %v3723 = vshrl.u32 %v3435, 16
      %v3725 = vrot.slane %v3723, 7
      %v3726 = vshll.u32 %v3435, 16
      %v3728 = vor.u32 %v3725, %v3726
      %v3729 = vsel %vm709, %v3721, %v3728
      %v3730 = vrot.slane %v3725, 4
      %v3732 = vshrl.u32 %v3638, 16
      %v3734 = vrot.slane %v3732, 7
      %v3735 = vshll.u32 %v3638, 16
      %v3737 = vor.u32 %v3734, %v3735
      %v3738 = vsel %vm709, %v3730, %v3737
      %v3740 = vshrl.u32 %v3437, 16
      %v3742 = vrot.slane %v3740, 7
      %v3743 = vrot.slane %v3742, 4
      %v3745 = vshrl.u32 %v3438, 16
      %v3747 = vrot.slane %v3745, 7
      %v3748 = vshll.u32 %v3438, 16
      %v3750 = vor.u32 %v3747, %v3748
      %v3751 = vsel %vm709, %v3743, %v3750
      %v3752 = vrot.slane %v3747, 4
      %v3754 = vshrl.u32 %v3639, 16
      %v3756 = vrot.slane %v3754, 7
      %v3757 = vshll.u32 %v3639, 16
      %v3759 = vor.u32 %v3756, %v3757
      %v3760 = vsel %vm709, %v3752, %v3759
      %v3762 = vshrl.u32 %v3440, 16
      %v3764 = vrot.slane %v3762, 7
      %v3765 = vrot.slane %v3764, 4
      %v3767 = vshrl.u32 %v3441, 16
      %v3769 = vrot.slane %v3767, 7
      %v3770 = vshll.u32 %v3441, 16
      %v3772 = vor.u32 %v3769, %v3770
      %v3773 = vsel %vm709, %v3765, %v3772
      %v3774 = vrot.slane %v3769, 4
      %v3776 = vshrl.u32 %v3640, 16
      %v3778 = vrot.slane %v3776, 7
      %v3779 = vshll.u32 %v3640, 16
      %v3781 = vor.u32 %v3778, %v3779
      %v3782 = vsel %vm709, %v3774, %v3781
      %v3784 = vshrl.u32 %v3443, 16
      %v3786 = vrot.slane %v3784, 7
      %v3787 = vrot.slane %v3786, 4
      %v3789 = vshrl.u32 %v3444, 16
      %v3791 = vrot.slane %v3789, 7
      %v3792 = vshll.u32 %v3444, 16
      %v3794 = vor.u32 %v3791, %v3792
      %v3795 = vsel %vm709, %v3787, %v3794
      %v3796 = vrot.slane %v3791, 4
      %v3798 = vshrl.u32 %v3641, 16
      %v3800 = vrot.slane %v3798, 7
      %v3801 = vshll.u32 %v3641, 16
      %v3803 = vor.u32 %v3800, %v3801
      %v3804 = vsel %vm709, %v3796, %v3803
      %v3806 = vshrl.u32 %v3446, 16
      %v3808 = vrot.slane %v3806, 7
      %v3809 = vrot.slane %v3808, 4
      %v3811 = vshrl.u32 %v3447, 16
      %v3813 = vrot.slane %v3811, 7
      %v3814 = vshll.u32 %v3447, 16
      %v3816 = vor.u32 %v3813, %v3814
      %v3817 = vsel %vm709, %v3809, %v3816
      %v3818 = vrot.slane %v3813, 4
      %v3820 = vshrl.u32 %v3642, 16
      %v3822 = vrot.slane %v3820, 7
      %v3823 = vshll.u32 %v3642, 16
      %v3825 = vor.u32 %v3822, %v3823
      %v3826 = vsel %vm709, %v3818, %v3825
      %v3828 = vshrl.u32 %v3449, 16
      %v3830 = vrot.slane %v3828, 7
      %v3831 = vrot.slane %v3830, 4
      %v3833 = vshrl.u32 %v3450, 16
      %v3835 = vrot.slane %v3833, 7
      %v3836 = vshll.u32 %v3450, 16
      %v3838 = vor.u32 %v3835, %v3836
      %v3839 = vsel %vm709, %v3831, %v3838
      %v3840 = vrot.slane %v3835, 4
      %v3842 = vshrl.u32 %v3643, 16
      %v3844 = vrot.slane %v3842, 7
      %v3845 = vshll.u32 %v3643, 16
      %v3847 = vor.u32 %v3844, %v3845
      %v3848 = vsel %vm709, %v3840, %v3847
      %v3850 = vshrl.u32 %v3452, 16
      %v3852 = vrot.slane %v3850, 7
      %v3853 = vrot.slane %v3852, 4
      %v3855 = vshrl.u32 %v3453, 16
      %v3857 = vrot.slane %v3855, 7
      %v3858 = vshll.u32 %v3453, 16
      %v3860 = vor.u32 %v3857, %v3858
      %v3861 = vsel %vm709, %v3853, %v3860
      %v3862 = vrot.slane %v3857, 4
      %v3864 = vshrl.u32 %v3644, 16
      %v3866 = vrot.slane %v3864, 7
      %v3867 = vshll.u32 %v3644, 16
      %v3869 = vor.u32 %v3866, %v3867
      %v3870 = vsel %vm709, %v3862, %v3869
      %v3872 = vshrl.u32 %v3455, 16
      %v3874 = vrot.slane %v3872, 7
      %v3875 = vrot.slane %v3874, 4
      %v3877 = vshrl.u32 %v3456, 16
      %v3879 = vrot.slane %v3877, 7
      %v3880 = vshll.u32 %v3456, 16
      %v3882 = vor.u32 %v3879, %v3880
      %v3883 = vsel %vm709, %v3875, %v3882
      %v3884 = vrot.slane %v3879, 4
      %v3886 = vshrl.u32 %v3645, 16
      %v3888 = vrot.slane %v3886, 7
      %v3889 = vshll.u32 %v3645, 16
      %v3891 = vor.u32 %v3888, %v3889
      %v3892 = vsel %vm709, %v3884, %v3891
      %v3894 = vshrl.u32 %v3458, 16
      %v3896 = vrot.slane %v3894, 7
      %v3897 = vrot.slane %v3896, 4
      %v3899 = vshrl.u32 %v3459, 16
      %v3901 = vrot.slane %v3899, 7
      %v3902 = vshll.u32 %v3459, 16
      %v3904 = vor.u32 %v3901, %v3902
      %v3905 = vsel %vm709, %v3897, %v3904
      %v3906 = vrot.slane %v3901, 4
      %v3908 = vshrl.u32 %v3646, 16
      %v3910 = vrot.slane %v3908, 7
      %v3911 = vshll.u32 %v3646, 16
      %v3913 = vor.u32 %v3910, %v3911
      %v3914 = vsel %vm709, %v3906, %v3913
      %v3916 = vshrl.u32 %v3461, 16
      %v3918 = vrot.slane %v3916, 7
      %v3919 = vrot.slane %v3918, 4
      %v3921 = vshrl.u32 %v3462, 16
      %v3923 = vrot.slane %v3921, 7
      %v3924 = vshll.u32 %v3462, 16
      %v3926 = vor.u32 %v3923, %v3924
      %v3927 = vsel %vm709, %v3919, %v3926
      %v3928 = vrot.slane %v3923, 4
      %v3930 = vshrl.u32 %v3647, 16
      %v3932 = vrot.slane %v3930, 7
      %v3933 = vshll.u32 %v3647, 16
      %v3935 = vor.u32 %v3932, %v3933
      %v3936 = vsel %vm709, %v3928, %v3935
      %v3938 = vshrl.u32 %v3464, 16
      %v3940 = vrot.slane %v3938, 7
      %v3941 = vrot.slane %v3940, 4
      %v3943 = vshrl.u32 %v3465, 16
      %v3945 = vrot.slane %v3943, 7
      %v3946 = vshll.u32 %v3465, 16
      %v3948 = vor.u32 %v3945, %v3946
      %v3949 = vsel %vm709, %v3941, %v3948
      %v3950 = vrot.slane %v3945, 4
      %v3952 = vshrl.u32 %v3648, 16
      %v3954 = vrot.slane %v3952, 7
      %v3955 = vshll.u32 %v3648, 16
      %v3957 = vor.u32 %v3954, %v3955
      %v3958 = vsel %vm709, %v3950, %v3957
      %v3960 = vshrl.u32 %v3467, 16
      %v3962 = vrot.slane %v3960, 7
      %v3963 = vrot.slane %v3962, 4
      %v3965 = vshrl.u32 %v3468, 16
      %v3967 = vrot.slane %v3965, 7
      %v3968 = vshll.u32 %v3468, 16
      %v3970 = vor.u32 %v3967, %v3968
      %v3971 = vsel %vm709, %v3963, %v3970
      %v3972 = vrot.slane %v3967, 4
      %v3974 = vshrl.u32 %v3649, 16
      %v3976 = vrot.slane %v3974, 7
      %v3977 = vshll.u32 %v3649, 16
      %v3979 = vor.u32 %v3976, %v3977
      %v3980 = vsel %vm709, %v3972, %v3979
      %v3982 = vshrl.u32 %v3470, 16
      %v3984 = vrot.slane %v3982, 7
      %v3985 = vrot.slane %v3984, 4
      %v3987 = vshrl.u32 %v3471, 16
      %v3989 = vrot.slane %v3987, 7
      %v3990 = vshll.u32 %v3471, 16
      %v3992 = vor.u32 %v3989, %v3990
      %v3993 = vsel %vm709, %v3985, %v3992
      %v3994 = vrot.slane %v3989, 4
      %v3996 = vshrl.u32 %v3650, 16
      %v3998 = vrot.slane %v3996, 7
      %v3999 = vshll.u32 %v3650, 16
      %v4001 = vor.u32 %v3998, %v3999
      %v4002 = vsel %vm709, %v3994, %v4001
      %s4003 = scalar_lea.vmem %s1, 24
      %v4004 = vld [vmem:[%s4003] sm:$0xf]
      %v4005 = vunpack.c.l.b16 %v3663
      %v4006 = vunpack.c.l.b16 %v3672
      %v4007 = vunpack.c.l.b16 %v3685
      %v4008 = vunpack.c.l.b16 %v3694
      %v4009 = vunpack.c.l.b16 %v3707
      %v4010 = vunpack.c.l.b16 %v3716
      %v4011 = vunpack.c.l.b16 %v3729
      %v4012 = vunpack.c.l.b16 %v3738
      %v4013 = vunpack.c.l.b16 %v3751
      %v4014 = vunpack.c.l.b16 %v3760
      %v4015 = vunpack.c.l.b16 %v3773
      %v4016 = vunpack.c.l.b16 %v3782
      %v4017 = vunpack.c.l.b16 %v3795
      %v4018 = vunpack.c.l.b16 %v3804
      %v4019 = vunpack.c.l.b16 %v3817
      %v4020 = vunpack.c.l.b16 %v3826
      %v4021 = vunpack.c.l.b16 %v3839
      %v4022 = vunpack.c.l.b16 %v3848
      %v4023 = vunpack.c.l.b16 %v3861
      %v4024 = vunpack.c.l.b16 %v3870
      %v4025 = vunpack.c.l.b16 %v3883
      %v4026 = vunpack.c.l.b16 %v3892
      %v4027 = vunpack.c.l.b16 %v3905
      %v4028 = vunpack.c.l.b16 %v3914
      %v4029 = vunpack.c.l.b16 %v3927
      %v4030 = vunpack.c.l.b16 %v3936
      %v4031 = vunpack.c.l.b16 %v3949
      %v4032 = vunpack.c.l.b16 %v3958
      %v4033 = vunpack.c.l.b16 %v3971
      %v4034 = vunpack.c.l.b16 %v3980
      %v4035 = vunpack.c.l.b16 %v3993
      %v4036 = vunpack.c.l.b16 %v4002
      %v4037 = vpack.c.b16 %v4006, %v4005
      %v4038 = vpack.c.b16 %v4008, %v4007
      %v4039 = vpack.c.b16 %v4010, %v4009
      %v4040 = vpack.c.b16 %v4012, %v4011
      %v4041 = vpack.c.b16 %v4014, %v4013
      %v4042 = vpack.c.b16 %v4016, %v4015
      %v4043 = vpack.c.b16 %v4018, %v4017
      %v4044 = vpack.c.b16 %v4020, %v4019
      %v4045 = vpack.c.b16 %v4022, %v4021
      %v4046 = vpack.c.b16 %v4024, %v4023
      %v4047 = vpack.c.b16 %v4026, %v4025
      %v4048 = vpack.c.b16 %v4028, %v4027
      %v4049 = vpack.c.b16 %v4030, %v4029
      %v4050 = vpack.c.b16 %v4032, %v4031
      %v4051 = vpack.c.b16 %v4034, %v4033
      %v4052 = vpack.c.b16 %v4036, %v4035
      %v4054 = vsel %vm254, %v4037, 0
      %v4057 = vsel %vm254, %v4038, 0
      %v4060 = vsel %vm254, %v4039, 0
      %v4063 = vsel %vm254, %v4040, 0
      %v4066 = vsel %vm254, %v4041, 0
      %v4069 = vsel %vm254, %v4042, 0
      %v4072 = vsel %vm254, %v4043, 0
      %v4075 = vsel %vm254, %v4044, 0
      %v4078 = vsel %vm254, %v4045, 0
      %v4081 = vsel %vm254, %v4046, 0
      %v4084 = vsel %vm254, %v4047, 0
      %v4087 = vsel %vm254, %v4048, 0
      %v4090 = vsel %vm254, %v4049, 0
      %v4093 = vsel %vm254, %v4050, 0
      %v4096 = vsel %vm254, %v4051, 0
      %v4099 = vsel %vm254, %v4052, 0
      %v4102 = vsel %vm1160, %v4004, 0
      %4104 = vmatprep.subr.bf16.mxu0 0
      %4105 = vmatpush1.bf16.msra.mxu0 %v4102
      %4106 = vmatprep.subr.bf16.mxu0 0
      %4107 = vmatpush1.bf16.msra.mxu0 0
      %4108 = vmatprep.subr.bf16.mxu0 0
      %4109 = vmatpush1.bf16.msra.mxu0 0
      %4110 = vmatprep.subr.bf16.mxu0 0
      %4111 = vmatpush1.bf16.msra.mxu0 0
      %4112 = vmatprep.subr.bf16.mxu0 0
      %4113 = vmatpush1.bf16.msra.mxu0 0
      %4114 = vmatprep.subr.bf16.mxu0 0
      %4115 = vmatpush1.bf16.msra.mxu0 0
      %4116 = vmatprep.subr.bf16.mxu0 0
      %4117 = vmatpush1.bf16.msra.mxu0 0
      %4118 = vmatprep.subr.bf16.mxu0 0
      %4119 = vmatpush1.bf16.msra.mxu0 0
      %4120 = vmatprep.subr.bf16.mxu0 0
      %4121 = vmatpush1.bf16.msra.mxu0 0
      %4122 = vmatprep.subr.bf16.mxu0 0
      %4123 = vmatpush1.bf16.msra.mxu0 0
      %4124 = vmatprep.subr.bf16.mxu0 0
      %4125 = vmatpush1.bf16.msra.mxu0 0
      %4126 = vmatprep.subr.bf16.mxu0 0
      %4127 = vmatpush1.bf16.msra.mxu0 0
      %4128 = vmatprep.subr.bf16.mxu0 0
      %4129 = vmatpush1.bf16.msra.mxu0 0
      %4130 = vmatprep.subr.bf16.mxu0 0
      %4131 = vmatpush1.bf16.msra.mxu0 0
      %4132 = vmatprep.subr.bf16.mxu0 0
      %4133 = vmatpush1.bf16.msra.mxu0 0
      %4134 = vmatprep.subr.bf16.mxu0 0
      %4135 = vmatpush1.bf16.msra.mxu0 0
      %4136 = vmatprep.mubr.bf16.mxu0 0
      %4137 = vmatmul.mubr.bf16.gmra.mrb[0].mxu0 %v4054
      %v4138 = vpop.f32.mrb[0].mxu0
      %v4139 = vadd.f32 0.0, %v4138
      %v4140 = vpop.f32.mrb[0].mxu0
      %v4141 = vpop.f32.mrb[0].mxu0
      %v4142 = vadd.f32 0.0, %v4141
      %v4143 = vpop.f32.mrb[0].mxu0
      %4144 = vmatprep.mubr.bf16.mxu0 0
      %4145 = vmatmul.mubr.bf16.gmra.mrb[0].mxu0 %v4057
      %v4146 = vpop.f32.mrb[0].mxu0
      %v4147 = vadd.f32 0.0, %v4146
      %v4148 = vpop.f32.mrb[0].mxu0
      %v4149 = vpop.f32.mrb[0].mxu0
      %v4150 = vadd.f32 0.0, %v4149
      %v4151 = vpop.f32.mrb[0].mxu0
      %4152 = vmatprep.mubr.bf16.mxu0 0
      %4153 = vmatmul.mubr.bf16.gmra.mrb[0].mxu0 %v4060
      %v4154 = vpop.f32.mrb[0].mxu0
      %v4155 = vadd.f32 0.0, %v4154
      %v4156 = vpop.f32.mrb[0].mxu0
      %v4157 = vpop.f32.mrb[0].mxu0
      %v4158 = vadd.f32 0.0, %v4157
      %v4159 = vpop.f32.mrb[0].mxu0
      %4160 = vmatprep.mubr.bf16.mxu0 0
      %4161 = vmatmul.mubr.bf16.gmra.mrb[0].mxu0 %v4063
      %v4162 = vpop.f32.mrb[0].mxu0
      %v4163 = vadd.f32 0.0, %v4162
      %v4164 = vpop.f32.mrb[0].mxu0
      %v4165 = vpop.f32.mrb[0].mxu0
      %v4166 = vadd.f32 0.0, %v4165
      %v4167 = vpop.f32.mrb[0].mxu0
      %4168 = vmatprep.mubr.bf16.mxu0 0
      %4169 = vmatmul.mubr.bf16.gmra.mrb[0].mxu0 %v4066
      %v4170 = vpop.f32.mrb[0].mxu0
      %v4171 = vadd.f32 0.0, %v4170
      %v4172 = vpop.f32.mrb[0].mxu0
      %v4173 = vpop.f32.mrb[0].mxu0
      %v4174 = vadd.f32 0.0, %v4173
      %v4175 = vpop.f32.mrb[0].mxu0
      %4176 = vmatprep.mubr.bf16.mxu0 0
      %4177 = vmatmul.mubr.bf16.gmra.mrb[0].mxu0 %v4069
      %v4178 = vpop.f32.mrb[0].mxu0
      %v4179 = vadd.f32 0.0, %v4178
      %v4180 = vpop.f32.mrb[0].mxu0
      %v4181 = vpop.f32.mrb[0].mxu0
      %v4182 = vadd.f32 0.0, %v4181
      %v4183 = vpop.f32.mrb[0].mxu0
      %4184 = vmatprep.mubr.bf16.mxu0 0
      %4185 = vmatmul.mubr.bf16.gmra.mrb[0].mxu0 %v4072
      %v4186 = vpop.f32.mrb[0].mxu0
      %v4187 = vadd.f32 0.0, %v4186
      %v4188 = vpop.f32.mrb[0].mxu0
      %v4189 = vpop.f32.mrb[0].mxu0
      %v4190 = vadd.f32 0.0, %v4189
      %v4191 = vpop.f32.mrb[0].mxu0
      %4192 = vmatprep.mubr.bf16.mxu0 0
      %4193 = vmatmul.mubr.bf16.gmra.mrb[0].mxu0 %v4075
      %v4194 = vpop.f32.mrb[0].mxu0
      %v4195 = vadd.f32 0.0, %v4194
      %v4196 = vpop.f32.mrb[0].mxu0
      %v4197 = vpop.f32.mrb[0].mxu0
      %v4198 = vadd.f32 0.0, %v4197
      %v4199 = vpop.f32.mrb[0].mxu0
      %4200 = vmatprep.mubr.bf16.mxu0 0
      %4201 = vmatmul.mubr.bf16.gmra.mrb[0].mxu0 %v4078
      %v4202 = vpop.f32.mrb[0].mxu0
      %v4203 = vadd.f32 0.0, %v4202
      %v4204 = vpop.f32.mrb[0].mxu0
      %v4205 = vpop.f32.mrb[0].mxu0
      %v4206 = vadd.f32 0.0, %v4205
      %v4207 = vpop.f32.mrb[0].mxu0
      %4208 = vmatprep.mubr.bf16.mxu0 0
      %4209 = vmatmul.mubr.bf16.gmra.mrb[0].mxu0 %v4081
      %v4210 = vpop.f32.mrb[0].mxu0
      %v4211 = vadd.f32 0.0, %v4210
      %v4212 = vpop.f32.mrb[0].mxu0
      %v4213 = vpop.f32.mrb[0].mxu0
      %v4214 = vadd.f32 0.0, %v4213
      %v4215 = vpop.f32.mrb[0].mxu0
      %4216 = vmatprep.mubr.bf16.mxu0 0
      %4217 = vmatmul.mubr.bf16.gmra.mrb[0].mxu0 %v4084
      %v4218 = vpop.f32.mrb[0].mxu0
      %v4219 = vadd.f32 0.0, %v4218
      %v4220 = vpop.f32.mrb[0].mxu0
      %v4221 = vpop.f32.mrb[0].mxu0
      %v4222 = vadd.f32 0.0, %v4221
      %v4223 = vpop.f32.mrb[0].mxu0
      %4224 = vmatprep.mubr.bf16.mxu0 0
      %4225 = vmatmul.mubr.bf16.gmra.mrb[0].mxu0 %v4087
      %v4226 = vpop.f32.mrb[0].mxu0
      %v4227 = vadd.f32 0.0, %v4226
      %v4228 = vpop.f32.mrb[0].mxu0
      %v4229 = vpop.f32.mrb[0].mxu0
      %v4230 = vadd.f32 0.0, %v4229
      %v4231 = vpop.f32.mrb[0].mxu0
      %4232 = vmatprep.mubr.bf16.mxu0 0
      %4233 = vmatmul.mubr.bf16.gmra.mrb[0].mxu0 %v4090
      %v4234 = vpop.f32.mrb[0].mxu0
      %v4235 = vadd.f32 0.0, %v4234
      %v4236 = vpop.f32.mrb[0].mxu0
      %v4237 = vpop.f32.mrb[0].mxu0
      %v4238 = vadd.f32 0.0, %v4237
      %v4239 = vpop.f32.mrb[0].mxu0
      %4240 = vmatprep.mubr.bf16.mxu0 0
      %4241 = vmatmul.mubr.bf16.gmra.mrb[0].mxu0 %v4093
      %v4242 = vpop.f32.mrb[0].mxu0
      %v4243 = vadd.f32 0.0, %v4242
      %v4244 = vpop.f32.mrb[0].mxu0
      %v4245 = vpop.f32.mrb[0].mxu0
      %v4246 = vadd.f32 0.0, %v4245
      %v4247 = vpop.f32.mrb[0].mxu0
      %4248 = vmatprep.mubr.bf16.mxu0 0
      %4249 = vmatmul.mubr.bf16.gmra.mrb[0].mxu0 %v4096
      %v4250 = vpop.f32.mrb[0].mxu0
      %v4251 = vadd.f32 0.0, %v4250
      %v4252 = vpop.f32.mrb[0].mxu0
      %v4253 = vpop.f32.mrb[0].mxu0
      %v4254 = vadd.f32 0.0, %v4253
      %v4255 = vpop.f32.mrb[0].mxu0
      %4256 = vmatprep.mubr.bf16.mxu0 0
      %4257 = vmatmul.mubr.bf16.gmra.mrb[0].mxu0 %v4099
      %v4258 = vpop.f32.mrb[0].mxu0
      %v4259 = vadd.f32 0.0, %v4258
      %v4260 = vpop.f32.mrb[0].mxu0
      %v4261 = vpop.f32.mrb[0].mxu0
      %v4262 = vadd.f32 0.0, %v4261
      %v4263 = vpop.f32.mrb[0].mxu0
      %4264 = vdwg.mxu0
      %v4265 = vunpack.c.l.b16 %v3524
      %v4266 = vunpack.c.l.b16 %v3527
      %v4267 = vunpack.c.l.b16 %v3531
      %v4268 = vunpack.c.l.b16 %v3534
      %v4269 = vunpack.c.l.b16 %v3538
      %v4270 = vunpack.c.l.b16 %v3541
      %v4271 = vunpack.c.l.b16 %v3545
      %v4272 = vunpack.c.l.b16 %v3548
      %v4273 = vunpack.c.l.b16 %v3552
      %v4274 = vunpack.c.l.b16 %v3555
      %v4275 = vunpack.c.l.b16 %v3559
      %v4276 = vunpack.c.l.b16 %v3562
      %v4277 = vunpack.c.l.b16 %v3566
      %v4278 = vunpack.c.l.b16 %v3569
      %v4279 = vunpack.c.l.b16 %v3573
      %v4280 = vunpack.c.l.b16 %v3576
      %v4281 = vunpack.c.l.b16 %v3580
      %v4282 = vunpack.c.l.b16 %v3583
      %v4283 = vunpack.c.l.b16 %v3587
      %v4284 = vunpack.c.l.b16 %v3590
      %v4285 = vunpack.c.l.b16 %v3594
      %v4286 = vunpack.c.l.b16 %v3597
      %v4287 = vunpack.c.l.b16 %v3601
      %v4288 = vunpack.c.l.b16 %v3604
      %v4289 = vunpack.c.l.b16 %v3608
      %v4290 = vunpack.c.l.b16 %v3611
      %v4291 = vunpack.c.l.b16 %v3615
      %v4292 = vunpack.c.l.b16 %v3618
      %v4293 = vunpack.c.l.b16 %v3622
      %v4294 = vunpack.c.l.b16 %v3625
      %v4295 = vunpack.c.l.b16 %v3629
      %v4296 = vunpack.c.l.b16 %v3632
      %v4297 = vpack.c.b16 %v4266, %v4265
      %v4298 = vpack.c.b16 %v4268, %v4267
      %v4299 = vpack.c.b16 %v4270, %v4269
      %v4300 = vpack.c.b16 %v4272, %v4271
      %v4301 = vpack.c.b16 %v4274, %v4273
      %v4302 = vpack.c.b16 %v4276, %v4275
      %v4303 = vpack.c.b16 %v4278, %v4277
      %v4304 = vpack.c.b16 %v4280, %v4279
      %v4305 = vpack.c.b16 %v4282, %v4281
      %v4306 = vpack.c.b16 %v4284, %v4283
      %v4307 = vpack.c.b16 %v4286, %v4285
      %v4308 = vpack.c.b16 %v4288, %v4287
      %v4309 = vpack.c.b16 %v4290, %v4289
      %v4310 = vpack.c.b16 %v4292, %v4291
      %v4311 = vpack.c.b16 %v4294, %v4293
      %v4312 = vpack.c.b16 %v4296, %v4295
      %v4314 = vsel %vm254, %v4297, 0
      %v4317 = vsel %vm254, %v4298, 0
      %v4320 = vsel %vm254, %v4299, 0
      %v4323 = vsel %vm254, %v4300, 0
      %v4326 = vsel %vm254, %v4301, 0
      %v4329 = vsel %vm254, %v4302, 0
      %v4332 = vsel %vm254, %v4303, 0
      %v4335 = vsel %vm254, %v4304, 0
      %v4338 = vsel %vm254, %v4305, 0
      %v4341 = vsel %vm254, %v4306, 0
      %v4344 = vsel %vm254, %v4307, 0
      %v4347 = vsel %vm254, %v4308, 0
      %v4350 = vsel %vm254, %v4309, 0
      %v4353 = vsel %vm254, %v4310, 0
      %v4356 = vsel %vm254, %v4311, 0
      %v4359 = vsel %vm254, %v4312, 0
      %v4362 = vsel %vm1160, %v3634, 0
      %4364 = vmatprep.subr.bf16.mxu0 0
      %4365 = vmatpush1.bf16.msra.mxu0 %v4362
      %4366 = vmatprep.subr.bf16.mxu0 0
      %4367 = vmatpush1.bf16.msra.mxu0 0
      %4368 = vmatprep.subr.bf16.mxu0 0
      %4369 = vmatpush1.bf16.msra.mxu0 0
      %4370 = vmatprep.subr.bf16.mxu0 0
      %4371 = vmatpush1.bf16.msra.mxu0 0
      %4372 = vmatprep.subr.bf16.mxu0 0
      %4373 = vmatpush1.bf16.msra.mxu0 0
      %4374 = vmatprep.subr.bf16.mxu0 0
      %4375 = vmatpush1.bf16.msra.mxu0 0
      %4376 = vmatprep.subr.bf16.mxu0 0
      %4377 = vmatpush1.bf16.msra.mxu0 0
      %4378 = vmatprep.subr.bf16.mxu0 0
      %4379 = vmatpush1.bf16.msra.mxu0 0
      %4380 = vmatprep.subr.bf16.mxu0 0
      %4381 = vmatpush1.bf16.msra.mxu0 0
      %4382 = vmatprep.subr.bf16.mxu0 0
      %4383 = vmatpush1.bf16.msra.mxu0 0
      %4384 = vmatprep.subr.bf16.mxu0 0
      %4385 = vmatpush1.bf16.msra.mxu0 0
      %4386 = vmatprep.subr.bf16.mxu0 0
      %4387 = vmatpush1.bf16.msra.mxu0 0
      %4388 = vmatprep.subr.bf16.mxu0 0
      %4389 = vmatpush1.bf16.msra.mxu0 0
      %4390 = vmatprep.subr.bf16.mxu0 0
      %4391 = vmatpush1.bf16.msra.mxu0 0
      %4392 = vmatprep.subr.bf16.mxu0 0
      %4393 = vmatpush1.bf16.msra.mxu0 0
      %4394 = vmatprep.subr.bf16.mxu0 0
      %4395 = vmatpush1.bf16.msra.mxu0 0
      %4396 = vmatprep.mubr.bf16.mxu0 0
      %4397 = vmatmul.mubr.bf16.gmra.mrb[0].mxu0 %v4314
      %v4398 = vpop.f32.mrb[0].mxu0
      %v4399 = vadd.f32 %v4139, %v4398
      %v4400 = vpop.f32.mrb[0].mxu0
      %v4401 = vpop.f32.mrb[0].mxu0
      %v4402 = vadd.f32 %v4142, %v4401
      %v4403 = vpop.f32.mrb[0].mxu0
      %4404 = vmatprep.mubr.bf16.mxu0 0
      %4405 = vmatmul.mubr.bf16.gmra.mrb[0].mxu0 %v4317
      %v4406 = vpop.f32.mrb[0].mxu0
      %v4407 = vadd.f32 %v4147, %v4406
      %v4408 = vpop.f32.mrb[0].mxu0
      %v4409 = vpop.f32.mrb[0].mxu0
      %v4410 = vadd.f32 %v4150, %v4409
      %v4411 = vpop.f32.mrb[0].mxu0
      %4412 = vmatprep.mubr.bf16.mxu0 0
      %4413 = vmatmul.mubr.bf16.gmra.mrb[0].mxu0 %v4320
      %v4414 = vpop.f32.mrb[0].mxu0
      %v4415 = vadd.f32 %v4155, %v4414
      %v4416 = vpop.f32.mrb[0].mxu0
      %v4417 = vpop.f32.mrb[0].mxu0
      %v4418 = vadd.f32 %v4158, %v4417
      %v4419 = vpop.f32.mrb[0].mxu0
      %4420 = vmatprep.mubr.bf16.mxu0 0
      %4421 = vmatmul.mubr.bf16.gmra.mrb[0].mxu0 %v4323
      %v4422 = vpop.f32.mrb[0].mxu0
      %v4423 = vadd.f32 %v4163, %v4422
      %v4424 = vpop.f32.mrb[0].mxu0
      %v4425 = vpop.f32.mrb[0].mxu0
      %v4426 = vadd.f32 %v4166, %v4425
      %v4427 = vpop.f32.mrb[0].mxu0
      %4428 = vmatprep.mubr.bf16.mxu0 0
      %4429 = vmatmul.mubr.bf16.gmra.mrb[0].mxu0 %v4326
      %v4430 = vpop.f32.mrb[0].mxu0
      %v4431 = vadd.f32 %v4171, %v4430
      %v4432 = vpop.f32.mrb[0].mxu0
      %v4433 = vpop.f32.mrb[0].mxu0
      %v4434 = vadd.f32 %v4174, %v4433
      %v4435 = vpop.f32.mrb[0].mxu0
      %4436 = vmatprep.mubr.bf16.mxu0 0
      %4437 = vmatmul.mubr.bf16.gmra.mrb[0].mxu0 %v4329
      %v4438 = vpop.f32.mrb[0].mxu0
      %v4439 = vadd.f32 %v4179, %v4438
      %v4440 = vpop.f32.mrb[0].mxu0
      %v4441 = vpop.f32.mrb[0].mxu0
      %v4442 = vadd.f32 %v4182, %v4441
      %v4443 = vpop.f32.mrb[0].mxu0
      %4444 = vmatprep.mubr.bf16.mxu0 0
      %4445 = vmatmul.mubr.bf16.gmra.mrb[0].mxu0 %v4332
      %v4446 = vpop.f32.mrb[0].mxu0
      %v4447 = vadd.f32 %v4187, %v4446
      %v4448 = vpop.f32.mrb[0].mxu0
      %v4449 = vpop.f32.mrb[0].mxu0
      %v4450 = vadd.f32 %v4190, %v4449
      %v4451 = vpop.f32.mrb[0].mxu0
      %4452 = vmatprep.mubr.bf16.mxu0 0
      %4453 = vmatmul.mubr.bf16.gmra.mrb[0].mxu0 %v4335
      %v4454 = vpop.f32.mrb[0].mxu0
      %v4455 = vadd.f32 %v4195, %v4454
      %v4456 = vpop.f32.mrb[0].mxu0
      %v4457 = vpop.f32.mrb[0].mxu0
      %v4458 = vadd.f32 %v4198, %v4457
      %v4459 = vpop.f32.mrb[0].mxu0
      %4460 = vmatprep.mubr.bf16.mxu0 0
      %4461 = vmatmul.mubr.bf16.gmra.mrb[0].mxu0 %v4338
      %v4462 = vpop.f32.mrb[0].mxu0
      %v4463 = vadd.f32 %v4203, %v4462
      %v4464 = vpop.f32.mrb[0].mxu0
      %v4465 = vpop.f32.mrb[0].mxu0
      %v4466 = vadd.f32 %v4206, %v4465
      %v4467 = vpop.f32.mrb[0].mxu0
      %4468 = vmatprep.mubr.bf16.mxu0 0
      %4469 = vmatmul.mubr.bf16.gmra.mrb[0].mxu0 %v4341
      %v4470 = vpop.f32.mrb[0].mxu0
      %v4471 = vadd.f32 %v4211, %v4470
      %v4472 = vpop.f32.mrb[0].mxu0
      %v4473 = vpop.f32.mrb[0].mxu0
      %v4474 = vadd.f32 %v4214, %v4473
      %v4475 = vpop.f32.mrb[0].mxu0
      %4476 = vmatprep.mubr.bf16.mxu0 0
      %4477 = vmatmul.mubr.bf16.gmra.mrb[0].mxu0 %v4344
      %v4478 = vpop.f32.mrb[0].mxu0
      %v4479 = vadd.f32 %v4219, %v4478
      %v4480 = vpop.f32.mrb[0].mxu0
      %v4481 = vpop.f32.mrb[0].mxu0
      %v4482 = vadd.f32 %v4222, %v4481
      %v4483 = vpop.f32.mrb[0].mxu0
      %4484 = vmatprep.mubr.bf16.mxu0 0
      %4485 = vmatmul.mubr.bf16.gmra.mrb[0].mxu0 %v4347
      %v4486 = vpop.f32.mrb[0].mxu0
      %v4487 = vadd.f32 %v4227, %v4486
      %v4488 = vpop.f32.mrb[0].mxu0
      %v4489 = vpop.f32.mrb[0].mxu0
      %v4490 = vadd.f32 %v4230, %v4489
      %v4491 = vpop.f32.mrb[0].mxu0
      %4492 = vmatprep.mubr.bf16.mxu0 0
      %4493 = vmatmul.mubr.bf16.gmra.mrb[0].mxu0 %v4350
      %v4494 = vpop.f32.mrb[0].mxu0
      %v4495 = vadd.f32 %v4235, %v4494
      %v4496 = vpop.f32.mrb[0].mxu0
      %v4497 = vpop.f32.mrb[0].mxu0
      %v4498 = vadd.f32 %v4238, %v4497
      %v4499 = vpop.f32.mrb[0].mxu0
      %4500 = vmatprep.mubr.bf16.mxu0 0
      %4501 = vmatmul.mubr.bf16.gmra.mrb[0].mxu0 %v4353
      %v4502 = vpop.f32.mrb[0].mxu0
      %v4503 = vadd.f32 %v4243, %v4502
      %v4504 = vpop.f32.mrb[0].mxu0
      %v4505 = vpop.f32.mrb[0].mxu0
      %v4506 = vadd.f32 %v4246, %v4505
      %v4507 = vpop.f32.mrb[0].mxu0
      %4508 = vmatprep.mubr.bf16.mxu0 0
      %4509 = vmatmul.mubr.bf16.gmra.mrb[0].mxu0 %v4356
      %v4510 = vpop.f32.mrb[0].mxu0
      %v4511 = vadd.f32 %v4251, %v4510
      %v4512 = vpop.f32.mrb[0].mxu0
      %v4513 = vpop.f32.mrb[0].mxu0
      %v4514 = vadd.f32 %v4254, %v4513
      %v4515 = vpop.f32.mrb[0].mxu0
      %4516 = vmatprep.mubr.bf16.mxu0 0
      %4517 = vmatmul.mubr.bf16.gmra.mrb[0].mxu0 %v4359
      %v4518 = vpop.f32.mrb[0].mxu0
      %v4519 = vadd.f32 %v4259, %v4518
      %v4520 = vpop.f32.mrb[0].mxu0
      %v4521 = vpop.f32.mrb[0].mxu0
      %v4522 = vadd.f32 %v4262, %v4521
      %v4523 = vpop.f32.mrb[0].mxu0
      %4524 = vdwg.mxu0
      %s4525 = scalar_lea.vmem %s1, 28
      %v4526 = vld [vmem:[%s4525] sm:$0xf]
      %v4543 = vunpack.c.l.b16 %v3426
      %v4544 = vunpack.c.l.b16 %v3635
      %v4545 = vunpack.c.l.b16 %v3429
      %v4546 = vunpack.c.l.b16 %v3636
      %v4547 = vunpack.c.l.b16 %v3432
      %v4548 = vunpack.c.l.b16 %v3637
      %v4549 = vunpack.c.l.b16 %v3435
      %v4550 = vunpack.c.l.b16 %v3638
      %v4551 = vunpack.c.l.b16 %v3438
      %v4552 = vunpack.c.l.b16 %v3639
      %v4553 = vunpack.c.l.b16 %v3441
      %v4554 = vunpack.c.l.b16 %v3640
      %v4555 = vunpack.c.l.b16 %v3444
      %v4556 = vunpack.c.l.b16 %v3641
      %v4557 = vunpack.c.l.b16 %v3447
      %v4558 = vunpack.c.l.b16 %v3642
      %v4559 = vunpack.c.l.b16 %v3450
      %v4560 = vunpack.c.l.b16 %v3643
      %v4561 = vunpack.c.l.b16 %v3453
      %v4562 = vunpack.c.l.b16 %v3644
      %v4563 = vunpack.c.l.b16 %v3456
      %v4564 = vunpack.c.l.b16 %v3645
      %v4565 = vunpack.c.l.b16 %v3459
      %v4566 = vunpack.c.l.b16 %v3646
      %v4567 = vunpack.c.l.b16 %v3462
      %v4568 = vunpack.c.l.b16 %v3647
      %v4569 = vunpack.c.l.b16 %v3465
      %v4570 = vunpack.c.l.b16 %v3648
      %v4571 = vunpack.c.l.b16 %v3468
      %v4572 = vunpack.c.l.b16 %v3649
      %v4573 = vunpack.c.l.b16 %v3471
      %v4574 = vunpack.c.l.b16 %v3650
      %v4575 = vpack.c.b16 %v4544, %v4543
      %v4576 = vpack.c.b16 %v4546, %v4545
      %v4577 = vpack.c.b16 %v4548, %v4547
      %v4578 = vpack.c.b16 %v4550, %v4549
      %v4579 = vpack.c.b16 %v4552, %v4551
      %v4580 = vpack.c.b16 %v4554, %v4553
      %v4581 = vpack.c.b16 %v4556, %v4555
      %v4582 = vpack.c.b16 %v4558, %v4557
      %v4583 = vpack.c.b16 %v4560, %v4559
      %v4584 = vpack.c.b16 %v4562, %v4561
      %v4585 = vpack.c.b16 %v4564, %v4563
      %v4586 = vpack.c.b16 %v4566, %v4565
      %v4587 = vpack.c.b16 %v4568, %v4567
      %v4588 = vpack.c.b16 %v4570, %v4569
      %v4589 = vpack.c.b16 %v4572, %v4571
      %v4590 = vpack.c.b16 %v4574, %v4573
      %v4592 = vsel %vm254, %v4575, 0
      %v4595 = vsel %vm254, %v4576, 0
      %v4598 = vsel %vm254, %v4577, 0
      %v4601 = vsel %vm254, %v4578, 0
      %v4604 = vsel %vm254, %v4579, 0
      %v4607 = vsel %vm254, %v4580, 0
      %v4610 = vsel %vm254, %v4581, 0
      %v4613 = vsel %vm254, %v4582, 0
      %v4616 = vsel %vm254, %v4583, 0
      %v4619 = vsel %vm254, %v4584, 0
      %v4622 = vsel %vm254, %v4585, 0
      %v4625 = vsel %vm254, %v4586, 0
      %v4628 = vsel %vm254, %v4587, 0
      %v4631 = vsel %vm254, %v4588, 0
      %v4634 = vsel %vm254, %v4589, 0
      %v4637 = vsel %vm254, %v4590, 0
      %v4640 = vsel %vm1160, %v4526, 0
      %4642 = vmatprep.subr.bf16.mxu0 0
      %4643 = vmatpush1.bf16.msra.mxu0 %v4640
      %4644 = vmatprep.subr.bf16.mxu0 0
      %4645 = vmatpush1.bf16.msra.mxu0 0
      %4646 = vmatprep.subr.bf16.mxu0 0
      %4647 = vmatpush1.bf16.msra.mxu0 0
      %4648 = vmatprep.subr.bf16.mxu0 0
      %4649 = vmatpush1.bf16.msra.mxu0 0
      %4650 = vmatprep.subr.bf16.mxu0 0
      %4651 = vmatpush1.bf16.msra.mxu0 0
      %4652 = vmatprep.subr.bf16.mxu0 0
      %4653 = vmatpush1.bf16.msra.mxu0 0
      %4654 = vmatprep.subr.bf16.mxu0 0
      %4655 = vmatpush1.bf16.msra.mxu0 0
      %4656 = vmatprep.subr.bf16.mxu0 0
      %4657 = vmatpush1.bf16.msra.mxu0 0
      %4658 = vmatprep.subr.bf16.mxu0 0
      %4659 = vmatpush1.bf16.msra.mxu0 0
      %4660 = vmatprep.subr.bf16.mxu0 0
      %4661 = vmatpush1.bf16.msra.mxu0 0
      %4662 = vmatprep.subr.bf16.mxu0 0
      %4663 = vmatpush1.bf16.msra.mxu0 0
      %4664 = vmatprep.subr.bf16.mxu0 0
      %4665 = vmatpush1.bf16.msra.mxu0 0
      %4666 = vmatprep.subr.bf16.mxu0 0
      %4667 = vmatpush1.bf16.msra.mxu0 0
      %4668 = vmatprep.subr.bf16.mxu0 0
      %4669 = vmatpush1.bf16.msra.mxu0 0
      %4670 = vmatprep.subr.bf16.mxu0 0
      %4671 = vmatpush1.bf16.msra.mxu0 0
      %4672 = vmatprep.subr.bf16.mxu0 0
      %4673 = vmatpush1.bf16.msra.mxu0 0
      %4674 = vmatprep.mubr.bf16.mxu0 0
      %4675 = vmatmul.mubr.bf16.gmra.mrb[0].mxu0 %v4592
      %v4676 = vpop.f32.mrb[0].mxu0
      %v4677 = vadd.f32 0.0, %v4676
      %v4678 = vpop.f32.mrb[0].mxu0
      %v4679 = vpop.f32.mrb[0].mxu0
      %v4680 = vadd.f32 0.0, %v4679
      %v4681 = vpop.f32.mrb[0].mxu0
      %4682 = vmatprep.mubr.bf16.mxu0 0
      %4683 = vmatmul.mubr.bf16.gmra.mrb[0].mxu0 %v4595
      %v4684 = vpop.f32.mrb[0].mxu0
      %v4685 = vadd.f32 0.0, %v4684
      %v4686 = vpop.f32.mrb[0].mxu0
      %v4687 = vpop.f32.mrb[0].mxu0
      %v4688 = vadd.f32 0.0, %v4687
      %v4689 = vpop.f32.mrb[0].mxu0
      %4690 = vmatprep.mubr.bf16.mxu0 0
      %4691 = vmatmul.mubr.bf16.gmra.mrb[0].mxu0 %v4598
      %v4692 = vpop.f32.mrb[0].mxu0
      %v4693 = vadd.f32 0.0, %v4692
      %v4694 = vpop.f32.mrb[0].mxu0
      %v4695 = vpop.f32.mrb[0].mxu0
      %v4696 = vadd.f32 0.0, %v4695
      %v4697 = vpop.f32.mrb[0].mxu0
      %4698 = vmatprep.mubr.bf16.mxu0 0
      %4699 = vmatmul.mubr.bf16.gmra.mrb[0].mxu0 %v4601
      %v4700 = vpop.f32.mrb[0].mxu0
      %v4701 = vadd.f32 0.0, %v4700
      %v4702 = vpop.f32.mrb[0].mxu0
      %v4703 = vpop.f32.mrb[0].mxu0
      %v4704 = vadd.f32 0.0, %v4703
      %v4705 = vpop.f32.mrb[0].mxu0
      %4706 = vmatprep.mubr.bf16.mxu0 0
      %4707 = vmatmul.mubr.bf16.gmra.mrb[0].mxu0 %v4604
      %v4708 = vpop.f32.mrb[0].mxu0
      %v4709 = vadd.f32 0.0, %v4708
      %v4710 = vpop.f32.mrb[0].mxu0
      %v4711 = vpop.f32.mrb[0].mxu0
      %v4712 = vadd.f32 0.0, %v4711
      %v4713 = vpop.f32.mrb[0].mxu0
      %4714 = vmatprep.mubr.bf16.mxu0 0
      %4715 = vmatmul.mubr.bf16.gmra.mrb[0].mxu0 %v4607
      %v4716 = vpop.f32.mrb[0].mxu0
      %v4717 = vadd.f32 0.0, %v4716
      %v4718 = vpop.f32.mrb[0].mxu0
      %v4719 = vpop.f32.mrb[0].mxu0
      %v4720 = vadd.f32 0.0, %v4719
      %v4721 = vpop.f32.mrb[0].mxu0
      %4722 = vmatprep.mubr.bf16.mxu0 0
      %4723 = vmatmul.mubr.bf16.gmra.mrb[0].mxu0 %v4610
      %v4724 = vpop.f32.mrb[0].mxu0
      %v4725 = vadd.f32 0.0, %v4724
      %v4726 = vpop.f32.mrb[0].mxu0
      %v4727 = vpop.f32.mrb[0].mxu0
      %v4728 = vadd.f32 0.0, %v4727
      %v4729 = vpop.f32.mrb[0].mxu0
      %4730 = vmatprep.mubr.bf16.mxu0 0
      %4731 = vmatmul.mubr.bf16.gmra.mrb[0].mxu0 %v4613
      %v4732 = vpop.f32.mrb[0].mxu0
      %v4733 = vadd.f32 0.0, %v4732
      %v4734 = vpop.f32.mrb[0].mxu0
      %v4735 = vpop.f32.mrb[0].mxu0
      %v4736 = vadd.f32 0.0, %v4735
      %v4737 = vpop.f32.mrb[0].mxu0
      %4738 = vmatprep.mubr.bf16.mxu0 0
      %4739 = vmatmul.mubr.bf16.gmra.mrb[0].mxu0 %v4616
      %v4740 = vpop.f32.mrb[0].mxu0
      %v4741 = vadd.f32 0.0, %v4740
      %v4742 = vpop.f32.mrb[0].mxu0
      %v4743 = vpop.f32.mrb[0].mxu0
      %v4744 = vadd.f32 0.0, %v4743
      %v4745 = vpop.f32.mrb[0].mxu0
      %4746 = vmatprep.mubr.bf16.mxu0 0
      %4747 = vmatmul.mubr.bf16.gmra.mrb[0].mxu0 %v4619
      %v4748 = vpop.f32.mrb[0].mxu0
      %v4749 = vadd.f32 0.0, %v4748
      %v4750 = vpop.f32.mrb[0].mxu0
      %v4751 = vpop.f32.mrb[0].mxu0
      %v4752 = vadd.f32 0.0, %v4751
      %v4753 = vpop.f32.mrb[0].mxu0
      %4754 = vmatprep.mubr.bf16.mxu0 0
      %4755 = vmatmul.mubr.bf16.gmra.mrb[0].mxu0 %v4622
      %v4756 = vpop.f32.mrb[0].mxu0
      %v4757 = vadd.f32 0.0, %v4756
      %v4758 = vpop.f32.mrb[0].mxu0
      %v4759 = vpop.f32.mrb[0].mxu0
      %v4760 = vadd.f32 0.0, %v4759
      %v4761 = vpop.f32.mrb[0].mxu0
      %4762 = vmatprep.mubr.bf16.mxu0 0
      %4763 = vmatmul.mubr.bf16.gmra.mrb[0].mxu0 %v4625
      %v4764 = vpop.f32.mrb[0].mxu0
      %v4765 = vadd.f32 0.0, %v4764
      %v4766 = vpop.f32.mrb[0].mxu0
      %v4767 = vpop.f32.mrb[0].mxu0
      %v4768 = vadd.f32 0.0, %v4767
      %v4769 = vpop.f32.mrb[0].mxu0
      %4770 = vmatprep.mubr.bf16.mxu0 0
      %4771 = vmatmul.mubr.bf16.gmra.mrb[0].mxu0 %v4628
      %v4772 = vpop.f32.mrb[0].mxu0
      %v4773 = vadd.f32 0.0, %v4772
      %v4774 = vpop.f32.mrb[0].mxu0
      %v4775 = vpop.f32.mrb[0].mxu0
      %v4776 = vadd.f32 0.0, %v4775
      %v4777 = vpop.f32.mrb[0].mxu0
      %4778 = vmatprep.mubr.bf16.mxu0 0
      %4779 = vmatmul.mubr.bf16.gmra.mrb[0].mxu0 %v4631
      %v4780 = vpop.f32.mrb[0].mxu0
      %v4781 = vadd.f32 0.0, %v4780
      %v4782 = vpop.f32.mrb[0].mxu0
      %v4783 = vpop.f32.mrb[0].mxu0
      %v4784 = vadd.f32 0.0, %v4783
      %v4785 = vpop.f32.mrb[0].mxu0
      %4786 = vmatprep.mubr.bf16.mxu0 0
      %4787 = vmatmul.mubr.bf16.gmra.mrb[0].mxu0 %v4634
      %v4788 = vpop.f32.mrb[0].mxu0
      %v4789 = vadd.f32 0.0, %v4788
      %v4790 = vpop.f32.mrb[0].mxu0
      %v4791 = vpop.f32.mrb[0].mxu0
      %v4792 = vadd.f32 0.0, %v4791
      %v4793 = vpop.f32.mrb[0].mxu0
      %4794 = vmatprep.mubr.bf16.mxu0 0
      %4795 = vmatmul.mubr.bf16.gmra.mrb[0].mxu0 %v4637
      %v4796 = vpop.f32.mrb[0].mxu0
      %v4797 = vadd.f32 0.0, %v4796
      %v4798 = vpop.f32.mrb[0].mxu0
      %v4799 = vpop.f32.mrb[0].mxu0
      %v4800 = vadd.f32 0.0, %v4799
      %v4801 = vpop.f32.mrb[0].mxu0
      %4802 = vdwg.mxu0
      %v4803 = vadd.f32 %v4399, %v4677
      %v4804 = vadd.f32 %v4402, %v4680
      %v4805 = vadd.f32 %v4407, %v4685
      %v4806 = vadd.f32 %v4410, %v4688
      %v4807 = vadd.f32 %v4415, %v4693
      %v4808 = vadd.f32 %v4418, %v4696
      %v4809 = vadd.f32 %v4423, %v4701
      %v4810 = vadd.f32 %v4426, %v4704
      %v4811 = vadd.f32 %v4431, %v4709
      %v4812 = vadd.f32 %v4434, %v4712
      %v4813 = vadd.f32 %v4439, %v4717
      %v4814 = vadd.f32 %v4442, %v4720
      %v4815 = vadd.f32 %v4447, %v4725
      %v4816 = vadd.f32 %v4450, %v4728
      %v4817 = vadd.f32 %v4455, %v4733
      %v4818 = vadd.f32 %v4458, %v4736
      %v4819 = vadd.f32 %v4463, %v4741
      %v4820 = vadd.f32 %v4466, %v4744
      %v4821 = vadd.f32 %v4471, %v4749
      %v4822 = vadd.f32 %v4474, %v4752
      %v4823 = vadd.f32 %v4479, %v4757
      %v4824 = vadd.f32 %v4482, %v4760
      %v4825 = vadd.f32 %v4487, %v4765
      %v4826 = vadd.f32 %v4490, %v4768
      %v4827 = vadd.f32 %v4495, %v4773
      %v4828 = vadd.f32 %v4498, %v4776
      %v4829 = vadd.f32 %v4503, %v4781
      %v4830 = vadd.f32 %v4506, %v4784
      %v4831 = vadd.f32 %v4511, %v4789
      %v4832 = vadd.f32 %v4514, %v4792
      %v4833 = vadd.f32 %v4519, %v4797
      %v4834 = vadd.f32 %v4522, %v4800
      %v4835 = vld [vmem:[#allocation2 + $0x8] sm:$0xf]
      %v4836 = vld [vmem:[#allocation2 + $0xc] sm:$0xf]
      %v4837 = vld [vmem:[#allocation2 + $0x10] sm:$0x1]
      %v4838 = vld [vmem:[#allocation2 + $0x1c] sm:$0xf]
      %v4839 = vld [vmem:[#allocation2 + $0x20] sm:$0xf]
      %v4840 = vld [vmem:[#allocation2 + $0x24] sm:$0x1]
      %v4841 = vld [vmem:[#allocation2 + $0x30] sm:$0xf]
      %v4842 = vld [vmem:[#allocation2 + $0x34] sm:$0xf]
      %v4843 = vld [vmem:[#allocation2 + $0x38] sm:$0x1]
      %v4844 = vld [vmem:[#allocation2 + $0x44] sm:$0xf]
      %v4845 = vld [vmem:[#allocation2 + $0x48] sm:$0xf]
      %v4846 = vld [vmem:[#allocation2 + $0x4c] sm:$0x1]
      %v4847 = vld [vmem:[#allocation2 + $0x58] sm:$0xf]
      %v4848 = vld [vmem:[#allocation2 + $0x5c] sm:$0xf]
      %v4849 = vld [vmem:[#allocation2 + $0x60] sm:$0x1]
      %v4850 = vld [vmem:[#allocation2 + $0x6c] sm:$0xf]
      %v4851 = vld [vmem:[#allocation2 + $0x70] sm:$0xf]
      %v4852 = vld [vmem:[#allocation2 + $0x74] sm:$0x1]
      %v4853 = vld [vmem:[#allocation2 + $0x80] sm:$0xf]
      %v4854 = vld [vmem:[#allocation2 + $0x84] sm:$0xf]
      %v4855 = vld [vmem:[#allocation2 + $0x88] sm:$0x1]
      %v4856 = vld [vmem:[#allocation2 + $0x94] sm:$0xf]
      %v4857 = vld [vmem:[#allocation2 + $0x98] sm:$0xf]
      %v4858 = vld [vmem:[#allocation2 + $0x9c] sm:$0x1]
      %v4859 = vld [vmem:[#allocation2 + $0xa8] sm:$0xf]
      %v4860 = vld [vmem:[#allocation2 + $0xac] sm:$0xf]
      %v4861 = vld [vmem:[#allocation2 + $0xb0] sm:$0x1]
      %v4862 = vld [vmem:[#allocation2 + $0xbc] sm:$0xf]
      %v4863 = vld [vmem:[#allocation2 + $0xc0] sm:$0xf]
      %v4864 = vld [vmem:[#allocation2 + $0xc4] sm:$0x1]
      %v4865 = vld [vmem:[#allocation2 + $0xd0] sm:$0xf]
      %v4866 = vld [vmem:[#allocation2 + $0xd4] sm:$0xf]
      %v4867 = vld [vmem:[#allocation2 + $0xd8] sm:$0x1]
      %v4868 = vld [vmem:[#allocation2 + $0xe4] sm:$0xf]
      %v4869 = vld [vmem:[#allocation2 + $0xe8] sm:$0xf]
      %v4870 = vld [vmem:[#allocation2 + $0xec] sm:$0x1]
      %v4871 = vld [vmem:[#allocation2 + $0xf8] sm:$0xf]
      %v4872 = vld [vmem:[#allocation2 + $0xfc] sm:$0xf]
      %v4873 = vld [vmem:[#allocation2 + $0x100] sm:$0x1]
      %v4874 = vld [vmem:[#allocation2 + $0x10c] sm:$0xf]
      %v4875 = vld [vmem:[#allocation2 + $0x110] sm:$0xf]
      %v4876 = vld [vmem:[#allocation2 + $0x114] sm:$0x1]
      %v4877 = vld [vmem:[#allocation2 + $0x120] sm:$0xf]
      %v4878 = vld [vmem:[#allocation2 + $0x124] sm:$0xf]
      %v4879 = vld [vmem:[#allocation2 + $0x128] sm:$0x1]
      %v4880 = vld [vmem:[#allocation2 + $0x134] sm:$0xf]
      %v4881 = vld [vmem:[#allocation2 + $0x138] sm:$0xf]
      %v4882 = vld [vmem:[#allocation2 + $0x13c] sm:$0x1]
      %v4884 = vshrl.u32 %v4835, 16
      %v4886 = vrot.slane %v4884, 4
      %v4887 = vshll.u32 %v4835, 16
      %v4889 = vrot.slane %v4887, 5
      %v4890 = vor.u32 %v4886, %v4889
      %v4891 = vrot.slane %v4890, 4
      %v4893 = vshll.u32 %v4836, 16
      %v4895 = vrot.slane %v4893, 5
      %v4896 = vsel %vm1945, %v4891, %v4895
      %v4897 = vshrl.u32 %v4836, 16
      %v4899 = vrot.slane %v4897, 4
      %v4900 = vor.u32 %v4899, %v4895
      %v4901 = vrot.slane %v4900, 4
      %v4903 = vshll.u32 %v4837, 16
      %v4905 = vrot.slane %v4903, 5
      %v4906 = vsel %vm1945, %v4901, %v4905
      %v4908 = vshrl.u32 %v4838, 16
      %v4910 = vrot.slane %v4908, 4
      %v4911 = vshll.u32 %v4838, 16
      %v4913 = vrot.slane %v4911, 5
      %v4914 = vor.u32 %v4910, %v4913
      %v4915 = vrot.slane %v4914, 4
      %v4917 = vshll.u32 %v4839, 16
      %v4919 = vrot.slane %v4917, 5
      %v4920 = vsel %vm1945, %v4915, %v4919
      %v4921 = vshrl.u32 %v4839, 16
      %v4923 = vrot.slane %v4921, 4
      %v4924 = vor.u32 %v4923, %v4919
      %v4925 = vrot.slane %v4924, 4
      %v4927 = vshll.u32 %v4840, 16
      %v4929 = vrot.slane %v4927, 5
      %v4930 = vsel %vm1945, %v4925, %v4929
      %v4932 = vshrl.u32 %v4841, 16
      %v4934 = vrot.slane %v4932, 4
      %v4935 = vshll.u32 %v4841, 16
      %v4937 = vrot.slane %v4935, 5
      %v4938 = vor.u32 %v4934, %v4937
      %v4939 = vrot.slane %v4938, 4
      %v4941 = vshll.u32 %v4842, 16
      %v4943 = vrot.slane %v4941, 5
      %v4944 = vsel %vm1945, %v4939, %v4943
      %v4945 = vshrl.u32 %v4842, 16
      %v4947 = vrot.slane %v4945, 4
      %v4948 = vor.u32 %v4947, %v4943
      %v4949 = vrot.slane %v4948, 4
      %v4951 = vshll.u32 %v4843, 16
      %v4953 = vrot.slane %v4951, 5
      %v4954 = vsel %vm1945, %v4949, %v4953
      %v4956 = vshrl.u32 %v4844, 16
      %v4958 = vrot.slane %v4956, 4
      %v4959 = vshll.u32 %v4844, 16
      %v4961 = vrot.slane %v4959, 5
      %v4962 = vor.u32 %v4958, %v4961
      %v4963 = vrot.slane %v4962, 4
      %v4965 = vshll.u32 %v4845, 16
      %v4967 = vrot.slane %v4965, 5
      %v4968 = vsel %vm1945, %v4963, %v4967
      %v4969 = vshrl.u32 %v4845, 16
      %v4971 = vrot.slane %v4969, 4
      %v4972 = vor.u32 %v4971, %v4967
      %v4973 = vrot.slane %v4972, 4
      %v4975 = vshll.u32 %v4846, 16
      %v4977 = vrot.slane %v4975, 5
      %v4978 = vsel %vm1945, %v4973, %v4977
      %v4980 = vshrl.u32 %v4847, 16
      %v4982 = vrot.slane %v4980, 4
      %v4983 = vshll.u32 %v4847, 16
      %v4985 = vrot.slane %v4983, 5
      %v4986 = vor.u32 %v4982, %v4985
      %v4987 = vrot.slane %v4986, 4
      %v4989 = vshll.u32 %v4848, 16
      %v4991 = vrot.slane %v4989, 5
      %v4992 = vsel %vm1945, %v4987, %v4991
      %v4993 = vshrl.u32 %v4848, 16
      %v4995 = vrot.slane %v4993, 4
      %v4996 = vor.u32 %v4995, %v4991
      %v4997 = vrot.slane %v4996, 4
      %v4999 = vshll.u32 %v4849, 16
      %v5001 = vrot.slane %v4999, 5
      %v5002 = vsel %vm1945, %v4997, %v5001
      %v5004 = vshrl.u32 %v4850, 16
      %v5006 = vrot.slane %v5004, 4
      %v5007 = vshll.u32 %v4850, 16
      %v5009 = vrot.slane %v5007, 5
      %v5010 = vor.u32 %v5006, %v5009
      %v5011 = vrot.slane %v5010, 4
      %v5013 = vshll.u32 %v4851, 16
      %v5015 = vrot.slane %v5013, 5
      %v5016 = vsel %vm1945, %v5011, %v5015
      %v5017 = vshrl.u32 %v4851, 16
      %v5019 = vrot.slane %v5017, 4
      %v5020 = vor.u32 %v5019, %v5015
      %v5021 = vrot.slane %v5020, 4
      %v5023 = vshll.u32 %v4852, 16
      %v5025 = vrot.slane %v5023, 5
      %v5026 = vsel %vm1945, %v5021, %v5025
      %v5028 = vshrl.u32 %v4853, 16
      %v5030 = vrot.slane %v5028, 4
      %v5031 = vshll.u32 %v4853, 16
      %v5033 = vrot.slane %v5031, 5
      %v5034 = vor.u32 %v5030, %v5033
      %v5035 = vrot.slane %v5034, 4
      %v5037 = vshll.u32 %v4854, 16
      %v5039 = vrot.slane %v5037, 5
      %v5040 = vsel %vm1945, %v5035, %v5039
      %v5041 = vshrl.u32 %v4854, 16
      %v5043 = vrot.slane %v5041, 4
      %v5044 = vor.u32 %v5043, %v5039
      %v5045 = vrot.slane %v5044, 4
      %v5047 = vshll.u32 %v4855, 16
      %v5049 = vrot.slane %v5047, 5
      %v5050 = vsel %vm1945, %v5045, %v5049
      %v5052 = vshrl.u32 %v4856, 16
      %v5054 = vrot.slane %v5052, 4
      %v5055 = vshll.u32 %v4856, 16
      %v5057 = vrot.slane %v5055, 5
      %v5058 = vor.u32 %v5054, %v5057
      %v5059 = vrot.slane %v5058, 4
      %v5061 = vshll.u32 %v4857, 16
      %v5063 = vrot.slane %v5061, 5
      %v5064 = vsel %vm1945, %v5059, %v5063
      %v5065 = vshrl.u32 %v4857, 16
      %v5067 = vrot.slane %v5065, 4
      %v5068 = vor.u32 %v5067, %v5063
      %v5069 = vrot.slane %v5068, 4
      %v5071 = vshll.u32 %v4858, 16
      %v5073 = vrot.slane %v5071, 5
      %v5074 = vsel %vm1945, %v5069, %v5073
      %v5076 = vshrl.u32 %v4859, 16
      %v5078 = vrot.slane %v5076, 4
      %v5079 = vshll.u32 %v4859, 16
      %v5081 = vrot.slane %v5079, 5
      %v5082 = vor.u32 %v5078, %v5081
      %v5083 = vrot.slane %v5082, 4
      %v5085 = vshll.u32 %v4860, 16
      %v5087 = vrot.slane %v5085, 5
      %v5088 = vsel %vm1945, %v5083, %v5087
      %v5089 = vshrl.u32 %v4860, 16
      %v5091 = vrot.slane %v5089, 4
      %v5092 = vor.u32 %v5091, %v5087
      %v5093 = vrot.slane %v5092, 4
      %v5095 = vshll.u32 %v4861, 16
      %v5097 = vrot.slane %v5095, 5
      %v5098 = vsel %vm1945, %v5093, %v5097
      %v5100 = vshrl.u32 %v4862, 16
      %v5102 = vrot.slane %v5100, 4
      %v5103 = vshll.u32 %v4862, 16
      %v5105 = vrot.slane %v5103, 5
      %v5106 = vor.u32 %v5102, %v5105
      %v5107 = vrot.slane %v5106, 4
      %v5109 = vshll.u32 %v4863, 16
      %v5111 = vrot.slane %v5109, 5
      %v5112 = vsel %vm1945, %v5107, %v5111
      %v5113 = vshrl.u32 %v4863, 16
      %v5115 = vrot.slane %v5113, 4
      %v5116 = vor.u32 %v5115, %v5111
      %v5117 = vrot.slane %v5116, 4
      %v5119 = vshll.u32 %v4864, 16
      %v5121 = vrot.slane %v5119, 5
      %v5122 = vsel %vm1945, %v5117, %v5121
      %v5124 = vshrl.u32 %v4865, 16
      %v5126 = vrot.slane %v5124, 4
      %v5127 = vshll.u32 %v4865, 16
      %v5129 = vrot.slane %v5127, 5
      %v5130 = vor.u32 %v5126, %v5129
      %v5131 = vrot.slane %v5130, 4
      %v5133 = vshll.u32 %v4866, 16
      %v5135 = vrot.slane %v5133, 5
      %v5136 = vsel %vm1945, %v5131, %v5135
      %v5137 = vshrl.u32 %v4866, 16
      %v5139 = vrot.slane %v5137, 4
      %v5140 = vor.u32 %v5139, %v5135
      %v5141 = vrot.slane %v5140, 4
      %v5143 = vshll.u32 %v4867, 16
      %v5145 = vrot.slane %v5143, 5
      %v5146 = vsel %vm1945, %v5141, %v5145
      %v5148 = vshrl.u32 %v4868, 16
      %v5150 = vrot.slane %v5148, 4
      %v5151 = vshll.u32 %v4868, 16
      %v5153 = vrot.slane %v5151, 5
      %v5154 = vor.u32 %v5150, %v5153
      %v5155 = vrot.slane %v5154, 4
      %v5157 = vshll.u32 %v4869, 16
      %v5159 = vrot.slane %v5157, 5
      %v5160 = vsel %vm1945, %v5155, %v5159
      %v5161 = vshrl.u32 %v4869, 16
      %v5163 = vrot.slane %v5161, 4
      %v5164 = vor.u32 %v5163, %v5159
      %v5165 = vrot.slane %v5164, 4
      %v5167 = vshll.u32 %v4870, 16
      %v5169 = vrot.slane %v5167, 5
      %v5170 = vsel %vm1945, %v5165, %v5169
      %v5172 = vshrl.u32 %v4871, 16
      %v5174 = vrot.slane %v5172, 4
      %v5175 = vshll.u32 %v4871, 16
      %v5177 = vrot.slane %v5175, 5
      %v5178 = vor.u32 %v5174, %v5177
      %v5179 = vrot.slane %v5178, 4
      %v5181 = vshll.u32 %v4872, 16
      %v5183 = vrot.slane %v5181, 5
      %v5184 = vsel %vm1945, %v5179, %v5183
      %v5185 = vshrl.u32 %v4872, 16
      %v5187 = vrot.slane %v5185, 4
      %v5188 = vor.u32 %v5187, %v5183
      %v5189 = vrot.slane %v5188, 4
      %v5191 = vshll.u32 %v4873, 16
      %v5193 = vrot.slane %v5191, 5
      %v5194 = vsel %vm1945, %v5189, %v5193
      %v5196 = vshrl.u32 %v4874, 16
      %v5198 = vrot.slane %v5196, 4
      %v5199 = vshll.u32 %v4874, 16
      %v5201 = vrot.slane %v5199, 5
      %v5202 = vor.u32 %v5198, %v5201
      %v5203 = vrot.slane %v5202, 4
      %v5205 = vshll.u32 %v4875, 16
      %v5207 = vrot.slane %v5205, 5
      %v5208 = vsel %vm1945, %v5203, %v5207
      %v5209 = vshrl.u32 %v4875, 16
      %v5211 = vrot.slane %v5209, 4
      %v5212 = vor.u32 %v5211, %v5207
      %v5213 = vrot.slane %v5212, 4
      %v5215 = vshll.u32 %v4876, 16
      %v5217 = vrot.slane %v5215, 5
      %v5218 = vsel %vm1945, %v5213, %v5217
      %v5220 = vshrl.u32 %v4877, 16
      %v5222 = vrot.slane %v5220, 4
      %v5223 = vshll.u32 %v4877, 16
      %v5225 = vrot.slane %v5223, 5
      %v5226 = vor.u32 %v5222, %v5225
      %v5227 = vrot.slane %v5226, 4
      %v5229 = vshll.u32 %v4878, 16
      %v5231 = vrot.slane %v5229, 5
      %v5232 = vsel %vm1945, %v5227, %v5231
      %v5233 = vshrl.u32 %v4878, 16
      %v5235 = vrot.slane %v5233, 4
      %v5236 = vor.u32 %v5235, %v5231
      %v5237 = vrot.slane %v5236, 4
      %v5239 = vshll.u32 %v4879, 16
      %v5241 = vrot.slane %v5239, 5
      %v5242 = vsel %vm1945, %v5237, %v5241
      %v5244 = vshrl.u32 %v4880, 16
      %v5246 = vrot.slane %v5244, 4
      %v5247 = vshll.u32 %v4880, 16
      %v5249 = vrot.slane %v5247, 5
      %v5250 = vor.u32 %v5246, %v5249
      %v5251 = vrot.slane %v5250, 4
      %v5253 = vshll.u32 %v4881, 16
      %v5255 = vrot.slane %v5253, 5
      %v5256 = vsel %vm1945, %v5251, %v5255
      %v5257 = vshrl.u32 %v4881, 16
      %v5259 = vrot.slane %v5257, 4
      %v5260 = vor.u32 %v5259, %v5255
      %v5261 = vrot.slane %v5260, 4
      %v5263 = vshll.u32 %v4882, 16
      %v5265 = vrot.slane %v5263, 5
      %v5266 = vsel %vm1945, %v5261, %v5265
      %s5267 = scalar_lea.vmem %s1, 32
      %v5268 = vld [vmem:[%s5267] sm:$0xf]
      %v5269 = vunpack.c.l.b16 %v4896
      %v5270 = vunpack.c.l.b16 %v4906
      %v5271 = vunpack.c.l.b16 %v4920
      %v5272 = vunpack.c.l.b16 %v4930
      %v5273 = vunpack.c.l.b16 %v4944
      %v5274 = vunpack.c.l.b16 %v4954
      %v5275 = vunpack.c.l.b16 %v4968
      %v5276 = vunpack.c.l.b16 %v4978
      %v5277 = vunpack.c.l.b16 %v4992
      %v5278 = vunpack.c.l.b16 %v5002
      %v5279 = vunpack.c.l.b16 %v5016
      %v5280 = vunpack.c.l.b16 %v5026
      %v5281 = vunpack.c.l.b16 %v5040
      %v5282 = vunpack.c.l.b16 %v5050
      %v5283 = vunpack.c.l.b16 %v5064
      %v5284 = vunpack.c.l.b16 %v5074
      %v5285 = vunpack.c.l.b16 %v5088
      %v5286 = vunpack.c.l.b16 %v5098
      %v5287 = vunpack.c.l.b16 %v5112
      %v5288 = vunpack.c.l.b16 %v5122
      %v5289 = vunpack.c.l.b16 %v5136
      %v5290 = vunpack.c.l.b16 %v5146
      %v5291 = vunpack.c.l.b16 %v5160
      %v5292 = vunpack.c.l.b16 %v5170
      %v5293 = vunpack.c.l.b16 %v5184
      %v5294 = vunpack.c.l.b16 %v5194
      %v5295 = vunpack.c.l.b16 %v5208
      %v5296 = vunpack.c.l.b16 %v5218
      %v5297 = vunpack.c.l.b16 %v5232
      %v5298 = vunpack.c.l.b16 %v5242
      %v5299 = vunpack.c.l.b16 %v5256
      %v5300 = vunpack.c.l.b16 %v5266
      %v5301 = vpack.c.b16 %v5270, %v5269
      %v5302 = vpack.c.b16 %v5272, %v5271
      %v5303 = vpack.c.b16 %v5274, %v5273
      %v5304 = vpack.c.b16 %v5276, %v5275
      %v5305 = vpack.c.b16 %v5278, %v5277
      %v5306 = vpack.c.b16 %v5280, %v5279
      %v5307 = vpack.c.b16 %v5282, %v5281
      %v5308 = vpack.c.b16 %v5284, %v5283
      %v5309 = vpack.c.b16 %v5286, %v5285
      %v5310 = vpack.c.b16 %v5288, %v5287
      %v5311 = vpack.c.b16 %v5290, %v5289
      %v5312 = vpack.c.b16 %v5292, %v5291
      %v5313 = vpack.c.b16 %v5294, %v5293
      %v5314 = vpack.c.b16 %v5296, %v5295
      %v5315 = vpack.c.b16 %v5298, %v5297
      %v5316 = vpack.c.b16 %v5300, %v5299
      %v5318 = vsel %vm254, %v5301, 0
      %v5321 = vsel %vm254, %v5302, 0
      %v5324 = vsel %vm254, %v5303, 0
      %v5327 = vsel %vm254, %v5304, 0
      %v5330 = vsel %vm254, %v5305, 0
      %v5333 = vsel %vm254, %v5306, 0
      %v5336 = vsel %vm254, %v5307, 0
      %v5339 = vsel %vm254, %v5308, 0
      %v5342 = vsel %vm254, %v5309, 0
      %v5345 = vsel %vm254, %v5310, 0
      %v5348 = vsel %vm254, %v5311, 0
      %v5351 = vsel %vm254, %v5312, 0
      %v5354 = vsel %vm254, %v5313, 0
      %v5357 = vsel %vm254, %v5314, 0
      %v5360 = vsel %vm254, %v5315, 0
      %v5363 = vsel %vm254, %v5316, 0
      %v5366 = vsel %vm1160, %v5268, 0
      %5368 = vmatprep.subr.bf16.mxu0 0
      %5369 = vmatpush1.bf16.msra.mxu0 %v5366
      %5370 = vmatprep.subr.bf16.mxu0 0
      %5371 = vmatpush1.bf16.msra.mxu0 0
      %5372 = vmatprep.subr.bf16.mxu0 0
      %5373 = vmatpush1.bf16.msra.mxu0 0
      %5374 = vmatprep.subr.bf16.mxu0 0
      %5375 = vmatpush1.bf16.msra.mxu0 0
      %5376 = vmatprep.subr.bf16.mxu0 0
      %5377 = vmatpush1.bf16.msra.mxu0 0
      %5378 = vmatprep.subr.bf16.mxu0 0
      %5379 = vmatpush1.bf16.msra.mxu0 0
      %5380 = vmatprep.subr.bf16.mxu0 0
      %5381 = vmatpush1.bf16.msra.mxu0 0
      %5382 = vmatprep.subr.bf16.mxu0 0
      %5383 = vmatpush1.bf16.msra.mxu0 0
      %5384 = vmatprep.subr.bf16.mxu0 0
      %5385 = vmatpush1.bf16.msra.mxu0 0
      %5386 = vmatprep.subr.bf16.mxu0 0
      %5387 = vmatpush1.bf16.msra.mxu0 0
      %5388 = vmatprep.subr.bf16.mxu0 0
      %5389 = vmatpush1.bf16.msra.mxu0 0
      %5390 = vmatprep.subr.bf16.mxu0 0
      %5391 = vmatpush1.bf16.msra.mxu0 0
      %5392 = vmatprep.subr.bf16.mxu0 0
      %5393 = vmatpush1.bf16.msra.mxu0 0
      %5394 = vmatprep.subr.bf16.mxu0 0
      %5395 = vmatpush1.bf16.msra.mxu0 0
      %5396 = vmatprep.subr.bf16.mxu0 0
      %5397 = vmatpush1.bf16.msra.mxu0 0
      %5398 = vmatprep.subr.bf16.mxu0 0
      %5399 = vmatpush1.bf16.msra.mxu0 0
      %5400 = vmatprep.mubr.bf16.mxu0 0
      %5401 = vmatmul.mubr.bf16.gmra.mrb[0].mxu0 %v5318
      %v5402 = vpop.f32.mrb[0].mxu0
      %v5403 = vadd.f32 0.0, %v5402
      %v5404 = vpop.f32.mrb[0].mxu0
      %v5405 = vpop.f32.mrb[0].mxu0
      %v5406 = vadd.f32 0.0, %v5405
      %v5407 = vpop.f32.mrb[0].mxu0
      %5408 = vmatprep.mubr.bf16.mxu0 0
      %5409 = vmatmul.mubr.bf16.gmra.mrb[0].mxu0 %v5321
      %v5410 = vpop.f32.mrb[0].mxu0
      %v5411 = vadd.f32 0.0, %v5410
      %v5412 = vpop.f32.mrb[0].mxu0
      %v5413 = vpop.f32.mrb[0].mxu0
      %v5414 = vadd.f32 0.0, %v5413
      %v5415 = vpop.f32.mrb[0].mxu0
      %5416 = vmatprep.mubr.bf16.mxu0 0
      %5417 = vmatmul.mubr.bf16.gmra.mrb[0].mxu0 %v5324
      %v5418 = vpop.f32.mrb[0].mxu0
      %v5419 = vadd.f32 0.0, %v5418
      %v5420 = vpop.f32.mrb[0].mxu0
      %v5421 = vpop.f32.mrb[0].mxu0
      %v5422 = vadd.f32 0.0, %v5421
      %v5423 = vpop.f32.mrb[0].mxu0
      %5424 = vmatprep.mubr.bf16.mxu0 0
      %5425 = vmatmul.mubr.bf16.gmra.mrb[0].mxu0 %v5327
      %v5426 = vpop.f32.mrb[0].mxu0
      %v5427 = vadd.f32 0.0, %v5426
      %v5428 = vpop.f32.mrb[0].mxu0
      %v5429 = vpop.f32.mrb[0].mxu0
      %v5430 = vadd.f32 0.0, %v5429
      %v5431 = vpop.f32.mrb[0].mxu0
      %5432 = vmatprep.mubr.bf16.mxu0 0
      %5433 = vmatmul.mubr.bf16.gmra.mrb[0].mxu0 %v5330
      %v5434 = vpop.f32.mrb[0].mxu0
      %v5435 = vadd.f32 0.0, %v5434
      %v5436 = vpop.f32.mrb[0].mxu0
      %v5437 = vpop.f32.mrb[0].mxu0
      %v5438 = vadd.f32 0.0, %v5437
      %v5439 = vpop.f32.mrb[0].mxu0
      %5440 = vmatprep.mubr.bf16.mxu0 0
      %5441 = vmatmul.mubr.bf16.gmra.mrb[0].mxu0 %v5333
      %v5442 = vpop.f32.mrb[0].mxu0
      %v5443 = vadd.f32 0.0, %v5442
      %v5444 = vpop.f32.mrb[0].mxu0
      %v5445 = vpop.f32.mrb[0].mxu0
      %v5446 = vadd.f32 0.0, %v5445
      %v5447 = vpop.f32.mrb[0].mxu0
      %5448 = vmatprep.mubr.bf16.mxu0 0
      %5449 = vmatmul.mubr.bf16.gmra.mrb[0].mxu0 %v5336
      %v5450 = vpop.f32.mrb[0].mxu0
      %v5451 = vadd.f32 0.0, %v5450
      %v5452 = vpop.f32.mrb[0].mxu0
      %v5453 = vpop.f32.mrb[0].mxu0
      %v5454 = vadd.f32 0.0, %v5453
      %v5455 = vpop.f32.mrb[0].mxu0
      %5456 = vmatprep.mubr.bf16.mxu0 0
      %5457 = vmatmul.mubr.bf16.gmra.mrb[0].mxu0 %v5339
      %v5458 = vpop.f32.mrb[0].mxu0
      %v5459 = vadd.f32 0.0, %v5458
      %v5460 = vpop.f32.mrb[0].mxu0
      %v5461 = vpop.f32.mrb[0].mxu0
      %v5462 = vadd.f32 0.0, %v5461
      %v5463 = vpop.f32.mrb[0].mxu0
      %5464 = vmatprep.mubr.bf16.mxu0 0
      %5465 = vmatmul.mubr.bf16.gmra.mrb[0].mxu0 %v5342
      %v5466 = vpop.f32.mrb[0].mxu0
      %v5467 = vadd.f32 0.0, %v5466
      %v5468 = vpop.f32.mrb[0].mxu0
      %v5469 = vpop.f32.mrb[0].mxu0
      %v5470 = vadd.f32 0.0, %v5469
      %v5471 = vpop.f32.mrb[0].mxu0
      %5472 = vmatprep.mubr.bf16.mxu0 0
      %5473 = vmatmul.mubr.bf16.gmra.mrb[0].mxu0 %v5345
      %v5474 = vpop.f32.mrb[0].mxu0
      %v5475 = vadd.f32 0.0, %v5474
      %v5476 = vpop.f32.mrb[0].mxu0
      %v5477 = vpop.f32.mrb[0].mxu0
      %v5478 = vadd.f32 0.0, %v5477
      %v5479 = vpop.f32.mrb[0].mxu0
      %5480 = vmatprep.mubr.bf16.mxu0 0
      %5481 = vmatmul.mubr.bf16.gmra.mrb[0].mxu0 %v5348
      %v5482 = vpop.f32.mrb[0].mxu0
      %v5483 = vadd.f32 0.0, %v5482
      %v5484 = vpop.f32.mrb[0].mxu0
      %v5485 = vpop.f32.mrb[0].mxu0
      %v5486 = vadd.f32 0.0, %v5485
      %v5487 = vpop.f32.mrb[0].mxu0
      %5488 = vmatprep.mubr.bf16.mxu0 0
      %5489 = vmatmul.mubr.bf16.gmra.mrb[0].mxu0 %v5351
      %v5490 = vpop.f32.mrb[0].mxu0
      %v5491 = vadd.f32 0.0, %v5490
      %v5492 = vpop.f32.mrb[0].mxu0
      %v5493 = vpop.f32.mrb[0].mxu0
      %v5494 = vadd.f32 0.0, %v5493
      %v5495 = vpop.f32.mrb[0].mxu0
      %5496 = vmatprep.mubr.bf16.mxu0 0
      %5497 = vmatmul.mubr.bf16.gmra.mrb[0].mxu0 %v5354
      %v5498 = vpop.f32.mrb[0].mxu0
      %v5499 = vadd.f32 0.0, %v5498
      %v5500 = vpop.f32.mrb[0].mxu0
      %v5501 = vpop.f32.mrb[0].mxu0
      %v5502 = vadd.f32 0.0, %v5501
      %v5503 = vpop.f32.mrb[0].mxu0
      %5504 = vmatprep.mubr.bf16.mxu0 0
      %5505 = vmatmul.mubr.bf16.gmra.mrb[0].mxu0 %v5357
      %v5506 = vpop.f32.mrb[0].mxu0
      %v5507 = vadd.f32 0.0, %v5506
      %v5508 = vpop.f32.mrb[0].mxu0
      %v5509 = vpop.f32.mrb[0].mxu0
      %v5510 = vadd.f32 0.0, %v5509
      %v5511 = vpop.f32.mrb[0].mxu0
      %5512 = vmatprep.mubr.bf16.mxu0 0
      %5513 = vmatmul.mubr.bf16.gmra.mrb[0].mxu0 %v5360
      %v5514 = vpop.f32.mrb[0].mxu0
      %v5515 = vadd.f32 0.0, %v5514
      %v5516 = vpop.f32.mrb[0].mxu0
      %v5517 = vpop.f32.mrb[0].mxu0
      %v5518 = vadd.f32 0.0, %v5517
      %v5519 = vpop.f32.mrb[0].mxu0
      %5520 = vmatprep.mubr.bf16.mxu0 0
      %5521 = vmatmul.mubr.bf16.gmra.mrb[0].mxu0 %v5363
      %v5522 = vpop.f32.mrb[0].mxu0
      %v5523 = vadd.f32 0.0, %v5522
      %v5524 = vpop.f32.mrb[0].mxu0
      %v5525 = vpop.f32.mrb[0].mxu0
      %v5526 = vadd.f32 0.0, %v5525
      %v5527 = vpop.f32.mrb[0].mxu0
      %5528 = vdwg.mxu0
      %v5529 = vadd.f32 %v4803, %v5403
      %v5530 = vadd.f32 %v4804, %v5406
      %v5531 = vadd.f32 %v4805, %v5411
      %v5532 = vadd.f32 %v4806, %v5414
      %v5533 = vadd.f32 %v4807, %v5419
      %v5534 = vadd.f32 %v4808, %v5422
      %v5535 = vadd.f32 %v4809, %v5427
      %v5536 = vadd.f32 %v4810, %v5430
      %v5537 = vadd.f32 %v4811, %v5435
      %v5538 = vadd.f32 %v4812, %v5438
      %v5539 = vadd.f32 %v4813, %v5443
      %v5540 = vadd.f32 %v4814, %v5446
      %v5541 = vadd.f32 %v4815, %v5451
      %v5542 = vadd.f32 %v4816, %v5454
      %v5543 = vadd.f32 %v4817, %v5459
      %v5544 = vadd.f32 %v4818, %v5462
      %v5545 = vadd.f32 %v4819, %v5467
      %v5546 = vadd.f32 %v4820, %v5470
      %v5547 = vadd.f32 %v4821, %v5475
      %v5548 = vadd.f32 %v4822, %v5478
      %v5549 = vadd.f32 %v4823, %v5483
      %v5550 = vadd.f32 %v4824, %v5486
      %v5551 = vadd.f32 %v4825, %v5491
      %v5552 = vadd.f32 %v4826, %v5494
      %v5553 = vadd.f32 %v4827, %v5499
      %v5554 = vadd.f32 %v4828, %v5502
      %v5555 = vadd.f32 %v4829, %v5507
      %v5556 = vadd.f32 %v4830, %v5510
      %v5557 = vadd.f32 %v4831, %v5515
      %v5558 = vadd.f32 %v4832, %v5518
      %v5559 = vadd.f32 %v4833, %v5523
      %v5560 = vadd.f32 %v4834, %v5526
      %v5561 = vld [vmem:[#allocation2 + $0x8] sm:$0xe]
      %v5562 = vld [vmem:[#allocation2 + $0x1c] sm:$0xe]
      %v5563 = vld [vmem:[#allocation2 + $0x30] sm:$0xe]
      %v5564 = vld [vmem:[#allocation2 + $0x44] sm:$0xe]
      %v5565 = vld [vmem:[#allocation2 + $0x58] sm:$0xe]
      %v5566 = vld [vmem:[#allocation2 + $0x6c] sm:$0xe]
      %v5567 = vld [vmem:[#allocation2 + $0x80] sm:$0xe]
      %v5568 = vld [vmem:[#allocation2 + $0x94] sm:$0xe]
      %v5569 = vld [vmem:[#allocation2 + $0xa8] sm:$0xe]
      %v5570 = vld [vmem:[#allocation2 + $0xbc] sm:$0xe]
      %v5571 = vld [vmem:[#allocation2 + $0xd0] sm:$0xe]
      %v5572 = vld [vmem:[#allocation2 + $0xe4] sm:$0xe]
      %v5573 = vld [vmem:[#allocation2 + $0xf8] sm:$0xe]
      %v5574 = vld [vmem:[#allocation2 + $0x10c] sm:$0xe]
      %v5575 = vld [vmem:[#allocation2 + $0x120] sm:$0xe]
      %v5576 = vld [vmem:[#allocation2 + $0x134] sm:$0xe]
      %v5625 = vrot.slane %v5561, 5
      %v5626 = vrot.slane %v5625, 4
      %v5627 = vrot.slane %v4836, 5
      %v5628 = vsel %vm2690, %v5626, %v5627
      %v5629 = vrot.slane %v5627, 4
      %v5630 = vrot.slane %v4837, 5
      %v5631 = vsel %vm2690, %v5629, %v5630
      %v5632 = vrot.slane %v5562, 5
      %v5633 = vrot.slane %v5632, 4
      %v5634 = vrot.slane %v4839, 5
      %v5635 = vsel %vm2690, %v5633, %v5634
      %v5636 = vrot.slane %v5634, 4
      %v5637 = vrot.slane %v4840, 5
      %v5638 = vsel %vm2690, %v5636, %v5637
      %v5639 = vrot.slane %v5563, 5
      %v5640 = vrot.slane %v5639, 4
      %v5641 = vrot.slane %v4842, 5
      %v5642 = vsel %vm2690, %v5640, %v5641
      %v5643 = vrot.slane %v5641, 4
      %v5644 = vrot.slane %v4843, 5
      %v5645 = vsel %vm2690, %v5643, %v5644
      %v5646 = vrot.slane %v5564, 5
      %v5647 = vrot.slane %v5646, 4
      %v5648 = vrot.slane %v4845, 5
      %v5649 = vsel %vm2690, %v5647, %v5648
      %v5650 = vrot.slane %v5648, 4
      %v5651 = vrot.slane %v4846, 5
      %v5652 = vsel %vm2690, %v5650, %v5651
      %v5653 = vrot.slane %v5565, 5
      %v5654 = vrot.slane %v5653, 4
      %v5655 = vrot.slane %v4848, 5
      %v5656 = vsel %vm2690, %v5654, %v5655
      %v5657 = vrot.slane %v5655, 4
      %v5658 = vrot.slane %v4849, 5
      %v5659 = vsel %vm2690, %v5657, %v5658
      %v5660 = vrot.slane %v5566, 5
      %v5661 = vrot.slane %v5660, 4
      %v5662 = vrot.slane %v4851, 5
      %v5663 = vsel %vm2690, %v5661, %v5662
      %v5664 = vrot.slane %v5662, 4
      %v5665 = vrot.slane %v4852, 5
      %v5666 = vsel %vm2690, %v5664, %v5665
      %v5667 = vrot.slane %v5567, 5
      %v5668 = vrot.slane %v5667, 4
      %v5669 = vrot.slane %v4854, 5
      %v5670 = vsel %vm2690, %v5668, %v5669
      %v5671 = vrot.slane %v5669, 4
      %v5672 = vrot.slane %v4855, 5
      %v5673 = vsel %vm2690, %v5671, %v5672
      %v5674 = vrot.slane %v5568, 5
      %v5675 = vrot.slane %v5674, 4
      %v5676 = vrot.slane %v4857, 5
      %v5677 = vsel %vm2690, %v5675, %v5676
      %v5678 = vrot.slane %v5676, 4
      %v5679 = vrot.slane %v4858, 5
      %v5680 = vsel %vm2690, %v5678, %v5679
      %v5681 = vrot.slane %v5569, 5
      %v5682 = vrot.slane %v5681, 4
      %v5683 = vrot.slane %v4860, 5
      %v5684 = vsel %vm2690, %v5682, %v5683
      %v5685 = vrot.slane %v5683, 4
      %v5686 = vrot.slane %v4861, 5
      %v5687 = vsel %vm2690, %v5685, %v5686
      %v5688 = vrot.slane %v5570, 5
      %v5689 = vrot.slane %v5688, 4
      %v5690 = vrot.slane %v4863, 5
      %v5691 = vsel %vm2690, %v5689, %v5690
      %v5692 = vrot.slane %v5690, 4
      %v5693 = vrot.slane %v4864, 5
      %v5694 = vsel %vm2690, %v5692, %v5693
      %v5695 = vrot.slane %v5571, 5
      %v5696 = vrot.slane %v5695, 4
      %v5697 = vrot.slane %v4866, 5
      %v5698 = vsel %vm2690, %v5696, %v5697
      %v5699 = vrot.slane %v5697, 4
      %v5700 = vrot.slane %v4867, 5
      %v5701 = vsel %vm2690, %v5699, %v5700
      %v5702 = vrot.slane %v5572, 5
      %v5703 = vrot.slane %v5702, 4
      %v5704 = vrot.slane %v4869, 5
      %v5705 = vsel %vm2690, %v5703, %v5704
      %v5706 = vrot.slane %v5704, 4
      %v5707 = vrot.slane %v4870, 5
      %v5708 = vsel %vm2690, %v5706, %v5707
      %v5709 = vrot.slane %v5573, 5
      %v5710 = vrot.slane %v5709, 4
      %v5711 = vrot.slane %v4872, 5
      %v5712 = vsel %vm2690, %v5710, %v5711
      %v5713 = vrot.slane %v5711, 4
      %v5714 = vrot.slane %v4873, 5
      %v5715 = vsel %vm2690, %v5713, %v5714
      %v5716 = vrot.slane %v5574, 5
      %v5717 = vrot.slane %v5716, 4
      %v5718 = vrot.slane %v4875, 5
      %v5719 = vsel %vm2690, %v5717, %v5718
      %v5720 = vrot.slane %v5718, 4
      %v5721 = vrot.slane %v4876, 5
      %v5722 = vsel %vm2690, %v5720, %v5721
      %v5723 = vrot.slane %v5575, 5
      %v5724 = vrot.slane %v5723, 4
      %v5725 = vrot.slane %v4878, 5
      %v5726 = vsel %vm2690, %v5724, %v5725
      %v5727 = vrot.slane %v5725, 4
      %v5728 = vrot.slane %v4879, 5
      %v5729 = vsel %vm2690, %v5727, %v5728
      %v5730 = vrot.slane %v5576, 5
      %v5731 = vrot.slane %v5730, 4
      %v5732 = vrot.slane %v4881, 5
      %v5733 = vsel %vm2690, %v5731, %v5732
      %v5734 = vrot.slane %v5732, 4
      %v5735 = vrot.slane %v4882, 5
      %v5736 = vsel %vm2690, %v5734, %v5735
      %s5737 = scalar_lea.vmem %s1, 36
      %v5738 = vld [vmem:[%s5737] sm:$0xf]
      %v5739 = vunpack.c.l.b16 %v5628
      %v5740 = vunpack.c.l.b16 %v5631
      %v5741 = vunpack.c.l.b16 %v5635
      %v5742 = vunpack.c.l.b16 %v5638
      %v5743 = vunpack.c.l.b16 %v5642
      %v5744 = vunpack.c.l.b16 %v5645
      %v5745 = vunpack.c.l.b16 %v5649
      %v5746 = vunpack.c.l.b16 %v5652
      %v5747 = vunpack.c.l.b16 %v5656
      %v5748 = vunpack.c.l.b16 %v5659
      %v5749 = vunpack.c.l.b16 %v5663
      %v5750 = vunpack.c.l.b16 %v5666
      %v5751 = vunpack.c.l.b16 %v5670
      %v5752 = vunpack.c.l.b16 %v5673
      %v5753 = vunpack.c.l.b16 %v5677
      %v5754 = vunpack.c.l.b16 %v5680
      %v5755 = vunpack.c.l.b16 %v5684
      %v5756 = vunpack.c.l.b16 %v5687
      %v5757 = vunpack.c.l.b16 %v5691
      %v5758 = vunpack.c.l.b16 %v5694
      %v5759 = vunpack.c.l.b16 %v5698
      %v5760 = vunpack.c.l.b16 %v5701
      %v5761 = vunpack.c.l.b16 %v5705
      %v5762 = vunpack.c.l.b16 %v5708
      %v5763 = vunpack.c.l.b16 %v5712
      %v5764 = vunpack.c.l.b16 %v5715
      %v5765 = vunpack.c.l.b16 %v5719
      %v5766 = vunpack.c.l.b16 %v5722
      %v5767 = vunpack.c.l.b16 %v5726
      %v5768 = vunpack.c.l.b16 %v5729
      %v5769 = vunpack.c.l.b16 %v5733
      %v5770 = vunpack.c.l.b16 %v5736
      %v5771 = vpack.c.b16 %v5740, %v5739
      %v5772 = vpack.c.b16 %v5742, %v5741
      %v5773 = vpack.c.b16 %v5744, %v5743
      %v5774 = vpack.c.b16 %v5746, %v5745
      %v5775 = vpack.c.b16 %v5748, %v5747
      %v5776 = vpack.c.b16 %v5750, %v5749
      %v5777 = vpack.c.b16 %v5752, %v5751
      %v5778 = vpack.c.b16 %v5754, %v5753
      %v5779 = vpack.c.b16 %v5756, %v5755
      %v5780 = vpack.c.b16 %v5758, %v5757
      %v5781 = vpack.c.b16 %v5760, %v5759
      %v5782 = vpack.c.b16 %v5762, %v5761
      %v5783 = vpack.c.b16 %v5764, %v5763
      %v5784 = vpack.c.b16 %v5766, %v5765
      %v5785 = vpack.c.b16 %v5768, %v5767
      %v5786 = vpack.c.b16 %v5770, %v5769
      %v5788 = vsel %vm254, %v5771, 0
      %v5791 = vsel %vm254, %v5772, 0
      %v5794 = vsel %vm254, %v5773, 0
      %v5797 = vsel %vm254, %v5774, 0
      %v5800 = vsel %vm254, %v5775, 0
      %v5803 = vsel %vm254, %v5776, 0
      %v5806 = vsel %vm254, %v5777, 0
      %v5809 = vsel %vm254, %v5778, 0
      %v5812 = vsel %vm254, %v5779, 0
      %v5815 = vsel %vm254, %v5780, 0
      %v5818 = vsel %vm254, %v5781, 0
      %v5821 = vsel %vm254, %v5782, 0
      %v5824 = vsel %vm254, %v5783, 0
      %v5827 = vsel %vm254, %v5784, 0
      %v5830 = vsel %vm254, %v5785, 0
      %v5833 = vsel %vm254, %v5786, 0
      %v5836 = vsel %vm1160, %v5738, 0
      %5838 = vmatprep.subr.bf16.mxu0 0
      %5839 = vmatpush1.bf16.msra.mxu0 %v5836
      %5840 = vmatprep.subr.bf16.mxu0 0
      %5841 = vmatpush1.bf16.msra.mxu0 0
      %5842 = vmatprep.subr.bf16.mxu0 0
      %5843 = vmatpush1.bf16.msra.mxu0 0
      %5844 = vmatprep.subr.bf16.mxu0 0
      %5845 = vmatpush1.bf16.msra.mxu0 0
      %5846 = vmatprep.subr.bf16.mxu0 0
      %5847 = vmatpush1.bf16.msra.mxu0 0
      %5848 = vmatprep.subr.bf16.mxu0 0
      %5849 = vmatpush1.bf16.msra.mxu0 0
      %5850 = vmatprep.subr.bf16.mxu0 0
      %5851 = vmatpush1.bf16.msra.mxu0 0
      %5852 = vmatprep.subr.bf16.mxu0 0
      %5853 = vmatpush1.bf16.msra.mxu0 0
      %5854 = vmatprep.subr.bf16.mxu0 0
      %5855 = vmatpush1.bf16.msra.mxu0 0
      %5856 = vmatprep.subr.bf16.mxu0 0
      %5857 = vmatpush1.bf16.msra.mxu0 0
      %5858 = vmatprep.subr.bf16.mxu0 0
      %5859 = vmatpush1.bf16.msra.mxu0 0
      %5860 = vmatprep.subr.bf16.mxu0 0
      %5861 = vmatpush1.bf16.msra.mxu0 0
      %5862 = vmatprep.subr.bf16.mxu0 0
      %5863 = vmatpush1.bf16.msra.mxu0 0
      %5864 = vmatprep.subr.bf16.mxu0 0
      %5865 = vmatpush1.bf16.msra.mxu0 0
      %5866 = vmatprep.subr.bf16.mxu0 0
      %5867 = vmatpush1.bf16.msra.mxu0 0
      %5868 = vmatprep.subr.bf16.mxu0 0
      %5869 = vmatpush1.bf16.msra.mxu0 0
      %5870 = vmatprep.mubr.bf16.mxu0 0
      %5871 = vmatmul.mubr.bf16.gmra.mrb[0].mxu0 %v5788
      %v5872 = vpop.f32.mrb[0].mxu0
      %v5873 = vadd.f32 0.0, %v5872
      %v5874 = vpop.f32.mrb[0].mxu0
      %v5875 = vpop.f32.mrb[0].mxu0
      %v5876 = vadd.f32 0.0, %v5875
      %v5877 = vpop.f32.mrb[0].mxu0
      %5878 = vmatprep.mubr.bf16.mxu0 0
      %5879 = vmatmul.mubr.bf16.gmra.mrb[0].mxu0 %v5791
      %v5880 = vpop.f32.mrb[0].mxu0
      %v5881 = vadd.f32 0.0, %v5880
      %v5882 = vpop.f32.mrb[0].mxu0
      %v5883 = vpop.f32.mrb[0].mxu0
      %v5884 = vadd.f32 0.0, %v5883
      %v5885 = vpop.f32.mrb[0].mxu0
      %5886 = vmatprep.mubr.bf16.mxu0 0
      %5887 = vmatmul.mubr.bf16.gmra.mrb[0].mxu0 %v5794
      %v5888 = vpop.f32.mrb[0].mxu0
      %v5889 = vadd.f32 0.0, %v5888
      %v5890 = vpop.f32.mrb[0].mxu0
      %v5891 = vpop.f32.mrb[0].mxu0
      %v5892 = vadd.f32 0.0, %v5891
      %v5893 = vpop.f32.mrb[0].mxu0
      %5894 = vmatprep.mubr.bf16.mxu0 0
      %5895 = vmatmul.mubr.bf16.gmra.mrb[0].mxu0 %v5797
      %v5896 = vpop.f32.mrb[0].mxu0
      %v5897 = vadd.f32 0.0, %v5896
      %v5898 = vpop.f32.mrb[0].mxu0
      %v5899 = vpop.f32.mrb[0].mxu0
      %v5900 = vadd.f32 0.0, %v5899
      %v5901 = vpop.f32.mrb[0].mxu0
      %5902 = vmatprep.mubr.bf16.mxu0 0
      %5903 = vmatmul.mubr.bf16.gmra.mrb[0].mxu0 %v5800
      %v5904 = vpop.f32.mrb[0].mxu0
      %v5905 = vadd.f32 0.0, %v5904
      %v5906 = vpop.f32.mrb[0].mxu0
      %v5907 = vpop.f32.mrb[0].mxu0
      %v5908 = vadd.f32 0.0, %v5907
      %v5909 = vpop.f32.mrb[0].mxu0
      %5910 = vmatprep.mubr.bf16.mxu0 0
      %5911 = vmatmul.mubr.bf16.gmra.mrb[0].mxu0 %v5803
      %v5912 = vpop.f32.mrb[0].mxu0
      %v5913 = vadd.f32 0.0, %v5912
      %v5914 = vpop.f32.mrb[0].mxu0
      %v5915 = vpop.f32.mrb[0].mxu0
      %v5916 = vadd.f32 0.0, %v5915
      %v5917 = vpop.f32.mrb[0].mxu0
      %5918 = vmatprep.mubr.bf16.mxu0 0
      %5919 = vmatmul.mubr.bf16.gmra.mrb[0].mxu0 %v5806
      %v5920 = vpop.f32.mrb[0].mxu0
      %v5921 = vadd.f32 0.0, %v5920
      %v5922 = vpop.f32.mrb[0].mxu0
      %v5923 = vpop.f32.mrb[0].mxu0
      %v5924 = vadd.f32 0.0, %v5923
      %v5925 = vpop.f32.mrb[0].mxu0
      %5926 = vmatprep.mubr.bf16.mxu0 0
      %5927 = vmatmul.mubr.bf16.gmra.mrb[0].mxu0 %v5809
      %v5928 = vpop.f32.mrb[0].mxu0
      %v5929 = vadd.f32 0.0, %v5928
      %v5930 = vpop.f32.mrb[0].mxu0
      %v5931 = vpop.f32.mrb[0].mxu0
      %v5932 = vadd.f32 0.0, %v5931
      %v5933 = vpop.f32.mrb[0].mxu0
      %5934 = vmatprep.mubr.bf16.mxu0 0
      %5935 = vmatmul.mubr.bf16.gmra.mrb[0].mxu0 %v5812
      %v5936 = vpop.f32.mrb[0].mxu0
      %v5937 = vadd.f32 0.0, %v5936
      %v5938 = vpop.f32.mrb[0].mxu0
      %v5939 = vpop.f32.mrb[0].mxu0
      %v5940 = vadd.f32 0.0, %v5939
      %v5941 = vpop.f32.mrb[0].mxu0
      %5942 = vmatprep.mubr.bf16.mxu0 0
      %5943 = vmatmul.mubr.bf16.gmra.mrb[0].mxu0 %v5815
      %v5944 = vpop.f32.mrb[0].mxu0
      %v5945 = vadd.f32 0.0, %v5944
      %v5946 = vpop.f32.mrb[0].mxu0
      %v5947 = vpop.f32.mrb[0].mxu0
      %v5948 = vadd.f32 0.0, %v5947
      %v5949 = vpop.f32.mrb[0].mxu0
      %5950 = vmatprep.mubr.bf16.mxu0 0
      %5951 = vmatmul.mubr.bf16.gmra.mrb[0].mxu0 %v5818
      %v5952 = vpop.f32.mrb[0].mxu0
      %v5953 = vadd.f32 0.0, %v5952
      %v5954 = vpop.f32.mrb[0].mxu0
      %v5955 = vpop.f32.mrb[0].mxu0
      %v5956 = vadd.f32 0.0, %v5955
      %v5957 = vpop.f32.mrb[0].mxu0
      %5958 = vmatprep.mubr.bf16.mxu0 0
      %5959 = vmatmul.mubr.bf16.gmra.mrb[0].mxu0 %v5821
      %v5960 = vpop.f32.mrb[0].mxu0
      %v5961 = vadd.f32 0.0, %v5960
      %v5962 = vpop.f32.mrb[0].mxu0
      %v5963 = vpop.f32.mrb[0].mxu0
      %v5964 = vadd.f32 0.0, %v5963
      %v5965 = vpop.f32.mrb[0].mxu0
      %5966 = vmatprep.mubr.bf16.mxu0 0
      %5967 = vmatmul.mubr.bf16.gmra.mrb[0].mxu0 %v5824
      %v5968 = vpop.f32.mrb[0].mxu0
      %v5969 = vadd.f32 0.0, %v5968
      %v5970 = vpop.f32.mrb[0].mxu0
      %v5971 = vpop.f32.mrb[0].mxu0
      %v5972 = vadd.f32 0.0, %v5971
      %v5973 = vpop.f32.mrb[0].mxu0
      %5974 = vmatprep.mubr.bf16.mxu0 0
      %5975 = vmatmul.mubr.bf16.gmra.mrb[0].mxu0 %v5827
      %v5976 = vpop.f32.mrb[0].mxu0
      %v5977 = vadd.f32 0.0, %v5976
      %v5978 = vpop.f32.mrb[0].mxu0
      %v5979 = vpop.f32.mrb[0].mxu0
      %v5980 = vadd.f32 0.0, %v5979
      %v5981 = vpop.f32.mrb[0].mxu0
      %5982 = vmatprep.mubr.bf16.mxu0 0
      %5983 = vmatmul.mubr.bf16.gmra.mrb[0].mxu0 %v5830
      %v5984 = vpop.f32.mrb[0].mxu0
      %v5985 = vadd.f32 0.0, %v5984
      %v5986 = vpop.f32.mrb[0].mxu0
      %v5987 = vpop.f32.mrb[0].mxu0
      %v5988 = vadd.f32 0.0, %v5987
      %v5989 = vpop.f32.mrb[0].mxu0
      %5990 = vmatprep.mubr.bf16.mxu0 0
      %5991 = vmatmul.mubr.bf16.gmra.mrb[0].mxu0 %v5833
      %v5992 = vpop.f32.mrb[0].mxu0
      %v5993 = vadd.f32 0.0, %v5992
      %v5994 = vpop.f32.mrb[0].mxu0
      %v5995 = vpop.f32.mrb[0].mxu0
      %v5996 = vadd.f32 0.0, %v5995
      %v5997 = vpop.f32.mrb[0].mxu0
      %5998 = vdwg.mxu0
      %v5999 = vadd.f32 %v5529, %v5873
      %v6000 = vadd.f32 %v5530, %v5876
      %v6001 = vadd.f32 %v5531, %v5881
      %v6002 = vadd.f32 %v5532, %v5884
      %v6003 = vadd.f32 %v5533, %v5889
      %v6004 = vadd.f32 %v5534, %v5892
      %v6005 = vadd.f32 %v5535, %v5897
      %v6006 = vadd.f32 %v5536, %v5900
      %v6007 = vadd.f32 %v5537, %v5905
      %v6008 = vadd.f32 %v5538, %v5908
      %v6009 = vadd.f32 %v5539, %v5913
      %v6010 = vadd.f32 %v5540, %v5916
      %v6011 = vadd.f32 %v5541, %v5921
      %v6012 = vadd.f32 %v5542, %v5924
      %v6013 = vadd.f32 %v5543, %v5929
      %v6014 = vadd.f32 %v5544, %v5932
      %v6015 = vadd.f32 %v5545, %v5937
      %v6016 = vadd.f32 %v5546, %v5940
      %v6017 = vadd.f32 %v5547, %v5945
      %v6018 = vadd.f32 %v5548, %v5948
      %v6019 = vadd.f32 %v5549, %v5953
      %v6020 = vadd.f32 %v5550, %v5956
      %v6021 = vadd.f32 %v5551, %v5961
      %v6022 = vadd.f32 %v5552, %v5964
      %v6023 = vadd.f32 %v5553, %v5969
      %v6024 = vadd.f32 %v5554, %v5972
      %v6025 = vadd.f32 %v5555, %v5977
      %v6026 = vadd.f32 %v5556, %v5980
      %v6027 = vadd.f32 %v5557, %v5985
      %v6028 = vadd.f32 %v5558, %v5988
      %v6029 = vadd.f32 %v5559, %v5993
      %v6030 = vadd.f32 %v5560, %v5996
      %s6031 = scalar_lea.vmem %s2, 1
      %v6032 = vld [vmem:[%s6031] sm:$0x1]
      %v6034 = vlaneseq
      %v6035 = vshrl.u32 %v6034, 7
      %v6036 = vsub.s32 0, %v6035
      %v6037 = vrot.slane %v6032, %v6036
      %v6039 = vadd.f32 %v5999, %v6037
      %v6040 = vadd.f32 %v6000, %v6037
      %v6041 = vadd.f32 %v6001, %v6037
      %v6042 = vadd.f32 %v6002, %v6037
      %v6043 = vadd.f32 %v6003, %v6037
      %v6044 = vadd.f32 %v6004, %v6037
      %v6045 = vadd.f32 %v6005, %v6037
      %v6046 = vadd.f32 %v6006, %v6037
      %v6047 = vadd.f32 %v6007, %v6037
      %v6048 = vadd.f32 %v6008, %v6037
      %v6049 = vadd.f32 %v6009, %v6037
      %v6050 = vadd.f32 %v6010, %v6037
      %v6051 = vadd.f32 %v6011, %v6037
      %v6052 = vadd.f32 %v6012, %v6037
      %v6053 = vadd.f32 %v6013, %v6037
      %v6054 = vadd.f32 %v6014, %v6037
      %v6055 = vadd.f32 %v6015, %v6037
      %v6056 = vadd.f32 %v6016, %v6037
      %v6057 = vadd.f32 %v6017, %v6037
      %v6058 = vadd.f32 %v6018, %v6037
      %v6059 = vadd.f32 %v6019, %v6037
      %v6060 = vadd.f32 %v6020, %v6037
      %v6061 = vadd.f32 %v6021, %v6037
      %v6062 = vadd.f32 %v6022, %v6037
      %v6063 = vadd.f32 %v6023, %v6037
      %v6064 = vadd.f32 %v6024, %v6037
      %v6065 = vadd.f32 %v6025, %v6037
      %v6066 = vadd.f32 %v6026, %v6037
      %v6067 = vadd.f32 %v6027, %v6037
      %v6068 = vadd.f32 %v6028, %v6037
      %v6069 = vadd.f32 %v6029, %v6037
      %v6070 = vadd.f32 %v6030, %v6037
      %v6071 = vmax.f32 %v6039, 0.0
      %v6072 = vmax.f32 %v6040, 0.0
      %v6073 = vmax.f32 %v6041, 0.0
      %v6074 = vmax.f32 %v6042, 0.0
      %v6075 = vmax.f32 %v6043, 0.0
      %v6076 = vmax.f32 %v6044, 0.0
      %v6077 = vmax.f32 %v6045, 0.0
      %v6078 = vmax.f32 %v6046, 0.0
      %v6079 = vmax.f32 %v6047, 0.0
      %v6080 = vmax.f32 %v6048, 0.0
      %v6081 = vmax.f32 %v6049, 0.0
      %v6082 = vmax.f32 %v6050, 0.0
      %v6083 = vmax.f32 %v6051, 0.0
      %v6084 = vmax.f32 %v6052, 0.0
      %v6085 = vmax.f32 %v6053, 0.0
      %v6086 = vmax.f32 %v6054, 0.0
      %v6087 = vmax.f32 %v6055, 0.0
      %v6088 = vmax.f32 %v6056, 0.0
      %v6089 = vmax.f32 %v6057, 0.0
      %v6090 = vmax.f32 %v6058, 0.0
      %v6091 = vmax.f32 %v6059, 0.0
      %v6092 = vmax.f32 %v6060, 0.0
      %v6093 = vmax.f32 %v6061, 0.0
      %v6094 = vmax.f32 %v6062, 0.0
      %v6095 = vmax.f32 %v6063, 0.0
      %v6096 = vmax.f32 %v6064, 0.0
      %v6097 = vmax.f32 %v6065, 0.0
      %v6098 = vmax.f32 %v6066, 0.0
      %v6099 = vmax.f32 %v6067, 0.0
      %v6100 = vmax.f32 %v6068, 0.0
      %v6101 = vmax.f32 %v6069, 0.0
      %v6102 = vmax.f32 %v6070, 0.0
      %v6103 = vadd.f32 %v3233, %v6087
      %v6104 = vadd.f32 %v3234, %v6088
      %v6105 = vadd.f32 %v3235, %v6089
      %v6106 = vadd.f32 %v3236, %v6090
      %v6107 = vadd.f32 %v3237, %v6091
      %v6108 = vadd.f32 %v3238, %v6092
      %v6109 = vadd.f32 %v3239, %v6093
      %v6110 = vadd.f32 %v3240, %v6094
      %v6111 = vadd.f32 %v3241, %v6095
      %v6112 = vadd.f32 %v3242, %v6096
      %v6113 = vadd.f32 %v3243, %v6097
      %v6114 = vadd.f32 %v3244, %v6098
      %v6115 = vadd.f32 %v3245, %v6099
      %v6116 = vadd.f32 %v3246, %v6100
      %v6117 = vadd.f32 %v3247, %v6101
      %v6118 = vadd.f32 %v3248, %v6102
      %6119 = vst.msk [vmem:[%s170] sm:$0xff] %vm254, %v6103
      %6120 = vst.msk [vmem:[%s170 + $0x8] sm:$0xff] %vm254, %v6104
      %6121 = vst.msk [vmem:[%s170 + $0x10] sm:$0xff] %vm254, %v6105
      %6122 = vst.msk [vmem:[%s170 + $0x18] sm:$0xff] %vm254, %v6106
      %6123 = vst.msk [vmem:[%s170 + $0x20] sm:$0xff] %vm254, %v6107
      %6124 = vst.msk [vmem:[%s170 + $0x28] sm:$0xff] %vm254, %v6108
      %6125 = vst.msk [vmem:[%s170 + $0x30] sm:$0xff] %vm254, %v6109
      %6126 = vst.msk [vmem:[%s170 + $0x38] sm:$0xff] %vm254, %v6110
      %6127 = vst.msk [vmem:[%s170 + $0x40] sm:$0xff] %vm254, %v6111
      %6128 = vst.msk [vmem:[%s170 + $0x48] sm:$0xff] %vm254, %v6112
      %6129 = vst.msk [vmem:[%s170 + $0x50] sm:$0xff] %vm254, %v6113
      %6130 = vst.msk [vmem:[%s170 + $0x58] sm:$0xff] %vm254, %v6114
      %6131 = vst.msk [vmem:[%s170 + $0x60] sm:$0xff] %vm254, %v6115
      %6132 = vst.msk [vmem:[%s170 + $0x68] sm:$0xff] %vm254, %v6116
      %6133 = vst.msk [vmem:[%s170 + $0x70] sm:$0xff] %vm254, %v6117
      %6134 = vst.msk [vmem:[%s170 + $0x78] sm:$0xff] %vm254, %v6118
      %v6135 = vadd.f32 %v3249, %v6071
      %v6136 = vadd.f32 %v3250, %v6072
      %v6137 = vadd.f32 %v3251, %v6073
      %v6138 = vadd.f32 %v3252, %v6074
      %v6139 = vadd.f32 %v3253, %v6075
      %v6140 = vadd.f32 %v3254, %v6076
      %v6141 = vadd.f32 %v3255, %v6077
      %v6142 = vadd.f32 %v3256, %v6078
      %v6143 = vadd.f32 %v3257, %v6079
      %v6144 = vadd.f32 %v3258, %v6080
      %v6145 = vadd.f32 %v3259, %v6081
      %v6146 = vadd.f32 %v3260, %v6082
      %v6147 = vadd.f32 %v3261, %v6083
      %v6148 = vadd.f32 %v3262, %v6084
      %v6149 = vadd.f32 %v3263, %v6085
      %v6150 = vadd.f32 %v3264, %v6086
      %s6151 = scalar_lea.vmem %s170, 128
      %6152 = vst.msk [vmem:[%s6151] sm:$0xff] %vm254, %v6135
      %6153 = vst.msk [vmem:[%s6151 + $0x8] sm:$0xff] %vm254, %v6136
      %6154 = vst.msk [vmem:[%s6151 + $0x10] sm:$0xff] %vm254, %v6137
      %6155 = vst.msk [vmem:[%s6151 + $0x18] sm:$0xff] %vm254, %v6138
      %6156 = vst.msk [vmem:[%s6151 + $0x20] sm:$0xff] %vm254, %v6139
      %6157 = vst.msk [vmem:[%s6151 + $0x28] sm:$0xff] %vm254, %v6140
      %6158 = vst.msk [vmem:[%s6151 + $0x30] sm:$0xff] %vm254, %v6141
      %6159 = vst.msk [vmem:[%s6151 + $0x38] sm:$0xff] %vm254, %v6142
      %6160 = vst.msk [vmem:[%s6151 + $0x40] sm:$0xff] %vm254, %v6143
      %6161 = vst.msk [vmem:[%s6151 + $0x48] sm:$0xff] %vm254, %v6144
      %6162 = vst.msk [vmem:[%s6151 + $0x50] sm:$0xff] %vm254, %v6145
      %6163 = vst.msk [vmem:[%s6151 + $0x58] sm:$0xff] %vm254, %v6146
      %6164 = vst.msk [vmem:[%s6151 + $0x60] sm:$0xff] %vm254, %v6147
      %6165 = vst.msk [vmem:[%s6151 + $0x68] sm:$0xff] %vm254, %v6148
      %6166 = vst.msk [vmem:[%s6151 + $0x70] sm:$0xff] %vm254, %v6149
      %6167 = vst.msk [vmem:[%s6151 + $0x78] sm:$0xff] %vm254, %v6150
      %v6168 = vld [vmem:[%s170] sm:$0xff]
      %v6169 = vld [vmem:[%s170 + $0x8] sm:$0xff]
      %v6170 = vld [vmem:[%s170 + $0x10] sm:$0xff]
      %v6171 = vld [vmem:[%s170 + $0x18] sm:$0xff]
      %v6172 = vld [vmem:[%s170 + $0x20] sm:$0xff]
      %v6173 = vld [vmem:[%s170 + $0x28] sm:$0xff]
      %v6174 = vld [vmem:[%s170 + $0x30] sm:$0xff]
      %v6175 = vld [vmem:[%s170 + $0x38] sm:$0xff]
      %v6176 = vld [vmem:[%s170 + $0x40] sm:$0xff]
      %v6177 = vld [vmem:[%s170 + $0x48] sm:$0xff]
      %v6178 = vld [vmem:[%s170 + $0x50] sm:$0xff]
      %v6179 = vld [vmem:[%s170 + $0x58] sm:$0xff]
      %v6180 = vld [vmem:[%s170 + $0x60] sm:$0xff]
      %v6181 = vld [vmem:[%s170 + $0x68] sm:$0xff]
      %v6182 = vld [vmem:[%s170 + $0x70] sm:$0xff]
      %v6183 = vld [vmem:[%s170 + $0x78] sm:$0xff]
      %v6184 = vld [vmem:[%s170 + $0x80] sm:$0xff]
      %v6185 = vld [vmem:[%s170 + $0x88] sm:$0xff]
      %v6186 = vld [vmem:[%s170 + $0x90] sm:$0xff]
      %v6187 = vld [vmem:[%s170 + $0x98] sm:$0xff]
      %v6188 = vld [vmem:[%s170 + $0xa0] sm:$0xff]
      %v6189 = vld [vmem:[%s170 + $0xa8] sm:$0xff]
      %v6190 = vld [vmem:[%s170 + $0xb0] sm:$0xff]
      %v6191 = vld [vmem:[%s170 + $0xb8] sm:$0xff]
      %v6192 = vld [vmem:[%s170 + $0xc0] sm:$0xff]
      %v6193 = vld [vmem:[%s170 + $0xc8] sm:$0xff]
      %v6194 = vld [vmem:[%s170 + $0xd0] sm:$0xff]
      %v6195 = vld [vmem:[%s170 + $0xd8] sm:$0xff]
      %v6196 = vld [vmem:[%s170 + $0xe0] sm:$0xff]
      %v6197 = vld [vmem:[%s170 + $0xe8] sm:$0xff]
      %v6198 = vld [vmem:[%s170 + $0xf0] sm:$0xff]
      %v6199 = vld [vmem:[%s170 + $0xf8] sm:$0xff]
      %v6200 = vpack.c.bf16 %v6169, %v6168
      %v6201 = vpack.c.bf16 %v6171, %v6170
      %v6202 = vpack.c.bf16 %v6173, %v6172
      %v6203 = vpack.c.bf16 %v6175, %v6174
      %v6204 = vpack.c.bf16 %v6177, %v6176
      %v6205 = vpack.c.bf16 %v6179, %v6178
      %v6206 = vpack.c.bf16 %v6181, %v6180
      %v6207 = vpack.c.bf16 %v6183, %v6182
      %v6208 = vpack.c.bf16 %v6185, %v6184
      %v6209 = vpack.c.bf16 %v6187, %v6186
      %v6210 = vpack.c.bf16 %v6189, %v6188
      %v6211 = vpack.c.bf16 %v6191, %v6190
      %v6212 = vpack.c.bf16 %v6193, %v6192
      %v6213 = vpack.c.bf16 %v6195, %v6194
      %v6214 = vpack.c.bf16 %v6197, %v6196
      %v6215 = vpack.c.bf16 %v6199, %v6198
      %v6232 = vunpack.c.l.b16 %v6200
      %v6233 = vunpack.c.h.b16 %v6200
      %v6234 = vunpack.c.l.b16 %v6201
      %v6235 = vunpack.c.h.b16 %v6201
      %v6236 = vunpack.c.l.b16 %v6202
      %v6237 = vunpack.c.h.b16 %v6202
      %v6238 = vunpack.c.l.b16 %v6203
      %v6239 = vunpack.c.h.b16 %v6203
      %v6240 = vunpack.c.l.b16 %v6204
      %v6241 = vunpack.c.h.b16 %v6204
      %v6242 = vunpack.c.l.b16 %v6205
      %v6243 = vunpack.c.h.b16 %v6205
      %v6244 = vunpack.c.l.b16 %v6206
      %v6245 = vunpack.c.h.b16 %v6206
      %v6246 = vunpack.c.l.b16 %v6207
      %v6247 = vunpack.c.h.b16 %v6207
      %v6248 = vunpack.c.l.b16 %v6208
      %v6249 = vunpack.c.h.b16 %v6208
      %v6250 = vunpack.c.l.b16 %v6209
      %v6251 = vunpack.c.h.b16 %v6209
      %v6252 = vunpack.c.l.b16 %v6210
      %v6253 = vunpack.c.h.b16 %v6210
      %v6254 = vunpack.c.l.b16 %v6211
      %v6255 = vunpack.c.h.b16 %v6211
      %v6256 = vunpack.c.l.b16 %v6212
      %v6257 = vunpack.c.h.b16 %v6212
      %v6258 = vunpack.c.l.b16 %v6213
      %v6259 = vunpack.c.h.b16 %v6213
      %v6260 = vunpack.c.l.b16 %v6214
      %v6261 = vunpack.c.h.b16 %v6214
      %v6262 = vunpack.c.l.b16 %v6215
      %v6263 = vunpack.c.h.b16 %v6215
      %v6264 = vpack.c.b16 %v6232, %v6232
      %v6265 = vpack.c.b16 %v6233, %v6233
      %v6266 = vpack.c.b16 %v6234, %v6234
      %v6267 = vpack.c.b16 %v6235, %v6235
      %v6268 = vpack.c.b16 %v6236, %v6236
      %v6269 = vpack.c.b16 %v6237, %v6237
      %v6270 = vpack.c.b16 %v6238, %v6238
      %v6271 = vpack.c.b16 %v6239, %v6239
      %v6272 = vpack.c.b16 %v6240, %v6240
      %v6273 = vpack.c.b16 %v6241, %v6241
      %v6274 = vpack.c.b16 %v6242, %v6242
      %v6275 = vpack.c.b16 %v6243, %v6243
      %v6276 = vpack.c.b16 %v6244, %v6244
      %v6277 = vpack.c.b16 %v6245, %v6245
      %v6278 = vpack.c.b16 %v6246, %v6246
      %v6279 = vpack.c.b16 %v6247, %v6247
      %v6280 = vpack.c.b16 %v6248, %v6248
      %v6281 = vpack.c.b16 %v6249, %v6249
      %v6282 = vpack.c.b16 %v6250, %v6250
      %v6283 = vpack.c.b16 %v6251, %v6251
      %v6284 = vpack.c.b16 %v6252, %v6252
      %v6285 = vpack.c.b16 %v6253, %v6253
      %v6286 = vpack.c.b16 %v6254, %v6254
      %v6287 = vpack.c.b16 %v6255, %v6255
      %v6288 = vpack.c.b16 %v6256, %v6256
      %v6289 = vpack.c.b16 %v6257, %v6257
      %v6290 = vpack.c.b16 %v6258, %v6258
      %v6291 = vpack.c.b16 %v6259, %v6259
      %v6292 = vpack.c.b16 %v6260, %v6260
      %v6293 = vpack.c.b16 %v6261, %v6261
      %v6294 = vpack.c.b16 %v6262, %v6262
      %v6295 = vpack.c.b16 %v6263, %v6263
      %6328 = vst.msk [vmem:[#allocation2 + $0x8] sm:$0xf] %vm172, %v6264
      %6329 = vst.msk [vmem:[#allocation2 + $0xc] sm:$0xf] %vm172, %v6265
      %6330 = vst.msk [vmem:[#allocation2 + $0x1c] sm:$0xf] %vm172, %v6266
      %6331 = vst.msk [vmem:[#allocation2 + $0x20] sm:$0xf] %vm172, %v6267
      %6332 = vst.msk [vmem:[#allocation2 + $0x30] sm:$0xf] %vm172, %v6268
      %6333 = vst.msk [vmem:[#allocation2 + $0x34] sm:$0xf] %vm172, %v6269
      %6334 = vst.msk [vmem:[#allocation2 + $0x44] sm:$0xf] %vm172, %v6270
      %6335 = vst.msk [vmem:[#allocation2 + $0x48] sm:$0xf] %vm172, %v6271
      %6336 = vst.msk [vmem:[#allocation2 + $0x58] sm:$0xf] %vm172, %v6272
      %6337 = vst.msk [vmem:[#allocation2 + $0x5c] sm:$0xf] %vm172, %v6273
      %6338 = vst.msk [vmem:[#allocation2 + $0x6c] sm:$0xf] %vm172, %v6274
      %6339 = vst.msk [vmem:[#allocation2 + $0x70] sm:$0xf] %vm172, %v6275
      %6340 = vst.msk [vmem:[#allocation2 + $0x80] sm:$0xf] %vm172, %v6276
      %6341 = vst.msk [vmem:[#allocation2 + $0x84] sm:$0xf] %vm172, %v6277
      %6342 = vst.msk [vmem:[#allocation2 + $0x94] sm:$0xf] %vm172, %v6278
      %6343 = vst.msk [vmem:[#allocation2 + $0x98] sm:$0xf] %vm172, %v6279
      %6344 = vst.msk [vmem:[#allocation2 + $0xa8] sm:$0xf] %vm172, %v6280
      %6345 = vst.msk [vmem:[#allocation2 + $0xac] sm:$0xf] %vm172, %v6281
      %6346 = vst.msk [vmem:[#allocation2 + $0xbc] sm:$0xf] %vm172, %v6282
      %6347 = vst.msk [vmem:[#allocation2 + $0xc0] sm:$0xf] %vm172, %v6283
      %6348 = vst.msk [vmem:[#allocation2 + $0xd0] sm:$0xf] %vm172, %v6284
      %6349 = vst.msk [vmem:[#allocation2 + $0xd4] sm:$0xf] %vm172, %v6285
      %6350 = vst.msk [vmem:[#allocation2 + $0xe4] sm:$0xf] %vm172, %v6286
      %6351 = vst.msk [vmem:[#allocation2 + $0xe8] sm:$0xf] %vm172, %v6287
      %6352 = vst.msk [vmem:[#allocation2 + $0xf8] sm:$0xf] %vm172, %v6288
      %6353 = vst.msk [vmem:[#allocation2 + $0xfc] sm:$0xf] %vm172, %v6289
      %6354 = vst.msk [vmem:[#allocation2 + $0x10c] sm:$0xf] %vm172, %v6290
      %6355 = vst.msk [vmem:[#allocation2 + $0x110] sm:$0xf] %vm172, %v6291
      %6356 = vst.msk [vmem:[#allocation2 + $0x120] sm:$0xf] %vm172, %v6292
      %6357 = vst.msk [vmem:[#allocation2 + $0x124] sm:$0xf] %vm172, %v6293
      %6358 = vst.msk [vmem:[#allocation2 + $0x134] sm:$0xf] %vm172, %v6294
      %6359 = vst.msk [vmem:[#allocation2 + $0x138] sm:$0xf] %vm172, %v6295
      %v6360 = vld [vmem:[#allocation2 + $0x4] sm:$0x8]
      %v6361 = vld [vmem:[#allocation2 + $0x8] sm:$0xf]
      %v6362 = vld [vmem:[#allocation2 + $0xc] sm:$0x7]
      %v6363 = vld [vmem:[#allocation2 + $0x18] sm:$0x8]
      %v6364 = vld [vmem:[#allocation2 + $0x1c] sm:$0xf]
      %v6365 = vld [vmem:[#allocation2 + $0x20] sm:$0x7]
      %v6366 = vld [vmem:[#allocation2 + $0x2c] sm:$0x8]
      %v6367 = vld [vmem:[#allocation2 + $0x30] sm:$0xf]
      %v6368 = vld [vmem:[#allocation2 + $0x34] sm:$0x7]
      %v6369 = vld [vmem:[#allocation2 + $0x40] sm:$0x8]
      %v6370 = vld [vmem:[#allocation2 + $0x44] sm:$0xf]
      %v6371 = vld [vmem:[#allocation2 + $0x48] sm:$0x7]
      %v6372 = vld [vmem:[#allocation2 + $0x54] sm:$0x8]
      %v6373 = vld [vmem:[#allocation2 + $0x58] sm:$0xf]
      %v6374 = vld [vmem:[#allocation2 + $0x5c] sm:$0x7]
      %v6375 = vld [vmem:[#allocation2 + $0x68] sm:$0x8]
      %v6376 = vld [vmem:[#allocation2 + $0x6c] sm:$0xf]
      %v6377 = vld [vmem:[#allocation2 + $0x70] sm:$0x7]
      %v6378 = vld [vmem:[#allocation2 + $0x7c] sm:$0x8]
      %v6379 = vld [vmem:[#allocation2 + $0x80] sm:$0xf]
      %v6380 = vld [vmem:[#allocation2 + $0x84] sm:$0x7]
      %v6381 = vld [vmem:[#allocation2 + $0x90] sm:$0x8]
      %v6382 = vld [vmem:[#allocation2 + $0x94] sm:$0xf]
      %v6383 = vld [vmem:[#allocation2 + $0x98] sm:$0x7]
      %v6384 = vld [vmem:[#allocation2 + $0xa4] sm:$0x8]
      %v6385 = vld [vmem:[#allocation2 + $0xa8] sm:$0xf]
      %v6386 = vld [vmem:[#allocation2 + $0xac] sm:$0x7]
      %v6387 = vld [vmem:[#allocation2 + $0xb8] sm:$0x8]
      %v6388 = vld [vmem:[#allocation2 + $0xbc] sm:$0xf]
      %v6389 = vld [vmem:[#allocation2 + $0xc0] sm:$0x7]
      %v6390 = vld [vmem:[#allocation2 + $0xcc] sm:$0x8]
      %v6391 = vld [vmem:[#allocation2 + $0xd0] sm:$0xf]
      %v6392 = vld [vmem:[#allocation2 + $0xd4] sm:$0x7]
      %v6393 = vld [vmem:[#allocation2 + $0xe0] sm:$0x8]
      %v6394 = vld [vmem:[#allocation2 + $0xe4] sm:$0xf]
      %v6395 = vld [vmem:[#allocation2 + $0xe8] sm:$0x7]
      %v6396 = vld [vmem:[#allocation2 + $0xf4] sm:$0x8]
      %v6397 = vld [vmem:[#allocation2 + $0xf8] sm:$0xf]
      %v6398 = vld [vmem:[#allocation2 + $0xfc] sm:$0x7]
      %v6399 = vld [vmem:[#allocation2 + $0x108] sm:$0x8]
      %v6400 = vld [vmem:[#allocation2 + $0x10c] sm:$0xf]
      %v6401 = vld [vmem:[#allocation2 + $0x110] sm:$0x7]
      %v6402 = vld [vmem:[#allocation2 + $0x11c] sm:$0x8]
      %v6403 = vld [vmem:[#allocation2 + $0x120] sm:$0xf]
      %v6404 = vld [vmem:[#allocation2 + $0x124] sm:$0x7]
      %v6405 = vld [vmem:[#allocation2 + $0x130] sm:$0x8]
      %v6406 = vld [vmem:[#allocation2 + $0x134] sm:$0xf]
      %v6407 = vld [vmem:[#allocation2 + $0x138] sm:$0x7]
      %v6456 = vrot.slane %v6360, 7
      %v6457 = vrot.slane %v6456, 4
      %v6458 = vrot.slane %v6361, 7
      %v6459 = vsel %vm577, %v6457, %v6458
      %v6460 = vrot.slane %v6458, 4
      %v6461 = vrot.slane %v6362, 7
      %v6462 = vsel %vm577, %v6460, %v6461
      %v6463 = vrot.slane %v6363, 7
      %v6464 = vrot.slane %v6463, 4
      %v6465 = vrot.slane %v6364, 7
      %v6466 = vsel %vm577, %v6464, %v6465
      %v6467 = vrot.slane %v6465, 4
      %v6468 = vrot.slane %v6365, 7
      %v6469 = vsel %vm577, %v6467, %v6468
      %v6470 = vrot.slane %v6366, 7
      %v6471 = vrot.slane %v6470, 4
      %v6472 = vrot.slane %v6367, 7
      %v6473 = vsel %vm577, %v6471, %v6472
      %v6474 = vrot.slane %v6472, 4
      %v6475 = vrot.slane %v6368, 7
      %v6476 = vsel %vm577, %v6474, %v6475
      %v6477 = vrot.slane %v6369, 7
      %v6478 = vrot.slane %v6477, 4
      %v6479 = vrot.slane %v6370, 7
      %v6480 = vsel %vm577, %v6478, %v6479
      %v6481 = vrot.slane %v6479, 4
      %v6482 = vrot.slane %v6371, 7
      %v6483 = vsel %vm577, %v6481, %v6482
      %v6484 = vrot.slane %v6372, 7
      %v6485 = vrot.slane %v6484, 4
      %v6486 = vrot.slane %v6373, 7
      %v6487 = vsel %vm577, %v6485, %v6486
      %v6488 = vrot.slane %v6486, 4
      %v6489 = vrot.slane %v6374, 7
      %v6490 = vsel %vm577, %v6488, %v6489
      %v6491 = vrot.slane %v6375, 7
      %v6492 = vrot.slane %v6491, 4
      %v6493 = vrot.slane %v6376, 7
      %v6494 = vsel %vm577, %v6492, %v6493
      %v6495 = vrot.slane %v6493, 4
      %v6496 = vrot.slane %v6377, 7
      %v6497 = vsel %vm577, %v6495, %v6496
      %v6498 = vrot.slane %v6378, 7
      %v6499 = vrot.slane %v6498, 4
      %v6500 = vrot.slane %v6379, 7
      %v6501 = vsel %vm577, %v6499, %v6500
      %v6502 = vrot.slane %v6500, 4
      %v6503 = vrot.slane %v6380, 7
      %v6504 = vsel %vm577, %v6502, %v6503
      %v6505 = vrot.slane %v6381, 7
      %v6506 = vrot.slane %v6505, 4
      %v6507 = vrot.slane %v6382, 7
      %v6508 = vsel %vm577, %v6506, %v6507
      %v6509 = vrot.slane %v6507, 4
      %v6510 = vrot.slane %v6383, 7
      %v6511 = vsel %vm577, %v6509, %v6510
      %v6512 = vrot.slane %v6384, 7
      %v6513 = vrot.slane %v6512, 4
      %v6514 = vrot.slane %v6385, 7
      %v6515 = vsel %vm577, %v6513, %v6514
      %v6516 = vrot.slane %v6514, 4
      %v6517 = vrot.slane %v6386, 7
      %v6518 = vsel %vm577, %v6516, %v6517
      %v6519 = vrot.slane %v6387, 7
      %v6520 = vrot.slane %v6519, 4
      %v6521 = vrot.slane %v6388, 7
      %v6522 = vsel %vm577, %v6520, %v6521
      %v6523 = vrot.slane %v6521, 4
      %v6524 = vrot.slane %v6389, 7
      %v6525 = vsel %vm577, %v6523, %v6524
      %v6526 = vrot.slane %v6390, 7
      %v6527 = vrot.slane %v6526, 4
      %v6528 = vrot.slane %v6391, 7
      %v6529 = vsel %vm577, %v6527, %v6528
      %v6530 = vrot.slane %v6528, 4
      %v6531 = vrot.slane %v6392, 7
      %v6532 = vsel %vm577, %v6530, %v6531
      %v6533 = vrot.slane %v6393, 7
      %v6534 = vrot.slane %v6533, 4
      %v6535 = vrot.slane %v6394, 7
      %v6536 = vsel %vm577, %v6534, %v6535
      %v6537 = vrot.slane %v6535, 4
      %v6538 = vrot.slane %v6395, 7
      %v6539 = vsel %vm577, %v6537, %v6538
      %v6540 = vrot.slane %v6396, 7
      %v6541 = vrot.slane %v6540, 4
      %v6542 = vrot.slane %v6397, 7
      %v6543 = vsel %vm577, %v6541, %v6542
      %v6544 = vrot.slane %v6542, 4
      %v6545 = vrot.slane %v6398, 7
      %v6546 = vsel %vm577, %v6544, %v6545
      %v6547 = vrot.slane %v6399, 7
      %v6548 = vrot.slane %v6547, 4
      %v6549 = vrot.slane %v6400, 7
      %v6550 = vsel %vm577, %v6548, %v6549
      %v6551 = vrot.slane %v6549, 4
      %v6552 = vrot.slane %v6401, 7
      %v6553 = vsel %vm577, %v6551, %v6552
      %v6554 = vrot.slane %v6402, 7
      %v6555 = vrot.slane %v6554, 4
      %v6556 = vrot.slane %v6403, 7
      %v6557 = vsel %vm577, %v6555, %v6556
      %v6558 = vrot.slane %v6556, 4
      %v6559 = vrot.slane %v6404, 7
      %v6560 = vsel %vm577, %v6558, %v6559
      %v6561 = vrot.slane %v6405, 7
      %v6562 = vrot.slane %v6561, 4
      %v6563 = vrot.slane %v6406, 7
      %v6564 = vsel %vm577, %v6562, %v6563
      %v6565 = vrot.slane %v6563, 4
      %v6566 = vrot.slane %v6407, 7
      %v6567 = vsel %vm577, %v6565, %v6566
      %s6568 = scalar_lea.vmem %s1, 40
      %v6569 = vld [vmem:[%s6568] sm:$0xf]
      %v6570 = vld [vmem:[#allocation2 + $0xc] sm:$0xf]
      %v6571 = vld [vmem:[#allocation2 + $0x20] sm:$0xf]
      %v6572 = vld [vmem:[#allocation2 + $0x34] sm:$0xf]
      %v6573 = vld [vmem:[#allocation2 + $0x48] sm:$0xf]
      %v6574 = vld [vmem:[#allocation2 + $0x5c] sm:$0xf]
      %v6575 = vld [vmem:[#allocation2 + $0x70] sm:$0xf]
      %v6576 = vld [vmem:[#allocation2 + $0x84] sm:$0xf]
      %v6577 = vld [vmem:[#allocation2 + $0x98] sm:$0xf]
      %v6578 = vld [vmem:[#allocation2 + $0xac] sm:$0xf]
      %v6579 = vld [vmem:[#allocation2 + $0xc0] sm:$0xf]
      %v6580 = vld [vmem:[#allocation2 + $0xd4] sm:$0xf]
      %v6581 = vld [vmem:[#allocation2 + $0xe8] sm:$0xf]
      %v6582 = vld [vmem:[#allocation2 + $0xfc] sm:$0xf]
      %v6583 = vld [vmem:[#allocation2 + $0x110] sm:$0xf]
      %v6584 = vld [vmem:[#allocation2 + $0x124] sm:$0xf]
      %v6585 = vld [vmem:[#allocation2 + $0x138] sm:$0xf]
      %v6587 = vshrl.u32 %v6360, 16
      %v6589 = vrot.slane %v6587, 7
      %v6590 = vrot.slane %v6589, 4
      %v6592 = vshrl.u32 %v6361, 16
      %v6594 = vrot.slane %v6592, 7
      %v6595 = vshll.u32 %v6361, 16
      %v6597 = vor.u32 %v6594, %v6595
      %v6598 = vsel %vm709, %v6590, %v6597
      %v6599 = vrot.slane %v6594, 4
      %v6601 = vshrl.u32 %v6570, 16
      %v6603 = vrot.slane %v6601, 7
      %v6604 = vshll.u32 %v6570, 16
      %v6606 = vor.u32 %v6603, %v6604
      %v6607 = vsel %vm709, %v6599, %v6606
      %v6609 = vshrl.u32 %v6363, 16
      %v6611 = vrot.slane %v6609, 7
      %v6612 = vrot.slane %v6611, 4
      %v6614 = vshrl.u32 %v6364, 16
      %v6616 = vrot.slane %v6614, 7
      %v6617 = vshll.u32 %v6364, 16
      %v6619 = vor.u32 %v6616, %v6617
      %v6620 = vsel %vm709, %v6612, %v6619
      %v6621 = vrot.slane %v6616, 4
      %v6623 = vshrl.u32 %v6571, 16
      %v6625 = vrot.slane %v6623, 7
      %v6626 = vshll.u32 %v6571, 16
      %v6628 = vor.u32 %v6625, %v6626
      %v6629 = vsel %vm709, %v6621, %v6628
      %v6631 = vshrl.u32 %v6366, 16
      %v6633 = vrot.slane %v6631, 7
      %v6634 = vrot.slane %v6633, 4
      %v6636 = vshrl.u32 %v6367, 16
      %v6638 = vrot.slane %v6636, 7
      %v6639 = vshll.u32 %v6367, 16
      %v6641 = vor.u32 %v6638, %v6639
      %v6642 = vsel %vm709, %v6634, %v6641
      %v6643 = vrot.slane %v6638, 4
      %v6645 = vshrl.u32 %v6572, 16
      %v6647 = vrot.slane %v6645, 7
      %v6648 = vshll.u32 %v6572, 16
      %v6650 = vor.u32 %v6647, %v6648
      %v6651 = vsel %vm709, %v6643, %v6650
      %v6653 = vshrl.u32 %v6369, 16
      %v6655 = vrot.slane %v6653, 7
      %v6656 = vrot.slane %v6655, 4
      %v6658 = vshrl.u32 %v6370, 16
      %v6660 = vrot.slane %v6658, 7
      %v6661 = vshll.u32 %v6370, 16
      %v6663 = vor.u32 %v6660, %v6661
      %v6664 = vsel %vm709, %v6656, %v6663
      %v6665 = vrot.slane %v6660, 4
      %v6667 = vshrl.u32 %v6573, 16
      %v6669 = vrot.slane %v6667, 7
      %v6670 = vshll.u32 %v6573, 16
      %v6672 = vor.u32 %v6669, %v6670
      %v6673 = vsel %vm709, %v6665, %v6672
      %v6675 = vshrl.u32 %v6372, 16
      %v6677 = vrot.slane %v6675, 7
      %v6678 = vrot.slane %v6677, 4
      %v6680 = vshrl.u32 %v6373, 16
      %v6682 = vrot.slane %v6680, 7
      %v6683 = vshll.u32 %v6373, 16
      %v6685 = vor.u32 %v6682, %v6683
      %v6686 = vsel %vm709, %v6678, %v6685
      %v6687 = vrot.slane %v6682, 4
      %v6689 = vshrl.u32 %v6574, 16
      %v6691 = vrot.slane %v6689, 7
      %v6692 = vshll.u32 %v6574, 16
      %v6694 = vor.u32 %v6691, %v6692
      %v6695 = vsel %vm709, %v6687, %v6694
      %v6697 = vshrl.u32 %v6375, 16
      %v6699 = vrot.slane %v6697, 7
      %v6700 = vrot.slane %v6699, 4
      %v6702 = vshrl.u32 %v6376, 16
      %v6704 = vrot.slane %v6702, 7
      %v6705 = vshll.u32 %v6376, 16
      %v6707 = vor.u32 %v6704, %v6705
      %v6708 = vsel %vm709, %v6700, %v6707
      %v6709 = vrot.slane %v6704, 4
      %v6711 = vshrl.u32 %v6575, 16
      %v6713 = vrot.slane %v6711, 7
      %v6714 = vshll.u32 %v6575, 16
      %v6716 = vor.u32 %v6713, %v6714
      %v6717 = vsel %vm709, %v6709, %v6716
      %v6719 = vshrl.u32 %v6378, 16
      %v6721 = vrot.slane %v6719, 7
      %v6722 = vrot.slane %v6721, 4
      %v6724 = vshrl.u32 %v6379, 16
      %v6726 = vrot.slane %v6724, 7
      %v6727 = vshll.u32 %v6379, 16
      %v6729 = vor.u32 %v6726, %v6727
      %v6730 = vsel %vm709, %v6722, %v6729
      %v6731 = vrot.slane %v6726, 4
      %v6733 = vshrl.u32 %v6576, 16
      %v6735 = vrot.slane %v6733, 7
      %v6736 = vshll.u32 %v6576, 16
      %v6738 = vor.u32 %v6735, %v6736
      %v6739 = vsel %vm709, %v6731, %v6738
      %v6741 = vshrl.u32 %v6381, 16
      %v6743 = vrot.slane %v6741, 7
      %v6744 = vrot.slane %v6743, 4
      %v6746 = vshrl.u32 %v6382, 16
      %v6748 = vrot.slane %v6746, 7
      %v6749 = vshll.u32 %v6382, 16
      %v6751 = vor.u32 %v6748, %v6749
      %v6752 = vsel %vm709, %v6744, %v6751
      %v6753 = vrot.slane %v6748, 4
      %v6755 = vshrl.u32 %v6577, 16
      %v6757 = vrot.slane %v6755, 7
      %v6758 = vshll.u32 %v6577, 16
      %v6760 = vor.u32 %v6757, %v6758
      %v6761 = vsel %vm709, %v6753, %v6760
      %v6763 = vshrl.u32 %v6384, 16
      %v6765 = vrot.slane %v6763, 7
      %v6766 = vrot.slane %v6765, 4
      %v6768 = vshrl.u32 %v6385, 16
      %v6770 = vrot.slane %v6768, 7
      %v6771 = vshll.u32 %v6385, 16
      %v6773 = vor.u32 %v6770, %v6771
      %v6774 = vsel %vm709, %v6766, %v6773
      %v6775 = vrot.slane %v6770, 4
      %v6777 = vshrl.u32 %v6578, 16
      %v6779 = vrot.slane %v6777, 7
      %v6780 = vshll.u32 %v6578, 16
      %v6782 = vor.u32 %v6779, %v6780
      %v6783 = vsel %vm709, %v6775, %v6782
      %v6785 = vshrl.u32 %v6387, 16
      %v6787 = vrot.slane %v6785, 7
      %v6788 = vrot.slane %v6787, 4
      %v6790 = vshrl.u32 %v6388, 16
      %v6792 = vrot.slane %v6790, 7
      %v6793 = vshll.u32 %v6388, 16
      %v6795 = vor.u32 %v6792, %v6793
      %v6796 = vsel %vm709, %v6788, %v6795
      %v6797 = vrot.slane %v6792, 4
      %v6799 = vshrl.u32 %v6579, 16
      %v6801 = vrot.slane %v6799, 7
      %v6802 = vshll.u32 %v6579, 16
      %v6804 = vor.u32 %v6801, %v6802
      %v6805 = vsel %vm709, %v6797, %v6804
      %v6807 = vshrl.u32 %v6390, 16
      %v6809 = vrot.slane %v6807, 7
      %v6810 = vrot.slane %v6809, 4
      %v6812 = vshrl.u32 %v6391, 16
      %v6814 = vrot.slane %v6812, 7
      %v6815 = vshll.u32 %v6391, 16
      %v6817 = vor.u32 %v6814, %v6815
      %v6818 = vsel %vm709, %v6810, %v6817
      %v6819 = vrot.slane %v6814, 4
      %v6821 = vshrl.u32 %v6580, 16
      %v6823 = vrot.slane %v6821, 7
      %v6824 = vshll.u32 %v6580, 16
      %v6826 = vor.u32 %v6823, %v6824
      %v6827 = vsel %vm709, %v6819, %v6826
      %v6829 = vshrl.u32 %v6393, 16
      %v6831 = vrot.slane %v6829, 7
      %v6832 = vrot.slane %v6831, 4
      %v6834 = vshrl.u32 %v6394, 16
      %v6836 = vrot.slane %v6834, 7
      %v6837 = vshll.u32 %v6394, 16
      %v6839 = vor.u32 %v6836, %v6837
      %v6840 = vsel %vm709, %v6832, %v6839
      %v6841 = vrot.slane %v6836, 4
      %v6843 = vshrl.u32 %v6581, 16
      %v6845 = vrot.slane %v6843, 7
      %v6846 = vshll.u32 %v6581, 16
      %v6848 = vor.u32 %v6845, %v6846
      %v6849 = vsel %vm709, %v6841, %v6848
      %v6851 = vshrl.u32 %v6396, 16
      %v6853 = vrot.slane %v6851, 7
      %v6854 = vrot.slane %v6853, 4
      %v6856 = vshrl.u32 %v6397, 16
      %v6858 = vrot.slane %v6856, 7
      %v6859 = vshll.u32 %v6397, 16
      %v6861 = vor.u32 %v6858, %v6859
      %v6862 = vsel %vm709, %v6854, %v6861
      %v6863 = vrot.slane %v6858, 4
      %v6865 = vshrl.u32 %v6582, 16
      %v6867 = vrot.slane %v6865, 7
      %v6868 = vshll.u32 %v6582, 16
      %v6870 = vor.u32 %v6867, %v6868
      %v6871 = vsel %vm709, %v6863, %v6870
      %v6873 = vshrl.u32 %v6399, 16
      %v6875 = vrot.slane %v6873, 7
      %v6876 = vrot.slane %v6875, 4
      %v6878 = vshrl.u32 %v6400, 16
      %v6880 = vrot.slane %v6878, 7
      %v6881 = vshll.u32 %v6400, 16
      %v6883 = vor.u32 %v6880, %v6881
      %v6884 = vsel %vm709, %v6876, %v6883
      %v6885 = vrot.slane %v6880, 4
      %v6887 = vshrl.u32 %v6583, 16
      %v6889 = vrot.slane %v6887, 7
      %v6890 = vshll.u32 %v6583, 16
      %v6892 = vor.u32 %v6889, %v6890
      %v6893 = vsel %vm709, %v6885, %v6892
      %v6895 = vshrl.u32 %v6402, 16
      %v6897 = vrot.slane %v6895, 7
      %v6898 = vrot.slane %v6897, 4
      %v6900 = vshrl.u32 %v6403, 16
      %v6902 = vrot.slane %v6900, 7
      %v6903 = vshll.u32 %v6403, 16
      %v6905 = vor.u32 %v6902, %v6903
      %v6906 = vsel %vm709, %v6898, %v6905
      %v6907 = vrot.slane %v6902, 4
      %v6909 = vshrl.u32 %v6584, 16
      %v6911 = vrot.slane %v6909, 7
      %v6912 = vshll.u32 %v6584, 16
      %v6914 = vor.u32 %v6911, %v6912
      %v6915 = vsel %vm709, %v6907, %v6914
      %v6917 = vshrl.u32 %v6405, 16
      %v6919 = vrot.slane %v6917, 7
      %v6920 = vrot.slane %v6919, 4
      %v6922 = vshrl.u32 %v6406, 16
      %v6924 = vrot.slane %v6922, 7
      %v6925 = vshll.u32 %v6406, 16
      %v6927 = vor.u32 %v6924, %v6925
      %v6928 = vsel %vm709, %v6920, %v6927
      %v6929 = vrot.slane %v6924, 4
      %v6931 = vshrl.u32 %v6585, 16
      %v6933 = vrot.slane %v6931, 7
      %v6934 = vshll.u32 %v6585, 16
      %v6936 = vor.u32 %v6933, %v6934
      %v6937 = vsel %vm709, %v6929, %v6936
      %s6938 = scalar_lea.vmem %s1, 44
      %v6939 = vld [vmem:[%s6938] sm:$0xf]
      %v6940 = vunpack.c.l.b16 %v6598
      %v6941 = vunpack.c.l.b16 %v6607
      %v6942 = vunpack.c.l.b16 %v6620
      %v6943 = vunpack.c.l.b16 %v6629
      %v6944 = vunpack.c.l.b16 %v6642
      %v6945 = vunpack.c.l.b16 %v6651
      %v6946 = vunpack.c.l.b16 %v6664
      %v6947 = vunpack.c.l.b16 %v6673
      %v6948 = vunpack.c.l.b16 %v6686
      %v6949 = vunpack.c.l.b16 %v6695
      %v6950 = vunpack.c.l.b16 %v6708
      %v6951 = vunpack.c.l.b16 %v6717
      %v6952 = vunpack.c.l.b16 %v6730
      %v6953 = vunpack.c.l.b16 %v6739
      %v6954 = vunpack.c.l.b16 %v6752
      %v6955 = vunpack.c.l.b16 %v6761
      %v6956 = vunpack.c.l.b16 %v6774
      %v6957 = vunpack.c.l.b16 %v6783
      %v6958 = vunpack.c.l.b16 %v6796
      %v6959 = vunpack.c.l.b16 %v6805
      %v6960 = vunpack.c.l.b16 %v6818
      %v6961 = vunpack.c.l.b16 %v6827
      %v6962 = vunpack.c.l.b16 %v6840
      %v6963 = vunpack.c.l.b16 %v6849
      %v6964 = vunpack.c.l.b16 %v6862
      %v6965 = vunpack.c.l.b16 %v6871
      %v6966 = vunpack.c.l.b16 %v6884
      %v6967 = vunpack.c.l.b16 %v6893
      %v6968 = vunpack.c.l.b16 %v6906
      %v6969 = vunpack.c.l.b16 %v6915
      %v6970 = vunpack.c.l.b16 %v6928
      %v6971 = vunpack.c.l.b16 %v6937
      %v6972 = vpack.c.b16 %v6941, %v6940
      %v6973 = vpack.c.b16 %v6943, %v6942
      %v6974 = vpack.c.b16 %v6945, %v6944
      %v6975 = vpack.c.b16 %v6947, %v6946
      %v6976 = vpack.c.b16 %v6949, %v6948
      %v6977 = vpack.c.b16 %v6951, %v6950
      %v6978 = vpack.c.b16 %v6953, %v6952
      %v6979 = vpack.c.b16 %v6955, %v6954
      %v6980 = vpack.c.b16 %v6957, %v6956
      %v6981 = vpack.c.b16 %v6959, %v6958
      %v6982 = vpack.c.b16 %v6961, %v6960
      %v6983 = vpack.c.b16 %v6963, %v6962
      %v6984 = vpack.c.b16 %v6965, %v6964
      %v6985 = vpack.c.b16 %v6967, %v6966
      %v6986 = vpack.c.b16 %v6969, %v6968
      %v6987 = vpack.c.b16 %v6971, %v6970
      %v6989 = vsel %vm254, %v6972, 0
      %v6992 = vsel %vm254, %v6973, 0
      %v6995 = vsel %vm254, %v6974, 0
      %v6998 = vsel %vm254, %v6975, 0
      %v7001 = vsel %vm254, %v6976, 0
      %v7004 = vsel %vm254, %v6977, 0
      %v7007 = vsel %vm254, %v6978, 0
      %v7010 = vsel %vm254, %v6979, 0
      %v7013 = vsel %vm254, %v6980, 0
      %v7016 = vsel %vm254, %v6981, 0
      %v7019 = vsel %vm254, %v6982, 0
      %v7022 = vsel %vm254, %v6983, 0
      %v7025 = vsel %vm254, %v6984, 0
      %v7028 = vsel %vm254, %v6985, 0
      %v7031 = vsel %vm254, %v6986, 0
      %v7034 = vsel %vm254, %v6987, 0
      %v7037 = vsel %vm1160, %v6939, 0
      %7039 = vmatprep.subr.bf16.mxu0 0
      %7040 = vmatpush1.bf16.msra.mxu0 %v7037
      %7041 = vmatprep.subr.bf16.mxu0 0
      %7042 = vmatpush1.bf16.msra.mxu0 0
      %7043 = vmatprep.subr.bf16.mxu0 0
      %7044 = vmatpush1.bf16.msra.mxu0 0
      %7045 = vmatprep.subr.bf16.mxu0 0
      %7046 = vmatpush1.bf16.msra.mxu0 0
      %7047 = vmatprep.subr.bf16.mxu0 0
      %7048 = vmatpush1.bf16.msra.mxu0 0
      %7049 = vmatprep.subr.bf16.mxu0 0
      %7050 = vmatpush1.bf16.msra.mxu0 0
      %7051 = vmatprep.subr.bf16.mxu0 0
      %7052 = vmatpush1.bf16.msra.mxu0 0
      %7053 = vmatprep.subr.bf16.mxu0 0
      %7054 = vmatpush1.bf16.msra.mxu0 0
      %7055 = vmatprep.subr.bf16.mxu0 0
      %7056 = vmatpush1.bf16.msra.mxu0 0
      %7057 = vmatprep.subr.bf16.mxu0 0
      %7058 = vmatpush1.bf16.msra.mxu0 0
      %7059 = vmatprep.subr.bf16.mxu0 0
      %7060 = vmatpush1.bf16.msra.mxu0 0
      %7061 = vmatprep.subr.bf16.mxu0 0
      %7062 = vmatpush1.bf16.msra.mxu0 0
      %7063 = vmatprep.subr.bf16.mxu0 0
      %7064 = vmatpush1.bf16.msra.mxu0 0
      %7065 = vmatprep.subr.bf16.mxu0 0
      %7066 = vmatpush1.bf16.msra.mxu0 0
      %7067 = vmatprep.subr.bf16.mxu0 0
      %7068 = vmatpush1.bf16.msra.mxu0 0
      %7069 = vmatprep.subr.bf16.mxu0 0
      %7070 = vmatpush1.bf16.msra.mxu0 0
      %7071 = vmatprep.mubr.bf16.mxu0 0
      %7072 = vmatmul.mubr.bf16.gmra.mrb[0].mxu0 %v6989
      %v7073 = vpop.f32.mrb[0].mxu0
      %v7074 = vadd.f32 0.0, %v7073
      %v7075 = vpop.f32.mrb[0].mxu0
      %v7076 = vpop.f32.mrb[0].mxu0
      %v7077 = vadd.f32 0.0, %v7076
      %v7078 = vpop.f32.mrb[0].mxu0
      %7079 = vmatprep.mubr.bf16.mxu0 0
      %7080 = vmatmul.mubr.bf16.gmra.mrb[0].mxu0 %v6992
      %v7081 = vpop.f32.mrb[0].mxu0
      %v7082 = vadd.f32 0.0, %v7081
      %v7083 = vpop.f32.mrb[0].mxu0
      %v7084 = vpop.f32.mrb[0].mxu0
      %v7085 = vadd.f32 0.0, %v7084
      %v7086 = vpop.f32.mrb[0].mxu0
      %7087 = vmatprep.mubr.bf16.mxu0 0
      %7088 = vmatmul.mubr.bf16.gmra.mrb[0].mxu0 %v6995
      %v7089 = vpop.f32.mrb[0].mxu0
      %v7090 = vadd.f32 0.0, %v7089
      %v7091 = vpop.f32.mrb[0].mxu0
      %v7092 = vpop.f32.mrb[0].mxu0
      %v7093 = vadd.f32 0.0, %v7092
      %v7094 = vpop.f32.mrb[0].mxu0
      %7095 = vmatprep.mubr.bf16.mxu0 0
      %7096 = vmatmul.mubr.bf16.gmra.mrb[0].mxu0 %v6998
      %v7097 = vpop.f32.mrb[0].mxu0
      %v7098 = vadd.f32 0.0, %v7097
      %v7099 = vpop.f32.mrb[0].mxu0
      %v7100 = vpop.f32.mrb[0].mxu0
      %v7101 = vadd.f32 0.0, %v7100
      %v7102 = vpop.f32.mrb[0].mxu0
      %7103 = vmatprep.mubr.bf16.mxu0 0
      %7104 = vmatmul.mubr.bf16.gmra.mrb[0].mxu0 %v7001
      %v7105 = vpop.f32.mrb[0].mxu0
      %v7106 = vadd.f32 0.0, %v7105
      %v7107 = vpop.f32.mrb[0].mxu0
      %v7108 = vpop.f32.mrb[0].mxu0
      %v7109 = vadd.f32 0.0, %v7108
      %v7110 = vpop.f32.mrb[0].mxu0
      %7111 = vmatprep.mubr.bf16.mxu0 0
      %7112 = vmatmul.mubr.bf16.gmra.mrb[0].mxu0 %v7004
      %v7113 = vpop.f32.mrb[0].mxu0
      %v7114 = vadd.f32 0.0, %v7113
      %v7115 = vpop.f32.mrb[0].mxu0
      %v7116 = vpop.f32.mrb[0].mxu0
      %v7117 = vadd.f32 0.0, %v7116
      %v7118 = vpop.f32.mrb[0].mxu0
      %7119 = vmatprep.mubr.bf16.mxu0 0
      %7120 = vmatmul.mubr.bf16.gmra.mrb[0].mxu0 %v7007
      %v7121 = vpop.f32.mrb[0].mxu0
      %v7122 = vadd.f32 0.0, %v7121
      %v7123 = vpop.f32.mrb[0].mxu0
      %v7124 = vpop.f32.mrb[0].mxu0
      %v7125 = vadd.f32 0.0, %v7124
      %v7126 = vpop.f32.mrb[0].mxu0
      %7127 = vmatprep.mubr.bf16.mxu0 0
      %7128 = vmatmul.mubr.bf16.gmra.mrb[0].mxu0 %v7010
      %v7129 = vpop.f32.mrb[0].mxu0
      %v7130 = vadd.f32 0.0, %v7129
      %v7131 = vpop.f32.mrb[0].mxu0
      %v7132 = vpop.f32.mrb[0].mxu0
      %v7133 = vadd.f32 0.0, %v7132
      %v7134 = vpop.f32.mrb[0].mxu0
      %7135 = vmatprep.mubr.bf16.mxu0 0
      %7136 = vmatmul.mubr.bf16.gmra.mrb[0].mxu0 %v7013
      %v7137 = vpop.f32.mrb[0].mxu0
      %v7138 = vadd.f32 0.0, %v7137
      %v7139 = vpop.f32.mrb[0].mxu0
      %v7140 = vpop.f32.mrb[0].mxu0
      %v7141 = vadd.f32 0.0, %v7140
      %v7142 = vpop.f32.mrb[0].mxu0
      %7143 = vmatprep.mubr.bf16.mxu0 0
      %7144 = vmatmul.mubr.bf16.gmra.mrb[0].mxu0 %v7016
      %v7145 = vpop.f32.mrb[0].mxu0
      %v7146 = vadd.f32 0.0, %v7145
      %v7147 = vpop.f32.mrb[0].mxu0
      %v7148 = vpop.f32.mrb[0].mxu0
      %v7149 = vadd.f32 0.0, %v7148
      %v7150 = vpop.f32.mrb[0].mxu0
      %7151 = vmatprep.mubr.bf16.mxu0 0
      %7152 = vmatmul.mubr.bf16.gmra.mrb[0].mxu0 %v7019
      %v7153 = vpop.f32.mrb[0].mxu0
      %v7154 = vadd.f32 0.0, %v7153
      %v7155 = vpop.f32.mrb[0].mxu0
      %v7156 = vpop.f32.mrb[0].mxu0
      %v7157 = vadd.f32 0.0, %v7156
      %v7158 = vpop.f32.mrb[0].mxu0
      %7159 = vmatprep.mubr.bf16.mxu0 0
      %7160 = vmatmul.mubr.bf16.gmra.mrb[0].mxu0 %v7022
      %v7161 = vpop.f32.mrb[0].mxu0
      %v7162 = vadd.f32 0.0, %v7161
      %v7163 = vpop.f32.mrb[0].mxu0
      %v7164 = vpop.f32.mrb[0].mxu0
      %v7165 = vadd.f32 0.0, %v7164
      %v7166 = vpop.f32.mrb[0].mxu0
      %7167 = vmatprep.mubr.bf16.mxu0 0
      %7168 = vmatmul.mubr.bf16.gmra.mrb[0].mxu0 %v7025
      %v7169 = vpop.f32.mrb[0].mxu0
      %v7170 = vadd.f32 0.0, %v7169
      %v7171 = vpop.f32.mrb[0].mxu0
      %v7172 = vpop.f32.mrb[0].mxu0
      %v7173 = vadd.f32 0.0, %v7172
      %v7174 = vpop.f32.mrb[0].mxu0
      %7175 = vmatprep.mubr.bf16.mxu0 0
      %7176 = vmatmul.mubr.bf16.gmra.mrb[0].mxu0 %v7028
      %v7177 = vpop.f32.mrb[0].mxu0
      %v7178 = vadd.f32 0.0, %v7177
      %v7179 = vpop.f32.mrb[0].mxu0
      %v7180 = vpop.f32.mrb[0].mxu0
      %v7181 = vadd.f32 0.0, %v7180
      %v7182 = vpop.f32.mrb[0].mxu0
      %7183 = vmatprep.mubr.bf16.mxu0 0
      %7184 = vmatmul.mubr.bf16.gmra.mrb[0].mxu0 %v7031
      %v7185 = vpop.f32.mrb[0].mxu0
      %v7186 = vadd.f32 0.0, %v7185
      %v7187 = vpop.f32.mrb[0].mxu0
      %v7188 = vpop.f32.mrb[0].mxu0
      %v7189 = vadd.f32 0.0, %v7188
      %v7190 = vpop.f32.mrb[0].mxu0
      %7191 = vmatprep.mubr.bf16.mxu0 0
      %7192 = vmatmul.mubr.bf16.gmra.mrb[0].mxu0 %v7034
      %v7193 = vpop.f32.mrb[0].mxu0
      %v7194 = vadd.f32 0.0, %v7193
      %v7195 = vpop.f32.mrb[0].mxu0
      %v7196 = vpop.f32.mrb[0].mxu0
      %v7197 = vadd.f32 0.0, %v7196
      %v7198 = vpop.f32.mrb[0].mxu0
      %7199 = vdwg.mxu0
      %v7200 = vunpack.c.l.b16 %v6459
      %v7201 = vunpack.c.l.b16 %v6462
      %v7202 = vunpack.c.l.b16 %v6466
      %v7203 = vunpack.c.l.b16 %v6469
      %v7204 = vunpack.c.l.b16 %v6473
      %v7205 = vunpack.c.l.b16 %v6476
      %v7206 = vunpack.c.l.b16 %v6480
      %v7207 = vunpack.c.l.b16 %v6483
      %v7208 = vunpack.c.l.b16 %v6487
      %v7209 = vunpack.c.l.b16 %v6490
      %v7210 = vunpack.c.l.b16 %v6494
      %v7211 = vunpack.c.l.b16 %v6497
      %v7212 = vunpack.c.l.b16 %v6501
      %v7213 = vunpack.c.l.b16 %v6504
      %v7214 = vunpack.c.l.b16 %v6508
      %v7215 = vunpack.c.l.b16 %v6511
      %v7216 = vunpack.c.l.b16 %v6515
      %v7217 = vunpack.c.l.b16 %v6518
      %v7218 = vunpack.c.l.b16 %v6522
      %v7219 = vunpack.c.l.b16 %v6525
      %v7220 = vunpack.c.l.b16 %v6529
      %v7221 = vunpack.c.l.b16 %v6532
      %v7222 = vunpack.c.l.b16 %v6536
      %v7223 = vunpack.c.l.b16 %v6539
      %v7224 = vunpack.c.l.b16 %v6543
      %v7225 = vunpack.c.l.b16 %v6546
      %v7226 = vunpack.c.l.b16 %v6550
      %v7227 = vunpack.c.l.b16 %v6553
      %v7228 = vunpack.c.l.b16 %v6557
      %v7229 = vunpack.c.l.b16 %v6560
      %v7230 = vunpack.c.l.b16 %v6564
      %v7231 = vunpack.c.l.b16 %v6567
      %v7232 = vpack.c.b16 %v7201, %v7200
      %v7233 = vpack.c.b16 %v7203, %v7202
      %v7234 = vpack.c.b16 %v7205, %v7204
      %v7235 = vpack.c.b16 %v7207, %v7206
      %v7236 = vpack.c.b16 %v7209, %v7208
      %v7237 = vpack.c.b16 %v7211, %v7210
      %v7238 = vpack.c.b16 %v7213, %v7212
      %v7239 = vpack.c.b16 %v7215, %v7214
      %v7240 = vpack.c.b16 %v7217, %v7216
      %v7241 = vpack.c.b16 %v7219, %v7218
      %v7242 = vpack.c.b16 %v7221, %v7220
      %v7243 = vpack.c.b16 %v7223, %v7222
      %v7244 = vpack.c.b16 %v7225, %v7224
      %v7245 = vpack.c.b16 %v7227, %v7226
      %v7246 = vpack.c.b16 %v7229, %v7228
      %v7247 = vpack.c.b16 %v7231, %v7230
      %v7249 = vsel %vm254, %v7232, 0
      %v7252 = vsel %vm254, %v7233, 0
      %v7255 = vsel %vm254, %v7234, 0
      %v7258 = vsel %vm254, %v7235, 0
      %v7261 = vsel %vm254, %v7236, 0
      %v7264 = vsel %vm254, %v7237, 0
      %v7267 = vsel %vm254, %v7238, 0
      %v7270 = vsel %vm254, %v7239, 0
      %v7273 = vsel %vm254, %v7240, 0
      %v7276 = vsel %vm254, %v7241, 0
      %v7279 = vsel %vm254, %v7242, 0
      %v7282 = vsel %vm254, %v7243, 0
      %v7285 = vsel %vm254, %v7244, 0
      %v7288 = vsel %vm254, %v7245, 0
      %v7291 = vsel %vm254, %v7246, 0
      %v7294 = vsel %vm254, %v7247, 0
      %v7297 = vsel %vm1160, %v6569, 0
      %7299 = vmatprep.subr.bf16.mxu0 0
      %7300 = vmatpush1.bf16.msra.mxu0 %v7297
      %7301 = vmatprep.subr.bf16.mxu0 0
      %7302 = vmatpush1.bf16.msra.mxu0 0
      %7303 = vmatprep.subr.bf16.mxu0 0
      %7304 = vmatpush1.bf16.msra.mxu0 0
      %7305 = vmatprep.subr.bf16.mxu0 0
      %7306 = vmatpush1.bf16.msra.mxu0 0
      %7307 = vmatprep.subr.bf16.mxu0 0
      %7308 = vmatpush1.bf16.msra.mxu0 0
      %7309 = vmatprep.subr.bf16.mxu0 0
      %7310 = vmatpush1.bf16.msra.mxu0 0
      %7311 = vmatprep.subr.bf16.mxu0 0
      %7312 = vmatpush1.bf16.msra.mxu0 0
      %7313 = vmatprep.subr.bf16.mxu0 0
      %7314 = vmatpush1.bf16.msra.mxu0 0
      %7315 = vmatprep.subr.bf16.mxu0 0
      %7316 = vmatpush1.bf16.msra.mxu0 0
      %7317 = vmatprep.subr.bf16.mxu0 0
      %7318 = vmatpush1.bf16.msra.mxu0 0
      %7319 = vmatprep.subr.bf16.mxu0 0
      %7320 = vmatpush1.bf16.msra.mxu0 0
      %7321 = vmatprep.subr.bf16.mxu0 0
      %7322 = vmatpush1.bf16.msra.mxu0 0
      %7323 = vmatprep.subr.bf16.mxu0 0
      %7324 = vmatpush1.bf16.msra.mxu0 0
      %7325 = vmatprep.subr.bf16.mxu0 0
      %7326 = vmatpush1.bf16.msra.mxu0 0
      %7327 = vmatprep.subr.bf16.mxu0 0
      %7328 = vmatpush1.bf16.msra.mxu0 0
      %7329 = vmatprep.subr.bf16.mxu0 0
      %7330 = vmatpush1.bf16.msra.mxu0 0
      %7331 = vmatprep.mubr.bf16.mxu0 0
      %7332 = vmatmul.mubr.bf16.gmra.mrb[0].mxu0 %v7249
      %v7333 = vpop.f32.mrb[0].mxu0
      %v7334 = vadd.f32 %v7074, %v7333
      %v7335 = vpop.f32.mrb[0].mxu0
      %v7336 = vpop.f32.mrb[0].mxu0
      %v7337 = vadd.f32 %v7077, %v7336
      %v7338 = vpop.f32.mrb[0].mxu0
      %7339 = vmatprep.mubr.bf16.mxu0 0
      %7340 = vmatmul.mubr.bf16.gmra.mrb[0].mxu0 %v7252
      %v7341 = vpop.f32.mrb[0].mxu0
      %v7342 = vadd.f32 %v7082, %v7341
      %v7343 = vpop.f32.mrb[0].mxu0
      %v7344 = vpop.f32.mrb[0].mxu0
      %v7345 = vadd.f32 %v7085, %v7344
      %v7346 = vpop.f32.mrb[0].mxu0
      %7347 = vmatprep.mubr.bf16.mxu0 0
      %7348 = vmatmul.mubr.bf16.gmra.mrb[0].mxu0 %v7255
      %v7349 = vpop.f32.mrb[0].mxu0
      %v7350 = vadd.f32 %v7090, %v7349
      %v7351 = vpop.f32.mrb[0].mxu0
      %v7352 = vpop.f32.mrb[0].mxu0
      %v7353 = vadd.f32 %v7093, %v7352
      %v7354 = vpop.f32.mrb[0].mxu0
      %7355 = vmatprep.mubr.bf16.mxu0 0
      %7356 = vmatmul.mubr.bf16.gmra.mrb[0].mxu0 %v7258
      %v7357 = vpop.f32.mrb[0].mxu0
      %v7358 = vadd.f32 %v7098, %v7357
      %v7359 = vpop.f32.mrb[0].mxu0
      %v7360 = vpop.f32.mrb[0].mxu0
      %v7361 = vadd.f32 %v7101, %v7360
      %v7362 = vpop.f32.mrb[0].mxu0
      %7363 = vmatprep.mubr.bf16.mxu0 0
      %7364 = vmatmul.mubr.bf16.gmra.mrb[0].mxu0 %v7261
      %v7365 = vpop.f32.mrb[0].mxu0
      %v7366 = vadd.f32 %v7106, %v7365
      %v7367 = vpop.f32.mrb[0].mxu0
      %v7368 = vpop.f32.mrb[0].mxu0
      %v7369 = vadd.f32 %v7109, %v7368
      %v7370 = vpop.f32.mrb[0].mxu0
      %7371 = vmatprep.mubr.bf16.mxu0 0
      %7372 = vmatmul.mubr.bf16.gmra.mrb[0].mxu0 %v7264
      %v7373 = vpop.f32.mrb[0].mxu0
      %v7374 = vadd.f32 %v7114, %v7373
      %v7375 = vpop.f32.mrb[0].mxu0
      %v7376 = vpop.f32.mrb[0].mxu0
      %v7377 = vadd.f32 %v7117, %v7376
      %v7378 = vpop.f32.mrb[0].mxu0
      %7379 = vmatprep.mubr.bf16.mxu0 0
      %7380 = vmatmul.mubr.bf16.gmra.mrb[0].mxu0 %v7267
      %v7381 = vpop.f32.mrb[0].mxu0
      %v7382 = vadd.f32 %v7122, %v7381
      %v7383 = vpop.f32.mrb[0].mxu0
      %v7384 = vpop.f32.mrb[0].mxu0
      %v7385 = vadd.f32 %v7125, %v7384
      %v7386 = vpop.f32.mrb[0].mxu0
      %7387 = vmatprep.mubr.bf16.mxu0 0
      %7388 = vmatmul.mubr.bf16.gmra.mrb[0].mxu0 %v7270
      %v7389 = vpop.f32.mrb[0].mxu0
      %v7390 = vadd.f32 %v7130, %v7389
      %v7391 = vpop.f32.mrb[0].mxu0
      %v7392 = vpop.f32.mrb[0].mxu0
      %v7393 = vadd.f32 %v7133, %v7392
      %v7394 = vpop.f32.mrb[0].mxu0
      %7395 = vmatprep.mubr.bf16.mxu0 0
      %7396 = vmatmul.mubr.bf16.gmra.mrb[0].mxu0 %v7273
      %v7397 = vpop.f32.mrb[0].mxu0
      %v7398 = vadd.f32 %v7138, %v7397
      %v7399 = vpop.f32.mrb[0].mxu0
      %v7400 = vpop.f32.mrb[0].mxu0
      %v7401 = vadd.f32 %v7141, %v7400
      %v7402 = vpop.f32.mrb[0].mxu0
      %7403 = vmatprep.mubr.bf16.mxu0 0
      %7404 = vmatmul.mubr.bf16.gmra.mrb[0].mxu0 %v7276
      %v7405 = vpop.f32.mrb[0].mxu0
      %v7406 = vadd.f32 %v7146, %v7405
      %v7407 = vpop.f32.mrb[0].mxu0
      %v7408 = vpop.f32.mrb[0].mxu0
      %v7409 = vadd.f32 %v7149, %v7408
      %v7410 = vpop.f32.mrb[0].mxu0
      %7411 = vmatprep.mubr.bf16.mxu0 0
      %7412 = vmatmul.mubr.bf16.gmra.mrb[0].mxu0 %v7279
      %v7413 = vpop.f32.mrb[0].mxu0
      %v7414 = vadd.f32 %v7154, %v7413
      %v7415 = vpop.f32.mrb[0].mxu0
      %v7416 = vpop.f32.mrb[0].mxu0
      %v7417 = vadd.f32 %v7157, %v7416
      %v7418 = vpop.f32.mrb[0].mxu0
      %7419 = vmatprep.mubr.bf16.mxu0 0
      %7420 = vmatmul.mubr.bf16.gmra.mrb[0].mxu0 %v7282
      %v7421 = vpop.f32.mrb[0].mxu0
      %v7422 = vadd.f32 %v7162, %v7421
      %v7423 = vpop.f32.mrb[0].mxu0
      %v7424 = vpop.f32.mrb[0].mxu0
      %v7425 = vadd.f32 %v7165, %v7424
      %v7426 = vpop.f32.mrb[0].mxu0
      %7427 = vmatprep.mubr.bf16.mxu0 0
      %7428 = vmatmul.mubr.bf16.gmra.mrb[0].mxu0 %v7285
      %v7429 = vpop.f32.mrb[0].mxu0
      %v7430 = vadd.f32 %v7170, %v7429
      %v7431 = vpop.f32.mrb[0].mxu0
      %v7432 = vpop.f32.mrb[0].mxu0
      %v7433 = vadd.f32 %v7173, %v7432
      %v7434 = vpop.f32.mrb[0].mxu0
      %7435 = vmatprep.mubr.bf16.mxu0 0
      %7436 = vmatmul.mubr.bf16.gmra.mrb[0].mxu0 %v7288
      %v7437 = vpop.f32.mrb[0].mxu0
      %v7438 = vadd.f32 %v7178, %v7437
      %v7439 = vpop.f32.mrb[0].mxu0
      %v7440 = vpop.f32.mrb[0].mxu0
      %v7441 = vadd.f32 %v7181, %v7440
      %v7442 = vpop.f32.mrb[0].mxu0
      %7443 = vmatprep.mubr.bf16.mxu0 0
      %7444 = vmatmul.mubr.bf16.gmra.mrb[0].mxu0 %v7291
      %v7445 = vpop.f32.mrb[0].mxu0
      %v7446 = vadd.f32 %v7186, %v7445
      %v7447 = vpop.f32.mrb[0].mxu0
      %v7448 = vpop.f32.mrb[0].mxu0
      %v7449 = vadd.f32 %v7189, %v7448
      %v7450 = vpop.f32.mrb[0].mxu0
      %7451 = vmatprep.mubr.bf16.mxu0 0
      %7452 = vmatmul.mubr.bf16.gmra.mrb[0].mxu0 %v7294
      %v7453 = vpop.f32.mrb[0].mxu0
      %v7454 = vadd.f32 %v7194, %v7453
      %v7455 = vpop.f32.mrb[0].mxu0
      %v7456 = vpop.f32.mrb[0].mxu0
      %v7457 = vadd.f32 %v7197, %v7456
      %v7458 = vpop.f32.mrb[0].mxu0
      %7459 = vdwg.mxu0
      %s7460 = scalar_lea.vmem %s1, 48
      %v7461 = vld [vmem:[%s7460] sm:$0xf]
      %v7478 = vunpack.c.l.b16 %v6361
      %v7479 = vunpack.c.l.b16 %v6570
      %v7480 = vunpack.c.l.b16 %v6364
      %v7481 = vunpack.c.l.b16 %v6571
      %v7482 = vunpack.c.l.b16 %v6367
      %v7483 = vunpack.c.l.b16 %v6572
      %v7484 = vunpack.c.l.b16 %v6370
      %v7485 = vunpack.c.l.b16 %v6573
      %v7486 = vunpack.c.l.b16 %v6373
      %v7487 = vunpack.c.l.b16 %v6574
      %v7488 = vunpack.c.l.b16 %v6376
      %v7489 = vunpack.c.l.b16 %v6575
      %v7490 = vunpack.c.l.b16 %v6379
      %v7491 = vunpack.c.l.b16 %v6576
      %v7492 = vunpack.c.l.b16 %v6382
      %v7493 = vunpack.c.l.b16 %v6577
      %v7494 = vunpack.c.l.b16 %v6385
      %v7495 = vunpack.c.l.b16 %v6578
      %v7496 = vunpack.c.l.b16 %v6388
      %v7497 = vunpack.c.l.b16 %v6579
      %v7498 = vunpack.c.l.b16 %v6391
      %v7499 = vunpack.c.l.b16 %v6580
      %v7500 = vunpack.c.l.b16 %v6394
      %v7501 = vunpack.c.l.b16 %v6581
      %v7502 = vunpack.c.l.b16 %v6397
      %v7503 = vunpack.c.l.b16 %v6582
      %v7504 = vunpack.c.l.b16 %v6400
      %v7505 = vunpack.c.l.b16 %v6583
      %v7506 = vunpack.c.l.b16 %v6403
      %v7507 = vunpack.c.l.b16 %v6584
      %v7508 = vunpack.c.l.b16 %v6406
      %v7509 = vunpack.c.l.b16 %v6585
      %v7510 = vpack.c.b16 %v7479, %v7478
      %v7511 = vpack.c.b16 %v7481, %v7480
      %v7512 = vpack.c.b16 %v7483, %v7482
      %v7513 = vpack.c.b16 %v7485, %v7484
      %v7514 = vpack.c.b16 %v7487, %v7486
      %v7515 = vpack.c.b16 %v7489, %v7488
      %v7516 = vpack.c.b16 %v7491, %v7490
      %v7517 = vpack.c.b16 %v7493, %v7492
      %v7518 = vpack.c.b16 %v7495, %v7494
      %v7519 = vpack.c.b16 %v7497, %v7496
      %v7520 = vpack.c.b16 %v7499, %v7498
      %v7521 = vpack.c.b16 %v7501, %v7500
      %v7522 = vpack.c.b16 %v7503, %v7502
      %v7523 = vpack.c.b16 %v7505, %v7504
      %v7524 = vpack.c.b16 %v7507, %v7506
      %v7525 = vpack.c.b16 %v7509, %v7508
      %v7527 = vsel %vm254, %v7510, 0
      %v7530 = vsel %vm254, %v7511, 0
      %v7533 = vsel %vm254, %v7512, 0
      %v7536 = vsel %vm254, %v7513, 0
      %v7539 = vsel %vm254, %v7514, 0
      %v7542 = vsel %vm254, %v7515, 0
      %v7545 = vsel %vm254, %v7516, 0
      %v7548 = vsel %vm254, %v7517, 0
      %v7551 = vsel %vm254, %v7518, 0
      %v7554 = vsel %vm254, %v7519, 0
      %v7557 = vsel %vm254, %v7520, 0
      %v7560 = vsel %vm254, %v7521, 0
      %v7563 = vsel %vm254, %v7522, 0
      %v7566 = vsel %vm254, %v7523, 0
      %v7569 = vsel %vm254, %v7524, 0
      %v7572 = vsel %vm254, %v7525, 0
      %v7575 = vsel %vm1160, %v7461, 0
      %7577 = vmatprep.subr.bf16.mxu0 0
      %7578 = vmatpush1.bf16.msra.mxu0 %v7575
      %7579 = vmatprep.subr.bf16.mxu0 0
      %7580 = vmatpush1.bf16.msra.mxu0 0
      %7581 = vmatprep.subr.bf16.mxu0 0
      %7582 = vmatpush1.bf16.msra.mxu0 0
      %7583 = vmatprep.subr.bf16.mxu0 0
      %7584 = vmatpush1.bf16.msra.mxu0 0
      %7585 = vmatprep.subr.bf16.mxu0 0
      %7586 = vmatpush1.bf16.msra.mxu0 0
      %7587 = vmatprep.subr.bf16.mxu0 0
      %7588 = vmatpush1.bf16.msra.mxu0 0
      %7589 = vmatprep.subr.bf16.mxu0 0
      %7590 = vmatpush1.bf16.msra.mxu0 0
      %7591 = vmatprep.subr.bf16.mxu0 0
      %7592 = vmatpush1.bf16.msra.mxu0 0
      %7593 = vmatprep.subr.bf16.mxu0 0
      %7594 = vmatpush1.bf16.msra.mxu0 0
      %7595 = vmatprep.subr.bf16.mxu0 0
      %7596 = vmatpush1.bf16.msra.mxu0 0
      %7597 = vmatprep.subr.bf16.mxu0 0
      %7598 = vmatpush1.bf16.msra.mxu0 0
      %7599 = vmatprep.subr.bf16.mxu0 0
      %7600 = vmatpush1.bf16.msra.mxu0 0
      %7601 = vmatprep.subr.bf16.mxu0 0
      %7602 = vmatpush1.bf16.msra.mxu0 0
      %7603 = vmatprep.subr.bf16.mxu0 0
      %7604 = vmatpush1.bf16.msra.mxu0 0
      %7605 = vmatprep.subr.bf16.mxu0 0
      %7606 = vmatpush1.bf16.msra.mxu0 0
      %7607 = vmatprep.subr.bf16.mxu0 0
      %7608 = vmatpush1.bf16.msra.mxu0 0
      %7609 = vmatprep.mubr.bf16.mxu0 0
      %7610 = vmatmul.mubr.bf16.gmra.mrb[0].mxu0 %v7527
      %v7611 = vpop.f32.mrb[0].mxu0
      %v7612 = vadd.f32 0.0, %v7611
      %v7613 = vpop.f32.mrb[0].mxu0
      %v7614 = vpop.f32.mrb[0].mxu0
      %v7615 = vadd.f32 0.0, %v7614
      %v7616 = vpop.f32.mrb[0].mxu0
      %7617 = vmatprep.mubr.bf16.mxu0 0
      %7618 = vmatmul.mubr.bf16.gmra.mrb[0].mxu0 %v7530
      %v7619 = vpop.f32.mrb[0].mxu0
      %v7620 = vadd.f32 0.0, %v7619
      %v7621 = vpop.f32.mrb[0].mxu0
      %v7622 = vpop.f32.mrb[0].mxu0
      %v7623 = vadd.f32 0.0, %v7622
      %v7624 = vpop.f32.mrb[0].mxu0
      %7625 = vmatprep.mubr.bf16.mxu0 0
      %7626 = vmatmul.mubr.bf16.gmra.mrb[0].mxu0 %v7533
      %v7627 = vpop.f32.mrb[0].mxu0
      %v7628 = vadd.f32 0.0, %v7627
      %v7629 = vpop.f32.mrb[0].mxu0
      %v7630 = vpop.f32.mrb[0].mxu0
      %v7631 = vadd.f32 0.0, %v7630
      %v7632 = vpop.f32.mrb[0].mxu0
      %7633 = vmatprep.mubr.bf16.mxu0 0
      %7634 = vmatmul.mubr.bf16.gmra.mrb[0].mxu0 %v7536
      %v7635 = vpop.f32.mrb[0].mxu0
      %v7636 = vadd.f32 0.0, %v7635
      %v7637 = vpop.f32.mrb[0].mxu0
      %v7638 = vpop.f32.mrb[0].mxu0
      %v7639 = vadd.f32 0.0, %v7638
      %v7640 = vpop.f32.mrb[0].mxu0
      %7641 = vmatprep.mubr.bf16.mxu0 0
      %7642 = vmatmul.mubr.bf16.gmra.mrb[0].mxu0 %v7539
      %v7643 = vpop.f32.mrb[0].mxu0
      %v7644 = vadd.f32 0.0, %v7643
      %v7645 = vpop.f32.mrb[0].mxu0
      %v7646 = vpop.f32.mrb[0].mxu0
      %v7647 = vadd.f32 0.0, %v7646
      %v7648 = vpop.f32.mrb[0].mxu0
      %7649 = vmatprep.mubr.bf16.mxu0 0
      %7650 = vmatmul.mubr.bf16.gmra.mrb[0].mxu0 %v7542
      %v7651 = vpop.f32.mrb[0].mxu0
      %v7652 = vadd.f32 0.0, %v7651
      %v7653 = vpop.f32.mrb[0].mxu0
      %v7654 = vpop.f32.mrb[0].mxu0
      %v7655 = vadd.f32 0.0, %v7654
      %v7656 = vpop.f32.mrb[0].mxu0
      %7657 = vmatprep.mubr.bf16.mxu0 0
      %7658 = vmatmul.mubr.bf16.gmra.mrb[0].mxu0 %v7545
      %v7659 = vpop.f32.mrb[0].mxu0
      %v7660 = vadd.f32 0.0, %v7659
      %v7661 = vpop.f32.mrb[0].mxu0
      %v7662 = vpop.f32.mrb[0].mxu0
      %v7663 = vadd.f32 0.0, %v7662
      %v7664 = vpop.f32.mrb[0].mxu0
      %7665 = vmatprep.mubr.bf16.mxu0 0
      %7666 = vmatmul.mubr.bf16.gmra.mrb[0].mxu0 %v7548
      %v7667 = vpop.f32.mrb[0].mxu0
      %v7668 = vadd.f32 0.0, %v7667
      %v7669 = vpop.f32.mrb[0].mxu0
      %v7670 = vpop.f32.mrb[0].mxu0
      %v7671 = vadd.f32 0.0, %v7670
      %v7672 = vpop.f32.mrb[0].mxu0
      %7673 = vmatprep.mubr.bf16.mxu0 0
      %7674 = vmatmul.mubr.bf16.gmra.mrb[0].mxu0 %v7551
      %v7675 = vpop.f32.mrb[0].mxu0
      %v7676 = vadd.f32 0.0, %v7675
      %v7677 = vpop.f32.mrb[0].mxu0
      %v7678 = vpop.f32.mrb[0].mxu0
      %v7679 = vadd.f32 0.0, %v7678
      %v7680 = vpop.f32.mrb[0].mxu0
      %7681 = vmatprep.mubr.bf16.mxu0 0
      %7682 = vmatmul.mubr.bf16.gmra.mrb[0].mxu0 %v7554
      %v7683 = vpop.f32.mrb[0].mxu0
      %v7684 = vadd.f32 0.0, %v7683
      %v7685 = vpop.f32.mrb[0].mxu0
      %v7686 = vpop.f32.mrb[0].mxu0
      %v7687 = vadd.f32 0.0, %v7686
      %v7688 = vpop.f32.mrb[0].mxu0
      %7689 = vmatprep.mubr.bf16.mxu0 0
      %7690 = vmatmul.mubr.bf16.gmra.mrb[0].mxu0 %v7557
      %v7691 = vpop.f32.mrb[0].mxu0
      %v7692 = vadd.f32 0.0, %v7691
      %v7693 = vpop.f32.mrb[0].mxu0
      %v7694 = vpop.f32.mrb[0].mxu0
      %v7695 = vadd.f32 0.0, %v7694
      %v7696 = vpop.f32.mrb[0].mxu0
      %7697 = vmatprep.mubr.bf16.mxu0 0
      %7698 = vmatmul.mubr.bf16.gmra.mrb[0].mxu0 %v7560
      %v7699 = vpop.f32.mrb[0].mxu0
      %v7700 = vadd.f32 0.0, %v7699
      %v7701 = vpop.f32.mrb[0].mxu0
      %v7702 = vpop.f32.mrb[0].mxu0
      %v7703 = vadd.f32 0.0, %v7702
      %v7704 = vpop.f32.mrb[0].mxu0
      %7705 = vmatprep.mubr.bf16.mxu0 0
      %7706 = vmatmul.mubr.bf16.gmra.mrb[0].mxu0 %v7563
      %v7707 = vpop.f32.mrb[0].mxu0
      %v7708 = vadd.f32 0.0, %v7707
      %v7709 = vpop.f32.mrb[0].mxu0
      %v7710 = vpop.f32.mrb[0].mxu0
      %v7711 = vadd.f32 0.0, %v7710
      %v7712 = vpop.f32.mrb[0].mxu0
      %7713 = vmatprep.mubr.bf16.mxu0 0
      %7714 = vmatmul.mubr.bf16.gmra.mrb[0].mxu0 %v7566
      %v7715 = vpop.f32.mrb[0].mxu0
      %v7716 = vadd.f32 0.0, %v7715
      %v7717 = vpop.f32.mrb[0].mxu0
      %v7718 = vpop.f32.mrb[0].mxu0
      %v7719 = vadd.f32 0.0, %v7718
      %v7720 = vpop.f32.mrb[0].mxu0
      %7721 = vmatprep.mubr.bf16.mxu0 0
      %7722 = vmatmul.mubr.bf16.gmra.mrb[0].mxu0 %v7569
      %v7723 = vpop.f32.mrb[0].mxu0
      %v7724 = vadd.f32 0.0, %v7723
      %v7725 = vpop.f32.mrb[0].mxu0
      %v7726 = vpop.f32.mrb[0].mxu0
      %v7727 = vadd.f32 0.0, %v7726
      %v7728 = vpop.f32.mrb[0].mxu0
      %7729 = vmatprep.mubr.bf16.mxu0 0
      %7730 = vmatmul.mubr.bf16.gmra.mrb[0].mxu0 %v7572
      %v7731 = vpop.f32.mrb[0].mxu0
      %v7732 = vadd.f32 0.0, %v7731
      %v7733 = vpop.f32.mrb[0].mxu0
      %v7734 = vpop.f32.mrb[0].mxu0
      %v7735 = vadd.f32 0.0, %v7734
      %v7736 = vpop.f32.mrb[0].mxu0
      %7737 = vdwg.mxu0
      %v7738 = vadd.f32 %v7334, %v7612
      %v7739 = vadd.f32 %v7337, %v7615
      %v7740 = vadd.f32 %v7342, %v7620
      %v7741 = vadd.f32 %v7345, %v7623
      %v7742 = vadd.f32 %v7350, %v7628
      %v7743 = vadd.f32 %v7353, %v7631
      %v7744 = vadd.f32 %v7358, %v7636
      %v7745 = vadd.f32 %v7361, %v7639
      %v7746 = vadd.f32 %v7366, %v7644
      %v7747 = vadd.f32 %v7369, %v7647
      %v7748 = vadd.f32 %v7374, %v7652
      %v7749 = vadd.f32 %v7377, %v7655
      %v7750 = vadd.f32 %v7382, %v7660
      %v7751 = vadd.f32 %v7385, %v7663
      %v7752 = vadd.f32 %v7390, %v7668
      %v7753 = vadd.f32 %v7393, %v7671
      %v7754 = vadd.f32 %v7398, %v7676
      %v7755 = vadd.f32 %v7401, %v7679
      %v7756 = vadd.f32 %v7406, %v7684
      %v7757 = vadd.f32 %v7409, %v7687
      %v7758 = vadd.f32 %v7414, %v7692
      %v7759 = vadd.f32 %v7417, %v7695
      %v7760 = vadd.f32 %v7422, %v7700
      %v7761 = vadd.f32 %v7425, %v7703
      %v7762 = vadd.f32 %v7430, %v7708
      %v7763 = vadd.f32 %v7433, %v7711
      %v7764 = vadd.f32 %v7438, %v7716
      %v7765 = vadd.f32 %v7441, %v7719
      %v7766 = vadd.f32 %v7446, %v7724
      %v7767 = vadd.f32 %v7449, %v7727
      %v7768 = vadd.f32 %v7454, %v7732
      %v7769 = vadd.f32 %v7457, %v7735
      %v7770 = vld [vmem:[#allocation2 + $0x8] sm:$0xf]
      %v7771 = vld [vmem:[#allocation2 + $0xc] sm:$0xf]
      %v7772 = vld [vmem:[#allocation2 + $0x10] sm:$0x1]
      %v7773 = vld [vmem:[#allocation2 + $0x1c] sm:$0xf]
      %v7774 = vld [vmem:[#allocation2 + $0x20] sm:$0xf]
      %v7775 = vld [vmem:[#allocation2 + $0x24] sm:$0x1]
      %v7776 = vld [vmem:[#allocation2 + $0x30] sm:$0xf]
      %v7777 = vld [vmem:[#allocation2 + $0x34] sm:$0xf]
      %v7778 = vld [vmem:[#allocation2 + $0x38] sm:$0x1]
      %v7779 = vld [vmem:[#allocation2 + $0x44] sm:$0xf]
      %v7780 = vld [vmem:[#allocation2 + $0x48] sm:$0xf]
      %v7781 = vld [vmem:[#allocation2 + $0x4c] sm:$0x1]
      %v7782 = vld [vmem:[#allocation2 + $0x58] sm:$0xf]
      %v7783 = vld [vmem:[#allocation2 + $0x5c] sm:$0xf]
      %v7784 = vld [vmem:[#allocation2 + $0x60] sm:$0x1]
      %v7785 = vld [vmem:[#allocation2 + $0x6c] sm:$0xf]
      %v7786 = vld [vmem:[#allocation2 + $0x70] sm:$0xf]
      %v7787 = vld [vmem:[#allocation2 + $0x74] sm:$0x1]
      %v7788 = vld [vmem:[#allocation2 + $0x80] sm:$0xf]
      %v7789 = vld [vmem:[#allocation2 + $0x84] sm:$0xf]
      %v7790 = vld [vmem:[#allocation2 + $0x88] sm:$0x1]
      %v7791 = vld [vmem:[#allocation2 + $0x94] sm:$0xf]
      %v7792 = vld [vmem:[#allocation2 + $0x98] sm:$0xf]
      %v7793 = vld [vmem:[#allocation2 + $0x9c] sm:$0x1]
      %v7794 = vld [vmem:[#allocation2 + $0xa8] sm:$0xf]
      %v7795 = vld [vmem:[#allocation2 + $0xac] sm:$0xf]
      %v7796 = vld [vmem:[#allocation2 + $0xb0] sm:$0x1]
      %v7797 = vld [vmem:[#allocation2 + $0xbc] sm:$0xf]
      %v7798 = vld [vmem:[#allocation2 + $0xc0] sm:$0xf]
      %v7799 = vld [vmem:[#allocation2 + $0xc4] sm:$0x1]
      %v7800 = vld [vmem:[#allocation2 + $0xd0] sm:$0xf]
      %v7801 = vld [vmem:[#allocation2 + $0xd4] sm:$0xf]
      %v7802 = vld [vmem:[#allocation2 + $0xd8] sm:$0x1]
      %v7803 = vld [vmem:[#allocation2 + $0xe4] sm:$0xf]
      %v7804 = vld [vmem:[#allocation2 + $0xe8] sm:$0xf]
      %v7805 = vld [vmem:[#allocation2 + $0xec] sm:$0x1]
      %v7806 = vld [vmem:[#allocation2 + $0xf8] sm:$0xf]
      %v7807 = vld [vmem:[#allocation2 + $0xfc] sm:$0xf]
      %v7808 = vld [vmem:[#allocation2 + $0x100] sm:$0x1]
      %v7809 = vld [vmem:[#allocation2 + $0x10c] sm:$0xf]
      %v7810 = vld [vmem:[#allocation2 + $0x110] sm:$0xf]
      %v7811 = vld [vmem:[#allocation2 + $0x114] sm:$0x1]
      %v7812 = vld [vmem:[#allocation2 + $0x120] sm:$0xf]
      %v7813 = vld [vmem:[#allocation2 + $0x124] sm:$0xf]
      %v7814 = vld [vmem:[#allocation2 + $0x128] sm:$0x1]
      %v7815 = vld [vmem:[#allocation2 + $0x134] sm:$0xf]
      %v7816 = vld [vmem:[#allocation2 + $0x138] sm:$0xf]
      %v7817 = vld [vmem:[#allocation2 + $0x13c] sm:$0x1]
      %v7819 = vshrl.u32 %v7770, 16
      %v7821 = vrot.slane %v7819, 4
      %v7822 = vshll.u32 %v7770, 16
      %v7824 = vrot.slane %v7822, 5
      %v7825 = vor.u32 %v7821, %v7824
      %v7826 = vrot.slane %v7825, 4
      %v7828 = vshll.u32 %v7771, 16
      %v7830 = vrot.slane %v7828, 5
      %v7831 = vsel %vm1945, %v7826, %v7830
      %v7832 = vshrl.u32 %v7771, 16
      %v7834 = vrot.slane %v7832, 4
      %v7835 = vor.u32 %v7834, %v7830
      %v7836 = vrot.slane %v7835, 4
      %v7838 = vshll.u32 %v7772, 16
      %v7840 = vrot.slane %v7838, 5
      %v7841 = vsel %vm1945, %v7836, %v7840
      %v7843 = vshrl.u32 %v7773, 16
      %v7845 = vrot.slane %v7843, 4
      %v7846 = vshll.u32 %v7773, 16
      %v7848 = vrot.slane %v7846, 5
      %v7849 = vor.u32 %v7845, %v7848
      %v7850 = vrot.slane %v7849, 4
      %v7852 = vshll.u32 %v7774, 16
      %v7854 = vrot.slane %v7852, 5
      %v7855 = vsel %vm1945, %v7850, %v7854
      %v7856 = vshrl.u32 %v7774, 16
      %v7858 = vrot.slane %v7856, 4
      %v7859 = vor.u32 %v7858, %v7854
      %v7860 = vrot.slane %v7859, 4
      %v7862 = vshll.u32 %v7775, 16
      %v7864 = vrot.slane %v7862, 5
      %v7865 = vsel %vm1945, %v7860, %v7864
      %v7867 = vshrl.u32 %v7776, 16
      %v7869 = vrot.slane %v7867, 4
      %v7870 = vshll.u32 %v7776, 16
      %v7872 = vrot.slane %v7870, 5
      %v7873 = vor.u32 %v7869, %v7872
      %v7874 = vrot.slane %v7873, 4
      %v7876 = vshll.u32 %v7777, 16
      %v7878 = vrot.slane %v7876, 5
      %v7879 = vsel %vm1945, %v7874, %v7878
      %v7880 = vshrl.u32 %v7777, 16
      %v7882 = vrot.slane %v7880, 4
      %v7883 = vor.u32 %v7882, %v7878
      %v7884 = vrot.slane %v7883, 4
      %v7886 = vshll.u32 %v7778, 16
      %v7888 = vrot.slane %v7886, 5
      %v7889 = vsel %vm1945, %v7884, %v7888
      %v7891 = vshrl.u32 %v7779, 16
      %v7893 = vrot.slane %v7891, 4
      %v7894 = vshll.u32 %v7779, 16
      %v7896 = vrot.slane %v7894, 5
      %v7897 = vor.u32 %v7893, %v7896
      %v7898 = vrot.slane %v7897, 4
      %v7900 = vshll.u32 %v7780, 16
      %v7902 = vrot.slane %v7900, 5
      %v7903 = vsel %vm1945, %v7898, %v7902
      %v7904 = vshrl.u32 %v7780, 16
      %v7906 = vrot.slane %v7904, 4
      %v7907 = vor.u32 %v7906, %v7902
      %v7908 = vrot.slane %v7907, 4
      %v7910 = vshll.u32 %v7781, 16
      %v7912 = vrot.slane %v7910, 5
      %v7913 = vsel %vm1945, %v7908, %v7912
      %v7915 = vshrl.u32 %v7782, 16
      %v7917 = vrot.slane %v7915, 4
      %v7918 = vshll.u32 %v7782, 16
      %v7920 = vrot.slane %v7918, 5
      %v7921 = vor.u32 %v7917, %v7920
      %v7922 = vrot.slane %v7921, 4
      %v7924 = vshll.u32 %v7783, 16
      %v7926 = vrot.slane %v7924, 5
      %v7927 = vsel %vm1945, %v7922, %v7926
      %v7928 = vshrl.u32 %v7783, 16
      %v7930 = vrot.slane %v7928, 4
      %v7931 = vor.u32 %v7930, %v7926
      %v7932 = vrot.slane %v7931, 4
      %v7934 = vshll.u32 %v7784, 16
      %v7936 = vrot.slane %v7934, 5
      %v7937 = vsel %vm1945, %v7932, %v7936
      %v7939 = vshrl.u32 %v7785, 16
      %v7941 = vrot.slane %v7939, 4
      %v7942 = vshll.u32 %v7785, 16
      %v7944 = vrot.slane %v7942, 5
      %v7945 = vor.u32 %v7941, %v7944
      %v7946 = vrot.slane %v7945, 4
      %v7948 = vshll.u32 %v7786, 16
      %v7950 = vrot.slane %v7948, 5
      %v7951 = vsel %vm1945, %v7946, %v7950
      %v7952 = vshrl.u32 %v7786, 16
      %v7954 = vrot.slane %v7952, 4
      %v7955 = vor.u32 %v7954, %v7950
      %v7956 = vrot.slane %v7955, 4
      %v7958 = vshll.u32 %v7787, 16
      %v7960 = vrot.slane %v7958, 5
      %v7961 = vsel %vm1945, %v7956, %v7960
      %v7963 = vshrl.u32 %v7788, 16
      %v7965 = vrot.slane %v7963, 4
      %v7966 = vshll.u32 %v7788, 16
      %v7968 = vrot.slane %v7966, 5
      %v7969 = vor.u32 %v7965, %v7968
      %v7970 = vrot.slane %v7969, 4
      %v7972 = vshll.u32 %v7789, 16
      %v7974 = vrot.slane %v7972, 5
      %v7975 = vsel %vm1945, %v7970, %v7974
      %v7976 = vshrl.u32 %v7789, 16
      %v7978 = vrot.slane %v7976, 4
      %v7979 = vor.u32 %v7978, %v7974
      %v7980 = vrot.slane %v7979, 4
      %v7982 = vshll.u32 %v7790, 16
      %v7984 = vrot.slane %v7982, 5
      %v7985 = vsel %vm1945, %v7980, %v7984
      %v7987 = vshrl.u32 %v7791, 16
      %v7989 = vrot.slane %v7987, 4
      %v7990 = vshll.u32 %v7791, 16
      %v7992 = vrot.slane %v7990, 5
      %v7993 = vor.u32 %v7989, %v7992
      %v7994 = vrot.slane %v7993, 4
      %v7996 = vshll.u32 %v7792, 16
      %v7998 = vrot.slane %v7996, 5
      %v7999 = vsel %vm1945, %v7994, %v7998
      %v8000 = vshrl.u32 %v7792, 16
      %v8002 = vrot.slane %v8000, 4
      %v8003 = vor.u32 %v8002, %v7998
      %v8004 = vrot.slane %v8003, 4
      %v8006 = vshll.u32 %v7793, 16
      %v8008 = vrot.slane %v8006, 5
      %v8009 = vsel %vm1945, %v8004, %v8008
      %v8011 = vshrl.u32 %v7794, 16
      %v8013 = vrot.slane %v8011, 4
      %v8014 = vshll.u32 %v7794, 16
      %v8016 = vrot.slane %v8014, 5
      %v8017 = vor.u32 %v8013, %v8016
      %v8018 = vrot.slane %v8017, 4
      %v8020 = vshll.u32 %v7795, 16
      %v8022 = vrot.slane %v8020, 5
      %v8023 = vsel %vm1945, %v8018, %v8022
      %v8024 = vshrl.u32 %v7795, 16
      %v8026 = vrot.slane %v8024, 4
      %v8027 = vor.u32 %v8026, %v8022
      %v8028 = vrot.slane %v8027, 4
      %v8030 = vshll.u32 %v7796, 16
      %v8032 = vrot.slane %v8030, 5
      %v8033 = vsel %vm1945, %v8028, %v8032
      %v8035 = vshrl.u32 %v7797, 16
      %v8037 = vrot.slane %v8035, 4
      %v8038 = vshll.u32 %v7797, 16
      %v8040 = vrot.slane %v8038, 5
      %v8041 = vor.u32 %v8037, %v8040
      %v8042 = vrot.slane %v8041, 4
      %v8044 = vshll.u32 %v7798, 16
      %v8046 = vrot.slane %v8044, 5
      %v8047 = vsel %vm1945, %v8042, %v8046
      %v8048 = vshrl.u32 %v7798, 16
      %v8050 = vrot.slane %v8048, 4
      %v8051 = vor.u32 %v8050, %v8046
      %v8052 = vrot.slane %v8051, 4
      %v8054 = vshll.u32 %v7799, 16
      %v8056 = vrot.slane %v8054, 5
      %v8057 = vsel %vm1945, %v8052, %v8056
      %v8059 = vshrl.u32 %v7800, 16
      %v8061 = vrot.slane %v8059, 4
      %v8062 = vshll.u32 %v7800, 16
      %v8064 = vrot.slane %v8062, 5
      %v8065 = vor.u32 %v8061, %v8064
      %v8066 = vrot.slane %v8065, 4
      %v8068 = vshll.u32 %v7801, 16
      %v8070 = vrot.slane %v8068, 5
      %v8071 = vsel %vm1945, %v8066, %v8070
      %v8072 = vshrl.u32 %v7801, 16
      %v8074 = vrot.slane %v8072, 4
      %v8075 = vor.u32 %v8074, %v8070
      %v8076 = vrot.slane %v8075, 4
      %v8078 = vshll.u32 %v7802, 16
      %v8080 = vrot.slane %v8078, 5
      %v8081 = vsel %vm1945, %v8076, %v8080
      %v8083 = vshrl.u32 %v7803, 16
      %v8085 = vrot.slane %v8083, 4
      %v8086 = vshll.u32 %v7803, 16
      %v8088 = vrot.slane %v8086, 5
      %v8089 = vor.u32 %v8085, %v8088
      %v8090 = vrot.slane %v8089, 4
      %v8092 = vshll.u32 %v7804, 16
      %v8094 = vrot.slane %v8092, 5
      %v8095 = vsel %vm1945, %v8090, %v8094
      %v8096 = vshrl.u32 %v7804, 16
      %v8098 = vrot.slane %v8096, 4
      %v8099 = vor.u32 %v8098, %v8094
      %v8100 = vrot.slane %v8099, 4
      %v8102 = vshll.u32 %v7805, 16
      %v8104 = vrot.slane %v8102, 5
      %v8105 = vsel %vm1945, %v8100, %v8104
      %v8107 = vshrl.u32 %v7806, 16
      %v8109 = vrot.slane %v8107, 4
      %v8110 = vshll.u32 %v7806, 16
      %v8112 = vrot.slane %v8110, 5
      %v8113 = vor.u32 %v8109, %v8112
      %v8114 = vrot.slane %v8113, 4
      %v8116 = vshll.u32 %v7807, 16
      %v8118 = vrot.slane %v8116, 5
      %v8119 = vsel %vm1945, %v8114, %v8118
      %v8120 = vshrl.u32 %v7807, 16
      %v8122 = vrot.slane %v8120, 4
      %v8123 = vor.u32 %v8122, %v8118
      %v8124 = vrot.slane %v8123, 4
      %v8126 = vshll.u32 %v7808, 16
      %v8128 = vrot.slane %v8126, 5
      %v8129 = vsel %vm1945, %v8124, %v8128
      %v8131 = vshrl.u32 %v7809, 16
      %v8133 = vrot.slane %v8131, 4
      %v8134 = vshll.u32 %v7809, 16
      %v8136 = vrot.slane %v8134, 5
      %v8137 = vor.u32 %v8133, %v8136
      %v8138 = vrot.slane %v8137, 4
      %v8140 = vshll.u32 %v7810, 16
      %v8142 = vrot.slane %v8140, 5
      %v8143 = vsel %vm1945, %v8138, %v8142
      %v8144 = vshrl.u32 %v7810, 16
      %v8146 = vrot.slane %v8144, 4
      %v8147 = vor.u32 %v8146, %v8142
      %v8148 = vrot.slane %v8147, 4
      %v8150 = vshll.u32 %v7811, 16
      %v8152 = vrot.slane %v8150, 5
      %v8153 = vsel %vm1945, %v8148, %v8152
      %v8155 = vshrl.u32 %v7812, 16
      %v8157 = vrot.slane %v8155, 4
      %v8158 = vshll.u32 %v7812, 16
      %v8160 = vrot.slane %v8158, 5
      %v8161 = vor.u32 %v8157, %v8160
      %v8162 = vrot.slane %v8161, 4
      %v8164 = vshll.u32 %v7813, 16
      %v8166 = vrot.slane %v8164, 5
      %v8167 = vsel %vm1945, %v8162, %v8166
      %v8168 = vshrl.u32 %v7813, 16
      %v8170 = vrot.slane %v8168, 4
      %v8171 = vor.u32 %v8170, %v8166
      %v8172 = vrot.slane %v8171, 4
      %v8174 = vshll.u32 %v7814, 16
      %v8176 = vrot.slane %v8174, 5
      %v8177 = vsel %vm1945, %v8172, %v8176
      %v8179 = vshrl.u32 %v7815, 16
      %v8181 = vrot.slane %v8179, 4
      %v8182 = vshll.u32 %v7815, 16
      %v8184 = vrot.slane %v8182, 5
      %v8185 = vor.u32 %v8181, %v8184
      %v8186 = vrot.slane %v8185, 4
      %v8188 = vshll.u32 %v7816, 16
      %v8190 = vrot.slane %v8188, 5
      %v8191 = vsel %vm1945, %v8186, %v8190
      %v8192 = vshrl.u32 %v7816, 16
      %v8194 = vrot.slane %v8192, 4
      %v8195 = vor.u32 %v8194, %v8190
      %v8196 = vrot.slane %v8195, 4
      %v8198 = vshll.u32 %v7817, 16
      %v8200 = vrot.slane %v8198, 5
      %v8201 = vsel %vm1945, %v8196, %v8200
      %s8202 = scalar_lea.vmem %s1, 52
      %v8203 = vld [vmem:[%s8202] sm:$0xf]
      %v8204 = vunpack.c.l.b16 %v7831
      %v8205 = vunpack.c.l.b16 %v7841
      %v8206 = vunpack.c.l.b16 %v7855
      %v8207 = vunpack.c.l.b16 %v7865
      %v8208 = vunpack.c.l.b16 %v7879
      %v8209 = vunpack.c.l.b16 %v7889
      %v8210 = vunpack.c.l.b16 %v7903
      %v8211 = vunpack.c.l.b16 %v7913
      %v8212 = vunpack.c.l.b16 %v7927
      %v8213 = vunpack.c.l.b16 %v7937
      %v8214 = vunpack.c.l.b16 %v7951
      %v8215 = vunpack.c.l.b16 %v7961
      %v8216 = vunpack.c.l.b16 %v7975
      %v8217 = vunpack.c.l.b16 %v7985
      %v8218 = vunpack.c.l.b16 %v7999
      %v8219 = vunpack.c.l.b16 %v8009
      %v8220 = vunpack.c.l.b16 %v8023
      %v8221 = vunpack.c.l.b16 %v8033
      %v8222 = vunpack.c.l.b16 %v8047
      %v8223 = vunpack.c.l.b16 %v8057
      %v8224 = vunpack.c.l.b16 %v8071
      %v8225 = vunpack.c.l.b16 %v8081
      %v8226 = vunpack.c.l.b16 %v8095
      %v8227 = vunpack.c.l.b16 %v8105
      %v8228 = vunpack.c.l.b16 %v8119
      %v8229 = vunpack.c.l.b16 %v8129
      %v8230 = vunpack.c.l.b16 %v8143
      %v8231 = vunpack.c.l.b16 %v8153
      %v8232 = vunpack.c.l.b16 %v8167
      %v8233 = vunpack.c.l.b16 %v8177
      %v8234 = vunpack.c.l.b16 %v8191
      %v8235 = vunpack.c.l.b16 %v8201
      %v8236 = vpack.c.b16 %v8205, %v8204
      %v8237 = vpack.c.b16 %v8207, %v8206
      %v8238 = vpack.c.b16 %v8209, %v8208
      %v8239 = vpack.c.b16 %v8211, %v8210
      %v8240 = vpack.c.b16 %v8213, %v8212
      %v8241 = vpack.c.b16 %v8215, %v8214
      %v8242 = vpack.c.b16 %v8217, %v8216
      %v8243 = vpack.c.b16 %v8219, %v8218
      %v8244 = vpack.c.b16 %v8221, %v8220
      %v8245 = vpack.c.b16 %v8223, %v8222
      %v8246 = vpack.c.b16 %v8225, %v8224
      %v8247 = vpack.c.b16 %v8227, %v8226
      %v8248 = vpack.c.b16 %v8229, %v8228
      %v8249 = vpack.c.b16 %v8231, %v8230
      %v8250 = vpack.c.b16 %v8233, %v8232
      %v8251 = vpack.c.b16 %v8235, %v8234
      %v8253 = vsel %vm254, %v8236, 0
      %v8256 = vsel %vm254, %v8237, 0
      %v8259 = vsel %vm254, %v8238, 0
      %v8262 = vsel %vm254, %v8239, 0
      %v8265 = vsel %vm254, %v8240, 0
      %v8268 = vsel %vm254, %v8241, 0
      %v8271 = vsel %vm254, %v8242, 0
      %v8274 = vsel %vm254, %v8243, 0
      %v8277 = vsel %vm254, %v8244, 0
      %v8280 = vsel %vm254, %v8245, 0
      %v8283 = vsel %vm254, %v8246, 0
      %v8286 = vsel %vm254, %v8247, 0
      %v8289 = vsel %vm254, %v8248, 0
      %v8292 = vsel %vm254, %v8249, 0
      %v8295 = vsel %vm254, %v8250, 0
      %v8298 = vsel %vm254, %v8251, 0
      %v8301 = vsel %vm1160, %v8203, 0
      %8303 = vmatprep.subr.bf16.mxu0 0
      %8304 = vmatpush1.bf16.msra.mxu0 %v8301
      %8305 = vmatprep.subr.bf16.mxu0 0
      %8306 = vmatpush1.bf16.msra.mxu0 0
      %8307 = vmatprep.subr.bf16.mxu0 0
      %8308 = vmatpush1.bf16.msra.mxu0 0
      %8309 = vmatprep.subr.bf16.mxu0 0
      %8310 = vmatpush1.bf16.msra.mxu0 0
      %8311 = vmatprep.subr.bf16.mxu0 0
      %8312 = vmatpush1.bf16.msra.mxu0 0
      %8313 = vmatprep.subr.bf16.mxu0 0
      %8314 = vmatpush1.bf16.msra.mxu0 0
      %8315 = vmatprep.subr.bf16.mxu0 0
      %8316 = vmatpush1.bf16.msra.mxu0 0
      %8317 = vmatprep.subr.bf16.mxu0 0
      %8318 = vmatpush1.bf16.msra.mxu0 0
      %8319 = vmatprep.subr.bf16.mxu0 0
      %8320 = vmatpush1.bf16.msra.mxu0 0
      %8321 = vmatprep.subr.bf16.mxu0 0
      %8322 = vmatpush1.bf16.msra.mxu0 0
      %8323 = vmatprep.subr.bf16.mxu0 0
      %8324 = vmatpush1.bf16.msra.mxu0 0
      %8325 = vmatprep.subr.bf16.mxu0 0
      %8326 = vmatpush1.bf16.msra.mxu0 0
      %8327 = vmatprep.subr.bf16.mxu0 0
      %8328 = vmatpush1.bf16.msra.mxu0 0
      %8329 = vmatprep.subr.bf16.mxu0 0
      %8330 = vmatpush1.bf16.msra.mxu0 0
      %8331 = vmatprep.subr.bf16.mxu0 0
      %8332 = vmatpush1.bf16.msra.mxu0 0
      %8333 = vmatprep.subr.bf16.mxu0 0
      %8334 = vmatpush1.bf16.msra.mxu0 0
      %8335 = vmatprep.mubr.bf16.mxu0 0
      %8336 = vmatmul.mubr.bf16.gmra.mrb[0].mxu0 %v8253
      %v8337 = vpop.f32.mrb[0].mxu0
      %v8338 = vadd.f32 0.0, %v8337
      %v8339 = vpop.f32.mrb[0].mxu0
      %v8340 = vpop.f32.mrb[0].mxu0
      %v8341 = vadd.f32 0.0, %v8340
      %v8342 = vpop.f32.mrb[0].mxu0
      %8343 = vmatprep.mubr.bf16.mxu0 0
      %8344 = vmatmul.mubr.bf16.gmra.mrb[0].mxu0 %v8256
      %v8345 = vpop.f32.mrb[0].mxu0
      %v8346 = vadd.f32 0.0, %v8345
      %v8347 = vpop.f32.mrb[0].mxu0
      %v8348 = vpop.f32.mrb[0].mxu0
      %v8349 = vadd.f32 0.0, %v8348
      %v8350 = vpop.f32.mrb[0].mxu0
      %8351 = vmatprep.mubr.bf16.mxu0 0
      %8352 = vmatmul.mubr.bf16.gmra.mrb[0].mxu0 %v8259
      %v8353 = vpop.f32.mrb[0].mxu0
      %v8354 = vadd.f32 0.0, %v8353
      %v8355 = vpop.f32.mrb[0].mxu0
      %v8356 = vpop.f32.mrb[0].mxu0
      %v8357 = vadd.f32 0.0, %v8356
      %v8358 = vpop.f32.mrb[0].mxu0
      %8359 = vmatprep.mubr.bf16.mxu0 0
      %8360 = vmatmul.mubr.bf16.gmra.mrb[0].mxu0 %v8262
      %v8361 = vpop.f32.mrb[0].mxu0
      %v8362 = vadd.f32 0.0, %v8361
      %v8363 = vpop.f32.mrb[0].mxu0
      %v8364 = vpop.f32.mrb[0].mxu0
      %v8365 = vadd.f32 0.0, %v8364
      %v8366 = vpop.f32.mrb[0].mxu0
      %8367 = vmatprep.mubr.bf16.mxu0 0
      %8368 = vmatmul.mubr.bf16.gmra.mrb[0].mxu0 %v8265
      %v8369 = vpop.f32.mrb[0].mxu0
      %v8370 = vadd.f32 0.0, %v8369
      %v8371 = vpop.f32.mrb[0].mxu0
      %v8372 = vpop.f32.mrb[0].mxu0
      %v8373 = vadd.f32 0.0, %v8372
      %v8374 = vpop.f32.mrb[0].mxu0
      %8375 = vmatprep.mubr.bf16.mxu0 0
      %8376 = vmatmul.mubr.bf16.gmra.mrb[0].mxu0 %v8268
      %v8377 = vpop.f32.mrb[0].mxu0
      %v8378 = vadd.f32 0.0, %v8377
      %v8379 = vpop.f32.mrb[0].mxu0
      %v8380 = vpop.f32.mrb[0].mxu0
      %v8381 = vadd.f32 0.0, %v8380
      %v8382 = vpop.f32.mrb[0].mxu0
      %8383 = vmatprep.mubr.bf16.mxu0 0
      %8384 = vmatmul.mubr.bf16.gmra.mrb[0].mxu0 %v8271
      %v8385 = vpop.f32.mrb[0].mxu0
      %v8386 = vadd.f32 0.0, %v8385
      %v8387 = vpop.f32.mrb[0].mxu0
      %v8388 = vpop.f32.mrb[0].mxu0
      %v8389 = vadd.f32 0.0, %v8388
      %v8390 = vpop.f32.mrb[0].mxu0
      %8391 = vmatprep.mubr.bf16.mxu0 0
      %8392 = vmatmul.mubr.bf16.gmra.mrb[0].mxu0 %v8274
      %v8393 = vpop.f32.mrb[0].mxu0
      %v8394 = vadd.f32 0.0, %v8393
      %v8395 = vpop.f32.mrb[0].mxu0
      %v8396 = vpop.f32.mrb[0].mxu0
      %v8397 = vadd.f32 0.0, %v8396
      %v8398 = vpop.f32.mrb[0].mxu0
      %8399 = vmatprep.mubr.bf16.mxu0 0
      %8400 = vmatmul.mubr.bf16.gmra.mrb[0].mxu0 %v8277
      %v8401 = vpop.f32.mrb[0].mxu0
      %v8402 = vadd.f32 0.0, %v8401
      %v8403 = vpop.f32.mrb[0].mxu0
      %v8404 = vpop.f32.mrb[0].mxu0
      %v8405 = vadd.f32 0.0, %v8404
      %v8406 = vpop.f32.mrb[0].mxu0
      %8407 = vmatprep.mubr.bf16.mxu0 0
      %8408 = vmatmul.mubr.bf16.gmra.mrb[0].mxu0 %v8280
      %v8409 = vpop.f32.mrb[0].mxu0
      %v8410 = vadd.f32 0.0, %v8409
      %v8411 = vpop.f32.mrb[0].mxu0
      %v8412 = vpop.f32.mrb[0].mxu0
      %v8413 = vadd.f32 0.0, %v8412
      %v8414 = vpop.f32.mrb[0].mxu0
      %8415 = vmatprep.mubr.bf16.mxu0 0
      %8416 = vmatmul.mubr.bf16.gmra.mrb[0].mxu0 %v8283
      %v8417 = vpop.f32.mrb[0].mxu0
      %v8418 = vadd.f32 0.0, %v8417
      %v8419 = vpop.f32.mrb[0].mxu0
      %v8420 = vpop.f32.mrb[0].mxu0
      %v8421 = vadd.f32 0.0, %v8420
      %v8422 = vpop.f32.mrb[0].mxu0
      %8423 = vmatprep.mubr.bf16.mxu0 0
      %8424 = vmatmul.mubr.bf16.gmra.mrb[0].mxu0 %v8286
      %v8425 = vpop.f32.mrb[0].mxu0
      %v8426 = vadd.f32 0.0, %v8425
      %v8427 = vpop.f32.mrb[0].mxu0
      %v8428 = vpop.f32.mrb[0].mxu0
      %v8429 = vadd.f32 0.0, %v8428
      %v8430 = vpop.f32.mrb[0].mxu0
      %8431 = vmatprep.mubr.bf16.mxu0 0
      %8432 = vmatmul.mubr.bf16.gmra.mrb[0].mxu0 %v8289
      %v8433 = vpop.f32.mrb[0].mxu0
      %v8434 = vadd.f32 0.0, %v8433
      %v8435 = vpop.f32.mrb[0].mxu0
      %v8436 = vpop.f32.mrb[0].mxu0
      %v8437 = vadd.f32 0.0, %v8436
      %v8438 = vpop.f32.mrb[0].mxu0
      %8439 = vmatprep.mubr.bf16.mxu0 0
      %8440 = vmatmul.mubr.bf16.gmra.mrb[0].mxu0 %v8292
      %v8441 = vpop.f32.mrb[0].mxu0
      %v8442 = vadd.f32 0.0, %v8441
      %v8443 = vpop.f32.mrb[0].mxu0
      %v8444 = vpop.f32.mrb[0].mxu0
      %v8445 = vadd.f32 0.0, %v8444
      %v8446 = vpop.f32.mrb[0].mxu0
      %8447 = vmatprep.mubr.bf16.mxu0 0
      %8448 = vmatmul.mubr.bf16.gmra.mrb[0].mxu0 %v8295
      %v8449 = vpop.f32.mrb[0].mxu0
      %v8450 = vadd.f32 0.0, %v8449
      %v8451 = vpop.f32.mrb[0].mxu0
      %v8452 = vpop.f32.mrb[0].mxu0
      %v8453 = vadd.f32 0.0, %v8452
      %v8454 = vpop.f32.mrb[0].mxu0
      %8455 = vmatprep.mubr.bf16.mxu0 0
      %8456 = vmatmul.mubr.bf16.gmra.mrb[0].mxu0 %v8298
      %v8457 = vpop.f32.mrb[0].mxu0
      %v8458 = vadd.f32 0.0, %v8457
      %v8459 = vpop.f32.mrb[0].mxu0
      %v8460 = vpop.f32.mrb[0].mxu0
      %v8461 = vadd.f32 0.0, %v8460
      %v8462 = vpop.f32.mrb[0].mxu0
      %8463 = vdwg.mxu0
      %v8464 = vadd.f32 %v7738, %v8338
      %v8465 = vadd.f32 %v7739, %v8341
      %v8466 = vadd.f32 %v7740, %v8346
      %v8467 = vadd.f32 %v7741, %v8349
      %v8468 = vadd.f32 %v7742, %v8354
      %v8469 = vadd.f32 %v7743, %v8357
      %v8470 = vadd.f32 %v7744, %v8362
      %v8471 = vadd.f32 %v7745, %v8365
      %v8472 = vadd.f32 %v7746, %v8370
      %v8473 = vadd.f32 %v7747, %v8373
      %v8474 = vadd.f32 %v7748, %v8378
      %v8475 = vadd.f32 %v7749, %v8381
      %v8476 = vadd.f32 %v7750, %v8386
      %v8477 = vadd.f32 %v7751, %v8389
      %v8478 = vadd.f32 %v7752, %v8394
      %v8479 = vadd.f32 %v7753, %v8397
      %v8480 = vadd.f32 %v7754, %v8402
      %v8481 = vadd.f32 %v7755, %v8405
      %v8482 = vadd.f32 %v7756, %v8410
      %v8483 = vadd.f32 %v7757, %v8413
      %v8484 = vadd.f32 %v7758, %v8418
      %v8485 = vadd.f32 %v7759, %v8421
      %v8486 = vadd.f32 %v7760, %v8426
      %v8487 = vadd.f32 %v7761, %v8429
      %v8488 = vadd.f32 %v7762, %v8434
      %v8489 = vadd.f32 %v7763, %v8437
      %v8490 = vadd.f32 %v7764, %v8442
      %v8491 = vadd.f32 %v7765, %v8445
      %v8492 = vadd.f32 %v7766, %v8450
      %v8493 = vadd.f32 %v7767, %v8453
      %v8494 = vadd.f32 %v7768, %v8458
      %v8495 = vadd.f32 %v7769, %v8461
      %v8496 = vld [vmem:[#allocation2 + $0x8] sm:$0xe]
      %v8497 = vld [vmem:[#allocation2 + $0x1c] sm:$0xe]
      %v8498 = vld [vmem:[#allocation2 + $0x30] sm:$0xe]
      %v8499 = vld [vmem:[#allocation2 + $0x44] sm:$0xe]
      %v8500 = vld [vmem:[#allocation2 + $0x58] sm:$0xe]
      %v8501 = vld [vmem:[#allocation2 + $0x6c] sm:$0xe]
      %v8502 = vld [vmem:[#allocation2 + $0x80] sm:$0xe]
      %v8503 = vld [vmem:[#allocation2 + $0x94] sm:$0xe]
      %v8504 = vld [vmem:[#allocation2 + $0xa8] sm:$0xe]
      %v8505 = vld [vmem:[#allocation2 + $0xbc] sm:$0xe]
      %v8506 = vld [vmem:[#allocation2 + $0xd0] sm:$0xe]
      %v8507 = vld [vmem:[#allocation2 + $0xe4] sm:$0xe]
      %v8508 = vld [vmem:[#allocation2 + $0xf8] sm:$0xe]
      %v8509 = vld [vmem:[#allocation2 + $0x10c] sm:$0xe]
      %v8510 = vld [vmem:[#allocation2 + $0x120] sm:$0xe]
      %v8511 = vld [vmem:[#allocation2 + $0x134] sm:$0xe]
      %v8560 = vrot.slane %v8496, 5
      %v8561 = vrot.slane %v8560, 4
      %v8562 = vrot.slane %v7771, 5
      %v8563 = vsel %vm2690, %v8561, %v8562
      %v8564 = vrot.slane %v8562, 4
      %v8565 = vrot.slane %v7772, 5
      %v8566 = vsel %vm2690, %v8564, %v8565
      %v8567 = vrot.slane %v8497, 5
      %v8568 = vrot.slane %v8567, 4
      %v8569 = vrot.slane %v7774, 5
      %v8570 = vsel %vm2690, %v8568, %v8569
      %v8571 = vrot.slane %v8569, 4
      %v8572 = vrot.slane %v7775, 5
      %v8573 = vsel %vm2690, %v8571, %v8572
      %v8574 = vrot.slane %v8498, 5
      %v8575 = vrot.slane %v8574, 4
      %v8576 = vrot.slane %v7777, 5
      %v8577 = vsel %vm2690, %v8575, %v8576
      %v8578 = vrot.slane %v8576, 4
      %v8579 = vrot.slane %v7778, 5
      %v8580 = vsel %vm2690, %v8578, %v8579
      %v8581 = vrot.slane %v8499, 5
      %v8582 = vrot.slane %v8581, 4
      %v8583 = vrot.slane %v7780, 5
      %v8584 = vsel %vm2690, %v8582, %v8583
      %v8585 = vrot.slane %v8583, 4
      %v8586 = vrot.slane %v7781, 5
      %v8587 = vsel %vm2690, %v8585, %v8586
      %v8588 = vrot.slane %v8500, 5
      %v8589 = vrot.slane %v8588, 4
      %v8590 = vrot.slane %v7783, 5
      %v8591 = vsel %vm2690, %v8589, %v8590
      %v8592 = vrot.slane %v8590, 4
      %v8593 = vrot.slane %v7784, 5
      %v8594 = vsel %vm2690, %v8592, %v8593
      %v8595 = vrot.slane %v8501, 5
      %v8596 = vrot.slane %v8595, 4
      %v8597 = vrot.slane %v7786, 5
      %v8598 = vsel %vm2690, %v8596, %v8597
      %v8599 = vrot.slane %v8597, 4
      %v8600 = vrot.slane %v7787, 5
      %v8601 = vsel %vm2690, %v8599, %v8600
      %v8602 = vrot.slane %v8502, 5
      %v8603 = vrot.slane %v8602, 4
      %v8604 = vrot.slane %v7789, 5
      %v8605 = vsel %vm2690, %v8603, %v8604
      %v8606 = vrot.slane %v8604, 4
      %v8607 = vrot.slane %v7790, 5
      %v8608 = vsel %vm2690, %v8606, %v8607
      %v8609 = vrot.slane %v8503, 5
      %v8610 = vrot.slane %v8609, 4
      %v8611 = vrot.slane %v7792, 5
      %v8612 = vsel %vm2690, %v8610, %v8611
      %v8613 = vrot.slane %v8611, 4
      %v8614 = vrot.slane %v7793, 5
      %v8615 = vsel %vm2690, %v8613, %v8614
      %v8616 = vrot.slane %v8504, 5
      %v8617 = vrot.slane %v8616, 4
      %v8618 = vrot.slane %v7795, 5
      %v8619 = vsel %vm2690, %v8617, %v8618
      %v8620 = vrot.slane %v8618, 4
      %v8621 = vrot.slane %v7796, 5
      %v8622 = vsel %vm2690, %v8620, %v8621
      %v8623 = vrot.slane %v8505, 5
      %v8624 = vrot.slane %v8623, 4
      %v8625 = vrot.slane %v7798, 5
      %v8626 = vsel %vm2690, %v8624, %v8625
      %v8627 = vrot.slane %v8625, 4
      %v8628 = vrot.slane %v7799, 5
      %v8629 = vsel %vm2690, %v8627, %v8628
      %v8630 = vrot.slane %v8506, 5
      %v8631 = vrot.slane %v8630, 4
      %v8632 = vrot.slane %v7801, 5
      %v8633 = vsel %vm2690, %v8631, %v8632
      %v8634 = vrot.slane %v8632, 4
      %v8635 = vrot.slane %v7802, 5
      %v8636 = vsel %vm2690, %v8634, %v8635
      %v8637 = vrot.slane %v8507, 5
      %v8638 = vrot.slane %v8637, 4
      %v8639 = vrot.slane %v7804, 5
      %v8640 = vsel %vm2690, %v8638, %v8639
      %v8641 = vrot.slane %v8639, 4
      %v8642 = vrot.slane %v7805, 5
      %v8643 = vsel %vm2690, %v8641, %v8642
      %v8644 = vrot.slane %v8508, 5
      %v8645 = vrot.slane %v8644, 4
      %v8646 = vrot.slane %v7807, 5
      %v8647 = vsel %vm2690, %v8645, %v8646
      %v8648 = vrot.slane %v8646, 4
      %v8649 = vrot.slane %v7808, 5
      %v8650 = vsel %vm2690, %v8648, %v8649
      %v8651 = vrot.slane %v8509, 5
      %v8652 = vrot.slane %v8651, 4
      %v8653 = vrot.slane %v7810, 5
      %v8654 = vsel %vm2690, %v8652, %v8653
      %v8655 = vrot.slane %v8653, 4
      %v8656 = vrot.slane %v7811, 5
      %v8657 = vsel %vm2690, %v8655, %v8656
      %v8658 = vrot.slane %v8510, 5
      %v8659 = vrot.slane %v8658, 4
      %v8660 = vrot.slane %v7813, 5
      %v8661 = vsel %vm2690, %v8659, %v8660
      %v8662 = vrot.slane %v8660, 4
      %v8663 = vrot.slane %v7814, 5
      %v8664 = vsel %vm2690, %v8662, %v8663
      %v8665 = vrot.slane %v8511, 5
      %v8666 = vrot.slane %v8665, 4
      %v8667 = vrot.slane %v7816, 5
      %v8668 = vsel %vm2690, %v8666, %v8667
      %v8669 = vrot.slane %v8667, 4
      %v8670 = vrot.slane %v7817, 5
      %v8671 = vsel %vm2690, %v8669, %v8670
      %s8672 = scalar_lea.vmem %s1, 56
      %v8673 = vld [vmem:[%s8672] sm:$0xf]
      %v8674 = vunpack.c.l.b16 %v8563
      %v8675 = vunpack.c.l.b16 %v8566
      %v8676 = vunpack.c.l.b16 %v8570
      %v8677 = vunpack.c.l.b16 %v8573
      %v8678 = vunpack.c.l.b16 %v8577
      %v8679 = vunpack.c.l.b16 %v8580
      %v8680 = vunpack.c.l.b16 %v8584
      %v8681 = vunpack.c.l.b16 %v8587
      %v8682 = vunpack.c.l.b16 %v8591
      %v8683 = vunpack.c.l.b16 %v8594
      %v8684 = vunpack.c.l.b16 %v8598
      %v8685 = vunpack.c.l.b16 %v8601
      %v8686 = vunpack.c.l.b16 %v8605
      %v8687 = vunpack.c.l.b16 %v8608
      %v8688 = vunpack.c.l.b16 %v8612
      %v8689 = vunpack.c.l.b16 %v8615
      %v8690 = vunpack.c.l.b16 %v8619
      %v8691 = vunpack.c.l.b16 %v8622
      %v8692 = vunpack.c.l.b16 %v8626
      %v8693 = vunpack.c.l.b16 %v8629
      %v8694 = vunpack.c.l.b16 %v8633
      %v8695 = vunpack.c.l.b16 %v8636
      %v8696 = vunpack.c.l.b16 %v8640
      %v8697 = vunpack.c.l.b16 %v8643
      %v8698 = vunpack.c.l.b16 %v8647
      %v8699 = vunpack.c.l.b16 %v8650
      %v8700 = vunpack.c.l.b16 %v8654
      %v8701 = vunpack.c.l.b16 %v8657
      %v8702 = vunpack.c.l.b16 %v8661
      %v8703 = vunpack.c.l.b16 %v8664
      %v8704 = vunpack.c.l.b16 %v8668
      %v8705 = vunpack.c.l.b16 %v8671
      %v8706 = vpack.c.b16 %v8675, %v8674
      %v8707 = vpack.c.b16 %v8677, %v8676
      %v8708 = vpack.c.b16 %v8679, %v8678
      %v8709 = vpack.c.b16 %v8681, %v8680
      %v8710 = vpack.c.b16 %v8683, %v8682
      %v8711 = vpack.c.b16 %v8685, %v8684
      %v8712 = vpack.c.b16 %v8687, %v8686
      %v8713 = vpack.c.b16 %v8689, %v8688
      %v8714 = vpack.c.b16 %v8691, %v8690
      %v8715 = vpack.c.b16 %v8693, %v8692
      %v8716 = vpack.c.b16 %v8695, %v8694
      %v8717 = vpack.c.b16 %v8697, %v8696
      %v8718 = vpack.c.b16 %v8699, %v8698
      %v8719 = vpack.c.b16 %v8701, %v8700
      %v8720 = vpack.c.b16 %v8703, %v8702
      %v8721 = vpack.c.b16 %v8705, %v8704
      %v8723 = vsel %vm254, %v8706, 0
      %v8726 = vsel %vm254, %v8707, 0
      %v8729 = vsel %vm254, %v8708, 0
      %v8732 = vsel %vm254, %v8709, 0
      %v8735 = vsel %vm254, %v8710, 0
      %v8738 = vsel %vm254, %v8711, 0
      %v8741 = vsel %vm254, %v8712, 0
      %v8744 = vsel %vm254, %v8713, 0
      %v8747 = vsel %vm254, %v8714, 0
      %v8750 = vsel %vm254, %v8715, 0
      %v8753 = vsel %vm254, %v8716, 0
      %v8756 = vsel %vm254, %v8717, 0
      %v8759 = vsel %vm254, %v8718, 0
      %v8762 = vsel %vm254, %v8719, 0
      %v8765 = vsel %vm254, %v8720, 0
      %v8768 = vsel %vm254, %v8721, 0
      %v8771 = vsel %vm1160, %v8673, 0
      %8773 = vmatprep.subr.bf16.mxu0 0
      %8774 = vmatpush1.bf16.msra.mxu0 %v8771
      %8775 = vmatprep.subr.bf16.mxu0 0
      %8776 = vmatpush1.bf16.msra.mxu0 0
      %8777 = vmatprep.subr.bf16.mxu0 0
      %8778 = vmatpush1.bf16.msra.mxu0 0
      %8779 = vmatprep.subr.bf16.mxu0 0
      %8780 = vmatpush1.bf16.msra.mxu0 0
      %8781 = vmatprep.subr.bf16.mxu0 0
      %8782 = vmatpush1.bf16.msra.mxu0 0
      %8783 = vmatprep.subr.bf16.mxu0 0
      %8784 = vmatpush1.bf16.msra.mxu0 0
      %8785 = vmatprep.subr.bf16.mxu0 0
      %8786 = vmatpush1.bf16.msra.mxu0 0
      %8787 = vmatprep.subr.bf16.mxu0 0
      %8788 = vmatpush1.bf16.msra.mxu0 0
      %8789 = vmatprep.subr.bf16.mxu0 0
      %8790 = vmatpush1.bf16.msra.mxu0 0
      %8791 = vmatprep.subr.bf16.mxu0 0
      %8792 = vmatpush1.bf16.msra.mxu0 0
      %8793 = vmatprep.subr.bf16.mxu0 0
      %8794 = vmatpush1.bf16.msra.mxu0 0
      %8795 = vmatprep.subr.bf16.mxu0 0
      %8796 = vmatpush1.bf16.msra.mxu0 0
      %8797 = vmatprep.subr.bf16.mxu0 0
      %8798 = vmatpush1.bf16.msra.mxu0 0
      %8799 = vmatprep.subr.bf16.mxu0 0
      %8800 = vmatpush1.bf16.msra.mxu0 0
      %8801 = vmatprep.subr.bf16.mxu0 0
      %8802 = vmatpush1.bf16.msra.mxu0 0
      %8803 = vmatprep.subr.bf16.mxu0 0
      %8804 = vmatpush1.bf16.msra.mxu0 0
      %8805 = vmatprep.mubr.bf16.mxu0 0
      %8806 = vmatmul.mubr.bf16.gmra.mrb[0].mxu0 %v8723
      %v8807 = vpop.f32.mrb[0].mxu0
      %v8808 = vadd.f32 0.0, %v8807
      %v8809 = vpop.f32.mrb[0].mxu0
      %v8810 = vpop.f32.mrb[0].mxu0
      %v8811 = vadd.f32 0.0, %v8810
      %v8812 = vpop.f32.mrb[0].mxu0
      %8813 = vmatprep.mubr.bf16.mxu0 0
      %8814 = vmatmul.mubr.bf16.gmra.mrb[0].mxu0 %v8726
      %v8815 = vpop.f32.mrb[0].mxu0
      %v8816 = vadd.f32 0.0, %v8815
      %v8817 = vpop.f32.mrb[0].mxu0
      %v8818 = vpop.f32.mrb[0].mxu0
      %v8819 = vadd.f32 0.0, %v8818
      %v8820 = vpop.f32.mrb[0].mxu0
      %8821 = vmatprep.mubr.bf16.mxu0 0
      %8822 = vmatmul.mubr.bf16.gmra.mrb[0].mxu0 %v8729
      %v8823 = vpop.f32.mrb[0].mxu0
      %v8824 = vadd.f32 0.0, %v8823
      %v8825 = vpop.f32.mrb[0].mxu0
      %v8826 = vpop.f32.mrb[0].mxu0
      %v8827 = vadd.f32 0.0, %v8826
      %v8828 = vpop.f32.mrb[0].mxu0
      %8829 = vmatprep.mubr.bf16.mxu0 0
      %8830 = vmatmul.mubr.bf16.gmra.mrb[0].mxu0 %v8732
      %v8831 = vpop.f32.mrb[0].mxu0
      %v8832 = vadd.f32 0.0, %v8831
      %v8833 = vpop.f32.mrb[0].mxu0
      %v8834 = vpop.f32.mrb[0].mxu0
      %v8835 = vadd.f32 0.0, %v8834
      %v8836 = vpop.f32.mrb[0].mxu0
      %8837 = vmatprep.mubr.bf16.mxu0 0
      %8838 = vmatmul.mubr.bf16.gmra.mrb[0].mxu0 %v8735
      %v8839 = vpop.f32.mrb[0].mxu0
      %v8840 = vadd.f32 0.0, %v8839
      %v8841 = vpop.f32.mrb[0].mxu0
      %v8842 = vpop.f32.mrb[0].mxu0
      %v8843 = vadd.f32 0.0, %v8842
      %v8844 = vpop.f32.mrb[0].mxu0
      %8845 = vmatprep.mubr.bf16.mxu0 0
      %8846 = vmatmul.mubr.bf16.gmra.mrb[0].mxu0 %v8738
      %v8847 = vpop.f32.mrb[0].mxu0
      %v8848 = vadd.f32 0.0, %v8847
      %v8849 = vpop.f32.mrb[0].mxu0
      %v8850 = vpop.f32.mrb[0].mxu0
      %v8851 = vadd.f32 0.0, %v8850
      %v8852 = vpop.f32.mrb[0].mxu0
      %8853 = vmatprep.mubr.bf16.mxu0 0
      %8854 = vmatmul.mubr.bf16.gmra.mrb[0].mxu0 %v8741
      %v8855 = vpop.f32.mrb[0].mxu0
      %v8856 = vadd.f32 0.0, %v8855
      %v8857 = vpop.f32.mrb[0].mxu0
      %v8858 = vpop.f32.mrb[0].mxu0
      %v8859 = vadd.f32 0.0, %v8858
      %v8860 = vpop.f32.mrb[0].mxu0
      %8861 = vmatprep.mubr.bf16.mxu0 0
      %8862 = vmatmul.mubr.bf16.gmra.mrb[0].mxu0 %v8744
      %v8863 = vpop.f32.mrb[0].mxu0
      %v8864 = vadd.f32 0.0, %v8863
      %v8865 = vpop.f32.mrb[0].mxu0
      %v8866 = vpop.f32.mrb[0].mxu0
      %v8867 = vadd.f32 0.0, %v8866
      %v8868 = vpop.f32.mrb[0].mxu0
      %8869 = vmatprep.mubr.bf16.mxu0 0
      %8870 = vmatmul.mubr.bf16.gmra.mrb[0].mxu0 %v8747
      %v8871 = vpop.f32.mrb[0].mxu0
      %v8872 = vadd.f32 0.0, %v8871
      %v8873 = vpop.f32.mrb[0].mxu0
      %v8874 = vpop.f32.mrb[0].mxu0
      %v8875 = vadd.f32 0.0, %v8874
      %v8876 = vpop.f32.mrb[0].mxu0
      %8877 = vmatprep.mubr.bf16.mxu0 0
      %8878 = vmatmul.mubr.bf16.gmra.mrb[0].mxu0 %v8750
      %v8879 = vpop.f32.mrb[0].mxu0
      %v8880 = vadd.f32 0.0, %v8879
      %v8881 = vpop.f32.mrb[0].mxu0
      %v8882 = vpop.f32.mrb[0].mxu0
      %v8883 = vadd.f32 0.0, %v8882
      %v8884 = vpop.f32.mrb[0].mxu0
      %8885 = vmatprep.mubr.bf16.mxu0 0
      %8886 = vmatmul.mubr.bf16.gmra.mrb[0].mxu0 %v8753
      %v8887 = vpop.f32.mrb[0].mxu0
      %v8888 = vadd.f32 0.0, %v8887
      %v8889 = vpop.f32.mrb[0].mxu0
      %v8890 = vpop.f32.mrb[0].mxu0
      %v8891 = vadd.f32 0.0, %v8890
      %v8892 = vpop.f32.mrb[0].mxu0
      %8893 = vmatprep.mubr.bf16.mxu0 0
      %8894 = vmatmul.mubr.bf16.gmra.mrb[0].mxu0 %v8756
      %v8895 = vpop.f32.mrb[0].mxu0
      %v8896 = vadd.f32 0.0, %v8895
      %v8897 = vpop.f32.mrb[0].mxu0
      %v8898 = vpop.f32.mrb[0].mxu0
      %v8899 = vadd.f32 0.0, %v8898
      %v8900 = vpop.f32.mrb[0].mxu0
      %8901 = vmatprep.mubr.bf16.mxu0 0
      %8902 = vmatmul.mubr.bf16.gmra.mrb[0].mxu0 %v8759
      %v8903 = vpop.f32.mrb[0].mxu0
      %v8904 = vadd.f32 0.0, %v8903
      %v8905 = vpop.f32.mrb[0].mxu0
      %v8906 = vpop.f32.mrb[0].mxu0
      %v8907 = vadd.f32 0.0, %v8906
      %v8908 = vpop.f32.mrb[0].mxu0
      %8909 = vmatprep.mubr.bf16.mxu0 0
      %8910 = vmatmul.mubr.bf16.gmra.mrb[0].mxu0 %v8762
      %v8911 = vpop.f32.mrb[0].mxu0
      %v8912 = vadd.f32 0.0, %v8911
      %v8913 = vpop.f32.mrb[0].mxu0
      %v8914 = vpop.f32.mrb[0].mxu0
      %v8915 = vadd.f32 0.0, %v8914
      %v8916 = vpop.f32.mrb[0].mxu0
      %8917 = vmatprep.mubr.bf16.mxu0 0
      %8918 = vmatmul.mubr.bf16.gmra.mrb[0].mxu0 %v8765
      %v8919 = vpop.f32.mrb[0].mxu0
      %v8920 = vadd.f32 0.0, %v8919
      %v8921 = vpop.f32.mrb[0].mxu0
      %v8922 = vpop.f32.mrb[0].mxu0
      %v8923 = vadd.f32 0.0, %v8922
      %v8924 = vpop.f32.mrb[0].mxu0
      %8925 = vmatprep.mubr.bf16.mxu0 0
      %8926 = vmatmul.mubr.bf16.gmra.mrb[0].mxu0 %v8768
      %v8927 = vpop.f32.mrb[0].mxu0
      %v8928 = vadd.f32 0.0, %v8927
      %v8929 = vpop.f32.mrb[0].mxu0
      %v8930 = vpop.f32.mrb[0].mxu0
      %v8931 = vadd.f32 0.0, %v8930
      %v8932 = vpop.f32.mrb[0].mxu0
      %8933 = vdwg.mxu0
      %v8934 = vadd.f32 %v8464, %v8808
      %v8935 = vadd.f32 %v8465, %v8811
      %v8936 = vadd.f32 %v8466, %v8816
      %v8937 = vadd.f32 %v8467, %v8819
      %v8938 = vadd.f32 %v8468, %v8824
      %v8939 = vadd.f32 %v8469, %v8827
      %v8940 = vadd.f32 %v8470, %v8832
      %v8941 = vadd.f32 %v8471, %v8835
      %v8942 = vadd.f32 %v8472, %v8840
      %v8943 = vadd.f32 %v8473, %v8843
      %v8944 = vadd.f32 %v8474, %v8848
      %v8945 = vadd.f32 %v8475, %v8851
      %v8946 = vadd.f32 %v8476, %v8856
      %v8947 = vadd.f32 %v8477, %v8859
      %v8948 = vadd.f32 %v8478, %v8864
      %v8949 = vadd.f32 %v8479, %v8867
      %v8950 = vadd.f32 %v8480, %v8872
      %v8951 = vadd.f32 %v8481, %v8875
      %v8952 = vadd.f32 %v8482, %v8880
      %v8953 = vadd.f32 %v8483, %v8883
      %v8954 = vadd.f32 %v8484, %v8888
      %v8955 = vadd.f32 %v8485, %v8891
      %v8956 = vadd.f32 %v8486, %v8896
      %v8957 = vadd.f32 %v8487, %v8899
      %v8958 = vadd.f32 %v8488, %v8904
      %v8959 = vadd.f32 %v8489, %v8907
      %v8960 = vadd.f32 %v8490, %v8912
      %v8961 = vadd.f32 %v8491, %v8915
      %v8962 = vadd.f32 %v8492, %v8920
      %v8963 = vadd.f32 %v8493, %v8923
      %v8964 = vadd.f32 %v8494, %v8928
      %v8965 = vadd.f32 %v8495, %v8931
      %s8966 = scalar_lea.vmem %s2, 2
      %v8967 = vld [vmem:[%s8966] sm:$0x1]
      %v8969 = vlaneseq
      %v8970 = vshrl.u32 %v8969, 7
      %v8971 = vsub.s32 0, %v8970
      %v8972 = vrot.slane %v8967, %v8971
      %v8974 = vadd.f32 %v8934, %v8972
      %v8975 = vadd.f32 %v8935, %v8972
      %v8976 = vadd.f32 %v8936, %v8972
      %v8977 = vadd.f32 %v8937, %v8972
      %v8978 = vadd.f32 %v8938, %v8972
      %v8979 = vadd.f32 %v8939, %v8972
      %v8980 = vadd.f32 %v8940, %v8972
      %v8981 = vadd.f32 %v8941, %v8972
      %v8982 = vadd.f32 %v8942, %v8972
      %v8983 = vadd.f32 %v8943, %v8972
      %v8984 = vadd.f32 %v8944, %v8972
      %v8985 = vadd.f32 %v8945, %v8972
      %v8986 = vadd.f32 %v8946, %v8972
      %v8987 = vadd.f32 %v8947, %v8972
      %v8988 = vadd.f32 %v8948, %v8972
      %v8989 = vadd.f32 %v8949, %v8972
      %v8990 = vadd.f32 %v8950, %v8972
      %v8991 = vadd.f32 %v8951, %v8972
      %v8992 = vadd.f32 %v8952, %v8972
      %v8993 = vadd.f32 %v8953, %v8972
      %v8994 = vadd.f32 %v8954, %v8972
      %v8995 = vadd.f32 %v8955, %v8972
      %v8996 = vadd.f32 %v8956, %v8972
      %v8997 = vadd.f32 %v8957, %v8972
      %v8998 = vadd.f32 %v8958, %v8972
      %v8999 = vadd.f32 %v8959, %v8972
      %v9000 = vadd.f32 %v8960, %v8972
      %v9001 = vadd.f32 %v8961, %v8972
      %v9002 = vadd.f32 %v8962, %v8972
      %v9003 = vadd.f32 %v8963, %v8972
      %v9004 = vadd.f32 %v8964, %v8972
      %v9005 = vadd.f32 %v8965, %v8972
      %v9006 = vmax.f32 %v8974, 0.0
      %v9007 = vmax.f32 %v8975, 0.0
      %v9008 = vmax.f32 %v8976, 0.0
      %v9009 = vmax.f32 %v8977, 0.0
      %v9010 = vmax.f32 %v8978, 0.0
      %v9011 = vmax.f32 %v8979, 0.0
      %v9012 = vmax.f32 %v8980, 0.0
      %v9013 = vmax.f32 %v8981, 0.0
      %v9014 = vmax.f32 %v8982, 0.0
      %v9015 = vmax.f32 %v8983, 0.0
      %v9016 = vmax.f32 %v8984, 0.0
      %v9017 = vmax.f32 %v8985, 0.0
      %v9018 = vmax.f32 %v8986, 0.0
      %v9019 = vmax.f32 %v8987, 0.0
      %v9020 = vmax.f32 %v8988, 0.0
      %v9021 = vmax.f32 %v8989, 0.0
      %v9022 = vmax.f32 %v8990, 0.0
      %v9023 = vmax.f32 %v8991, 0.0
      %v9024 = vmax.f32 %v8992, 0.0
      %v9025 = vmax.f32 %v8993, 0.0
      %v9026 = vmax.f32 %v8994, 0.0
      %v9027 = vmax.f32 %v8995, 0.0
      %v9028 = vmax.f32 %v8996, 0.0
      %v9029 = vmax.f32 %v8997, 0.0
      %v9030 = vmax.f32 %v8998, 0.0
      %v9031 = vmax.f32 %v8999, 0.0
      %v9032 = vmax.f32 %v9000, 0.0
      %v9033 = vmax.f32 %v9001, 0.0
      %v9034 = vmax.f32 %v9002, 0.0
      %v9035 = vmax.f32 %v9003, 0.0
      %v9036 = vmax.f32 %v9004, 0.0
      %v9037 = vmax.f32 %v9005, 0.0
      %v9038 = vadd.f32 %v6168, %v9030
      %v9039 = vadd.f32 %v6169, %v9031
      %v9040 = vadd.f32 %v6170, %v9032
      %v9041 = vadd.f32 %v6171, %v9033
      %v9042 = vadd.f32 %v6172, %v9034
      %v9043 = vadd.f32 %v6173, %v9035
      %v9044 = vadd.f32 %v6174, %v9036
      %v9045 = vadd.f32 %v6175, %v9037
      %9046 = vst.msk [vmem:[%s170] sm:$0xff] %vm254, %v9038
      %9047 = vst.msk [vmem:[%s170 + $0x8] sm:$0xff] %vm254, %v9039
      %9048 = vst.msk [vmem:[%s170 + $0x10] sm:$0xff] %vm254, %v9040
      %9049 = vst.msk [vmem:[%s170 + $0x18] sm:$0xff] %vm254, %v9041
      %9050 = vst.msk [vmem:[%s170 + $0x20] sm:$0xff] %vm254, %v9042
      %9051 = vst.msk [vmem:[%s170 + $0x28] sm:$0xff] %vm254, %v9043
      %9052 = vst.msk [vmem:[%s170 + $0x30] sm:$0xff] %vm254, %v9044
      %9053 = vst.msk [vmem:[%s170 + $0x38] sm:$0xff] %vm254, %v9045
      %v9054 = vadd.f32 %v6176, %v9006
      %v9055 = vadd.f32 %v6177, %v9007
      %v9056 = vadd.f32 %v6178, %v9008
      %v9057 = vadd.f32 %v6179, %v9009
      %v9058 = vadd.f32 %v6180, %v9010
      %v9059 = vadd.f32 %v6181, %v9011
      %v9060 = vadd.f32 %v6182, %v9012
      %v9061 = vadd.f32 %v6183, %v9013
      %v9062 = vadd.f32 %v6184, %v9014
      %v9063 = vadd.f32 %v6185, %v9015
      %v9064 = vadd.f32 %v6186, %v9016
      %v9065 = vadd.f32 %v6187, %v9017
      %v9066 = vadd.f32 %v6188, %v9018
      %v9067 = vadd.f32 %v6189, %v9019
      %v9068 = vadd.f32 %v6190, %v9020
      %v9069 = vadd.f32 %v6191, %v9021
      %v9070 = vadd.f32 %v6192, %v9022
      %v9071 = vadd.f32 %v6193, %v9023
      %v9072 = vadd.f32 %v6194, %v9024
      %v9073 = vadd.f32 %v6195, %v9025
      %v9074 = vadd.f32 %v6196, %v9026
      %v9075 = vadd.f32 %v6197, %v9027
      %v9076 = vadd.f32 %v6198, %v9028
      %v9077 = vadd.f32 %v6199, %v9029
      %s9078 = scalar_lea.vmem %s170, 64
      %9079 = vst.msk [vmem:[%s9078] sm:$0xff] %vm254, %v9054
      %9080 = vst.msk [vmem:[%s9078 + $0x8] sm:$0xff] %vm254, %v9055
      %9081 = vst.msk [vmem:[%s9078 + $0x10] sm:$0xff] %vm254, %v9056
      %9082 = vst.msk [vmem:[%s9078 + $0x18] sm:$0xff] %vm254, %v9057
      %9083 = vst.msk [vmem:[%s9078 + $0x20] sm:$0xff] %vm254, %v9058
      %9084 = vst.msk [vmem:[%s9078 + $0x28] sm:$0xff] %vm254, %v9059
      %9085 = vst.msk [vmem:[%s9078 + $0x30] sm:$0xff] %vm254, %v9060
      %9086 = vst.msk [vmem:[%s9078 + $0x38] sm:$0xff] %vm254, %v9061
      %9087 = vst.msk [vmem:[%s9078 + $0x40] sm:$0xff] %vm254, %v9062
      %9088 = vst.msk [vmem:[%s9078 + $0x48] sm:$0xff] %vm254, %v9063
      %9089 = vst.msk [vmem:[%s9078 + $0x50] sm:$0xff] %vm254, %v9064
      %9090 = vst.msk [vmem:[%s9078 + $0x58] sm:$0xff] %vm254, %v9065
      %9091 = vst.msk [vmem:[%s9078 + $0x60] sm:$0xff] %vm254, %v9066
      %9092 = vst.msk [vmem:[%s9078 + $0x68] sm:$0xff] %vm254, %v9067
      %9093 = vst.msk [vmem:[%s9078 + $0x70] sm:$0xff] %vm254, %v9068
      %9094 = vst.msk [vmem:[%s9078 + $0x78] sm:$0xff] %vm254, %v9069
      %9095 = vst.msk [vmem:[%s9078 + $0x80] sm:$0xff] %vm254, %v9070
      %9096 = vst.msk [vmem:[%s9078 + $0x88] sm:$0xff] %vm254, %v9071
      %9097 = vst.msk [vmem:[%s9078 + $0x90] sm:$0xff] %vm254, %v9072
      %9098 = vst.msk [vmem:[%s9078 + $0x98] sm:$0xff] %vm254, %v9073
      %9099 = vst.msk [vmem:[%s9078 + $0xa0] sm:$0xff] %vm254, %v9074
      %9100 = vst.msk [vmem:[%s9078 + $0xa8] sm:$0xff] %vm254, %v9075
      %9101 = vst.msk [vmem:[%s9078 + $0xb0] sm:$0xff] %vm254, %v9076
      %9102 = vst.msk [vmem:[%s9078 + $0xb8] sm:$0xff] %vm254, %v9077
      %v9103 = vld [vmem:[%s170] sm:$0xff]
      %v9104 = vld [vmem:[%s170 + $0x8] sm:$0xff]
      %v9105 = vld [vmem:[%s170 + $0x10] sm:$0xff]
      %v9106 = vld [vmem:[%s170 + $0x18] sm:$0xff]
      %v9107 = vld [vmem:[%s170 + $0x20] sm:$0xff]
      %v9108 = vld [vmem:[%s170 + $0x28] sm:$0xff]
      %v9109 = vld [vmem:[%s170 + $0x30] sm:$0xff]
      %v9110 = vld [vmem:[%s170 + $0x38] sm:$0xff]
      %v9111 = vld [vmem:[%s170 + $0x40] sm:$0xff]
      %v9112 = vld [vmem:[%s170 + $0x48] sm:$0xff]
      %v9113 = vld [vmem:[%s170 + $0x50] sm:$0xff]
      %v9114 = vld [vmem:[%s170 + $0x58] sm:$0xff]
      %v9115 = vld [vmem:[%s170 + $0x60] sm:$0xff]
      %v9116 = vld [vmem:[%s170 + $0x68] sm:$0xff]
      %v9117 = vld [vmem:[%s170 + $0x70] sm:$0xff]
      %v9118 = vld [vmem:[%s170 + $0x78] sm:$0xff]
      %v9119 = vld [vmem:[%s170 + $0x80] sm:$0xff]
      %v9120 = vld [vmem:[%s170 + $0x88] sm:$0xff]
      %v9121 = vld [vmem:[%s170 + $0x90] sm:$0xff]
      %v9122 = vld [vmem:[%s170 + $0x98] sm:$0xff]
      %v9123 = vld [vmem:[%s170 + $0xa0] sm:$0xff]
      %v9124 = vld [vmem:[%s170 + $0xa8] sm:$0xff]
      %v9125 = vld [vmem:[%s170 + $0xb0] sm:$0xff]
      %v9126 = vld [vmem:[%s170 + $0xb8] sm:$0xff]
      %v9127 = vld [vmem:[%s170 + $0xc0] sm:$0xff]
      %v9128 = vld [vmem:[%s170 + $0xc8] sm:$0xff]
      %v9129 = vld [vmem:[%s170 + $0xd0] sm:$0xff]
      %v9130 = vld [vmem:[%s170 + $0xd8] sm:$0xff]
      %v9131 = vld [vmem:[%s170 + $0xe0] sm:$0xff]
      %v9132 = vld [vmem:[%s170 + $0xe8] sm:$0xff]
      %v9133 = vld [vmem:[%s170 + $0xf0] sm:$0xff]
      %v9134 = vld [vmem:[%s170 + $0xf8] sm:$0xff]
      %v9135 = vpack.c.bf16 %v9104, %v9103
      %v9136 = vpack.c.bf16 %v9106, %v9105
      %v9137 = vpack.c.bf16 %v9108, %v9107
      %v9138 = vpack.c.bf16 %v9110, %v9109
      %v9139 = vpack.c.bf16 %v9112, %v9111
      %v9140 = vpack.c.bf16 %v9114, %v9113
      %v9141 = vpack.c.bf16 %v9116, %v9115
      %v9142 = vpack.c.bf16 %v9118, %v9117
      %v9143 = vpack.c.bf16 %v9120, %v9119
      %v9144 = vpack.c.bf16 %v9122, %v9121
      %v9145 = vpack.c.bf16 %v9124, %v9123
      %v9146 = vpack.c.bf16 %v9126, %v9125
      %v9147 = vpack.c.bf16 %v9128, %v9127
      %v9148 = vpack.c.bf16 %v9130, %v9129
      %v9149 = vpack.c.bf16 %v9132, %v9131
      %v9150 = vpack.c.bf16 %v9134, %v9133
      %v9167 = vunpack.c.l.b16 %v9135
      %v9168 = vunpack.c.h.b16 %v9135
      %v9169 = vunpack.c.l.b16 %v9136
      %v9170 = vunpack.c.h.b16 %v9136
      %v9171 = vunpack.c.l.b16 %v9137
      %v9172 = vunpack.c.h.b16 %v9137
      %v9173 = vunpack.c.l.b16 %v9138
      %v9174 = vunpack.c.h.b16 %v9138
      %v9175 = vunpack.c.l.b16 %v9139
      %v9176 = vunpack.c.h.b16 %v9139
      %v9177 = vunpack.c.l.b16 %v9140
      %v9178 = vunpack.c.h.b16 %v9140
      %v9179 = vunpack.c.l.b16 %v9141
      %v9180 = vunpack.c.h.b16 %v9141
      %v9181 = vunpack.c.l.b16 %v9142
      %v9182 = vunpack.c.h.b16 %v9142
      %v9183 = vunpack.c.l.b16 %v9143
      %v9184 = vunpack.c.h.b16 %v9143
      %v9185 = vunpack.c.l.b16 %v9144
      %v9186 = vunpack.c.h.b16 %v9144
      %v9187 = vunpack.c.l.b16 %v9145
      %v9188 = vunpack.c.h.b16 %v9145
      %v9189 = vunpack.c.l.b16 %v9146
      %v9190 = vunpack.c.h.b16 %v9146
      %v9191 = vunpack.c.l.b16 %v9147
      %v9192 = vunpack.c.h.b16 %v9147
      %v9193 = vunpack.c.l.b16 %v9148
      %v9194 = vunpack.c.h.b16 %v9148
      %v9195 = vunpack.c.l.b16 %v9149
      %v9196 = vunpack.c.h.b16 %v9149
      %v9197 = vunpack.c.l.b16 %v9150
      %v9198 = vunpack.c.h.b16 %v9150
      %v9199 = vpack.c.b16 %v9167, %v9167
      %v9200 = vpack.c.b16 %v9168, %v9168
      %v9201 = vpack.c.b16 %v9169, %v9169
      %v9202 = vpack.c.b16 %v9170, %v9170
      %v9203 = vpack.c.b16 %v9171, %v9171
      %v9204 = vpack.c.b16 %v9172, %v9172
      %v9205 = vpack.c.b16 %v9173, %v9173
      %v9206 = vpack.c.b16 %v9174, %v9174
      %v9207 = vpack.c.b16 %v9175, %v9175
      %v9208 = vpack.c.b16 %v9176, %v9176
      %v9209 = vpack.c.b16 %v9177, %v9177
      %v9210 = vpack.c.b16 %v9178, %v9178
      %v9211 = vpack.c.b16 %v9179, %v9179
      %v9212 = vpack.c.b16 %v9180, %v9180
      %v9213 = vpack.c.b16 %v9181, %v9181
      %v9214 = vpack.c.b16 %v9182, %v9182
      %v9215 = vpack.c.b16 %v9183, %v9183
      %v9216 = vpack.c.b16 %v9184, %v9184
      %v9217 = vpack.c.b16 %v9185, %v9185
      %v9218 = vpack.c.b16 %v9186, %v9186
      %v9219 = vpack.c.b16 %v9187, %v9187
      %v9220 = vpack.c.b16 %v9188, %v9188
      %v9221 = vpack.c.b16 %v9189, %v9189
      %v9222 = vpack.c.b16 %v9190, %v9190
      %v9223 = vpack.c.b16 %v9191, %v9191
      %v9224 = vpack.c.b16 %v9192, %v9192
      %v9225 = vpack.c.b16 %v9193, %v9193
      %v9226 = vpack.c.b16 %v9194, %v9194
      %v9227 = vpack.c.b16 %v9195, %v9195
      %v9228 = vpack.c.b16 %v9196, %v9196
      %v9229 = vpack.c.b16 %v9197, %v9197
      %v9230 = vpack.c.b16 %v9198, %v9198
      %9263 = vst.msk [vmem:[#allocation2 + $0x8] sm:$0xf] %vm172, %v9199
      %9264 = vst.msk [vmem:[#allocation2 + $0xc] sm:$0xf] %vm172, %v9200
      %9265 = vst.msk [vmem:[#allocation2 + $0x1c] sm:$0xf] %vm172, %v9201
      %9266 = vst.msk [vmem:[#allocation2 + $0x20] sm:$0xf] %vm172, %v9202
      %9267 = vst.msk [vmem:[#allocation2 + $0x30] sm:$0xf] %vm172, %v9203
      %9268 = vst.msk [vmem:[#allocation2 + $0x34] sm:$0xf] %vm172, %v9204
      %9269 = vst.msk [vmem:[#allocation2 + $0x44] sm:$0xf] %vm172, %v9205
      %9270 = vst.msk [vmem:[#allocation2 + $0x48] sm:$0xf] %vm172, %v9206
      %9271 = vst.msk [vmem:[#allocation2 + $0x58] sm:$0xf] %vm172, %v9207
      %9272 = vst.msk [vmem:[#allocation2 + $0x5c] sm:$0xf] %vm172, %v9208
      %9273 = vst.msk [vmem:[#allocation2 + $0x6c] sm:$0xf] %vm172, %v9209
      %9274 = vst.msk [vmem:[#allocation2 + $0x70] sm:$0xf] %vm172, %v9210
      %9275 = vst.msk [vmem:[#allocation2 + $0x80] sm:$0xf] %vm172, %v9211
      %9276 = vst.msk [vmem:[#allocation2 + $0x84] sm:$0xf] %vm172, %v9212
      %9277 = vst.msk [vmem:[#allocation2 + $0x94] sm:$0xf] %vm172, %v9213
      %9278 = vst.msk [vmem:[#allocation2 + $0x98] sm:$0xf] %vm172, %v9214
      %9279 = vst.msk [vmem:[#allocation2 + $0xa8] sm:$0xf] %vm172, %v9215
      %9280 = vst.msk [vmem:[#allocation2 + $0xac] sm:$0xf] %vm172, %v9216
      %9281 = vst.msk [vmem:[#allocation2 + $0xbc] sm:$0xf] %vm172, %v9217
      %9282 = vst.msk [vmem:[#allocation2 + $0xc0] sm:$0xf] %vm172, %v9218
      %9283 = vst.msk [vmem:[#allocation2 + $0xd0] sm:$0xf] %vm172, %v9219
      %9284 = vst.msk [vmem:[#allocation2 + $0xd4] sm:$0xf] %vm172, %v9220
      %9285 = vst.msk [vmem:[#allocation2 + $0xe4] sm:$0xf] %vm172, %v9221
      %9286 = vst.msk [vmem:[#allocation2 + $0xe8] sm:$0xf] %vm172, %v9222
      %9287 = vst.msk [vmem:[#allocation2 + $0xf8] sm:$0xf] %vm172, %v9223
      %9288 = vst.msk [vmem:[#allocation2 + $0xfc] sm:$0xf] %vm172, %v9224
      %9289 = vst.msk [vmem:[#allocation2 + $0x10c] sm:$0xf] %vm172, %v9225
      %9290 = vst.msk [vmem:[#allocation2 + $0x110] sm:$0xf] %vm172, %v9226
      %9291 = vst.msk [vmem:[#allocation2 + $0x120] sm:$0xf] %vm172, %v9227
      %9292 = vst.msk [vmem:[#allocation2 + $0x124] sm:$0xf] %vm172, %v9228
      %9293 = vst.msk [vmem:[#allocation2 + $0x134] sm:$0xf] %vm172, %v9229
      %9294 = vst.msk [vmem:[#allocation2 + $0x138] sm:$0xf] %vm172, %v9230
      %v9295 = vld [vmem:[#allocation2 + $0x4] sm:$0x8]
      %v9296 = vld [vmem:[#allocation2 + $0x8] sm:$0xf]
      %v9297 = vld [vmem:[#allocation2 + $0xc] sm:$0x7]
      %v9298 = vld [vmem:[#allocation2 + $0x18] sm:$0x8]
      %v9299 = vld [vmem:[#allocation2 + $0x1c] sm:$0xf]
      %v9300 = vld [vmem:[#allocation2 + $0x20] sm:$0x7]
      %v9301 = vld [vmem:[#allocation2 + $0x2c] sm:$0x8]
      %v9302 = vld [vmem:[#allocation2 + $0x30] sm:$0xf]
      %v9303 = vld [vmem:[#allocation2 + $0x34] sm:$0x7]
      %v9304 = vld [vmem:[#allocation2 + $0x40] sm:$0x8]
      %v9305 = vld [vmem:[#allocation2 + $0x44] sm:$0xf]
      %v9306 = vld [vmem:[#allocation2 + $0x48] sm:$0x7]
      %v9307 = vld [vmem:[#allocation2 + $0x54] sm:$0x8]
      %v9308 = vld [vmem:[#allocation2 + $0x58] sm:$0xf]
      %v9309 = vld [vmem:[#allocation2 + $0x5c] sm:$0x7]
      %v9310 = vld [vmem:[#allocation2 + $0x68] sm:$0x8]
      %v9311 = vld [vmem:[#allocation2 + $0x6c] sm:$0xf]
      %v9312 = vld [vmem:[#allocation2 + $0x70] sm:$0x7]
      %v9313 = vld [vmem:[#allocation2 + $0x7c] sm:$0x8]
      %v9314 = vld [vmem:[#allocation2 + $0x80] sm:$0xf]
      %v9315 = vld [vmem:[#allocation2 + $0x84] sm:$0x7]
      %v9316 = vld [vmem:[#allocation2 + $0x90] sm:$0x8]
      %v9317 = vld [vmem:[#allocation2 + $0x94] sm:$0xf]
      %v9318 = vld [vmem:[#allocation2 + $0x98] sm:$0x7]
      %v9319 = vld [vmem:[#allocation2 + $0xa4] sm:$0x8]
      %v9320 = vld [vmem:[#allocation2 + $0xa8] sm:$0xf]
      %v9321 = vld [vmem:[#allocation2 + $0xac] sm:$0x7]
      %v9322 = vld [vmem:[#allocation2 + $0xb8] sm:$0x8]
      %v9323 = vld [vmem:[#allocation2 + $0xbc] sm:$0xf]
      %v9324 = vld [vmem:[#allocation2 + $0xc0] sm:$0x7]
      %v9325 = vld [vmem:[#allocation2 + $0xcc] sm:$0x8]
      %v9326 = vld [vmem:[#allocation2 + $0xd0] sm:$0xf]
      %v9327 = vld [vmem:[#allocation2 + $0xd4] sm:$0x7]
      %v9328 = vld [vmem:[#allocation2 + $0xe0] sm:$0x8]
      %v9329 = vld [vmem:[#allocation2 + $0xe4] sm:$0xf]
      %v9330 = vld [vmem:[#allocation2 + $0xe8] sm:$0x7]
      %v9331 = vld [vmem:[#allocation2 + $0xf4] sm:$0x8]
      %v9332 = vld [vmem:[#allocation2 + $0xf8] sm:$0xf]
      %v9333 = vld [vmem:[#allocation2 + $0xfc] sm:$0x7]
      %v9334 = vld [vmem:[#allocation2 + $0x108] sm:$0x8]
      %v9335 = vld [vmem:[#allocation2 + $0x10c] sm:$0xf]
      %v9336 = vld [vmem:[#allocation2 + $0x110] sm:$0x7]
      %v9337 = vld [vmem:[#allocation2 + $0x11c] sm:$0x8]
      %v9338 = vld [vmem:[#allocation2 + $0x120] sm:$0xf]
      %v9339 = vld [vmem:[#allocation2 + $0x124] sm:$0x7]
      %v9340 = vld [vmem:[#allocation2 + $0x130] sm:$0x8]
      %v9341 = vld [vmem:[#allocation2 + $0x134] sm:$0xf]
      %v9342 = vld [vmem:[#allocation2 + $0x138] sm:$0x7]
      %v9391 = vrot.slane %v9295, 7
      %v9392 = vrot.slane %v9391, 4
      %v9393 = vrot.slane %v9296, 7
      %v9394 = vsel %vm577, %v9392, %v9393
      %v9395 = vrot.slane %v9393, 4
      %v9396 = vrot.slane %v9297, 7
      %v9397 = vsel %vm577, %v9395, %v9396
      %v9398 = vrot.slane %v9298, 7
      %v9399 = vrot.slane %v9398, 4
      %v9400 = vrot.slane %v9299, 7
      %v9401 = vsel %vm577, %v9399, %v9400
      %v9402 = vrot.slane %v9400, 4
      %v9403 = vrot.slane %v9300, 7
      %v9404 = vsel %vm577, %v9402, %v9403
      %v9405 = vrot.slane %v9301, 7
      %v9406 = vrot.slane %v9405, 4
      %v9407 = vrot.slane %v9302, 7
      %v9408 = vsel %vm577, %v9406, %v9407
      %v9409 = vrot.slane %v9407, 4
      %v9410 = vrot.slane %v9303, 7
      %v9411 = vsel %vm577, %v9409, %v9410
      %v9412 = vrot.slane %v9304, 7
      %v9413 = vrot.slane %v9412, 4
      %v9414 = vrot.slane %v9305, 7
      %v9415 = vsel %vm577, %v9413, %v9414
      %v9416 = vrot.slane %v9414, 4
      %v9417 = vrot.slane %v9306, 7
      %v9418 = vsel %vm577, %v9416, %v9417
      %v9419 = vrot.slane %v9307, 7
      %v9420 = vrot.slane %v9419, 4
      %v9421 = vrot.slane %v9308, 7
      %v9422 = vsel %vm577, %v9420, %v9421
      %v9423 = vrot.slane %v9421, 4
      %v9424 = vrot.slane %v9309, 7
      %v9425 = vsel %vm577, %v9423, %v9424
      %v9426 = vrot.slane %v9310, 7
      %v9427 = vrot.slane %v9426, 4
      %v9428 = vrot.slane %v9311, 7
      %v9429 = vsel %vm577, %v9427, %v9428
      %v9430 = vrot.slane %v9428, 4
      %v9431 = vrot.slane %v9312, 7
      %v9432 = vsel %vm577, %v9430, %v9431
      %v9433 = vrot.slane %v9313, 7
      %v9434 = vrot.slane %v9433, 4
      %v9435 = vrot.slane %v9314, 7
      %v9436 = vsel %vm577, %v9434, %v9435
      %v9437 = vrot.slane %v9435, 4
      %v9438 = vrot.slane %v9315, 7
      %v9439 = vsel %vm577, %v9437, %v9438
      %v9440 = vrot.slane %v9316, 7
      %v9441 = vrot.slane %v9440, 4
      %v9442 = vrot.slane %v9317, 7
      %v9443 = vsel %vm577, %v9441, %v9442
      %v9444 = vrot.slane %v9442, 4
      %v9445 = vrot.slane %v9318, 7
      %v9446 = vsel %vm577, %v9444, %v9445
      %v9447 = vrot.slane %v9319, 7
      %v9448 = vrot.slane %v9447, 4
      %v9449 = vrot.slane %v9320, 7
      %v9450 = vsel %vm577, %v9448, %v9449
      %v9451 = vrot.slane %v9449, 4
      %v9452 = vrot.slane %v9321, 7
      %v9453 = vsel %vm577, %v9451, %v9452
      %v9454 = vrot.slane %v9322, 7
      %v9455 = vrot.slane %v9454, 4
      %v9456 = vrot.slane %v9323, 7
      %v9457 = vsel %vm577, %v9455, %v9456
      %v9458 = vrot.slane %v9456, 4
      %v9459 = vrot.slane %v9324, 7
      %v9460 = vsel %vm577, %v9458, %v9459
      %v9461 = vrot.slane %v9325, 7
      %v9462 = vrot.slane %v9461, 4
      %v9463 = vrot.slane %v9326, 7
      %v9464 = vsel %vm577, %v9462, %v9463
      %v9465 = vrot.slane %v9463, 4
      %v9466 = vrot.slane %v9327, 7
      %v9467 = vsel %vm577, %v9465, %v9466
      %v9468 = vrot.slane %v9328, 7
      %v9469 = vrot.slane %v9468, 4
      %v9470 = vrot.slane %v9329, 7
      %v9471 = vsel %vm577, %v9469, %v9470
      %v9472 = vrot.slane %v9470, 4
      %v9473 = vrot.slane %v9330, 7
      %v9474 = vsel %vm577, %v9472, %v9473
      %v9475 = vrot.slane %v9331, 7
      %v9476 = vrot.slane %v9475, 4
      %v9477 = vrot.slane %v9332, 7
      %v9478 = vsel %vm577, %v9476, %v9477
      %v9479 = vrot.slane %v9477, 4
      %v9480 = vrot.slane %v9333, 7
      %v9481 = vsel %vm577, %v9479, %v9480
      %v9482 = vrot.slane %v9334, 7
      %v9483 = vrot.slane %v9482, 4
      %v9484 = vrot.slane %v9335, 7
      %v9485 = vsel %vm577, %v9483, %v9484
      %v9486 = vrot.slane %v9484, 4
      %v9487 = vrot.slane %v9336, 7
      %v9488 = vsel %vm577, %v9486, %v9487
      %v9489 = vrot.slane %v9337, 7
      %v9490 = vrot.slane %v9489, 4
      %v9491 = vrot.slane %v9338, 7
      %v9492 = vsel %vm577, %v9490, %v9491
      %v9493 = vrot.slane %v9491, 4
      %v9494 = vrot.slane %v9339, 7
      %v9495 = vsel %vm577, %v9493, %v9494
      %v9496 = vrot.slane %v9340, 7
      %v9497 = vrot.slane %v9496, 4
      %v9498 = vrot.slane %v9341, 7
      %v9499 = vsel %vm577, %v9497, %v9498
      %v9500 = vrot.slane %v9498, 4
      %v9501 = vrot.slane %v9342, 7
      %v9502 = vsel %vm577, %v9500, %v9501
      %s9503 = scalar_lea.vmem %s1, 60
      %v9504 = vld [vmem:[%s9503] sm:$0xf]
      %v9505 = vld [vmem:[#allocation2 + $0xc] sm:$0xf]
      %v9506 = vld [vmem:[#allocation2 + $0x20] sm:$0xf]
      %v9507 = vld [vmem:[#allocation2 + $0x34] sm:$0xf]
      %v9508 = vld [vmem:[#allocation2 + $0x48] sm:$0xf]
      %v9509 = vld [vmem:[#allocation2 + $0x5c] sm:$0xf]
      %v9510 = vld [vmem:[#allocation2 + $0x70] sm:$0xf]
      %v9511 = vld [vmem:[#allocation2 + $0x84] sm:$0xf]
      %v9512 = vld [vmem:[#allocation2 + $0x98] sm:$0xf]
      %v9513 = vld [vmem:[#allocation2 + $0xac] sm:$0xf]
      %v9514 = vld [vmem:[#allocation2 + $0xc0] sm:$0xf]
      %v9515 = vld [vmem:[#allocation2 + $0xd4] sm:$0xf]
      %v9516 = vld [vmem:[#allocation2 + $0xe8] sm:$0xf]
      %v9517 = vld [vmem:[#allocation2 + $0xfc] sm:$0xf]
      %v9518 = vld [vmem:[#allocation2 + $0x110] sm:$0xf]
      %v9519 = vld [vmem:[#allocation2 + $0x124] sm:$0xf]
      %v9520 = vld [vmem:[#allocation2 + $0x138] sm:$0xf]
      %v9522 = vshrl.u32 %v9295, 16
      %v9524 = vrot.slane %v9522, 7
      %v9525 = vrot.slane %v9524, 4
      %v9527 = vshrl.u32 %v9296, 16
      %v9529 = vrot.slane %v9527, 7
      %v9530 = vshll.u32 %v9296, 16
      %v9532 = vor.u32 %v9529, %v9530
      %v9533 = vsel %vm709, %v9525, %v9532
      %v9534 = vrot.slane %v9529, 4
      %v9536 = vshrl.u32 %v9505, 16
      %v9538 = vrot.slane %v9536, 7
      %v9539 = vshll.u32 %v9505, 16
      %v9541 = vor.u32 %v9538, %v9539
      %v9542 = vsel %vm709, %v9534, %v9541
      %v9544 = vshrl.u32 %v9298, 16
      %v9546 = vrot.slane %v9544, 7
      %v9547 = vrot.slane %v9546, 4
      %v9549 = vshrl.u32 %v9299, 16
      %v9551 = vrot.slane %v9549, 7
      %v9552 = vshll.u32 %v9299, 16
      %v9554 = vor.u32 %v9551, %v9552
      %v9555 = vsel %vm709, %v9547, %v9554
      %v9556 = vrot.slane %v9551, 4
      %v9558 = vshrl.u32 %v9506, 16
      %v9560 = vrot.slane %v9558, 7
      %v9561 = vshll.u32 %v9506, 16
      %v9563 = vor.u32 %v9560, %v9561
      %v9564 = vsel %vm709, %v9556, %v9563
      %v9566 = vshrl.u32 %v9301, 16
      %v9568 = vrot.slane %v9566, 7
      %v9569 = vrot.slane %v9568, 4
      %v9571 = vshrl.u32 %v9302, 16
      %v9573 = vrot.slane %v9571, 7
      %v9574 = vshll.u32 %v9302, 16
      %v9576 = vor.u32 %v9573, %v9574
      %v9577 = vsel %vm709, %v9569, %v9576
      %v9578 = vrot.slane %v9573, 4
      %v9580 = vshrl.u32 %v9507, 16
      %v9582 = vrot.slane %v9580, 7
      %v9583 = vshll.u32 %v9507, 16
      %v9585 = vor.u32 %v9582, %v9583
      %v9586 = vsel %vm709, %v9578, %v9585
      %v9588 = vshrl.u32 %v9304, 16
      %v9590 = vrot.slane %v9588, 7
      %v9591 = vrot.slane %v9590, 4
      %v9593 = vshrl.u32 %v9305, 16
      %v9595 = vrot.slane %v9593, 7
      %v9596 = vshll.u32 %v9305, 16
      %v9598 = vor.u32 %v9595, %v9596
      %v9599 = vsel %vm709, %v9591, %v9598
      %v9600 = vrot.slane %v9595, 4
      %v9602 = vshrl.u32 %v9508, 16
      %v9604 = vrot.slane %v9602, 7
      %v9605 = vshll.u32 %v9508, 16
      %v9607 = vor.u32 %v9604, %v9605
      %v9608 = vsel %vm709, %v9600, %v9607
      %v9610 = vshrl.u32 %v9307, 16
      %v9612 = vrot.slane %v9610, 7
      %v9613 = vrot.slane %v9612, 4
      %v9615 = vshrl.u32 %v9308, 16
      %v9617 = vrot.slane %v9615, 7
      %v9618 = vshll.u32 %v9308, 16
      %v9620 = vor.u32 %v9617, %v9618
      %v9621 = vsel %vm709, %v9613, %v9620
      %v9622 = vrot.slane %v9617, 4
      %v9624 = vshrl.u32 %v9509, 16
      %v9626 = vrot.slane %v9624, 7
      %v9627 = vshll.u32 %v9509, 16
      %v9629 = vor.u32 %v9626, %v9627
      %v9630 = vsel %vm709, %v9622, %v9629
      %v9632 = vshrl.u32 %v9310, 16
      %v9634 = vrot.slane %v9632, 7
      %v9635 = vrot.slane %v9634, 4
      %v9637 = vshrl.u32 %v9311, 16
      %v9639 = vrot.slane %v9637, 7
      %v9640 = vshll.u32 %v9311, 16
      %v9642 = vor.u32 %v9639, %v9640
      %v9643 = vsel %vm709, %v9635, %v9642
      %v9644 = vrot.slane %v9639, 4
      %v9646 = vshrl.u32 %v9510, 16
      %v9648 = vrot.slane %v9646, 7
      %v9649 = vshll.u32 %v9510, 16
      %v9651 = vor.u32 %v9648, %v9649
      %v9652 = vsel %vm709, %v9644, %v9651
      %v9654 = vshrl.u32 %v9313, 16
      %v9656 = vrot.slane %v9654, 7
      %v9657 = vrot.slane %v9656, 4
      %v9659 = vshrl.u32 %v9314, 16
      %v9661 = vrot.slane %v9659, 7
      %v9662 = vshll.u32 %v9314, 16
      %v9664 = vor.u32 %v9661, %v9662
      %v9665 = vsel %vm709, %v9657, %v9664
      %v9666 = vrot.slane %v9661, 4
      %v9668 = vshrl.u32 %v9511, 16
      %v9670 = vrot.slane %v9668, 7
      %v9671 = vshll.u32 %v9511, 16
      %v9673 = vor.u32 %v9670, %v9671
      %v9674 = vsel %vm709, %v9666, %v9673
      %v9676 = vshrl.u32 %v9316, 16
      %v9678 = vrot.slane %v9676, 7
      %v9679 = vrot.slane %v9678, 4
      %v9681 = vshrl.u32 %v9317, 16
      %v9683 = vrot.slane %v9681, 7
      %v9684 = vshll.u32 %v9317, 16
      %v9686 = vor.u32 %v9683, %v9684
      %v9687 = vsel %vm709, %v9679, %v9686
      %v9688 = vrot.slane %v9683, 4
      %v9690 = vshrl.u32 %v9512, 16
      %v9692 = vrot.slane %v9690, 7
      %v9693 = vshll.u32 %v9512, 16
      %v9695 = vor.u32 %v9692, %v9693
      %v9696 = vsel %vm709, %v9688, %v9695
      %v9698 = vshrl.u32 %v9319, 16
      %v9700 = vrot.slane %v9698, 7
      %v9701 = vrot.slane %v9700, 4
      %v9703 = vshrl.u32 %v9320, 16
      %v9705 = vrot.slane %v9703, 7
      %v9706 = vshll.u32 %v9320, 16
      %v9708 = vor.u32 %v9705, %v9706
      %v9709 = vsel %vm709, %v9701, %v9708
      %v9710 = vrot.slane %v9705, 4
      %v9712 = vshrl.u32 %v9513, 16
      %v9714 = vrot.slane %v9712, 7
      %v9715 = vshll.u32 %v9513, 16
      %v9717 = vor.u32 %v9714, %v9715
      %v9718 = vsel %vm709, %v9710, %v9717
      %v9720 = vshrl.u32 %v9322, 16
      %v9722 = vrot.slane %v9720, 7
      %v9723 = vrot.slane %v9722, 4
      %v9725 = vshrl.u32 %v9323, 16
      %v9727 = vrot.slane %v9725, 7
      %v9728 = vshll.u32 %v9323, 16
      %v9730 = vor.u32 %v9727, %v9728
      %v9731 = vsel %vm709, %v9723, %v9730
      %v9732 = vrot.slane %v9727, 4
      %v9734 = vshrl.u32 %v9514, 16
      %v9736 = vrot.slane %v9734, 7
      %v9737 = vshll.u32 %v9514, 16
      %v9739 = vor.u32 %v9736, %v9737
      %v9740 = vsel %vm709, %v9732, %v9739
      %v9742 = vshrl.u32 %v9325, 16
      %v9744 = vrot.slane %v9742, 7
      %v9745 = vrot.slane %v9744, 4
      %v9747 = vshrl.u32 %v9326, 16
      %v9749 = vrot.slane %v9747, 7
      %v9750 = vshll.u32 %v9326, 16
      %v9752 = vor.u32 %v9749, %v9750
      %v9753 = vsel %vm709, %v9745, %v9752
      %v9754 = vrot.slane %v9749, 4
      %v9756 = vshrl.u32 %v9515, 16
      %v9758 = vrot.slane %v9756, 7
      %v9759 = vshll.u32 %v9515, 16
      %v9761 = vor.u32 %v9758, %v9759
      %v9762 = vsel %vm709, %v9754, %v9761
      %v9764 = vshrl.u32 %v9328, 16
      %v9766 = vrot.slane %v9764, 7
      %v9767 = vrot.slane %v9766, 4
      %v9769 = vshrl.u32 %v9329, 16
      %v9771 = vrot.slane %v9769, 7
      %v9772 = vshll.u32 %v9329, 16
      %v9774 = vor.u32 %v9771, %v9772
      %v9775 = vsel %vm709, %v9767, %v9774
      %v9776 = vrot.slane %v9771, 4
      %v9778 = vshrl.u32 %v9516, 16
      %v9780 = vrot.slane %v9778, 7
      %v9781 = vshll.u32 %v9516, 16
      %v9783 = vor.u32 %v9780, %v9781
      %v9784 = vsel %vm709, %v9776, %v9783
      %v9786 = vshrl.u32 %v9331, 16
      %v9788 = vrot.slane %v9786, 7
      %v9789 = vrot.slane %v9788, 4
      %v9791 = vshrl.u32 %v9332, 16
      %v9793 = vrot.slane %v9791, 7
      %v9794 = vshll.u32 %v9332, 16
      %v9796 = vor.u32 %v9793, %v9794
      %v9797 = vsel %vm709, %v9789, %v9796
      %v9798 = vrot.slane %v9793, 4
      %v9800 = vshrl.u32 %v9517, 16
      %v9802 = vrot.slane %v9800, 7
      %v9803 = vshll.u32 %v9517, 16
      %v9805 = vor.u32 %v9802, %v9803
      %v9806 = vsel %vm709, %v9798, %v9805
      %v9808 = vshrl.u32 %v9334, 16
      %v9810 = vrot.slane %v9808, 7
      %v9811 = vrot.slane %v9810, 4
      %v9813 = vshrl.u32 %v9335, 16
      %v9815 = vrot.slane %v9813, 7
      %v9816 = vshll.u32 %v9335, 16
      %v9818 = vor.u32 %v9815, %v9816
      %v9819 = vsel %vm709, %v9811, %v9818
      %v9820 = vrot.slane %v9815, 4
      %v9822 = vshrl.u32 %v9518, 16
      %v9824 = vrot.slane %v9822, 7
      %v9825 = vshll.u32 %v9518, 16
      %v9827 = vor.u32 %v9824, %v9825
      %v9828 = vsel %vm709, %v9820, %v9827
      %v9830 = vshrl.u32 %v9337, 16
      %v9832 = vrot.slane %v9830, 7
      %v9833 = vrot.slane %v9832, 4
      %v9835 = vshrl.u32 %v9338, 16
      %v9837 = vrot.slane %v9835, 7
      %v9838 = vshll.u32 %v9338, 16
      %v9840 = vor.u32 %v9837, %v9838
      %v9841 = vsel %vm709, %v9833, %v9840
      %v9842 = vrot.slane %v9837, 4
      %v9844 = vshrl.u32 %v9519, 16
      %v9846 = vrot.slane %v9844, 7
      %v9847 = vshll.u32 %v9519, 16
      %v9849 = vor.u32 %v9846, %v9847
      %v9850 = vsel %vm709, %v9842, %v9849
      %v9852 = vshrl.u32 %v9340, 16
      %v9854 = vrot.slane %v9852, 7
      %v9855 = vrot.slane %v9854, 4
      %v9857 = vshrl.u32 %v9341, 16
      %v9859 = vrot.slane %v9857, 7
      %v9860 = vshll.u32 %v9341, 16
      %v9862 = vor.u32 %v9859, %v9860
      %v9863 = vsel %vm709, %v9855, %v9862
      %v9864 = vrot.slane %v9859, 4
      %v9866 = vshrl.u32 %v9520, 16
      %v9868 = vrot.slane %v9866, 7
      %v9869 = vshll.u32 %v9520, 16
      %v9871 = vor.u32 %v9868, %v9869
      %v9872 = vsel %vm709, %v9864, %v9871
      %s9873 = scalar_lea.vmem %s1, 64
      %v9874 = vld [vmem:[%s9873] sm:$0xf]
      %v9875 = vunpack.c.l.b16 %v9533
      %v9876 = vunpack.c.l.b16 %v9542
      %v9877 = vunpack.c.l.b16 %v9555
      %v9878 = vunpack.c.l.b16 %v9564
      %v9879 = vunpack.c.l.b16 %v9577
      %v9880 = vunpack.c.l.b16 %v9586
      %v9881 = vunpack.c.l.b16 %v9599
      %v9882 = vunpack.c.l.b16 %v9608
      %v9883 = vunpack.c.l.b16 %v9621
      %v9884 = vunpack.c.l.b16 %v9630
      %v9885 = vunpack.c.l.b16 %v9643
      %v9886 = vunpack.c.l.b16 %v9652
      %v9887 = vunpack.c.l.b16 %v9665
      %v9888 = vunpack.c.l.b16 %v9674
      %v9889 = vunpack.c.l.b16 %v9687
      %v9890 = vunpack.c.l.b16 %v9696
      %v9891 = vunpack.c.l.b16 %v9709
      %v9892 = vunpack.c.l.b16 %v9718
      %v9893 = vunpack.c.l.b16 %v9731
      %v9894 = vunpack.c.l.b16 %v9740
      %v9895 = vunpack.c.l.b16 %v9753
      %v9896 = vunpack.c.l.b16 %v9762
      %v9897 = vunpack.c.l.b16 %v9775
      %v9898 = vunpack.c.l.b16 %v9784
      %v9899 = vunpack.c.l.b16 %v9797
      %v9900 = vunpack.c.l.b16 %v9806
      %v9901 = vunpack.c.l.b16 %v9819
      %v9902 = vunpack.c.l.b16 %v9828
      %v9903 = vunpack.c.l.b16 %v9841
      %v9904 = vunpack.c.l.b16 %v9850
      %v9905 = vunpack.c.l.b16 %v9863
      %v9906 = vunpack.c.l.b16 %v9872
      %v9907 = vpack.c.b16 %v9876, %v9875
      %v9908 = vpack.c.b16 %v9878, %v9877
      %v9909 = vpack.c.b16 %v9880, %v9879
      %v9910 = vpack.c.b16 %v9882, %v9881
      %v9911 = vpack.c.b16 %v9884, %v9883
      %v9912 = vpack.c.b16 %v9886, %v9885
      %v9913 = vpack.c.b16 %v9888, %v9887
      %v9914 = vpack.c.b16 %v9890, %v9889
      %v9915 = vpack.c.b16 %v9892, %v9891
      %v9916 = vpack.c.b16 %v9894, %v9893
      %v9917 = vpack.c.b16 %v9896, %v9895
      %v9918 = vpack.c.b16 %v9898, %v9897
      %v9919 = vpack.c.b16 %v9900, %v9899
      %v9920 = vpack.c.b16 %v9902, %v9901
      %v9921 = vpack.c.b16 %v9904, %v9903
      %v9922 = vpack.c.b16 %v9906, %v9905
      %v9924 = vsel %vm254, %v9907, 0
      %v9927 = vsel %vm254, %v9908, 0
      %v9930 = vsel %vm254, %v9909, 0
      %v9933 = vsel %vm254, %v9910, 0
      %v9936 = vsel %vm254, %v9911, 0
      %v9939 = vsel %vm254, %v9912, 0
      %v9942 = vsel %vm254, %v9913, 0
      %v9945 = vsel %vm254, %v9914, 0
      %v9948 = vsel %vm254, %v9915, 0
      %v9951 = vsel %vm254, %v9916, 0
      %v9954 = vsel %vm254, %v9917, 0
      %v9957 = vsel %vm254, %v9918, 0
      %v9960 = vsel %vm254, %v9919, 0
      %v9963 = vsel %vm254, %v9920, 0
      %v9966 = vsel %vm254, %v9921, 0
      %v9969 = vsel %vm254, %v9922, 0
      %v9972 = vsel %vm1160, %v9874, 0
      %9974 = vmatprep.subr.bf16.mxu0 0
      %9975 = vmatpush1.bf16.msra.mxu0 %v9972
      %9976 = vmatprep.subr.bf16.mxu0 0
      %9977 = vmatpush1.bf16.msra.mxu0 0
      %9978 = vmatprep.subr.bf16.mxu0 0
      %9979 = vmatpush1.bf16.msra.mxu0 0
      %9980 = vmatprep.subr.bf16.mxu0 0
      %9981 = vmatpush1.bf16.msra.mxu0 0
      %9982 = vmatprep.subr.bf16.mxu0 0
      %9983 = vmatpush1.bf16.msra.mxu0 0
      %9984 = vmatprep.subr.bf16.mxu0 0
      %9985 = vmatpush1.bf16.msra.mxu0 0
      %9986 = vmatprep.subr.bf16.mxu0 0
      %9987 = vmatpush1.bf16.msra.mxu0 0
      %9988 = vmatprep.subr.bf16.mxu0 0
      %9989 = vmatpush1.bf16.msra.mxu0 0
      %9990 = vmatprep.subr.bf16.mxu0 0
      %9991 = vmatpush1.bf16.msra.mxu0 0
      %9992 = vmatprep.subr.bf16.mxu0 0
      %9993 = vmatpush1.bf16.msra.mxu0 0
      %9994 = vmatprep.subr.bf16.mxu0 0
      %9995 = vmatpush1.bf16.msra.mxu0 0
      %9996 = vmatprep.subr.bf16.mxu0 0
      %9997 = vmatpush1.bf16.msra.mxu0 0
      %9998 = vmatprep.subr.bf16.mxu0 0
      %9999 = vmatpush1.bf16.msra.mxu0 0
      %10000 = vmatprep.subr.bf16.mxu0 0
      %10001 = vmatpush1.bf16.msra.mxu0 0
      %10002 = vmatprep.subr.bf16.mxu0 0
      %10003 = vmatpush1.bf16.msra.mxu0 0
      %10004 = vmatprep.subr.bf16.mxu0 0
      %10005 = vmatpush1.bf16.msra.mxu0 0
      %10006 = vmatprep.mubr.bf16.mxu0 0
      %10007 = vmatmul.mubr.bf16.gmra.mrb[0].mxu0 %v9924
      %v10008 = vpop.f32.mrb[0].mxu0
      %v10009 = vadd.f32 0.0, %v10008
      %v10010 = vpop.f32.mrb[0].mxu0
      %v10011 = vpop.f32.mrb[0].mxu0
      %v10012 = vadd.f32 0.0, %v10011
      %v10013 = vpop.f32.mrb[0].mxu0
      %10014 = vmatprep.mubr.bf16.mxu0 0
      %10015 = vmatmul.mubr.bf16.gmra.mrb[0].mxu0 %v9927
      %v10016 = vpop.f32.mrb[0].mxu0
      %v10017 = vadd.f32 0.0, %v10016
      %v10018 = vpop.f32.mrb[0].mxu0
      %v10019 = vpop.f32.mrb[0].mxu0
      %v10020 = vadd.f32 0.0, %v10019
      %v10021 = vpop.f32.mrb[0].mxu0
      %10022 = vmatprep.mubr.bf16.mxu0 0
      %10023 = vmatmul.mubr.bf16.gmra.mrb[0].mxu0 %v9930
      %v10024 = vpop.f32.mrb[0].mxu0
      %v10025 = vadd.f32 0.0, %v10024
      %v10026 = vpop.f32.mrb[0].mxu0
      %v10027 = vpop.f32.mrb[0].mxu0
      %v10028 = vadd.f32 0.0, %v10027
      %v10029 = vpop.f32.mrb[0].mxu0
      %10030 = vmatprep.mubr.bf16.mxu0 0
      %10031 = vmatmul.mubr.bf16.gmra.mrb[0].mxu0 %v9933
      %v10032 = vpop.f32.mrb[0].mxu0
      %v10033 = vadd.f32 0.0, %v10032
      %v10034 = vpop.f32.mrb[0].mxu0
      %v10035 = vpop.f32.mrb[0].mxu0
      %v10036 = vadd.f32 0.0, %v10035
      %v10037 = vpop.f32.mrb[0].mxu0
      %10038 = vmatprep.mubr.bf16.mxu0 0
      %10039 = vmatmul.mubr.bf16.gmra.mrb[0].mxu0 %v9936
      %v10040 = vpop.f32.mrb[0].mxu0
      %v10041 = vadd.f32 0.0, %v10040
      %v10042 = vpop.f32.mrb[0].mxu0
      %v10043 = vpop.f32.mrb[0].mxu0
      %v10044 = vadd.f32 0.0, %v10043
      %v10045 = vpop.f32.mrb[0].mxu0
      %10046 = vmatprep.mubr.bf16.mxu0 0
      %10047 = vmatmul.mubr.bf16.gmra.mrb[0].mxu0 %v9939
      %v10048 = vpop.f32.mrb[0].mxu0
      %v10049 = vadd.f32 0.0, %v10048
      %v10050 = vpop.f32.mrb[0].mxu0
      %v10051 = vpop.f32.mrb[0].mxu0
      %v10052 = vadd.f32 0.0, %v10051
      %v10053 = vpop.f32.mrb[0].mxu0
      %10054 = vmatprep.mubr.bf16.mxu0 0
      %10055 = vmatmul.mubr.bf16.gmra.mrb[0].mxu0 %v9942
      %v10056 = vpop.f32.mrb[0].mxu0
      %v10057 = vadd.f32 0.0, %v10056
      %v10058 = vpop.f32.mrb[0].mxu0
      %v10059 = vpop.f32.mrb[0].mxu0
      %v10060 = vadd.f32 0.0, %v10059
      %v10061 = vpop.f32.mrb[0].mxu0
      %10062 = vmatprep.mubr.bf16.mxu0 0
      %10063 = vmatmul.mubr.bf16.gmra.mrb[0].mxu0 %v9945
      %v10064 = vpop.f32.mrb[0].mxu0
      %v10065 = vadd.f32 0.0, %v10064
      %v10066 = vpop.f32.mrb[0].mxu0
      %v10067 = vpop.f32.mrb[0].mxu0
      %v10068 = vadd.f32 0.0, %v10067
      %v10069 = vpop.f32.mrb[0].mxu0
      %10070 = vmatprep.mubr.bf16.mxu0 0
      %10071 = vmatmul.mubr.bf16.gmra.mrb[0].mxu0 %v9948
      %v10072 = vpop.f32.mrb[0].mxu0
      %v10073 = vadd.f32 0.0, %v10072
      %v10074 = vpop.f32.mrb[0].mxu0
      %v10075 = vpop.f32.mrb[0].mxu0
      %v10076 = vadd.f32 0.0, %v10075
      %v10077 = vpop.f32.mrb[0].mxu0
      %10078 = vmatprep.mubr.bf16.mxu0 0
      %10079 = vmatmul.mubr.bf16.gmra.mrb[0].mxu0 %v9951
      %v10080 = vpop.f32.mrb[0].mxu0
      %v10081 = vadd.f32 0.0, %v10080
      %v10082 = vpop.f32.mrb[0].mxu0
      %v10083 = vpop.f32.mrb[0].mxu0
      %v10084 = vadd.f32 0.0, %v10083
      %v10085 = vpop.f32.mrb[0].mxu0
      %10086 = vmatprep.mubr.bf16.mxu0 0
      %10087 = vmatmul.mubr.bf16.gmra.mrb[0].mxu0 %v9954
      %v10088 = vpop.f32.mrb[0].mxu0
      %v10089 = vadd.f32 0.0, %v10088
      %v10090 = vpop.f32.mrb[0].mxu0
      %v10091 = vpop.f32.mrb[0].mxu0
      %v10092 = vadd.f32 0.0, %v10091
      %v10093 = vpop.f32.mrb[0].mxu0
      %10094 = vmatprep.mubr.bf16.mxu0 0
      %10095 = vmatmul.mubr.bf16.gmra.mrb[0].mxu0 %v9957
      %v10096 = vpop.f32.mrb[0].mxu0
      %v10097 = vadd.f32 0.0, %v10096
      %v10098 = vpop.f32.mrb[0].mxu0
      %v10099 = vpop.f32.mrb[0].mxu0
      %v10100 = vadd.f32 0.0, %v10099
      %v10101 = vpop.f32.mrb[0].mxu0
      %10102 = vmatprep.mubr.bf16.mxu0 0
      %10103 = vmatmul.mubr.bf16.gmra.mrb[0].mxu0 %v9960
      %v10104 = vpop.f32.mrb[0].mxu0
      %v10105 = vadd.f32 0.0, %v10104
      %v10106 = vpop.f32.mrb[0].mxu0
      %v10107 = vpop.f32.mrb[0].mxu0
      %v10108 = vadd.f32 0.0, %v10107
      %v10109 = vpop.f32.mrb[0].mxu0
      %10110 = vmatprep.mubr.bf16.mxu0 0
      %10111 = vmatmul.mubr.bf16.gmra.mrb[0].mxu0 %v9963
      %v10112 = vpop.f32.mrb[0].mxu0
      %v10113 = vadd.f32 0.0, %v10112
      %v10114 = vpop.f32.mrb[0].mxu0
      %v10115 = vpop.f32.mrb[0].mxu0
      %v10116 = vadd.f32 0.0, %v10115
      %v10117 = vpop.f32.mrb[0].mxu0
      %10118 = vmatprep.mubr.bf16.mxu0 0
      %10119 = vmatmul.mubr.bf16.gmra.mrb[0].mxu0 %v9966
      %v10120 = vpop.f32.mrb[0].mxu0
      %v10121 = vadd.f32 0.0, %v10120
      %v10122 = vpop.f32.mrb[0].mxu0
      %v10123 = vpop.f32.mrb[0].mxu0
      %v10124 = vadd.f32 0.0, %v10123
      %v10125 = vpop.f32.mrb[0].mxu0
      %10126 = vmatprep.mubr.bf16.mxu0 0
      %10127 = vmatmul.mubr.bf16.gmra.mrb[0].mxu0 %v9969
      %v10128 = vpop.f32.mrb[0].mxu0
      %v10129 = vadd.f32 0.0, %v10128
      %v10130 = vpop.f32.mrb[0].mxu0
      %v10131 = vpop.f32.mrb[0].mxu0
      %v10132 = vadd.f32 0.0, %v10131
      %v10133 = vpop.f32.mrb[0].mxu0
      %10134 = vdwg.mxu0
      %v10135 = vunpack.c.l.b16 %v9394
      %v10136 = vunpack.c.l.b16 %v9397
      %v10137 = vunpack.c.l.b16 %v9401
      %v10138 = vunpack.c.l.b16 %v9404
      %v10139 = vunpack.c.l.b16 %v9408
      %v10140 = vunpack.c.l.b16 %v9411
      %v10141 = vunpack.c.l.b16 %v9415
      %v10142 = vunpack.c.l.b16 %v9418
      %v10143 = vunpack.c.l.b16 %v9422
      %v10144 = vunpack.c.l.b16 %v9425
      %v10145 = vunpack.c.l.b16 %v9429
      %v10146 = vunpack.c.l.b16 %v9432
      %v10147 = vunpack.c.l.b16 %v9436
      %v10148 = vunpack.c.l.b16 %v9439
      %v10149 = vunpack.c.l.b16 %v9443
      %v10150 = vunpack.c.l.b16 %v9446
      %v10151 = vunpack.c.l.b16 %v9450
      %v10152 = vunpack.c.l.b16 %v9453
      %v10153 = vunpack.c.l.b16 %v9457
      %v10154 = vunpack.c.l.b16 %v9460
      %v10155 = vunpack.c.l.b16 %v9464
      %v10156 = vunpack.c.l.b16 %v9467
      %v10157 = vunpack.c.l.b16 %v9471
      %v10158 = vunpack.c.l.b16 %v9474
      %v10159 = vunpack.c.l.b16 %v9478
      %v10160 = vunpack.c.l.b16 %v9481
      %v10161 = vunpack.c.l.b16 %v9485
      %v10162 = vunpack.c.l.b16 %v9488
      %v10163 = vunpack.c.l.b16 %v9492
      %v10164 = vunpack.c.l.b16 %v9495
      %v10165 = vunpack.c.l.b16 %v9499
      %v10166 = vunpack.c.l.b16 %v9502
      %v10167 = vpack.c.b16 %v10136, %v10135
      %v10168 = vpack.c.b16 %v10138, %v10137
      %v10169 = vpack.c.b16 %v10140, %v10139
      %v10170 = vpack.c.b16 %v10142, %v10141
      %v10171 = vpack.c.b16 %v10144, %v10143
      %v10172 = vpack.c.b16 %v10146, %v10145
      %v10173 = vpack.c.b16 %v10148, %v10147
      %v10174 = vpack.c.b16 %v10150, %v10149
      %v10175 = vpack.c.b16 %v10152, %v10151
      %v10176 = vpack.c.b16 %v10154, %v10153
      %v10177 = vpack.c.b16 %v10156, %v10155
      %v10178 = vpack.c.b16 %v10158, %v10157
      %v10179 = vpack.c.b16 %v10160, %v10159
      %v10180 = vpack.c.b16 %v10162, %v10161
      %v10181 = vpack.c.b16 %v10164, %v10163
      %v10182 = vpack.c.b16 %v10166, %v10165
      %v10184 = vsel %vm254, %v10167, 0
      %v10187 = vsel %vm254, %v10168, 0
      %v10190 = vsel %vm254, %v10169, 0
      %v10193 = vsel %vm254, %v10170, 0
      %v10196 = vsel %vm254, %v10171, 0
      %v10199 = vsel %vm254, %v10172, 0
      %v10202 = vsel %vm254, %v10173, 0
      %v10205 = vsel %vm254, %v10174, 0
      %v10208 = vsel %vm254, %v10175, 0
      %v10211 = vsel %vm254, %v10176, 0
      %v10214 = vsel %vm254, %v10177, 0
      %v10217 = vsel %vm254, %v10178, 0
      %v10220 = vsel %vm254, %v10179, 0
      %v10223 = vsel %vm254, %v10180, 0
      %v10226 = vsel %vm254, %v10181, 0
      %v10229 = vsel %vm254, %v10182, 0
      %v10232 = vsel %vm1160, %v9504, 0
      %10234 = vmatprep.subr.bf16.mxu0 0
      %10235 = vmatpush1.bf16.msra.mxu0 %v10232
      %10236 = vmatprep.subr.bf16.mxu0 0
      %10237 = vmatpush1.bf16.msra.mxu0 0
      %10238 = vmatprep.subr.bf16.mxu0 0
      %10239 = vmatpush1.bf16.msra.mxu0 0
      %10240 = vmatprep.subr.bf16.mxu0 0
      %10241 = vmatpush1.bf16.msra.mxu0 0
      %10242 = vmatprep.subr.bf16.mxu0 0
      %10243 = vmatpush1.bf16.msra.mxu0 0
      %10244 = vmatprep.subr.bf16.mxu0 0
      %10245 = vmatpush1.bf16.msra.mxu0 0
      %10246 = vmatprep.subr.bf16.mxu0 0
      %10247 = vmatpush1.bf16.msra.mxu0 0
      %10248 = vmatprep.subr.bf16.mxu0 0
      %10249 = vmatpush1.bf16.msra.mxu0 0
      %10250 = vmatprep.subr.bf16.mxu0 0
      %10251 = vmatpush1.bf16.msra.mxu0 0
      %10252 = vmatprep.subr.bf16.mxu0 0
      %10253 = vmatpush1.bf16.msra.mxu0 0
      %10254 = vmatprep.subr.bf16.mxu0 0
      %10255 = vmatpush1.bf16.msra.mxu0 0
      %10256 = vmatprep.subr.bf16.mxu0 0
      %10257 = vmatpush1.bf16.msra.mxu0 0
      %10258 = vmatprep.subr.bf16.mxu0 0
      %10259 = vmatpush1.bf16.msra.mxu0 0
      %10260 = vmatprep.subr.bf16.mxu0 0
      %10261 = vmatpush1.bf16.msra.mxu0 0
      %10262 = vmatprep.subr.bf16.mxu0 0
      %10263 = vmatpush1.bf16.msra.mxu0 0
      %10264 = vmatprep.subr.bf16.mxu0 0
      %10265 = vmatpush1.bf16.msra.mxu0 0
      %10266 = vmatprep.mubr.bf16.mxu0 0
      %10267 = vmatmul.mubr.bf16.gmra.mrb[0].mxu0 %v10184
      %v10268 = vpop.f32.mrb[0].mxu0
      %v10269 = vadd.f32 %v10009, %v10268
      %v10270 = vpop.f32.mrb[0].mxu0
      %v10271 = vpop.f32.mrb[0].mxu0
      %v10272 = vadd.f32 %v10012, %v10271
      %v10273 = vpop.f32.mrb[0].mxu0
      %10274 = vmatprep.mubr.bf16.mxu0 0
      %10275 = vmatmul.mubr.bf16.gmra.mrb[0].mxu0 %v10187
      %v10276 = vpop.f32.mrb[0].mxu0
      %v10277 = vadd.f32 %v10017, %v10276
      %v10278 = vpop.f32.mrb[0].mxu0
      %v10279 = vpop.f32.mrb[0].mxu0
      %v10280 = vadd.f32 %v10020, %v10279
      %v10281 = vpop.f32.mrb[0].mxu0
      %10282 = vmatprep.mubr.bf16.mxu0 0
      %10283 = vmatmul.mubr.bf16.gmra.mrb[0].mxu0 %v10190
      %v10284 = vpop.f32.mrb[0].mxu0
      %v10285 = vadd.f32 %v10025, %v10284
      %v10286 = vpop.f32.mrb[0].mxu0
      %v10287 = vpop.f32.mrb[0].mxu0
      %v10288 = vadd.f32 %v10028, %v10287
      %v10289 = vpop.f32.mrb[0].mxu0
      %10290 = vmatprep.mubr.bf16.mxu0 0
      %10291 = vmatmul.mubr.bf16.gmra.mrb[0].mxu0 %v10193
      %v10292 = vpop.f32.mrb[0].mxu0
      %v10293 = vadd.f32 %v10033, %v10292
      %v10294 = vpop.f32.mrb[0].mxu0
      %v10295 = vpop.f32.mrb[0].mxu0
      %v10296 = vadd.f32 %v10036, %v10295
      %v10297 = vpop.f32.mrb[0].mxu0
      %10298 = vmatprep.mubr.bf16.mxu0 0
      %10299 = vmatmul.mubr.bf16.gmra.mrb[0].mxu0 %v10196
      %v10300 = vpop.f32.mrb[0].mxu0
      %v10301 = vadd.f32 %v10041, %v10300
      %v10302 = vpop.f32.mrb[0].mxu0
      %v10303 = vpop.f32.mrb[0].mxu0
      %v10304 = vadd.f32 %v10044, %v10303
      %v10305 = vpop.f32.mrb[0].mxu0
      %10306 = vmatprep.mubr.bf16.mxu0 0
      %10307 = vmatmul.mubr.bf16.gmra.mrb[0].mxu0 %v10199
      %v10308 = vpop.f32.mrb[0].mxu0
      %v10309 = vadd.f32 %v10049, %v10308
      %v10310 = vpop.f32.mrb[0].mxu0
      %v10311 = vpop.f32.mrb[0].mxu0
      %v10312 = vadd.f32 %v10052, %v10311
      %v10313 = vpop.f32.mrb[0].mxu0
      %10314 = vmatprep.mubr.bf16.mxu0 0
      %10315 = vmatmul.mubr.bf16.gmra.mrb[0].mxu0 %v10202
      %v10316 = vpop.f32.mrb[0].mxu0
      %v10317 = vadd.f32 %v10057, %v10316
      %v10318 = vpop.f32.mrb[0].mxu0
      %v10319 = vpop.f32.mrb[0].mxu0
      %v10320 = vadd.f32 %v10060, %v10319
      %v10321 = vpop.f32.mrb[0].mxu0
      %10322 = vmatprep.mubr.bf16.mxu0 0
      %10323 = vmatmul.mubr.bf16.gmra.mrb[0].mxu0 %v10205
      %v10324 = vpop.f32.mrb[0].mxu0
      %v10325 = vadd.f32 %v10065, %v10324
      %v10326 = vpop.f32.mrb[0].mxu0
      %v10327 = vpop.f32.mrb[0].mxu0
      %v10328 = vadd.f32 %v10068, %v10327
      %v10329 = vpop.f32.mrb[0].mxu0
      %10330 = vmatprep.mubr.bf16.mxu0 0
      %10331 = vmatmul.mubr.bf16.gmra.mrb[0].mxu0 %v10208
      %v10332 = vpop.f32.mrb[0].mxu0
      %v10333 = vadd.f32 %v10073, %v10332
      %v10334 = vpop.f32.mrb[0].mxu0
      %v10335 = vpop.f32.mrb[0].mxu0
      %v10336 = vadd.f32 %v10076, %v10335
      %v10337 = vpop.f32.mrb[0].mxu0
      %10338 = vmatprep.mubr.bf16.mxu0 0
      %10339 = vmatmul.mubr.bf16.gmra.mrb[0].mxu0 %v10211
      %v10340 = vpop.f32.mrb[0].mxu0
      %v10341 = vadd.f32 %v10081, %v10340
      %v10342 = vpop.f32.mrb[0].mxu0
      %v10343 = vpop.f32.mrb[0].mxu0
      %v10344 = vadd.f32 %v10084, %v10343
      %v10345 = vpop.f32.mrb[0].mxu0
      %10346 = vmatprep.mubr.bf16.mxu0 0
      %10347 = vmatmul.mubr.bf16.gmra.mrb[0].mxu0 %v10214
      %v10348 = vpop.f32.mrb[0].mxu0
      %v10349 = vadd.f32 %v10089, %v10348
      %v10350 = vpop.f32.mrb[0].mxu0
      %v10351 = vpop.f32.mrb[0].mxu0
      %v10352 = vadd.f32 %v10092, %v10351
      %v10353 = vpop.f32.mrb[0].mxu0
      %10354 = vmatprep.mubr.bf16.mxu0 0
      %10355 = vmatmul.mubr.bf16.gmra.mrb[0].mxu0 %v10217
      %v10356 = vpop.f32.mrb[0].mxu0
      %v10357 = vadd.f32 %v10097, %v10356
      %v10358 = vpop.f32.mrb[0].mxu0
      %v10359 = vpop.f32.mrb[0].mxu0
      %v10360 = vadd.f32 %v10100, %v10359
      %v10361 = vpop.f32.mrb[0].mxu0
      %10362 = vmatprep.mubr.bf16.mxu0 0
      %10363 = vmatmul.mubr.bf16.gmra.mrb[0].mxu0 %v10220
      %v10364 = vpop.f32.mrb[0].mxu0
      %v10365 = vadd.f32 %v10105, %v10364
      %v10366 = vpop.f32.mrb[0].mxu0
      %v10367 = vpop.f32.mrb[0].mxu0
      %v10368 = vadd.f32 %v10108, %v10367
      %v10369 = vpop.f32.mrb[0].mxu0
      %10370 = vmatprep.mubr.bf16.mxu0 0
      %10371 = vmatmul.mubr.bf16.gmra.mrb[0].mxu0 %v10223
      %v10372 = vpop.f32.mrb[0].mxu0
      %v10373 = vadd.f32 %v10113, %v10372
      %v10374 = vpop.f32.mrb[0].mxu0
      %v10375 = vpop.f32.mrb[0].mxu0
      %v10376 = vadd.f32 %v10116, %v10375
      %v10377 = vpop.f32.mrb[0].mxu0
      %10378 = vmatprep.mubr.bf16.mxu0 0
      %10379 = vmatmul.mubr.bf16.gmra.mrb[0].mxu0 %v10226
      %v10380 = vpop.f32.mrb[0].mxu0
      %v10381 = vadd.f32 %v10121, %v10380
      %v10382 = vpop.f32.mrb[0].mxu0
      %v10383 = vpop.f32.mrb[0].mxu0
      %v10384 = vadd.f32 %v10124, %v10383
      %v10385 = vpop.f32.mrb[0].mxu0
      %10386 = vmatprep.mubr.bf16.mxu0 0
      %10387 = vmatmul.mubr.bf16.gmra.mrb[0].mxu0 %v10229
      %v10388 = vpop.f32.mrb[0].mxu0
      %v10389 = vadd.f32 %v10129, %v10388
      %v10390 = vpop.f32.mrb[0].mxu0
      %v10391 = vpop.f32.mrb[0].mxu0
      %v10392 = vadd.f32 %v10132, %v10391
      %v10393 = vpop.f32.mrb[0].mxu0
      %10394 = vdwg.mxu0
      %s10395 = scalar_lea.vmem %s1, 68
      %v10396 = vld [vmem:[%s10395] sm:$0xf]
      %v10413 = vunpack.c.l.b16 %v9296
      %v10414 = vunpack.c.l.b16 %v9505
      %v10415 = vunpack.c.l.b16 %v9299
      %v10416 = vunpack.c.l.b16 %v9506
      %v10417 = vunpack.c.l.b16 %v9302
      %v10418 = vunpack.c.l.b16 %v9507
      %v10419 = vunpack.c.l.b16 %v9305
      %v10420 = vunpack.c.l.b16 %v9508
      %v10421 = vunpack.c.l.b16 %v9308
      %v10422 = vunpack.c.l.b16 %v9509
      %v10423 = vunpack.c.l.b16 %v9311
      %v10424 = vunpack.c.l.b16 %v9510
      %v10425 = vunpack.c.l.b16 %v9314
      %v10426 = vunpack.c.l.b16 %v9511
      %v10427 = vunpack.c.l.b16 %v9317
      %v10428 = vunpack.c.l.b16 %v9512
      %v10429 = vunpack.c.l.b16 %v9320
      %v10430 = vunpack.c.l.b16 %v9513
      %v10431 = vunpack.c.l.b16 %v9323
      %v10432 = vunpack.c.l.b16 %v9514
      %v10433 = vunpack.c.l.b16 %v9326
      %v10434 = vunpack.c.l.b16 %v9515
      %v10435 = vunpack.c.l.b16 %v9329
      %v10436 = vunpack.c.l.b16 %v9516
      %v10437 = vunpack.c.l.b16 %v9332
      %v10438 = vunpack.c.l.b16 %v9517
      %v10439 = vunpack.c.l.b16 %v9335
      %v10440 = vunpack.c.l.b16 %v9518
      %v10441 = vunpack.c.l.b16 %v9338
      %v10442 = vunpack.c.l.b16 %v9519
      %v10443 = vunpack.c.l.b16 %v9341
      %v10444 = vunpack.c.l.b16 %v9520
      %v10445 = vpack.c.b16 %v10414, %v10413
      %v10446 = vpack.c.b16 %v10416, %v10415
      %v10447 = vpack.c.b16 %v10418, %v10417
      %v10448 = vpack.c.b16 %v10420, %v10419
      %v10449 = vpack.c.b16 %v10422, %v10421
      %v10450 = vpack.c.b16 %v10424, %v10423
      %v10451 = vpack.c.b16 %v10426, %v10425
      %v10452 = vpack.c.b16 %v10428, %v10427
      %v10453 = vpack.c.b16 %v10430, %v10429
      %v10454 = vpack.c.b16 %v10432, %v10431
      %v10455 = vpack.c.b16 %v10434, %v10433
      %v10456 = vpack.c.b16 %v10436, %v10435
      %v10457 = vpack.c.b16 %v10438, %v10437
      %v10458 = vpack.c.b16 %v10440, %v10439
      %v10459 = vpack.c.b16 %v10442, %v10441
      %v10460 = vpack.c.b16 %v10444, %v10443
      %v10462 = vsel %vm254, %v10445, 0
      %v10465 = vsel %vm254, %v10446, 0
      %v10468 = vsel %vm254, %v10447, 0
      %v10471 = vsel %vm254, %v10448, 0
      %v10474 = vsel %vm254, %v10449, 0
      %v10477 = vsel %vm254, %v10450, 0
      %v10480 = vsel %vm254, %v10451, 0
      %v10483 = vsel %vm254, %v10452, 0
      %v10486 = vsel %vm254, %v10453, 0
      %v10489 = vsel %vm254, %v10454, 0
      %v10492 = vsel %vm254, %v10455, 0
      %v10495 = vsel %vm254, %v10456, 0
      %v10498 = vsel %vm254, %v10457, 0
      %v10501 = vsel %vm254, %v10458, 0
      %v10504 = vsel %vm254, %v10459, 0
      %v10507 = vsel %vm254, %v10460, 0
      %v10510 = vsel %vm1160, %v10396, 0
      %10512 = vmatprep.subr.bf16.mxu0 0
      %10513 = vmatpush1.bf16.msra.mxu0 %v10510
      %10514 = vmatprep.subr.bf16.mxu0 0
      %10515 = vmatpush1.bf16.msra.mxu0 0
      %10516 = vmatprep.subr.bf16.mxu0 0
      %10517 = vmatpush1.bf16.msra.mxu0 0
      %10518 = vmatprep.subr.bf16.mxu0 0
      %10519 = vmatpush1.bf16.msra.mxu0 0
      %10520 = vmatprep.subr.bf16.mxu0 0
      %10521 = vmatpush1.bf16.msra.mxu0 0
      %10522 = vmatprep.subr.bf16.mxu0 0
      %10523 = vmatpush1.bf16.msra.mxu0 0
      %10524 = vmatprep.subr.bf16.mxu0 0
      %10525 = vmatpush1.bf16.msra.mxu0 0
      %10526 = vmatprep.subr.bf16.mxu0 0
      %10527 = vmatpush1.bf16.msra.mxu0 0
      %10528 = vmatprep.subr.bf16.mxu0 0
      %10529 = vmatpush1.bf16.msra.mxu0 0
      %10530 = vmatprep.subr.bf16.mxu0 0
      %10531 = vmatpush1.bf16.msra.mxu0 0
      %10532 = vmatprep.subr.bf16.mxu0 0
      %10533 = vmatpush1.bf16.msra.mxu0 0
      %10534 = vmatprep.subr.bf16.mxu0 0
      %10535 = vmatpush1.bf16.msra.mxu0 0
      %10536 = vmatprep.subr.bf16.mxu0 0
      %10537 = vmatpush1.bf16.msra.mxu0 0
      %10538 = vmatprep.subr.bf16.mxu0 0
      %10539 = vmatpush1.bf16.msra.mxu0 0
      %10540 = vmatprep.subr.bf16.mxu0 0
      %10541 = vmatpush1.bf16.msra.mxu0 0
      %10542 = vmatprep.subr.bf16.mxu0 0
      %10543 = vmatpush1.bf16.msra.mxu0 0
      %10544 = vmatprep.mubr.bf16.mxu0 0
      %10545 = vmatmul.mubr.bf16.gmra.mrb[0].mxu0 %v10462
      %v10546 = vpop.f32.mrb[0].mxu0
      %v10547 = vadd.f32 0.0, %v10546
      %v10548 = vpop.f32.mrb[0].mxu0
      %v10549 = vpop.f32.mrb[0].mxu0
      %v10550 = vadd.f32 0.0, %v10549
      %v10551 = vpop.f32.mrb[0].mxu0
      %10552 = vmatprep.mubr.bf16.mxu0 0
      %10553 = vmatmul.mubr.bf16.gmra.mrb[0].mxu0 %v10465
      %v10554 = vpop.f32.mrb[0].mxu0
      %v10555 = vadd.f32 0.0, %v10554
      %v10556 = vpop.f32.mrb[0].mxu0
      %v10557 = vpop.f32.mrb[0].mxu0
      %v10558 = vadd.f32 0.0, %v10557
      %v10559 = vpop.f32.mrb[0].mxu0
      %10560 = vmatprep.mubr.bf16.mxu0 0
      %10561 = vmatmul.mubr.bf16.gmra.mrb[0].mxu0 %v10468
      %v10562 = vpop.f32.mrb[0].mxu0
      %v10563 = vadd.f32 0.0, %v10562
      %v10564 = vpop.f32.mrb[0].mxu0
      %v10565 = vpop.f32.mrb[0].mxu0
      %v10566 = vadd.f32 0.0, %v10565
      %v10567 = vpop.f32.mrb[0].mxu0
      %10568 = vmatprep.mubr.bf16.mxu0 0
      %10569 = vmatmul.mubr.bf16.gmra.mrb[0].mxu0 %v10471
      %v10570 = vpop.f32.mrb[0].mxu0
      %v10571 = vadd.f32 0.0, %v10570
      %v10572 = vpop.f32.mrb[0].mxu0
      %v10573 = vpop.f32.mrb[0].mxu0
      %v10574 = vadd.f32 0.0, %v10573
      %v10575 = vpop.f32.mrb[0].mxu0
      %10576 = vmatprep.mubr.bf16.mxu0 0
      %10577 = vmatmul.mubr.bf16.gmra.mrb[0].mxu0 %v10474
      %v10578 = vpop.f32.mrb[0].mxu0
      %v10579 = vadd.f32 0.0, %v10578
      %v10580 = vpop.f32.mrb[0].mxu0
      %v10581 = vpop.f32.mrb[0].mxu0
      %v10582 = vadd.f32 0.0, %v10581
      %v10583 = vpop.f32.mrb[0].mxu0
      %10584 = vmatprep.mubr.bf16.mxu0 0
      %10585 = vmatmul.mubr.bf16.gmra.mrb[0].mxu0 %v10477
      %v10586 = vpop.f32.mrb[0].mxu0
      %v10587 = vadd.f32 0.0, %v10586
      %v10588 = vpop.f32.mrb[0].mxu0
      %v10589 = vpop.f32.mrb[0].mxu0
      %v10590 = vadd.f32 0.0, %v10589
      %v10591 = vpop.f32.mrb[0].mxu0
      %10592 = vmatprep.mubr.bf16.mxu0 0
      %10593 = vmatmul.mubr.bf16.gmra.mrb[0].mxu0 %v10480
      %v10594 = vpop.f32.mrb[0].mxu0
      %v10595 = vadd.f32 0.0, %v10594
      %v10596 = vpop.f32.mrb[0].mxu0
      %v10597 = vpop.f32.mrb[0].mxu0
      %v10598 = vadd.f32 0.0, %v10597
      %v10599 = vpop.f32.mrb[0].mxu0
      %10600 = vmatprep.mubr.bf16.mxu0 0
      %10601 = vmatmul.mubr.bf16.gmra.mrb[0].mxu0 %v10483
      %v10602 = vpop.f32.mrb[0].mxu0
      %v10603 = vadd.f32 0.0, %v10602
      %v10604 = vpop.f32.mrb[0].mxu0
      %v10605 = vpop.f32.mrb[0].mxu0
      %v10606 = vadd.f32 0.0, %v10605
      %v10607 = vpop.f32.mrb[0].mxu0
      %10608 = vmatprep.mubr.bf16.mxu0 0
      %10609 = vmatmul.mubr.bf16.gmra.mrb[0].mxu0 %v10486
      %v10610 = vpop.f32.mrb[0].mxu0
      %v10611 = vadd.f32 0.0, %v10610
      %v10612 = vpop.f32.mrb[0].mxu0
      %v10613 = vpop.f32.mrb[0].mxu0
      %v10614 = vadd.f32 0.0, %v10613
      %v10615 = vpop.f32.mrb[0].mxu0
      %10616 = vmatprep.mubr.bf16.mxu0 0
      %10617 = vmatmul.mubr.bf16.gmra.mrb[0].mxu0 %v10489
      %v10618 = vpop.f32.mrb[0].mxu0
      %v10619 = vadd.f32 0.0, %v10618
      %v10620 = vpop.f32.mrb[0].mxu0
      %v10621 = vpop.f32.mrb[0].mxu0
      %v10622 = vadd.f32 0.0, %v10621
      %v10623 = vpop.f32.mrb[0].mxu0
      %10624 = vmatprep.mubr.bf16.mxu0 0
      %10625 = vmatmul.mubr.bf16.gmra.mrb[0].mxu0 %v10492
      %v10626 = vpop.f32.mrb[0].mxu0
      %v10627 = vadd.f32 0.0, %v10626
      %v10628 = vpop.f32.mrb[0].mxu0
      %v10629 = vpop.f32.mrb[0].mxu0
      %v10630 = vadd.f32 0.0, %v10629
      %v10631 = vpop.f32.mrb[0].mxu0
      %10632 = vmatprep.mubr.bf16.mxu0 0
      %10633 = vmatmul.mubr.bf16.gmra.mrb[0].mxu0 %v10495
      %v10634 = vpop.f32.mrb[0].mxu0
      %v10635 = vadd.f32 0.0, %v10634
      %v10636 = vpop.f32.mrb[0].mxu0
      %v10637 = vpop.f32.mrb[0].mxu0
      %v10638 = vadd.f32 0.0, %v10637
      %v10639 = vpop.f32.mrb[0].mxu0
      %10640 = vmatprep.mubr.bf16.mxu0 0
      %10641 = vmatmul.mubr.bf16.gmra.mrb[0].mxu0 %v10498
      %v10642 = vpop.f32.mrb[0].mxu0
      %v10643 = vadd.f32 0.0, %v10642
      %v10644 = vpop.f32.mrb[0].mxu0
      %v10645 = vpop.f32.mrb[0].mxu0
      %v10646 = vadd.f32 0.0, %v10645
      %v10647 = vpop.f32.mrb[0].mxu0
      %10648 = vmatprep.mubr.bf16.mxu0 0
      %10649 = vmatmul.mubr.bf16.gmra.mrb[0].mxu0 %v10501
      %v10650 = vpop.f32.mrb[0].mxu0
      %v10651 = vadd.f32 0.0, %v10650
      %v10652 = vpop.f32.mrb[0].mxu0
      %v10653 = vpop.f32.mrb[0].mxu0
      %v10654 = vadd.f32 0.0, %v10653
      %v10655 = vpop.f32.mrb[0].mxu0
      %10656 = vmatprep.mubr.bf16.mxu0 0
      %10657 = vmatmul.mubr.bf16.gmra.mrb[0].mxu0 %v10504
      %v10658 = vpop.f32.mrb[0].mxu0
      %v10659 = vadd.f32 0.0, %v10658
      %v10660 = vpop.f32.mrb[0].mxu0
      %v10661 = vpop.f32.mrb[0].mxu0
      %v10662 = vadd.f32 0.0, %v10661
      %v10663 = vpop.f32.mrb[0].mxu0
      %10664 = vmatprep.mubr.bf16.mxu0 0
      %10665 = vmatmul.mubr.bf16.gmra.mrb[0].mxu0 %v10507
      %v10666 = vpop.f32.mrb[0].mxu0
      %v10667 = vadd.f32 0.0, %v10666
      %v10668 = vpop.f32.mrb[0].mxu0
      %v10669 = vpop.f32.mrb[0].mxu0
      %v10670 = vadd.f32 0.0, %v10669
      %v10671 = vpop.f32.mrb[0].mxu0
      %10672 = vdwg.mxu0
      %v10673 = vadd.f32 %v10269, %v10547
      %v10674 = vadd.f32 %v10272, %v10550
      %v10675 = vadd.f32 %v10277, %v10555
      %v10676 = vadd.f32 %v10280, %v10558
      %v10677 = vadd.f32 %v10285, %v10563
      %v10678 = vadd.f32 %v10288, %v10566
      %v10679 = vadd.f32 %v10293, %v10571
      %v10680 = vadd.f32 %v10296, %v10574
      %v10681 = vadd.f32 %v10301, %v10579
      %v10682 = vadd.f32 %v10304, %v10582
      %v10683 = vadd.f32 %v10309, %v10587
      %v10684 = vadd.f32 %v10312, %v10590
      %v10685 = vadd.f32 %v10317, %v10595
      %v10686 = vadd.f32 %v10320, %v10598
      %v10687 = vadd.f32 %v10325, %v10603
      %v10688 = vadd.f32 %v10328, %v10606
      %v10689 = vadd.f32 %v10333, %v10611
      %v10690 = vadd.f32 %v10336, %v10614
      %v10691 = vadd.f32 %v10341, %v10619
      %v10692 = vadd.f32 %v10344, %v10622
      %v10693 = vadd.f32 %v10349, %v10627
      %v10694 = vadd.f32 %v10352, %v10630
      %v10695 = vadd.f32 %v10357, %v10635
      %v10696 = vadd.f32 %v10360, %v10638
      %v10697 = vadd.f32 %v10365, %v10643
      %v10698 = vadd.f32 %v10368, %v10646
      %v10699 = vadd.f32 %v10373, %v10651
      %v10700 = vadd.f32 %v10376, %v10654
      %v10701 = vadd.f32 %v10381, %v10659
      %v10702 = vadd.f32 %v10384, %v10662
      %v10703 = vadd.f32 %v10389, %v10667
      %v10704 = vadd.f32 %v10392, %v10670
      %v10705 = vld [vmem:[#allocation2 + $0x8] sm:$0xf]
      %v10706 = vld [vmem:[#allocation2 + $0xc] sm:$0xf]
      %v10707 = vld [vmem:[#allocation2 + $0x10] sm:$0x1]
      %v10708 = vld [vmem:[#allocation2 + $0x1c] sm:$0xf]
      %v10709 = vld [vmem:[#allocation2 + $0x20] sm:$0xf]
      %v10710 = vld [vmem:[#allocation2 + $0x24] sm:$0x1]
      %v10711 = vld [vmem:[#allocation2 + $0x30] sm:$0xf]
      %v10712 = vld [vmem:[#allocation2 + $0x34] sm:$0xf]
      %v10713 = vld [vmem:[#allocation2 + $0x38] sm:$0x1]
      %v10714 = vld [vmem:[#allocation2 + $0x44] sm:$0xf]
      %v10715 = vld [vmem:[#allocation2 + $0x48] sm:$0xf]
      %v10716 = vld [vmem:[#allocation2 + $0x4c] sm:$0x1]
      %v10717 = vld [vmem:[#allocation2 + $0x58] sm:$0xf]
      %v10718 = vld [vmem:[#allocation2 + $0x5c] sm:$0xf]
      %v10719 = vld [vmem:[#allocation2 + $0x60] sm:$0x1]
      %v10720 = vld [vmem:[#allocation2 + $0x6c] sm:$0xf]
      %v10721 = vld [vmem:[#allocation2 + $0x70] sm:$0xf]
      %v10722 = vld [vmem:[#allocation2 + $0x74] sm:$0x1]
      %v10723 = vld [vmem:[#allocation2 + $0x80] sm:$0xf]
      %v10724 = vld [vmem:[#allocation2 + $0x84] sm:$0xf]
      %v10725 = vld [vmem:[#allocation2 + $0x88] sm:$0x1]
      %v10726 = vld [vmem:[#allocation2 + $0x94] sm:$0xf]
      %v10727 = vld [vmem:[#allocation2 + $0x98] sm:$0xf]
      %v10728 = vld [vmem:[#allocation2 + $0x9c] sm:$0x1]
      %v10729 = vld [vmem:[#allocation2 + $0xa8] sm:$0xf]
      %v10730 = vld [vmem:[#allocation2 + $0xac] sm:$0xf]
      %v10731 = vld [vmem:[#allocation2 + $0xb0] sm:$0x1]
      %v10732 = vld [vmem:[#allocation2 + $0xbc] sm:$0xf]
      %v10733 = vld [vmem:[#allocation2 + $0xc0] sm:$0xf]
      %v10734 = vld [vmem:[#allocation2 + $0xc4] sm:$0x1]
      %v10735 = vld [vmem:[#allocation2 + $0xd0] sm:$0xf]
      %v10736 = vld [vmem:[#allocation2 + $0xd4] sm:$0xf]
      %v10737 = vld [vmem:[#allocation2 + $0xd8] sm:$0x1]
      %v10738 = vld [vmem:[#allocation2 + $0xe4] sm:$0xf]
      %v10739 = vld [vmem:[#allocation2 + $0xe8] sm:$0xf]
      %v10740 = vld [vmem:[#allocation2 + $0xec] sm:$0x1]
      %v10741 = vld [vmem:[#allocation2 + $0xf8] sm:$0xf]
      %v10742 = vld [vmem:[#allocation2 + $0xfc] sm:$0xf]
      %v10743 = vld [vmem:[#allocation2 + $0x100] sm:$0x1]
      %v10744 = vld [vmem:[#allocation2 + $0x10c] sm:$0xf]
      %v10745 = vld [vmem:[#allocation2 + $0x110] sm:$0xf]
      %v10746 = vld [vmem:[#allocation2 + $0x114] sm:$0x1]
      %v10747 = vld [vmem:[#allocation2 + $0x120] sm:$0xf]
      %v10748 = vld [vmem:[#allocation2 + $0x124] sm:$0xf]
      %v10749 = vld [vmem:[#allocation2 + $0x128] sm:$0x1]
      %v10750 = vld [vmem:[#allocation2 + $0x134] sm:$0xf]
      %v10751 = vld [vmem:[#allocation2 + $0x138] sm:$0xf]
      %v10752 = vld [vmem:[#allocation2 + $0x13c] sm:$0x1]
      %v10754 = vshrl.u32 %v10705, 16
      %v10756 = vrot.slane %v10754, 4
      %v10757 = vshll.u32 %v10705, 16
      %v10759 = vrot.slane %v10757, 5
      %v10760 = vor.u32 %v10756, %v10759
      %v10761 = vrot.slane %v10760, 4
      %v10763 = vshll.u32 %v10706, 16
      %v10765 = vrot.slane %v10763, 5
      %v10766 = vsel %vm1945, %v10761, %v10765
      %v10767 = vshrl.u32 %v10706, 16
      %v10769 = vrot.slane %v10767, 4
      %v10770 = vor.u32 %v10769, %v10765
      %v10771 = vrot.slane %v10770, 4
      %v10773 = vshll.u32 %v10707, 16
      %v10775 = vrot.slane %v10773, 5
      %v10776 = vsel %vm1945, %v10771, %v10775
      %v10778 = vshrl.u32 %v10708, 16
      %v10780 = vrot.slane %v10778, 4
      %v10781 = vshll.u32 %v10708, 16
      %v10783 = vrot.slane %v10781, 5
      %v10784 = vor.u32 %v10780, %v10783
      %v10785 = vrot.slane %v10784, 4
      %v10787 = vshll.u32 %v10709, 16
      %v10789 = vrot.slane %v10787, 5
      %v10790 = vsel %vm1945, %v10785, %v10789
      %v10791 = vshrl.u32 %v10709, 16
      %v10793 = vrot.slane %v10791, 4
      %v10794 = vor.u32 %v10793, %v10789
      %v10795 = vrot.slane %v10794, 4
      %v10797 = vshll.u32 %v10710, 16
      %v10799 = vrot.slane %v10797, 5
      %v10800 = vsel %vm1945, %v10795, %v10799
      %v10802 = vshrl.u32 %v10711, 16
      %v10804 = vrot.slane %v10802, 4
      %v10805 = vshll.u32 %v10711, 16
      %v10807 = vrot.slane %v10805, 5
      %v10808 = vor.u32 %v10804, %v10807
      %v10809 = vrot.slane %v10808, 4
      %v10811 = vshll.u32 %v10712, 16
      %v10813 = vrot.slane %v10811, 5
      %v10814 = vsel %vm1945, %v10809, %v10813
      %v10815 = vshrl.u32 %v10712, 16
      %v10817 = vrot.slane %v10815, 4
      %v10818 = vor.u32 %v10817, %v10813
      %v10819 = vrot.slane %v10818, 4
      %v10821 = vshll.u32 %v10713, 16
      %v10823 = vrot.slane %v10821, 5
      %v10824 = vsel %vm1945, %v10819, %v10823
      %v10826 = vshrl.u32 %v10714, 16
      %v10828 = vrot.slane %v10826, 4
      %v10829 = vshll.u32 %v10714, 16
      %v10831 = vrot.slane %v10829, 5
      %v10832 = vor.u32 %v10828, %v10831
      %v10833 = vrot.slane %v10832, 4
      %v10835 = vshll.u32 %v10715, 16
      %v10837 = vrot.slane %v10835, 5
      %v10838 = vsel %vm1945, %v10833, %v10837
      %v10839 = vshrl.u32 %v10715, 16
      %v10841 = vrot.slane %v10839, 4
      %v10842 = vor.u32 %v10841, %v10837
      %v10843 = vrot.slane %v10842, 4
      %v10845 = vshll.u32 %v10716, 16
      %v10847 = vrot.slane %v10845, 5
      %v10848 = vsel %vm1945, %v10843, %v10847
      %v10850 = vshrl.u32 %v10717, 16
      %v10852 = vrot.slane %v10850, 4
      %v10853 = vshll.u32 %v10717, 16
      %v10855 = vrot.slane %v10853, 5
      %v10856 = vor.u32 %v10852, %v10855
      %v10857 = vrot.slane %v10856, 4
      %v10859 = vshll.u32 %v10718, 16
      %v10861 = vrot.slane %v10859, 5
      %v10862 = vsel %vm1945, %v10857, %v10861
      %v10863 = vshrl.u32 %v10718, 16
      %v10865 = vrot.slane %v10863, 4
      %v10866 = vor.u32 %v10865, %v10861
      %v10867 = vrot.slane %v10866, 4
      %v10869 = vshll.u32 %v10719, 16
      %v10871 = vrot.slane %v10869, 5
      %v10872 = vsel %vm1945, %v10867, %v10871
      %v10874 = vshrl.u32 %v10720, 16
      %v10876 = vrot.slane %v10874, 4
      %v10877 = vshll.u32 %v10720, 16
      %v10879 = vrot.slane %v10877, 5
      %v10880 = vor.u32 %v10876, %v10879
      %v10881 = vrot.slane %v10880, 4
      %v10883 = vshll.u32 %v10721, 16
      %v10885 = vrot.slane %v10883, 5
      %v10886 = vsel %vm1945, %v10881, %v10885
      %v10887 = vshrl.u32 %v10721, 16
      %v10889 = vrot.slane %v10887, 4
      %v10890 = vor.u32 %v10889, %v10885
      %v10891 = vrot.slane %v10890, 4
      %v10893 = vshll.u32 %v10722, 16
      %v10895 = vrot.slane %v10893, 5
      %v10896 = vsel %vm1945, %v10891, %v10895
      %v10898 = vshrl.u32 %v10723, 16
      %v10900 = vrot.slane %v10898, 4
      %v10901 = vshll.u32 %v10723, 16
      %v10903 = vrot.slane %v10901, 5
      %v10904 = vor.u32 %v10900, %v10903
      %v10905 = vrot.slane %v10904, 4
      %v10907 = vshll.u32 %v10724, 16
      %v10909 = vrot.slane %v10907, 5
      %v10910 = vsel %vm1945, %v10905, %v10909
      %v10911 = vshrl.u32 %v10724, 16
      %v10913 = vrot.slane %v10911, 4
      %v10914 = vor.u32 %v10913, %v10909
      %v10915 = vrot.slane %v10914, 4
      %v10917 = vshll.u32 %v10725, 16
      %v10919 = vrot.slane %v10917, 5
      %v10920 = vsel %vm1945, %v10915, %v10919
      %v10922 = vshrl.u32 %v10726, 16
      %v10924 = vrot.slane %v10922, 4
      %v10925 = vshll.u32 %v10726, 16
      %v10927 = vrot.slane %v10925, 5
      %v10928 = vor.u32 %v10924, %v10927
      %v10929 = vrot.slane %v10928, 4
      %v10931 = vshll.u32 %v10727, 16
      %v10933 = vrot.slane %v10931, 5
      %v10934 = vsel %vm1945, %v10929, %v10933
      %v10935 = vshrl.u32 %v10727, 16
      %v10937 = vrot.slane %v10935, 4
      %v10938 = vor.u32 %v10937, %v10933
      %v10939 = vrot.slane %v10938, 4
      %v10941 = vshll.u32 %v10728, 16
      %v10943 = vrot.slane %v10941, 5
      %v10944 = vsel %vm1945, %v10939, %v10943
      %v10946 = vshrl.u32 %v10729, 16
      %v10948 = vrot.slane %v10946, 4
      %v10949 = vshll.u32 %v10729, 16
      %v10951 = vrot.slane %v10949, 5
      %v10952 = vor.u32 %v10948, %v10951
      %v10953 = vrot.slane %v10952, 4
      %v10955 = vshll.u32 %v10730, 16
      %v10957 = vrot.slane %v10955, 5
      %v10958 = vsel %vm1945, %v10953, %v10957
      %v10959 = vshrl.u32 %v10730, 16
      %v10961 = vrot.slane %v10959, 4
      %v10962 = vor.u32 %v10961, %v10957
      %v10963 = vrot.slane %v10962, 4
      %v10965 = vshll.u32 %v10731, 16
      %v10967 = vrot.slane %v10965, 5
      %v10968 = vsel %vm1945, %v10963, %v10967
      %v10970 = vshrl.u32 %v10732, 16
      %v10972 = vrot.slane %v10970, 4
      %v10973 = vshll.u32 %v10732, 16
      %v10975 = vrot.slane %v10973, 5
      %v10976 = vor.u32 %v10972, %v10975
      %v10977 = vrot.slane %v10976, 4
      %v10979 = vshll.u32 %v10733, 16
      %v10981 = vrot.slane %v10979, 5
      %v10982 = vsel %vm1945, %v10977, %v10981
      %v10983 = vshrl.u32 %v10733, 16
      %v10985 = vrot.slane %v10983, 4
      %v10986 = vor.u32 %v10985, %v10981
      %v10987 = vrot.slane %v10986, 4
      %v10989 = vshll.u32 %v10734, 16
      %v10991 = vrot.slane %v10989, 5
      %v10992 = vsel %vm1945, %v10987, %v10991
      %v10994 = vshrl.u32 %v10735, 16
      %v10996 = vrot.slane %v10994, 4
      %v10997 = vshll.u32 %v10735, 16
      %v10999 = vrot.slane %v10997, 5
      %v11000 = vor.u32 %v10996, %v10999
      %v11001 = vrot.slane %v11000, 4
      %v11003 = vshll.u32 %v10736, 16
      %v11005 = vrot.slane %v11003, 5
      %v11006 = vsel %vm1945, %v11001, %v11005
      %v11007 = vshrl.u32 %v10736, 16
      %v11009 = vrot.slane %v11007, 4
      %v11010 = vor.u32 %v11009, %v11005
      %v11011 = vrot.slane %v11010, 4
      %v11013 = vshll.u32 %v10737, 16
      %v11015 = vrot.slane %v11013, 5
      %v11016 = vsel %vm1945, %v11011, %v11015
      %v11018 = vshrl.u32 %v10738, 16
      %v11020 = vrot.slane %v11018, 4
      %v11021 = vshll.u32 %v10738, 16
      %v11023 = vrot.slane %v11021, 5
      %v11024 = vor.u32 %v11020, %v11023
      %v11025 = vrot.slane %v11024, 4
      %v11027 = vshll.u32 %v10739, 16
      %v11029 = vrot.slane %v11027, 5
      %v11030 = vsel %vm1945, %v11025, %v11029
      %v11031 = vshrl.u32 %v10739, 16
      %v11033 = vrot.slane %v11031, 4
      %v11034 = vor.u32 %v11033, %v11029
      %v11035 = vrot.slane %v11034, 4
      %v11037 = vshll.u32 %v10740, 16
      %v11039 = vrot.slane %v11037, 5
      %v11040 = vsel %vm1945, %v11035, %v11039
      %v11042 = vshrl.u32 %v10741, 16
      %v11044 = vrot.slane %v11042, 4
      %v11045 = vshll.u32 %v10741, 16
      %v11047 = vrot.slane %v11045, 5
      %v11048 = vor.u32 %v11044, %v11047
      %v11049 = vrot.slane %v11048, 4
      %v11051 = vshll.u32 %v10742, 16
      %v11053 = vrot.slane %v11051, 5
      %v11054 = vsel %vm1945, %v11049, %v11053
      %v11055 = vshrl.u32 %v10742, 16
      %v11057 = vrot.slane %v11055, 4
      %v11058 = vor.u32 %v11057, %v11053
      %v11059 = vrot.slane %v11058, 4
      %v11061 = vshll.u32 %v10743, 16
      %v11063 = vrot.slane %v11061, 5
      %v11064 = vsel %vm1945, %v11059, %v11063
      %v11066 = vshrl.u32 %v10744, 16
      %v11068 = vrot.slane %v11066, 4
      %v11069 = vshll.u32 %v10744, 16
      %v11071 = vrot.slane %v11069, 5
      %v11072 = vor.u32 %v11068, %v11071
      %v11073 = vrot.slane %v11072, 4
      %v11075 = vshll.u32 %v10745, 16
      %v11077 = vrot.slane %v11075, 5
      %v11078 = vsel %vm1945, %v11073, %v11077
      %v11079 = vshrl.u32 %v10745, 16
      %v11081 = vrot.slane %v11079, 4
      %v11082 = vor.u32 %v11081, %v11077
      %v11083 = vrot.slane %v11082, 4
      %v11085 = vshll.u32 %v10746, 16
      %v11087 = vrot.slane %v11085, 5
      %v11088 = vsel %vm1945, %v11083, %v11087
      %v11090 = vshrl.u32 %v10747, 16
      %v11092 = vrot.slane %v11090, 4
      %v11093 = vshll.u32 %v10747, 16
      %v11095 = vrot.slane %v11093, 5
      %v11096 = vor.u32 %v11092, %v11095
      %v11097 = vrot.slane %v11096, 4
      %v11099 = vshll.u32 %v10748, 16
      %v11101 = vrot.slane %v11099, 5
      %v11102 = vsel %vm1945, %v11097, %v11101
      %v11103 = vshrl.u32 %v10748, 16
      %v11105 = vrot.slane %v11103, 4
      %v11106 = vor.u32 %v11105, %v11101
      %v11107 = vrot.slane %v11106, 4
      %v11109 = vshll.u32 %v10749, 16
      %v11111 = vrot.slane %v11109, 5
      %v11112 = vsel %vm1945, %v11107, %v11111
      %v11114 = vshrl.u32 %v10750, 16
      %v11116 = vrot.slane %v11114, 4
      %v11117 = vshll.u32 %v10750, 16
      %v11119 = vrot.slane %v11117, 5
      %v11120 = vor.u32 %v11116, %v11119
      %v11121 = vrot.slane %v11120, 4
      %v11123 = vshll.u32 %v10751, 16
      %v11125 = vrot.slane %v11123, 5
      %v11126 = vsel %vm1945, %v11121, %v11125
      %v11127 = vshrl.u32 %v10751, 16
      %v11129 = vrot.slane %v11127, 4
      %v11130 = vor.u32 %v11129, %v11125
      %v11131 = vrot.slane %v11130, 4
      %v11133 = vshll.u32 %v10752, 16
      %v11135 = vrot.slane %v11133, 5
      %v11136 = vsel %vm1945, %v11131, %v11135
      %s11137 = scalar_lea.vmem %s1, 72
      %v11138 = vld [vmem:[%s11137] sm:$0xf]
      %v11139 = vunpack.c.l.b16 %v10766
      %v11140 = vunpack.c.l.b16 %v10776
      %v11141 = vunpack.c.l.b16 %v10790
      %v11142 = vunpack.c.l.b16 %v10800
      %v11143 = vunpack.c.l.b16 %v10814
      %v11144 = vunpack.c.l.b16 %v10824
      %v11145 = vunpack.c.l.b16 %v10838
      %v11146 = vunpack.c.l.b16 %v10848
      %v11147 = vunpack.c.l.b16 %v10862
      %v11148 = vunpack.c.l.b16 %v10872
      %v11149 = vunpack.c.l.b16 %v10886
      %v11150 = vunpack.c.l.b16 %v10896
      %v11151 = vunpack.c.l.b16 %v10910
      %v11152 = vunpack.c.l.b16 %v10920
      %v11153 = vunpack.c.l.b16 %v10934
      %v11154 = vunpack.c.l.b16 %v10944
      %v11155 = vunpack.c.l.b16 %v10958
      %v11156 = vunpack.c.l.b16 %v10968
      %v11157 = vunpack.c.l.b16 %v10982
      %v11158 = vunpack.c.l.b16 %v10992
      %v11159 = vunpack.c.l.b16 %v11006
      %v11160 = vunpack.c.l.b16 %v11016
      %v11161 = vunpack.c.l.b16 %v11030
      %v11162 = vunpack.c.l.b16 %v11040
      %v11163 = vunpack.c.l.b16 %v11054
      %v11164 = vunpack.c.l.b16 %v11064
      %v11165 = vunpack.c.l.b16 %v11078
      %v11166 = vunpack.c.l.b16 %v11088
      %v11167 = vunpack.c.l.b16 %v11102
      %v11168 = vunpack.c.l.b16 %v11112
      %v11169 = vunpack.c.l.b16 %v11126
      %v11170 = vunpack.c.l.b16 %v11136
      %v11171 = vpack.c.b16 %v11140, %v11139
      %v11172 = vpack.c.b16 %v11142, %v11141
      %v11173 = vpack.c.b16 %v11144, %v11143
      %v11174 = vpack.c.b16 %v11146, %v11145
      %v11175 = vpack.c.b16 %v11148, %v11147
      %v11176 = vpack.c.b16 %v11150, %v11149
      %v11177 = vpack.c.b16 %v11152, %v11151
      %v11178 = vpack.c.b16 %v11154, %v11153
      %v11179 = vpack.c.b16 %v11156, %v11155
      %v11180 = vpack.c.b16 %v11158, %v11157
      %v11181 = vpack.c.b16 %v11160, %v11159
      %v11182 = vpack.c.b16 %v11162, %v11161
      %v11183 = vpack.c.b16 %v11164, %v11163
      %v11184 = vpack.c.b16 %v11166, %v11165
      %v11185 = vpack.c.b16 %v11168, %v11167
      %v11186 = vpack.c.b16 %v11170, %v11169
      %v11188 = vsel %vm254, %v11171, 0
      %v11191 = vsel %vm254, %v11172, 0
      %v11194 = vsel %vm254, %v11173, 0
      %v11197 = vsel %vm254, %v11174, 0
      %v11200 = vsel %vm254, %v11175, 0
      %v11203 = vsel %vm254, %v11176, 0
      %v11206 = vsel %vm254, %v11177, 0
      %v11209 = vsel %vm254, %v11178, 0
      %v11212 = vsel %vm254, %v11179, 0
      %v11215 = vsel %vm254, %v11180, 0
      %v11218 = vsel %vm254, %v11181, 0
      %v11221 = vsel %vm254, %v11182, 0
      %v11224 = vsel %vm254, %v11183, 0
      %v11227 = vsel %vm254, %v11184, 0
      %v11230 = vsel %vm254, %v11185, 0
      %v11233 = vsel %vm254, %v11186, 0
      %v11236 = vsel %vm1160, %v11138, 0
      %11238 = vmatprep.subr.bf16.mxu0 0
      %11239 = vmatpush1.bf16.msra.mxu0 %v11236
      %11240 = vmatprep.subr.bf16.mxu0 0
      %11241 = vmatpush1.bf16.msra.mxu0 0
      %11242 = vmatprep.subr.bf16.mxu0 0
      %11243 = vmatpush1.bf16.msra.mxu0 0
      %11244 = vmatprep.subr.bf16.mxu0 0
      %11245 = vmatpush1.bf16.msra.mxu0 0
      %11246 = vmatprep.subr.bf16.mxu0 0
      %11247 = vmatpush1.bf16.msra.mxu0 0
      %11248 = vmatprep.subr.bf16.mxu0 0
      %11249 = vmatpush1.bf16.msra.mxu0 0
      %11250 = vmatprep.subr.bf16.mxu0 0
      %11251 = vmatpush1.bf16.msra.mxu0 0
      %11252 = vmatprep.subr.bf16.mxu0 0
      %11253 = vmatpush1.bf16.msra.mxu0 0
      %11254 = vmatprep.subr.bf16.mxu0 0
      %11255 = vmatpush1.bf16.msra.mxu0 0
      %11256 = vmatprep.subr.bf16.mxu0 0
      %11257 = vmatpush1.bf16.msra.mxu0 0
      %11258 = vmatprep.subr.bf16.mxu0 0
      %11259 = vmatpush1.bf16.msra.mxu0 0
      %11260 = vmatprep.subr.bf16.mxu0 0
      %11261 = vmatpush1.bf16.msra.mxu0 0
      %11262 = vmatprep.subr.bf16.mxu0 0
      %11263 = vmatpush1.bf16.msra.mxu0 0
      %11264 = vmatprep.subr.bf16.mxu0 0
      %11265 = vmatpush1.bf16.msra.mxu0 0
      %11266 = vmatprep.subr.bf16.mxu0 0
      %11267 = vmatpush1.bf16.msra.mxu0 0
      %11268 = vmatprep.subr.bf16.mxu0 0
      %11269 = vmatpush1.bf16.msra.mxu0 0
      %11270 = vmatprep.mubr.bf16.mxu0 0
      %11271 = vmatmul.mubr.bf16.gmra.mrb[0].mxu0 %v11188
      %v11272 = vpop.f32.mrb[0].mxu0
      %v11273 = vadd.f32 0.0, %v11272
      %v11274 = vpop.f32.mrb[0].mxu0
      %v11275 = vpop.f32.mrb[0].mxu0
      %v11276 = vadd.f32 0.0, %v11275
      %v11277 = vpop.f32.mrb[0].mxu0
      %11278 = vmatprep.mubr.bf16.mxu0 0
      %11279 = vmatmul.mubr.bf16.gmra.mrb[0].mxu0 %v11191
      %v11280 = vpop.f32.mrb[0].mxu0
      %v11281 = vadd.f32 0.0, %v11280
      %v11282 = vpop.f32.mrb[0].mxu0
      %v11283 = vpop.f32.mrb[0].mxu0
      %v11284 = vadd.f32 0.0, %v11283
      %v11285 = vpop.f32.mrb[0].mxu0
      %11286 = vmatprep.mubr.bf16.mxu0 0
      %11287 = vmatmul.mubr.bf16.gmra.mrb[0].mxu0 %v11194
      %v11288 = vpop.f32.mrb[0].mxu0
      %v11289 = vadd.f32 0.0, %v11288
      %v11290 = vpop.f32.mrb[0].mxu0
      %v11291 = vpop.f32.mrb[0].mxu0
      %v11292 = vadd.f32 0.0, %v11291
      %v11293 = vpop.f32.mrb[0].mxu0
      %11294 = vmatprep.mubr.bf16.mxu0 0
      %11295 = vmatmul.mubr.bf16.gmra.mrb[0].mxu0 %v11197
      %v11296 = vpop.f32.mrb[0].mxu0
      %v11297 = vadd.f32 0.0, %v11296
      %v11298 = vpop.f32.mrb[0].mxu0
      %v11299 = vpop.f32.mrb[0].mxu0
      %v11300 = vadd.f32 0.0, %v11299
      %v11301 = vpop.f32.mrb[0].mxu0
      %11302 = vmatprep.mubr.bf16.mxu0 0
      %11303 = vmatmul.mubr.bf16.gmra.mrb[0].mxu0 %v11200
      %v11304 = vpop.f32.mrb[0].mxu0
      %v11305 = vadd.f32 0.0, %v11304
      %v11306 = vpop.f32.mrb[0].mxu0
      %v11307 = vpop.f32.mrb[0].mxu0
      %v11308 = vadd.f32 0.0, %v11307
      %v11309 = vpop.f32.mrb[0].mxu0
      %11310 = vmatprep.mubr.bf16.mxu0 0
      %11311 = vmatmul.mubr.bf16.gmra.mrb[0].mxu0 %v11203
      %v11312 = vpop.f32.mrb[0].mxu0
      %v11313 = vadd.f32 0.0, %v11312
      %v11314 = vpop.f32.mrb[0].mxu0
      %v11315 = vpop.f32.mrb[0].mxu0
      %v11316 = vadd.f32 0.0, %v11315
      %v11317 = vpop.f32.mrb[0].mxu0
      %11318 = vmatprep.mubr.bf16.mxu0 0
      %11319 = vmatmul.mubr.bf16.gmra.mrb[0].mxu0 %v11206
      %v11320 = vpop.f32.mrb[0].mxu0
      %v11321 = vadd.f32 0.0, %v11320
      %v11322 = vpop.f32.mrb[0].mxu0
      %v11323 = vpop.f32.mrb[0].mxu0
      %v11324 = vadd.f32 0.0, %v11323
      %v11325 = vpop.f32.mrb[0].mxu0
      %11326 = vmatprep.mubr.bf16.mxu0 0
      %11327 = vmatmul.mubr.bf16.gmra.mrb[0].mxu0 %v11209
      %v11328 = vpop.f32.mrb[0].mxu0
      %v11329 = vadd.f32 0.0, %v11328
      %v11330 = vpop.f32.mrb[0].mxu0
      %v11331 = vpop.f32.mrb[0].mxu0
      %v11332 = vadd.f32 0.0, %v11331
      %v11333 = vpop.f32.mrb[0].mxu0
      %11334 = vmatprep.mubr.bf16.mxu0 0
      %11335 = vmatmul.mubr.bf16.gmra.mrb[0].mxu0 %v11212
      %v11336 = vpop.f32.mrb[0].mxu0
      %v11337 = vadd.f32 0.0, %v11336
      %v11338 = vpop.f32.mrb[0].mxu0
      %v11339 = vpop.f32.mrb[0].mxu0
      %v11340 = vadd.f32 0.0, %v11339
      %v11341 = vpop.f32.mrb[0].mxu0
      %11342 = vmatprep.mubr.bf16.mxu0 0
      %11343 = vmatmul.mubr.bf16.gmra.mrb[0].mxu0 %v11215
      %v11344 = vpop.f32.mrb[0].mxu0
      %v11345 = vadd.f32 0.0, %v11344
      %v11346 = vpop.f32.mrb[0].mxu0
      %v11347 = vpop.f32.mrb[0].mxu0
      %v11348 = vadd.f32 0.0, %v11347
      %v11349 = vpop.f32.mrb[0].mxu0
      %11350 = vmatprep.mubr.bf16.mxu0 0
      %11351 = vmatmul.mubr.bf16.gmra.mrb[0].mxu0 %v11218
      %v11352 = vpop.f32.mrb[0].mxu0
      %v11353 = vadd.f32 0.0, %v11352
      %v11354 = vpop.f32.mrb[0].mxu0
      %v11355 = vpop.f32.mrb[0].mxu0
      %v11356 = vadd.f32 0.0, %v11355
      %v11357 = vpop.f32.mrb[0].mxu0
      %11358 = vmatprep.mubr.bf16.mxu0 0
      %11359 = vmatmul.mubr.bf16.gmra.mrb[0].mxu0 %v11221
      %v11360 = vpop.f32.mrb[0].mxu0
      %v11361 = vadd.f32 0.0, %v11360
      %v11362 = vpop.f32.mrb[0].mxu0
      %v11363 = vpop.f32.mrb[0].mxu0
      %v11364 = vadd.f32 0.0, %v11363
      %v11365 = vpop.f32.mrb[0].mxu0
      %11366 = vmatprep.mubr.bf16.mxu0 0
      %11367 = vmatmul.mubr.bf16.gmra.mrb[0].mxu0 %v11224
      %v11368 = vpop.f32.mrb[0].mxu0
      %v11369 = vadd.f32 0.0, %v11368
      %v11370 = vpop.f32.mrb[0].mxu0
      %v11371 = vpop.f32.mrb[0].mxu0
      %v11372 = vadd.f32 0.0, %v11371
      %v11373 = vpop.f32.mrb[0].mxu0
      %11374 = vmatprep.mubr.bf16.mxu0 0
      %11375 = vmatmul.mubr.bf16.gmra.mrb[0].mxu0 %v11227
      %v11376 = vpop.f32.mrb[0].mxu0
      %v11377 = vadd.f32 0.0, %v11376
      %v11378 = vpop.f32.mrb[0].mxu0
      %v11379 = vpop.f32.mrb[0].mxu0
      %v11380 = vadd.f32 0.0, %v11379
      %v11381 = vpop.f32.mrb[0].mxu0
      %11382 = vmatprep.mubr.bf16.mxu0 0
      %11383 = vmatmul.mubr.bf16.gmra.mrb[0].mxu0 %v11230
      %v11384 = vpop.f32.mrb[0].mxu0
      %v11385 = vadd.f32 0.0, %v11384
      %v11386 = vpop.f32.mrb[0].mxu0
      %v11387 = vpop.f32.mrb[0].mxu0
      %v11388 = vadd.f32 0.0, %v11387
      %v11389 = vpop.f32.mrb[0].mxu0
      %11390 = vmatprep.mubr.bf16.mxu0 0
      %11391 = vmatmul.mubr.bf16.gmra.mrb[0].mxu0 %v11233
      %v11392 = vpop.f32.mrb[0].mxu0
      %v11393 = vadd.f32 0.0, %v11392
      %v11394 = vpop.f32.mrb[0].mxu0
      %v11395 = vpop.f32.mrb[0].mxu0
      %v11396 = vadd.f32 0.0, %v11395
      %v11397 = vpop.f32.mrb[0].mxu0
      %11398 = vdwg.mxu0
      %v11399 = vadd.f32 %v10673, %v11273
      %v11400 = vadd.f32 %v10674, %v11276
      %v11401 = vadd.f32 %v10675, %v11281
      %v11402 = vadd.f32 %v10676, %v11284
      %v11403 = vadd.f32 %v10677, %v11289
      %v11404 = vadd.f32 %v10678, %v11292
      %v11405 = vadd.f32 %v10679, %v11297
      %v11406 = vadd.f32 %v10680, %v11300
      %v11407 = vadd.f32 %v10681, %v11305
      %v11408 = vadd.f32 %v10682, %v11308
      %v11409 = vadd.f32 %v10683, %v11313
      %v11410 = vadd.f32 %v10684, %v11316
      %v11411 = vadd.f32 %v10685, %v11321
      %v11412 = vadd.f32 %v10686, %v11324
      %v11413 = vadd.f32 %v10687, %v11329
      %v11414 = vadd.f32 %v10688, %v11332
      %v11415 = vadd.f32 %v10689, %v11337
      %v11416 = vadd.f32 %v10690, %v11340
      %v11417 = vadd.f32 %v10691, %v11345
      %v11418 = vadd.f32 %v10692, %v11348
      %v11419 = vadd.f32 %v10693, %v11353
      %v11420 = vadd.f32 %v10694, %v11356
      %v11421 = vadd.f32 %v10695, %v11361
      %v11422 = vadd.f32 %v10696, %v11364
      %v11423 = vadd.f32 %v10697, %v11369
      %v11424 = vadd.f32 %v10698, %v11372
      %v11425 = vadd.f32 %v10699, %v11377
      %v11426 = vadd.f32 %v10700, %v11380
      %v11427 = vadd.f32 %v10701, %v11385
      %v11428 = vadd.f32 %v10702, %v11388
      %v11429 = vadd.f32 %v10703, %v11393
      %v11430 = vadd.f32 %v10704, %v11396
      %v11431 = vld [vmem:[#allocation2 + $0x8] sm:$0xe]
      %v11432 = vld [vmem:[#allocation2 + $0x1c] sm:$0xe]
      %v11433 = vld [vmem:[#allocation2 + $0x30] sm:$0xe]
      %v11434 = vld [vmem:[#allocation2 + $0x44] sm:$0xe]
      %v11435 = vld [vmem:[#allocation2 + $0x58] sm:$0xe]
      %v11436 = vld [vmem:[#allocation2 + $0x6c] sm:$0xe]
      %v11437 = vld [vmem:[#allocation2 + $0x80] sm:$0xe]
      %v11438 = vld [vmem:[#allocation2 + $0x94] sm:$0xe]
      %v11439 = vld [vmem:[#allocation2 + $0xa8] sm:$0xe]
      %v11440 = vld [vmem:[#allocation2 + $0xbc] sm:$0xe]
      %v11441 = vld [vmem:[#allocation2 + $0xd0] sm:$0xe]
      %v11442 = vld [vmem:[#allocation2 + $0xe4] sm:$0xe]
      %v11443 = vld [vmem:[#allocation2 + $0xf8] sm:$0xe]
      %v11444 = vld [vmem:[#allocation2 + $0x10c] sm:$0xe]
      %v11445 = vld [vmem:[#allocation2 + $0x120] sm:$0xe]
      %v11446 = vld [vmem:[#allocation2 + $0x134] sm:$0xe]
      %v11495 = vrot.slane %v11431, 5
      %v11496 = vrot.slane %v11495, 4
      %v11497 = vrot.slane %v10706, 5
      %v11498 = vsel %vm2690, %v11496, %v11497
      %v11499 = vrot.slane %v11497, 4
      %v11500 = vrot.slane %v10707, 5
      %v11501 = vsel %vm2690, %v11499, %v11500
      %v11502 = vrot.slane %v11432, 5
      %v11503 = vrot.slane %v11502, 4
      %v11504 = vrot.slane %v10709, 5
      %v11505 = vsel %vm2690, %v11503, %v11504
      %v11506 = vrot.slane %v11504, 4
      %v11507 = vrot.slane %v10710, 5
      %v11508 = vsel %vm2690, %v11506, %v11507
      %v11509 = vrot.slane %v11433, 5
      %v11510 = vrot.slane %v11509, 4
      %v11511 = vrot.slane %v10712, 5
      %v11512 = vsel %vm2690, %v11510, %v11511
      %v11513 = vrot.slane %v11511, 4
      %v11514 = vrot.slane %v10713, 5
      %v11515 = vsel %vm2690, %v11513, %v11514
      %v11516 = vrot.slane %v11434, 5
      %v11517 = vrot.slane %v11516, 4
      %v11518 = vrot.slane %v10715, 5
      %v11519 = vsel %vm2690, %v11517, %v11518
      %v11520 = vrot.slane %v11518, 4
      %v11521 = vrot.slane %v10716, 5
      %v11522 = vsel %vm2690, %v11520, %v11521
      %v11523 = vrot.slane %v11435, 5
      %v11524 = vrot.slane %v11523, 4
      %v11525 = vrot.slane %v10718, 5
      %v11526 = vsel %vm2690, %v11524, %v11525
      %v11527 = vrot.slane %v11525, 4
      %v11528 = vrot.slane %v10719, 5
      %v11529 = vsel %vm2690, %v11527, %v11528
      %v11530 = vrot.slane %v11436, 5
      %v11531 = vrot.slane %v11530, 4
      %v11532 = vrot.slane %v10721, 5
      %v11533 = vsel %vm2690, %v11531, %v11532
      %v11534 = vrot.slane %v11532, 4
      %v11535 = vrot.slane %v10722, 5
      %v11536 = vsel %vm2690, %v11534, %v11535
      %v11537 = vrot.slane %v11437, 5
      %v11538 = vrot.slane %v11537, 4
      %v11539 = vrot.slane %v10724, 5
      %v11540 = vsel %vm2690, %v11538, %v11539
      %v11541 = vrot.slane %v11539, 4
      %v11542 = vrot.slane %v10725, 5
      %v11543 = vsel %vm2690, %v11541, %v11542
      %v11544 = vrot.slane %v11438, 5
      %v11545 = vrot.slane %v11544, 4
      %v11546 = vrot.slane %v10727, 5
      %v11547 = vsel %vm2690, %v11545, %v11546
      %v11548 = vrot.slane %v11546, 4
      %v11549 = vrot.slane %v10728, 5
      %v11550 = vsel %vm2690, %v11548, %v11549
      %v11551 = vrot.slane %v11439, 5
      %v11552 = vrot.slane %v11551, 4
      %v11553 = vrot.slane %v10730, 5
      %v11554 = vsel %vm2690, %v11552, %v11553
      %v11555 = vrot.slane %v11553, 4
      %v11556 = vrot.slane %v10731, 5
      %v11557 = vsel %vm2690, %v11555, %v11556
      %v11558 = vrot.slane %v11440, 5
      %v11559 = vrot.slane %v11558, 4
      %v11560 = vrot.slane %v10733, 5
      %v11561 = vsel %vm2690, %v11559, %v11560
      %v11562 = vrot.slane %v11560, 4
      %v11563 = vrot.slane %v10734, 5
      %v11564 = vsel %vm2690, %v11562, %v11563
      %v11565 = vrot.slane %v11441, 5
      %v11566 = vrot.slane %v11565, 4
      %v11567 = vrot.slane %v10736, 5
      %v11568 = vsel %vm2690, %v11566, %v11567
      %v11569 = vrot.slane %v11567, 4
      %v11570 = vrot.slane %v10737, 5
      %v11571 = vsel %vm2690, %v11569, %v11570
      %v11572 = vrot.slane %v11442, 5
      %v11573 = vrot.slane %v11572, 4
      %v11574 = vrot.slane %v10739, 5
      %v11575 = vsel %vm2690, %v11573, %v11574
      %v11576 = vrot.slane %v11574, 4
      %v11577 = vrot.slane %v10740, 5
      %v11578 = vsel %vm2690, %v11576, %v11577
      %v11579 = vrot.slane %v11443, 5
      %v11580 = vrot.slane %v11579, 4
      %v11581 = vrot.slane %v10742, 5
      %v11582 = vsel %vm2690, %v11580, %v11581
      %v11583 = vrot.slane %v11581, 4
      %v11584 = vrot.slane %v10743, 5
      %v11585 = vsel %vm2690, %v11583, %v11584
      %v11586 = vrot.slane %v11444, 5
      %v11587 = vrot.slane %v11586, 4
      %v11588 = vrot.slane %v10745, 5
      %v11589 = vsel %vm2690, %v11587, %v11588
      %v11590 = vrot.slane %v11588, 4
      %v11591 = vrot.slane %v10746, 5
      %v11592 = vsel %vm2690, %v11590, %v11591
      %v11593 = vrot.slane %v11445, 5
      %v11594 = vrot.slane %v11593, 4
      %v11595 = vrot.slane %v10748, 5
      %v11596 = vsel %vm2690, %v11594, %v11595
      %v11597 = vrot.slane %v11595, 4
      %v11598 = vrot.slane %v10749, 5
      %v11599 = vsel %vm2690, %v11597, %v11598
      %v11600 = vrot.slane %v11446, 5
      %v11601 = vrot.slane %v11600, 4
      %v11602 = vrot.slane %v10751, 5
      %v11603 = vsel %vm2690, %v11601, %v11602
      %v11604 = vrot.slane %v11602, 4
      %v11605 = vrot.slane %v10752, 5
      %v11606 = vsel %vm2690, %v11604, %v11605
      %s11607 = scalar_lea.vmem %s1, 76
      %v11608 = vld [vmem:[%s11607] sm:$0xf]
      %v11609 = vunpack.c.l.b16 %v11498
      %v11610 = vunpack.c.l.b16 %v11501
      %v11611 = vunpack.c.l.b16 %v11505
      %v11612 = vunpack.c.l.b16 %v11508
      %v11613 = vunpack.c.l.b16 %v11512
      %v11614 = vunpack.c.l.b16 %v11515
      %v11615 = vunpack.c.l.b16 %v11519
      %v11616 = vunpack.c.l.b16 %v11522
      %v11617 = vunpack.c.l.b16 %v11526
      %v11618 = vunpack.c.l.b16 %v11529
      %v11619 = vunpack.c.l.b16 %v11533
      %v11620 = vunpack.c.l.b16 %v11536
      %v11621 = vunpack.c.l.b16 %v11540
      %v11622 = vunpack.c.l.b16 %v11543
      %v11623 = vunpack.c.l.b16 %v11547
      %v11624 = vunpack.c.l.b16 %v11550
      %v11625 = vunpack.c.l.b16 %v11554
      %v11626 = vunpack.c.l.b16 %v11557
      %v11627 = vunpack.c.l.b16 %v11561
      %v11628 = vunpack.c.l.b16 %v11564
      %v11629 = vunpack.c.l.b16 %v11568
      %v11630 = vunpack.c.l.b16 %v11571
      %v11631 = vunpack.c.l.b16 %v11575
      %v11632 = vunpack.c.l.b16 %v11578
      %v11633 = vunpack.c.l.b16 %v11582
      %v11634 = vunpack.c.l.b16 %v11585
      %v11635 = vunpack.c.l.b16 %v11589
      %v11636 = vunpack.c.l.b16 %v11592
      %v11637 = vunpack.c.l.b16 %v11596
      %v11638 = vunpack.c.l.b16 %v11599
      %v11639 = vunpack.c.l.b16 %v11603
      %v11640 = vunpack.c.l.b16 %v11606
      %v11641 = vpack.c.b16 %v11610, %v11609
      %v11642 = vpack.c.b16 %v11612, %v11611
      %v11643 = vpack.c.b16 %v11614, %v11613
      %v11644 = vpack.c.b16 %v11616, %v11615
      %v11645 = vpack.c.b16 %v11618, %v11617
      %v11646 = vpack.c.b16 %v11620, %v11619
      %v11647 = vpack.c.b16 %v11622, %v11621
      %v11648 = vpack.c.b16 %v11624, %v11623
      %v11649 = vpack.c.b16 %v11626, %v11625
      %v11650 = vpack.c.b16 %v11628, %v11627
      %v11651 = vpack.c.b16 %v11630, %v11629
      %v11652 = vpack.c.b16 %v11632, %v11631
      %v11653 = vpack.c.b16 %v11634, %v11633
      %v11654 = vpack.c.b16 %v11636, %v11635
      %v11655 = vpack.c.b16 %v11638, %v11637
      %v11656 = vpack.c.b16 %v11640, %v11639
      %v11658 = vsel %vm254, %v11641, 0
      %v11661 = vsel %vm254, %v11642, 0
      %v11664 = vsel %vm254, %v11643, 0
      %v11667 = vsel %vm254, %v11644, 0
      %v11670 = vsel %vm254, %v11645, 0
      %v11673 = vsel %vm254, %v11646, 0
      %v11676 = vsel %vm254, %v11647, 0
      %v11679 = vsel %vm254, %v11648, 0
      %v11682 = vsel %vm254, %v11649, 0
      %v11685 = vsel %vm254, %v11650, 0
      %v11688 = vsel %vm254, %v11651, 0
      %v11691 = vsel %vm254, %v11652, 0
      %v11694 = vsel %vm254, %v11653, 0
      %v11697 = vsel %vm254, %v11654, 0
      %v11700 = vsel %vm254, %v11655, 0
      %v11703 = vsel %vm254, %v11656, 0
      %v11706 = vsel %vm1160, %v11608, 0
      %11708 = vmatprep.subr.bf16.mxu0 0
      %11709 = vmatpush1.bf16.msra.mxu0 %v11706
      %11710 = vmatprep.subr.bf16.mxu0 0
      %11711 = vmatpush1.bf16.msra.mxu0 0
      %11712 = vmatprep.subr.bf16.mxu0 0
      %11713 = vmatpush1.bf16.msra.mxu0 0
      %11714 = vmatprep.subr.bf16.mxu0 0
      %11715 = vmatpush1.bf16.msra.mxu0 0
      %11716 = vmatprep.subr.bf16.mxu0 0
      %11717 = vmatpush1.bf16.msra.mxu0 0
      %11718 = vmatprep.subr.bf16.mxu0 0
      %11719 = vmatpush1.bf16.msra.mxu0 0
      %11720 = vmatprep.subr.bf16.mxu0 0
      %11721 = vmatpush1.bf16.msra.mxu0 0
      %11722 = vmatprep.subr.bf16.mxu0 0
      %11723 = vmatpush1.bf16.msra.mxu0 0
      %11724 = vmatprep.subr.bf16.mxu0 0
      %11725 = vmatpush1.bf16.msra.mxu0 0
      %11726 = vmatprep.subr.bf16.mxu0 0
      %11727 = vmatpush1.bf16.msra.mxu0 0
      %11728 = vmatprep.subr.bf16.mxu0 0
      %11729 = vmatpush1.bf16.msra.mxu0 0
      %11730 = vmatprep.subr.bf16.mxu0 0
      %11731 = vmatpush1.bf16.msra.mxu0 0
      %11732 = vmatprep.subr.bf16.mxu0 0
      %11733 = vmatpush1.bf16.msra.mxu0 0
      %11734 = vmatprep.subr.bf16.mxu0 0
      %11735 = vmatpush1.bf16.msra.mxu0 0
      %11736 = vmatprep.subr.bf16.mxu0 0
      %11737 = vmatpush1.bf16.msra.mxu0 0
      %11738 = vmatprep.subr.bf16.mxu0 0
      %11739 = vmatpush1.bf16.msra.mxu0 0
      %11740 = vmatprep.mubr.bf16.mxu0 0
      %11741 = vmatmul.mubr.bf16.gmra.mrb[0].mxu0 %v11658
      %v11742 = vpop.f32.mrb[0].mxu0
      %v11743 = vadd.f32 0.0, %v11742
      %v11744 = vpop.f32.mrb[0].mxu0
      %v11745 = vpop.f32.mrb[0].mxu0
      %v11746 = vadd.f32 0.0, %v11745
      %v11747 = vpop.f32.mrb[0].mxu0
      %11748 = vmatprep.mubr.bf16.mxu0 0
      %11749 = vmatmul.mubr.bf16.gmra.mrb[0].mxu0 %v11661
      %v11750 = vpop.f32.mrb[0].mxu0
      %v11751 = vadd.f32 0.0, %v11750
      %v11752 = vpop.f32.mrb[0].mxu0
      %v11753 = vpop.f32.mrb[0].mxu0
      %v11754 = vadd.f32 0.0, %v11753
      %v11755 = vpop.f32.mrb[0].mxu0
      %11756 = vmatprep.mubr.bf16.mxu0 0
      %11757 = vmatmul.mubr.bf16.gmra.mrb[0].mxu0 %v11664
      %v11758 = vpop.f32.mrb[0].mxu0
      %v11759 = vadd.f32 0.0, %v11758
      %v11760 = vpop.f32.mrb[0].mxu0
      %v11761 = vpop.f32.mrb[0].mxu0
      %v11762 = vadd.f32 0.0, %v11761
      %v11763 = vpop.f32.mrb[0].mxu0
      %11764 = vmatprep.mubr.bf16.mxu0 0
      %11765 = vmatmul.mubr.bf16.gmra.mrb[0].mxu0 %v11667
      %v11766 = vpop.f32.mrb[0].mxu0
      %v11767 = vadd.f32 0.0, %v11766
      %v11768 = vpop.f32.mrb[0].mxu0
      %v11769 = vpop.f32.mrb[0].mxu0
      %v11770 = vadd.f32 0.0, %v11769
      %v11771 = vpop.f32.mrb[0].mxu0
      %11772 = vmatprep.mubr.bf16.mxu0 0
      %11773 = vmatmul.mubr.bf16.gmra.mrb[0].mxu0 %v11670
      %v11774 = vpop.f32.mrb[0].mxu0
      %v11775 = vadd.f32 0.0, %v11774
      %v11776 = vpop.f32.mrb[0].mxu0
      %v11777 = vpop.f32.mrb[0].mxu0
      %v11778 = vadd.f32 0.0, %v11777
      %v11779 = vpop.f32.mrb[0].mxu0
      %11780 = vmatprep.mubr.bf16.mxu0 0
      %11781 = vmatmul.mubr.bf16.gmra.mrb[0].mxu0 %v11673
      %v11782 = vpop.f32.mrb[0].mxu0
      %v11783 = vadd.f32 0.0, %v11782
      %v11784 = vpop.f32.mrb[0].mxu0
      %v11785 = vpop.f32.mrb[0].mxu0
      %v11786 = vadd.f32 0.0, %v11785
      %v11787 = vpop.f32.mrb[0].mxu0
      %11788 = vmatprep.mubr.bf16.mxu0 0
      %11789 = vmatmul.mubr.bf16.gmra.mrb[0].mxu0 %v11676
      %v11790 = vpop.f32.mrb[0].mxu0
      %v11791 = vadd.f32 0.0, %v11790
      %v11792 = vpop.f32.mrb[0].mxu0
      %v11793 = vpop.f32.mrb[0].mxu0
      %v11794 = vadd.f32 0.0, %v11793
      %v11795 = vpop.f32.mrb[0].mxu0
      %11796 = vmatprep.mubr.bf16.mxu0 0
      %11797 = vmatmul.mubr.bf16.gmra.mrb[0].mxu0 %v11679
      %v11798 = vpop.f32.mrb[0].mxu0
      %v11799 = vadd.f32 0.0, %v11798
      %v11800 = vpop.f32.mrb[0].mxu0
      %v11801 = vpop.f32.mrb[0].mxu0
      %v11802 = vadd.f32 0.0, %v11801
      %v11803 = vpop.f32.mrb[0].mxu0
      %11804 = vmatprep.mubr.bf16.mxu0 0
      %11805 = vmatmul.mubr.bf16.gmra.mrb[0].mxu0 %v11682
      %v11806 = vpop.f32.mrb[0].mxu0
      %v11807 = vadd.f32 0.0, %v11806
      %v11808 = vpop.f32.mrb[0].mxu0
      %v11809 = vpop.f32.mrb[0].mxu0
      %v11810 = vadd.f32 0.0, %v11809
      %v11811 = vpop.f32.mrb[0].mxu0
      %11812 = vmatprep.mubr.bf16.mxu0 0
      %11813 = vmatmul.mubr.bf16.gmra.mrb[0].mxu0 %v11685
      %v11814 = vpop.f32.mrb[0].mxu0
      %v11815 = vadd.f32 0.0, %v11814
      %v11816 = vpop.f32.mrb[0].mxu0
      %v11817 = vpop.f32.mrb[0].mxu0
      %v11818 = vadd.f32 0.0, %v11817
      %v11819 = vpop.f32.mrb[0].mxu0
      %11820 = vmatprep.mubr.bf16.mxu0 0
      %11821 = vmatmul.mubr.bf16.gmra.mrb[0].mxu0 %v11688
      %v11822 = vpop.f32.mrb[0].mxu0
      %v11823 = vadd.f32 0.0, %v11822
      %v11824 = vpop.f32.mrb[0].mxu0
      %v11825 = vpop.f32.mrb[0].mxu0
      %v11826 = vadd.f32 0.0, %v11825
      %v11827 = vpop.f32.mrb[0].mxu0
      %11828 = vmatprep.mubr.bf16.mxu0 0
      %11829 = vmatmul.mubr.bf16.gmra.mrb[0].mxu0 %v11691
      %v11830 = vpop.f32.mrb[0].mxu0
      %v11831 = vadd.f32 0.0, %v11830
      %v11832 = vpop.f32.mrb[0].mxu0
      %v11833 = vpop.f32.mrb[0].mxu0
      %v11834 = vadd.f32 0.0, %v11833
      %v11835 = vpop.f32.mrb[0].mxu0
      %11836 = vmatprep.mubr.bf16.mxu0 0
      %11837 = vmatmul.mubr.bf16.gmra.mrb[0].mxu0 %v11694
      %v11838 = vpop.f32.mrb[0].mxu0
      %v11839 = vadd.f32 0.0, %v11838
      %v11840 = vpop.f32.mrb[0].mxu0
      %v11841 = vpop.f32.mrb[0].mxu0
      %v11842 = vadd.f32 0.0, %v11841
      %v11843 = vpop.f32.mrb[0].mxu0
      %11844 = vmatprep.mubr.bf16.mxu0 0
      %11845 = vmatmul.mubr.bf16.gmra.mrb[0].mxu0 %v11697
      %v11846 = vpop.f32.mrb[0].mxu0
      %v11847 = vadd.f32 0.0, %v11846
      %v11848 = vpop.f32.mrb[0].mxu0
      %v11849 = vpop.f32.mrb[0].mxu0
      %v11850 = vadd.f32 0.0, %v11849
      %v11851 = vpop.f32.mrb[0].mxu0
      %11852 = vmatprep.mubr.bf16.mxu0 0
      %11853 = vmatmul.mubr.bf16.gmra.mrb[0].mxu0 %v11700
      %v11854 = vpop.f32.mrb[0].mxu0
      %v11855 = vadd.f32 0.0, %v11854
      %v11856 = vpop.f32.mrb[0].mxu0
      %v11857 = vpop.f32.mrb[0].mxu0
      %v11858 = vadd.f32 0.0, %v11857
      %v11859 = vpop.f32.mrb[0].mxu0
      %11860 = vmatprep.mubr.bf16.mxu0 0
      %11861 = vmatmul.mubr.bf16.gmra.mrb[0].mxu0 %v11703
      %v11862 = vpop.f32.mrb[0].mxu0
      %v11863 = vadd.f32 0.0, %v11862
      %v11864 = vpop.f32.mrb[0].mxu0
      %v11865 = vpop.f32.mrb[0].mxu0
      %v11866 = vadd.f32 0.0, %v11865
      %v11867 = vpop.f32.mrb[0].mxu0
      %11868 = vdwg.mxu0
      %v11869 = vadd.f32 %v11399, %v11743
      %v11870 = vadd.f32 %v11400, %v11746
      %v11871 = vadd.f32 %v11401, %v11751
      %v11872 = vadd.f32 %v11402, %v11754
      %v11873 = vadd.f32 %v11403, %v11759
      %v11874 = vadd.f32 %v11404, %v11762
      %v11875 = vadd.f32 %v11405, %v11767
      %v11876 = vadd.f32 %v11406, %v11770
      %v11877 = vadd.f32 %v11407, %v11775
      %v11878 = vadd.f32 %v11408, %v11778
      %v11879 = vadd.f32 %v11409, %v11783
      %v11880 = vadd.f32 %v11410, %v11786
      %v11881 = vadd.f32 %v11411, %v11791
      %v11882 = vadd.f32 %v11412, %v11794
      %v11883 = vadd.f32 %v11413, %v11799
      %v11884 = vadd.f32 %v11414, %v11802
      %v11885 = vadd.f32 %v11415, %v11807
      %v11886 = vadd.f32 %v11416, %v11810
      %v11887 = vadd.f32 %v11417, %v11815
      %v11888 = vadd.f32 %v11418, %v11818
      %v11889 = vadd.f32 %v11419, %v11823
      %v11890 = vadd.f32 %v11420, %v11826
      %v11891 = vadd.f32 %v11421, %v11831
      %v11892 = vadd.f32 %v11422, %v11834
      %v11893 = vadd.f32 %v11423, %v11839
      %v11894 = vadd.f32 %v11424, %v11842
      %v11895 = vadd.f32 %v11425, %v11847
      %v11896 = vadd.f32 %v11426, %v11850
      %v11897 = vadd.f32 %v11427, %v11855
      %v11898 = vadd.f32 %v11428, %v11858
      %v11899 = vadd.f32 %v11429, %v11863
      %v11900 = vadd.f32 %v11430, %v11866
      %s11901 = scalar_lea.vmem %s2, 3
      %v11902 = vld [vmem:[%s11901] sm:$0x1]
      %v11904 = vlaneseq
      %v11905 = vshrl.u32 %v11904, 7
      %v11906 = vsub.s32 0, %v11905
      %v11907 = vrot.slane %v11902, %v11906
      %v11909 = vadd.f32 %v11869, %v11907
      %v11910 = vadd.f32 %v11870, %v11907
      %v11911 = vadd.f32 %v11871, %v11907
      %v11912 = vadd.f32 %v11872, %v11907
      %v11913 = vadd.f32 %v11873, %v11907
      %v11914 = vadd.f32 %v11874, %v11907
      %v11915 = vadd.f32 %v11875, %v11907
      %v11916 = vadd.f32 %v11876, %v11907
      %v11917 = vadd.f32 %v11877, %v11907
      %v11918 = vadd.f32 %v11878, %v11907
      %v11919 = vadd.f32 %v11879, %v11907
      %v11920 = vadd.f32 %v11880, %v11907
      %v11921 = vadd.f32 %v11881, %v11907
      %v11922 = vadd.f32 %v11882, %v11907
      %v11923 = vadd.f32 %v11883, %v11907
      %v11924 = vadd.f32 %v11884, %v11907
      %v11925 = vadd.f32 %v11885, %v11907
      %v11926 = vadd.f32 %v11886, %v11907
      %v11927 = vadd.f32 %v11887, %v11907
      %v11928 = vadd.f32 %v11888, %v11907
      %v11929 = vadd.f32 %v11889, %v11907
      %v11930 = vadd.f32 %v11890, %v11907
      %v11931 = vadd.f32 %v11891, %v11907
      %v11932 = vadd.f32 %v11892, %v11907
      %v11933 = vadd.f32 %v11893, %v11907
      %v11934 = vadd.f32 %v11894, %v11907
      %v11935 = vadd.f32 %v11895, %v11907
      %v11936 = vadd.f32 %v11896, %v11907
      %v11937 = vadd.f32 %v11897, %v11907
      %v11938 = vadd.f32 %v11898, %v11907
      %v11939 = vadd.f32 %v11899, %v11907
      %v11940 = vadd.f32 %v11900, %v11907
      %v11941 = vmax.f32 %v11909, 0.0
      %v11942 = vmax.f32 %v11910, 0.0
      %v11943 = vmax.f32 %v11911, 0.0
      %v11944 = vmax.f32 %v11912, 0.0
      %v11945 = vmax.f32 %v11913, 0.0
      %v11946 = vmax.f32 %v11914, 0.0
      %v11947 = vmax.f32 %v11915, 0.0
      %v11948 = vmax.f32 %v11916, 0.0
      %v11949 = vmax.f32 %v11917, 0.0
      %v11950 = vmax.f32 %v11918, 0.0
      %v11951 = vmax.f32 %v11919, 0.0
      %v11952 = vmax.f32 %v11920, 0.0
      %v11953 = vmax.f32 %v11921, 0.0
      %v11954 = vmax.f32 %v11922, 0.0
      %v11955 = vmax.f32 %v11923, 0.0
      %v11956 = vmax.f32 %v11924, 0.0
      %v11957 = vmax.f32 %v11925, 0.0
      %v11958 = vmax.f32 %v11926, 0.0
      %v11959 = vmax.f32 %v11927, 0.0
      %v11960 = vmax.f32 %v11928, 0.0
      %v11961 = vmax.f32 %v11929, 0.0
      %v11962 = vmax.f32 %v11930, 0.0
      %v11963 = vmax.f32 %v11931, 0.0
      %v11964 = vmax.f32 %v11932, 0.0
      %v11965 = vmax.f32 %v11933, 0.0
      %v11966 = vmax.f32 %v11934, 0.0
      %v11967 = vmax.f32 %v11935, 0.0
      %v11968 = vmax.f32 %v11936, 0.0
      %v11969 = vmax.f32 %v11937, 0.0
      %v11970 = vmax.f32 %v11938, 0.0
      %v11971 = vmax.f32 %v11939, 0.0
      %v11972 = vmax.f32 %v11940, 0.0
      %v11973 = vadd.f32 %v9103, %v11957
      %v11974 = vadd.f32 %v9104, %v11958
      %v11975 = vadd.f32 %v9105, %v11959
      %v11976 = vadd.f32 %v9106, %v11960
      %v11977 = vadd.f32 %v9107, %v11961
      %v11978 = vadd.f32 %v9108, %v11962
      %v11979 = vadd.f32 %v9109, %v11963
      %v11980 = vadd.f32 %v9110, %v11964
      %v11981 = vadd.f32 %v9111, %v11965
      %v11982 = vadd.f32 %v9112, %v11966
      %v11983 = vadd.f32 %v9113, %v11967
      %v11984 = vadd.f32 %v9114, %v11968
      %v11985 = vadd.f32 %v9115, %v11969
      %v11986 = vadd.f32 %v9116, %v11970
      %v11987 = vadd.f32 %v9117, %v11971
      %v11988 = vadd.f32 %v9118, %v11972
      %11989 = vst.msk [vmem:[%s170] sm:$0xff] %vm254, %v11973
      %11990 = vst.msk [vmem:[%s170 + $0x8] sm:$0xff] %vm254, %v11974
      %11991 = vst.msk [vmem:[%s170 + $0x10] sm:$0xff] %vm254, %v11975
      %11992 = vst.msk [vmem:[%s170 + $0x18] sm:$0xff] %vm254, %v11976
      %11993 = vst.msk [vmem:[%s170 + $0x20] sm:$0xff] %vm254, %v11977
      %11994 = vst.msk [vmem:[%s170 + $0x28] sm:$0xff] %vm254, %v11978
      %11995 = vst.msk [vmem:[%s170 + $0x30] sm:$0xff] %vm254, %v11979
      %11996 = vst.msk [vmem:[%s170 + $0x38] sm:$0xff] %vm254, %v11980
      %11997 = vst.msk [vmem:[%s170 + $0x40] sm:$0xff] %vm254, %v11981
      %11998 = vst.msk [vmem:[%s170 + $0x48] sm:$0xff] %vm254, %v11982
      %11999 = vst.msk [vmem:[%s170 + $0x50] sm:$0xff] %vm254, %v11983
      %12000 = vst.msk [vmem:[%s170 + $0x58] sm:$0xff] %vm254, %v11984
      %12001 = vst.msk [vmem:[%s170 + $0x60] sm:$0xff] %vm254, %v11985
      %12002 = vst.msk [vmem:[%s170 + $0x68] sm:$0xff] %vm254, %v11986
      %12003 = vst.msk [vmem:[%s170 + $0x70] sm:$0xff] %vm254, %v11987
      %12004 = vst.msk [vmem:[%s170 + $0x78] sm:$0xff] %vm254, %v11988
      %v12005 = vadd.f32 %v9119, %v11941
      %v12006 = vadd.f32 %v9120, %v11942
      %v12007 = vadd.f32 %v9121, %v11943
      %v12008 = vadd.f32 %v9122, %v11944
      %v12009 = vadd.f32 %v9123, %v11945
      %v12010 = vadd.f32 %v9124, %v11946
      %v12011 = vadd.f32 %v9125, %v11947
      %v12012 = vadd.f32 %v9126, %v11948
      %v12013 = vadd.f32 %v9127, %v11949
      %v12014 = vadd.f32 %v9128, %v11950
      %v12015 = vadd.f32 %v9129, %v11951
      %v12016 = vadd.f32 %v9130, %v11952
      %v12017 = vadd.f32 %v9131, %v11953
      %v12018 = vadd.f32 %v9132, %v11954
      %v12019 = vadd.f32 %v9133, %v11955
      %v12020 = vadd.f32 %v9134, %v11956
      %12021 = vst.msk [vmem:[%s6151] sm:$0xff] %vm254, %v12005
      %12022 = vst.msk [vmem:[%s6151 + $0x8] sm:$0xff] %vm254, %v12006
      %12023 = vst.msk [vmem:[%s6151 + $0x10] sm:$0xff] %vm254, %v12007
      %12024 = vst.msk [vmem:[%s6151 + $0x18] sm:$0xff] %vm254, %v12008
      %12025 = vst.msk [vmem:[%s6151 + $0x20] sm:$0xff] %vm254, %v12009
      %12026 = vst.msk [vmem:[%s6151 + $0x28] sm:$0xff] %vm254, %v12010
      %12027 = vst.msk [vmem:[%s6151 + $0x30] sm:$0xff] %vm254, %v12011
      %12028 = vst.msk [vmem:[%s6151 + $0x38] sm:$0xff] %vm254, %v12012
      %12029 = vst.msk [vmem:[%s6151 + $0x40] sm:$0xff] %vm254, %v12013
      %12030 = vst.msk [vmem:[%s6151 + $0x48] sm:$0xff] %vm254, %v12014
      %12031 = vst.msk [vmem:[%s6151 + $0x50] sm:$0xff] %vm254, %v12015
      %12032 = vst.msk [vmem:[%s6151 + $0x58] sm:$0xff] %vm254, %v12016
      %12033 = vst.msk [vmem:[%s6151 + $0x60] sm:$0xff] %vm254, %v12017
      %12034 = vst.msk [vmem:[%s6151 + $0x68] sm:$0xff] %vm254, %v12018
      %12035 = vst.msk [vmem:[%s6151 + $0x70] sm:$0xff] %vm254, %v12019
      %12036 = vst.msk [vmem:[%s6151 + $0x78] sm:$0xff] %vm254, %v12020
      %p12037 = scmp.lt.s32.totalorder %s14, 1
      %s12038 = scalar_select %p12037, %s14, 1
      %s12039 = smul.addr %s12038, 32
      %s12040 = smul.addr %s12039, 8
      %s12041 = scalar_lea.vmem %s3, %s12040
      // Predicated region
      $region33: #{resa_forward.1} parent=31 // pred_check
        %p12042 = pneg %p100
      $region34: #{resa_forward.1} parent=31 // pred_check_branch
        %12044 = sbr.rel (%p12042) target = $region36
      $region35: #{resa_forward.1} parent=31 // pred_region
        _
      $region36: #{resa_forward.1} parent=31 // pred_fallthru
        _
    $region32: #{resa_forward.1} parent=5 // pred_fallthru
      _
    %p12045 = scmp.le.s32.totalorder 2, %s9
    // Predicated region
    $region37: #{resa_forward.1} parent=5 // pred_check
      %p12046 = pneg %p12045
    $region38: #{resa_forward.1} parent=5 // pred_check_branch
      %12048 = sbr.rel (%p12046) target = $region40
    $region39: #{resa_forward.1} parent=5 // pred_region
      %s12049 = ssub.s32 %s9, 2
      // Predicated region
      $region41: #{resa_forward.1} parent=39 // pred_check
        %p12050 = pneg %p106
      $region42: #{resa_forward.1} parent=39 // pred_check_branch
        %12052 = sbr.rel (%p12050) target = $region44
      $region43: #{resa_forward.1} parent=39 // pred_region
        %p12053 = scmp.lt.s32.totalorder %s15, 1
        %s12054 = scalar_select %p12053, %s15, 1
        %s12055 = smul.addr %s12054, 32
        %s12056 = smul.addr %s12055, 8
        %s12057 = scalar_lea.vmem %s3, %s12056
      $region44: #{resa_forward.1} parent=39 // pred_fallthru
        _
    $region40: #{resa_forward.1} parent=5 // pred_fallthru
      _
  $region6: #{resa_forward.1} parent=0 // loop_footer
    %s13 = sadd.s32 1, %s9
  $region7: #{resa_forward.1} parent=0 // loop_footer_branch
    %8 = sbr.rel target = $region3
  $region8: #{resa_forward.1} parent=0 // loop_exit
    _

</llo_original>
